<compile_context>
chip_gen: v6e
topology: v6e:2x2x1
jax: 0.10.0
libtpu: 0.0.40
codegen_flags: <defaults>
</compile_context>

<pallas_src>
import jax
import jax.numpy as jnp
from jax.experimental import pallas as pl
from jax.experimental.pallas import tpu as pltpu


# ----------------------------------------------------------------------------
# Kernels
# ----------------------------------------------------------------------------
def _upsample_nearest_kernel(x_ref, o_ref):
    """Nearest-neighbor 2x upsample of one row tile.

    x_ref: (1, th, W, C)  ->  o_ref: (1, 2*th, 2*W, C)
    """
    x = x_ref[0]
    th, w, c = x.shape
    u = jnp.broadcast_to(x[:, None, :, None, :], (th, 2, w, 2, c))
    o_ref[0] = u.reshape(2 * th, 2 * w, c)


def _upsample_conv_kernel(top_ref, mid_ref, bot_ref, w_ref, b_ref, o_ref):
    """Fused nearest-2x upsample + 3x3 conv, polyphase form, one output row tile.

    top/bot: (1, 1, W, C)    1-row halos (index clamped; masked to zero at borders)
    mid    : (1, th, W, C)   this tile's input rows (no HBM-side padding)
    w_ref  : (16, Cin, Cout) pre-summed phase weights, index ((dy*2+dx)*2+a)*2+b
    b_ref  : (1, Cout) f32
    o_ref  : (1, 2*th, 2*W, Cout)
    """
    th = mid_ref.shape[1]
    w = mid_ref.shape[2]
    cin = mid_ref.shape[3]
    cout = o_ref.shape[3]
    dt = mid_ref.dtype

    i = pl.program_id(1)
    last = pl.num_programs(1) - 1

    # The conv zero padding lives on the upsampled image; at the top/bottom image
    # borders the clamped halo row must contribute zeros.  (Single-row mask -- cost is
    # negligible; a predicated zero-fill would also work on v5e's f32-only VPU.)
    top = top_ref[0] * (i > 0).astype(dt)                       # (1, W, C)
    bot = bot_ref[0] * (i < last).astype(dt)                    # (1, W, C)
    xt = jnp.concatenate([top, mid_ref[0], bot], axis=0)        # (th+2, W, C)
    # In-kernel 1-column zero pad (replaces the old jnp.pad HBM pass on the input).
    zc = jnp.zeros((th + 2, 1, cin), dt)
    xt = jnp.concatenate([zc, xt, zc], axis=1)                  # (th+2, W+2, C)

    bias = b_ref[...].astype(jnp.float32)                       # (1, Cout)

    # Polyphase: output[2r+dy, 2c+dx] = sum_{a,b} Weff[dy,dx,a,b] . xt[r+dy+a, c+dx+b]
    # 4 phases x 4 taps = 16 accumulating MXU matmuls of (th*W, Cin) @ (Cin, Cout).
    # TODO(synk): on v5e/v6e, concatenating the 4 taps along K (im2col) gives 4
    # matmuls of (th*W, 4*Cin) and fewer MRF drains / VPU adds.
    rows = []
    for dy in range(2):
        cols = []
        for dx in range(2):
            acc = jnp.zeros((th * w, cout), jnp.float32)
            for a in range(2):
                for b in range(2):
                    k = ((dy * 2 + dx) * 2 + a) * 2 + b
                    tap = xt[dy + a:dy + a + th, dx + b:dx + b + w, :]
                    acc = acc + jnp.dot(tap.reshape(th * w, cin), w_ref[k],
                                        preferred_element_type=jnp.float32)
            cols.append((acc + bias).reshape(th, w, cout))
        # Interleave the two column phases: (th, W, 2, Cout) -> (th, 2W, Cout)
        rows.append(jnp.stack(cols, axis=2).reshape(th, 2 * w, cout))
    # Interleave the two row phases: (th, 2, 2W, Cout) -> (2th, 2W, Cout)
    out = jnp.stack(rows, axis=1).reshape(2 * th, 2 * w, cout)
    o_ref[0] = out.astype(o_ref.dtype)


# ----------------------------------------------------------------------------
# Generation-aware VMEM budget + tile sizing
# ----------------------------------------------------------------------------
def _vmem_capacity_bytes():
    try:
        return int(pltpu.get_tpu_info().vmem_capacity_bytes)
    except Exception:                       # pragma: no cover - conservative fallback
        return 64 * 1024 * 1024             # v7x per-core VMEM (safe everywhere)


def _pick_row_tile(h, footprint_fn, budget_bytes, min_h_steps=1):
    """Largest divisor of h whose per-step VMEM footprint fits the budget, then
    shrunk (still a divisor) until the H grid has at least `min_h_steps` steps so
    both v7x TensorCores stay busy and the DMA pipeline can overlap."""
    divs = sorted((d for d in range(1, h + 1) if h % d == 0), reverse=True)
    th = divs[-1]                                        # = 1, always-valid fallback
    for d in divs:
        if footprint_fn(d) <= budget_bytes:
            th = d
            break
    while h // th < min_h_steps:
        smaller = [d for d in divs if d < th]
        if not smaller:
            break
        th = smaller[0]
    return th
    # TODO(synk): add W tiling (column halos) for extreme W*C where even th=1 overflows.


def _const_spec(block_shape, nbytes):
    """BlockSpec for a grid-invariant input.  Large blocks (weights) are requested
    single-buffered (pl.Buffered(1)) so only one copy lives in VMEM."""
    zeros = (0,) * len(block_shape)
    index_map = lambda b, i: zeros
    if nbytes >= (1 << 21):                              # only worth it for multi-MB blocks
        try:
            return pl.BlockSpec(block_shape, index_map, pipeline_mode=pl.Buffered(1))
        except (TypeError, ValueError):
            pass
    return pl.BlockSpec(block_shape, index_map)


# ----------------------------------------------------------------------------
# NHWC core wrappers
# ----------------------------------------------------------------------------
def _upsample_nearest_nhwc(x_nhwc):
    n, h, w, c = x_nhwc.shape
    itemsize = jnp.dtype(x_nhwc.dtype).itemsize
    cap = _vmem_capacity_bytes()
    budget = int(cap * 0.72)

    # Nearest-only footprint: double-buffered in/out tiles + in-kernel upsampled temp.
    def footprint(th):
        return (2 * th * w * c + 2 * 4 * th * w * c + 4 * th * w * c) * itemsize

    th = _pick_row_tile(h, footprint, budget, min_h_steps=-(-4 // n))

    return pl.pallas_call(
        _upsample_nearest_kernel,
        out_shape=jax.ShapeDtypeStruct((n, 2 * h, 2 * w, c), x_nhwc.dtype),
        grid_spec=pltpu.PrefetchScalarGridSpec(
            num_scalar_prefetch=0,
            grid=(n, h // th),
            in_specs=[pl.BlockSpec((1, th, w, c), lambda b, i: (b, i, 0, 0))],
            out_specs=pl.BlockSpec((1, 2 * th, 2 * w, c), lambda b, i: (b, i, 0, 0)),
        ),
        compiler_params=pltpu.CompilerParams(
            dimension_semantics=("parallel", "parallel"),
            vmem_limit_bytes=int(cap * 0.80)),
    )(x_nhwc)


def _polyphase_weights(w_hwio):
    """Pre-sum the 3x3 kernel into the 4 phase-specific 2x2 kernels of the
    nearest-2x + conv3x3 polyphase decomposition.

    Returns (16, Cin, Cout) f32, index = ((dy*2+dx)*2+a)*2+b; tap (a,b) of phase
    (dy,dx) multiplies X[i-1+dy+a, j-1+dx+b]."""
    w_hwio = w_hwio.astype(jnp.float32)
    w0, w1, w2 = w_hwio[0], w_hwio[1], w_hwio[2]          # each (3, Cin, Cout) over kw
    row = ((w0, w1 + w2), (w0 + w1, w2))                  # [dy][a]
    taps = []
    for dy in range(2):
        for dx in range(2):
            for a in range(2):
                r = row[dy][a]
                col = (r[0], r[1] + r[2]) if dx == 0 else (r[0] + r[1], r[2])
                for b in range(2):
                    taps.append(col[b])
    return jnp.stack(taps, axis=0)                        # (16, Cin, Cout)


def _upsample_conv_nhwc(x_nhwc, w_eff, b2d):
    n, h, w, c = x_nhwc.shape
    cout = w_eff.shape[-1]
    itemsize = jnp.dtype(x_nhwc.dtype).itemsize
    cap = _vmem_capacity_bytes()
    budget = int(cap * 0.72)
    w_bytes = 16 * c * cout * jnp.dtype(w_eff.dtype).itemsize

    def footprint(th):
        weights = w_bytes + 4 * cout                       # single-buffered phase weights
        in_t = 2 * (th + 2) * w * c * itemsize             # mid + 2 halo rows, x2 buffers
        out_t = 2 * (4 * th * w * cout) * itemsize         # output tile, double-buffered
        xt = (th + 2) * (w + 2) * c * itemsize             # in-kernel haloed/padded tile
        work = 6 * th * w * cout * 4                       # f32 phase accs + interleave temps
        return weights + in_t + out_t + xt + work

    th = _pick_row_tile(h, footprint, budget, min_h_steps=-(-4 // n))

    return pl.pallas_call(
        _upsample_conv_kernel,
        out_shape=jax.ShapeDtypeStruct((n, 2 * h, 2 * w, cout), x_nhwc.dtype),
        grid_spec=pltpu.PrefetchScalarGridSpec(
            num_scalar_prefetch=0,
            grid=(n, h // th),
            in_specs=[
                # 1-row halos above/below the tile (clamped; masked in-kernel at borders)
                pl.BlockSpec((1, 1, w, c),
                             lambda b, i: (b, jnp.maximum(i * th - 1, 0), 0, 0)),
                pl.BlockSpec((1, th, w, c), lambda b, i: (b, i, 0, 0)),
                pl.BlockSpec((1, 1, w, c),
                             lambda b, i: (b, jnp.minimum((i + 1) * th, h - 1), 0, 0)),
                # Grid-invariant pre-summed phase weights / bias.
                _const_spec((16, c, cout), w_bytes),
                _const_spec((1, cout), 4 * cout),
            ],
            out_specs=pl.BlockSpec((1, 2 * th, 2 * w, cout),
                                   lambda b, i: (b, i, 0, 0)),
        ),
        compiler_params=pltpu.CompilerParams(
            dimension_semantics=("parallel", "parallel"),
            vmem_limit_bytes=int(cap * 0.80)),
    )(x_nhwc, x_nhwc, x_nhwc, w_eff, b2d)


# ----------------------------------------------------------------------------
# NCHW adapter (matches the PyTorch module's forward)
# ----------------------------------------------------------------------------
def _upsample_forward(x_nchw, weight=None, bias=None, *, with_conv, compute_dtype=None):
    """x:(N,C,H,W); weight:(Cout,Cin,3,3) [PyTorch OIHW]; bias:(Cout,).

    compute_dtype=jnp.bfloat16 is the recommended production setting on v6e/v7x
    (halves HBM traffic and weight VMEM; accumulation stays f32)."""
    x_nhwc = jnp.transpose(x_nchw, (0, 2, 3, 1))          # NCHW -> NHWC (lane dim = C)
    if not with_conv:
        out_nhwc = _upsample_nearest_nhwc(x_nhwc)
    else:
        w_hwio = jnp.transpose(weight, (2, 3, 1, 0))      # OIHW -> HWIO
        w_eff = _polyphase_weights(w_hwio)                # (16, Cin, Cout) f32
        if compute_dtype is not None:                     # bf16 MXU path
            x_nhwc = x_nhwc.astype(compute_dtype)
            w_eff = w_eff.astype(compute_dtype)
        b2d = bias.astype(jnp.float32).reshape(1, -1)
        out_nhwc = _upsample_conv_nhwc(x_nhwc, w_eff, b2d)
    return jnp.transpose(out_nhwc, (0, 3, 1, 2)).astype(x_nchw.dtype)


upsample_forward = jax.jit(_upsample_forward,
                           static_argnames=("with_conv", "compute_dtype"))


# ----------------------------------------------------------------------------
# Pure-JAX references for verification
# ----------------------------------------------------------------------------
def _ref_upsample_nearest(x_nchw):
    return jnp.repeat(jnp.repeat(x_nchw, 2, axis=2), 2, axis=3)


def _ref_upsample_conv(x_nchw, weight, bias):
    up = _ref_upsample_nearest(x_nchw).astype(jnp.float32)
    out = jax.lax.conv_general_dilated(
        up, weight.astype(jnp.float32), window_strides=(1, 1),
        padding=((1, 1), (1, 1)), dimension_numbers=("NCHW", "OIHW", "NCHW"))
    return (out + bias.reshape(1, -1, 1, 1)).astype(x_nchw.dtype)


# ----------------------------------------------------------------------------
if __name__ == "__main__":
    key = jax.random.PRNGKey(0)
    kx, kw, kb = jax.random.split(key, 3)

    N, C, H, W = 2, 4, 16, 16
    x = jax.random.normal(kx, (N, C, H, W), dtype=jnp.float32)

    # Deterministic synthetic Conv2d(C, C, 3, stride=1, padding=1) params (OIHW layout).
    fan_in = C * 3 * 3
    bound = 1.0 / (fan_in ** 0.5)
    weight = jax.random.uniform(kw, (C, C, 3, 3), jnp.float32, -bound, bound)
    bias = jax.random.uniform(kb, (C,), jnp.float32, -bound, bound)

    # with_conv=True: nearest 2x upsample fused with the 3x3 same-padding conv
    # (polyphase decomposition).
    y_conv = jax.block_until_ready(upsample_forward(x, weight, bias, with_conv=True))
    y_conv_ref = _ref_upsample_conv(x, weight, bias)
    assert y_conv.shape == (N, C, 2 * H, 2 * W), y_conv.shape
    assert jnp.allclose(y_conv, y_conv_ref, atol=1e-4, rtol=1e-4), float(
        jnp.max(jnp.abs(y_conv - y_conv_ref)))

    # with_conv=False: pure nearest 2x upsample (bit-exact copy).
    y_up = jax.block_until_ready(upsample_forward(x, with_conv=False))
    y_up_ref = _ref_upsample_nearest(x)
    assert y_up.shape == (N, C, 2 * H, 2 * W), y_up.shape
    assert jnp.array_equal(y_up, y_up_ref)

    # bf16 MXU compute path (production setting) - loose-tolerance smoke check.
    y_bf16 = jax.block_until_ready(
        upsample_forward(x, weight, bias, with_conv=True, compute_dtype=jnp.bfloat16))
    assert jnp.allclose(y_bf16, y_conv_ref, atol=5e-2, rtol=5e-2)

    print("KERNEL_OK")
</pallas_src>

<mosaic_0001>
module attributes {stable_mosaic.version = 11 : i64} {
  func.func @_upsample_conv_kernel(%arg0: i32, %arg1: i32, %arg2: memref<1x1x16x4xf32, #tpu.memory_space<vmem>>, %arg3: memref<1x8x16x4xf32, #tpu.memory_space<vmem>>, %arg4: memref<1x1x16x4xf32, #tpu.memory_space<vmem>>, %arg5: memref<16x4x4xf32, #tpu.memory_space<vmem>>, %arg6: memref<1x4xf32, #tpu.memory_space<vmem>>, %arg7: memref<1x16x32x4xf32, #tpu.memory_space<vmem>>) attributes {dimension_semantics = [#tpu.dimension_semantics<parallel>, #tpu.dimension_semantics<parallel>], iteration_bounds = array<i64: 2, 2>, scalar_prefetch = 0 : i64, scratch_operands = 0 : i64, tpu.core_type = #tpu.core_type<tc>, window_params = [{transform_indices = @transform_0, window_bounds = array<i64: 1, 1, 16, 4>}, {transform_indices = @transform_1, window_bounds = array<i64: 1, 8, 16, 4>}, {transform_indices = @transform_2, window_bounds = array<i64: 1, 1, 16, 4>}, {pipeline_mode = #tpu.pipeline_mode<synchronous>, transform_indices = @transform_3, window_bounds = array<i64: 16, 4, 4>}, {pipeline_mode = #tpu.pipeline_mode<synchronous>, transform_indices = @transform_4, window_bounds = array<i64: 1, 4>}, {transform_indices = @transform_5, window_bounds = array<i64: 1, 16, 32, 4>}]} {
    %c0 = arith.constant 0 : index
    %c0_0 = arith.constant 0 : index
    %c0_1 = arith.constant 0 : index
    %c0_2 = arith.constant 0 : index
    %0 = vector.load %arg2[%c0, %c0_0, %c0_1, %c0_2] : memref<1x1x16x4xf32, #tpu.memory_space<vmem>>, vector<1x1x16x4xf32>
    %1 = vector.shape_cast %0 : vector<1x1x16x4xf32> to vector<1x16x4xf32>
    %c0_i32 = arith.constant 0 : i32
    %2 = arith.cmpi sgt, %arg1, %c0_i32 : i32
    %3 = arith.extui %2 : i1 to i32
    %4 = arith.sitofp %3 : i32 to f32
    %5 = vector.broadcast %4 : f32 to vector<1x16x4xf32>
    %6 = arith.mulf %1, %5 : vector<1x16x4xf32>
    %c0_3 = arith.constant 0 : index
    %c0_4 = arith.constant 0 : index
    %c0_5 = arith.constant 0 : index
    %c0_6 = arith.constant 0 : index
    %7 = vector.load %arg4[%c0_3, %c0_4, %c0_5, %c0_6] : memref<1x1x16x4xf32, #tpu.memory_space<vmem>>, vector<1x1x16x4xf32>
    %8 = vector.shape_cast %7 : vector<1x1x16x4xf32> to vector<1x16x4xf32>
    %c1_i32 = arith.constant 1 : i32
    %9 = arith.cmpi slt, %arg1, %c1_i32 : i32
    %10 = arith.extui %9 : i1 to i32
    %11 = arith.sitofp %10 : i32 to f32
    %12 = vector.broadcast %11 : f32 to vector<1x16x4xf32>
    %13 = arith.mulf %8, %12 : vector<1x16x4xf32>
    %c0_7 = arith.constant 0 : index
    %c0_8 = arith.constant 0 : index
    %c0_9 = arith.constant 0 : index
    %c0_10 = arith.constant 0 : index
    %14 = vector.load %arg3[%c0_7, %c0_8, %c0_9, %c0_10] : memref<1x8x16x4xf32, #tpu.memory_space<vmem>>, vector<1x8x16x4xf32>
    %15 = vector.shape_cast %14 : vector<1x8x16x4xf32> to vector<8x16x4xf32>
    %16 = tpu.concatenate %6, %15, %13 in 0 : vector<1x16x4xf32>, vector<8x16x4xf32>, vector<1x16x4xf32> -> vector<10x16x4xf32>
    %cst = arith.constant 0.000000e+00 : f32
    %17 = vector.broadcast %cst : f32 to vector<10x1x4xf32>
    %18 = tpu.concatenate %17, %16, %17 in 1 : vector<10x1x4xf32>, vector<10x16x4xf32>, vector<10x1x4xf32> -> vector<10x18x4xf32>
    %c0_11 = arith.constant 0 : index
    %c0_12 = arith.constant 0 : index
    %19 = vector.load %arg6[%c0_11, %c0_12] : memref<1x4xf32, #tpu.memory_space<vmem>>, vector<1x4xf32>
    %cst_13 = arith.constant 0.000000e+00 : f32
    %20 = vector.broadcast %cst_13 : f32 to vector<128x4xf32>
    %21 = vector.extract_strided_slice %18 {offsets = [0, 0, 0], sizes = [8, 16, 4], strides = [1, 1, 1]} : vector<10x18x4xf32> to vector<8x16x4xf32>
    %22 = vector.shape_cast %21 : vector<8x16x4xf32> to vector<128x4xf32>
    %c0_14 = arith.constant 0 : index
    %c0_15 = arith.constant 0 : index
    %c0_16 = arith.constant 0 : index
    %23 = vector.load %arg5[%c0_14, %c0_15, %c0_16] : memref<16x4x4xf32, #tpu.memory_space<vmem>>, vector<1x4x4xf32>
    %24 = vector.shape_cast %23 : vector<1x4x4xf32> to vector<4x4xf32>
    %cst_17 = arith.constant dense<0.000000e+00> : vector<128x4xf32>
    %25 = tpu.matmul %22, %24, %cst_17 {dimension_numbers = #tpu.dot_dimension_numbers<[1], [0], [0], [1], [0, 0, 1, 1], [], []>} : vector<128x4xf32>, vector<4x4xf32>, vector<128x4xf32> -> vector<128x4xf32>
    %26 = arith.addf %20, %25 : vector<128x4xf32>
    %27 = vector.extract_strided_slice %18 {offsets = [0, 1, 0], sizes = [8, 16, 4], strides = [1, 1, 1]} : vector<10x18x4xf32> to vector<8x16x4xf32>
    %28 = vector.shape_cast %27 : vector<8x16x4xf32> to vector<128x4xf32>
    %c1 = arith.constant 1 : index
    %c0_18 = arith.constant 0 : index
    %c0_19 = arith.constant 0 : index
    %29 = vector.load %arg5[%c1, %c0_18, %c0_19] : memref<16x4x4xf32, #tpu.memory_space<vmem>>, vector<1x4x4xf32>
    %30 = vector.shape_cast %29 : vector<1x4x4xf32> to vector<4x4xf32>
    %cst_20 = arith.constant dense<0.000000e+00> : vector<128x4xf32>
    %31 = tpu.matmul %28, %30, %cst_20 {dimension_numbers = #tpu.dot_dimension_numbers<[1], [0], [0], [1], [0, 0, 1, 1], [], []>} : vector<128x4xf32>, vector<4x4xf32>, vector<128x4xf32> -> vector<128x4xf32>
    %32 = arith.addf %26, %31 : vector<128x4xf32>
    %33 = vector.extract_strided_slice %18 {offsets = [1, 0, 0], sizes = [8, 16, 4], strides = [1, 1, 1]} : vector<10x18x4xf32> to vector<8x16x4xf32>
    %34 = vector.shape_cast %33 : vector<8x16x4xf32> to vector<128x4xf32>
    %c2 = arith.constant 2 : index
    %c0_21 = arith.constant 0 : index
    %c0_22 = arith.constant 0 : index
    %35 = vector.load %arg5[%c2, %c0_21, %c0_22] : memref<16x4x4xf32, #tpu.memory_space<vmem>>, vector<1x4x4xf32>
    %36 = vector.shape_cast %35 : vector<1x4x4xf32> to vector<4x4xf32>
    %cst_23 = arith.constant dense<0.000000e+00> : vector<128x4xf32>
    %37 = tpu.matmul %34, %36, %cst_23 {dimension_numbers = #tpu.dot_dimension_numbers<[1], [0], [0], [1], [0, 0, 1, 1], [], []>} : vector<128x4xf32>, vector<4x4xf32>, vector<128x4xf32> -> vector<128x4xf32>
    %38 = arith.addf %32, %37 : vector<128x4xf32>
    %39 = vector.extract_strided_slice %18 {offsets = [1, 1, 0], sizes = [8, 16, 4], strides = [1, 1, 1]} : vector<10x18x4xf32> to vector<8x16x4xf32>
    %40 = vector.shape_cast %39 : vector<8x16x4xf32> to vector<128x4xf32>
    %c3 = arith.constant 3 : index
    %c0_24 = arith.constant 0 : index
    %c0_25 = arith.constant 0 : index
    %41 = vector.load %arg5[%c3, %c0_24, %c0_25] : memref<16x4x4xf32, #tpu.memory_space<vmem>>, vector<1x4x4xf32>
    %42 = vector.shape_cast %41 : vector<1x4x4xf32> to vector<4x4xf32>
    %cst_26 = arith.constant dense<0.000000e+00> : vector<128x4xf32>
    %43 = tpu.matmul %40, %42, %cst_26 {dimension_numbers = #tpu.dot_dimension_numbers<[1], [0], [0], [1], [0, 0, 1, 1], [], []>} : vector<128x4xf32>, vector<4x4xf32>, vector<128x4xf32> -> vector<128x4xf32>
    %44 = arith.addf %38, %43 : vector<128x4xf32>
    %45 = vector.broadcast %19 : vector<1x4xf32> to vector<128x4xf32>
    %46 = arith.addf %44, %45 : vector<128x4xf32>
    %47 = vector.shape_cast %46 : vector<128x4xf32> to vector<8x16x4xf32>
    %cst_27 = arith.constant 0.000000e+00 : f32
    %48 = vector.broadcast %cst_27 : f32 to vector<128x4xf32>
    %49 = vector.extract_strided_slice %18 {offsets = [0, 1, 0], sizes = [8, 16, 4], strides = [1, 1, 1]} : vector<10x18x4xf32> to vector<8x16x4xf32>
    %50 = vector.shape_cast %49 : vector<8x16x4xf32> to vector<128x4xf32>
    %c4 = arith.constant 4 : index
    %c0_28 = arith.constant 0 : index
    %c0_29 = arith.constant 0 : index
    %51 = vector.load %arg5[%c4, %c0_28, %c0_29] : memref<16x4x4xf32, #tpu.memory_space<vmem>>, vector<1x4x4xf32>
    %52 = vector.shape_cast %51 : vector<1x4x4xf32> to vector<4x4xf32>
    %cst_30 = arith.constant dense<0.000000e+00> : vector<128x4xf32>
    %53 = tpu.matmul %50, %52, %cst_30 {dimension_numbers = #tpu.dot_dimension_numbers<[1], [0], [0], [1], [0, 0, 1, 1], [], []>} : vector<128x4xf32>, vector<4x4xf32>, vector<128x4xf32> -> vector<128x4xf32>
    %54 = arith.addf %48, %53 : vector<128x4xf32>
    %55 = vector.extract_strided_slice %18 {offsets = [0, 2, 0], sizes = [8, 16, 4], strides = [1, 1, 1]} : vector<10x18x4xf32> to vector<8x16x4xf32>
    %56 = vector.shape_cast %55 : vector<8x16x4xf32> to vector<128x4xf32>
    %c5 = arith.constant 5 : index
    %c0_31 = arith.constant 0 : index
    %c0_32 = arith.constant 0 : index
    %57 = vector.load %arg5[%c5, %c0_31, %c0_32] : memref<16x4x4xf32, #tpu.memory_space<vmem>>, vector<1x4x4xf32>
    %58 = vector.shape_cast %57 : vector<1x4x4xf32> to vector<4x4xf32>
    %cst_33 = arith.constant dense<0.000000e+00> : vector<128x4xf32>
    %59 = tpu.matmul %56, %58, %cst_33 {dimension_numbers = #tpu.dot_dimension_numbers<[1], [0], [0], [1], [0, 0, 1, 1], [], []>} : vector<128x4xf32>, vector<4x4xf32>, vector<128x4xf32> -> vector<128x4xf32>
    %60 = arith.addf %54, %59 : vector<128x4xf32>
    %61 = vector.extract_strided_slice %18 {offsets = [1, 1, 0], sizes = [8, 16, 4], strides = [1, 1, 1]} : vector<10x18x4xf32> to vector<8x16x4xf32>
    %62 = vector.shape_cast %61 : vector<8x16x4xf32> to vector<128x4xf32>
    %c6 = arith.constant 6 : index
    %c0_34 = arith.constant 0 : index
    %c0_35 = arith.constant 0 : index
    %63 = vector.load %arg5[%c6, %c0_34, %c0_35] : memref<16x4x4xf32, #tpu.memory_space<vmem>>, vector<1x4x4xf32>
    %64 = vector.shape_cast %63 : vector<1x4x4xf32> to vector<4x4xf32>
    %cst_36 = arith.constant dense<0.000000e+00> : vector<128x4xf32>
    %65 = tpu.matmul %62, %64, %cst_36 {dimension_numbers = #tpu.dot_dimension_numbers<[1], [0], [0], [1], [0, 0, 1, 1], [], []>} : vector<128x4xf32>, vector<4x4xf32>, vector<128x4xf32> -> vector<128x4xf32>
    %66 = arith.addf %60, %65 : vector<128x4xf32>
    %67 = vector.extract_strided_slice %18 {offsets = [1, 2, 0], sizes = [8, 16, 4], strides = [1, 1, 1]} : vector<10x18x4xf32> to vector<8x16x4xf32>
    %68 = vector.shape_cast %67 : vector<8x16x4xf32> to vector<128x4xf32>
    %c7 = arith.constant 7 : index
    %c0_37 = arith.constant 0 : index
    %c0_38 = arith.constant 0 : index
    %69 = vector.load %arg5[%c7, %c0_37, %c0_38] : memref<16x4x4xf32, #tpu.memory_space<vmem>>, vector<1x4x4xf32>
    %70 = vector.shape_cast %69 : vector<1x4x4xf32> to vector<4x4xf32>
    %cst_39 = arith.constant dense<0.000000e+00> : vector<128x4xf32>
    %71 = tpu.matmul %68, %70, %cst_39 {dimension_numbers = #tpu.dot_dimension_numbers<[1], [0], [0], [1], [0, 0, 1, 1], [], []>} : vector<128x4xf32>, vector<4x4xf32>, vector<128x4xf32> -> vector<128x4xf32>
    %72 = arith.addf %66, %71 : vector<128x4xf32>
    %73 = vector.broadcast %19 : vector<1x4xf32> to vector<128x4xf32>
    %74 = arith.addf %72, %73 : vector<128x4xf32>
    %75 = vector.shape_cast %74 : vector<128x4xf32> to vector<8x16x4xf32>
    %76 = vector.shape_cast %47 : vector<8x16x4xf32> to vector<8x16x1x4xf32>
    %77 = vector.shape_cast %75 : vector<8x16x4xf32> to vector<8x16x1x4xf32>
    %78 = tpu.concatenate %76, %77 in 2 : vector<8x16x1x4xf32>, vector<8x16x1x4xf32> -> vector<8x16x2x4xf32>
    %79 = vector.shape_cast %78 : vector<8x16x2x4xf32> to vector<8x32x4xf32>
    %cst_40 = arith.constant 0.000000e+00 : f32
    %80 = vector.broadcast %cst_40 : f32 to vector<128x4xf32>
    %81 = vector.extract_strided_slice %18 {offsets = [1, 0, 0], sizes = [8, 16, 4], strides = [1, 1, 1]} : vector<10x18x4xf32> to vector<8x16x4xf32>
    %82 = vector.shape_cast %81 : vector<8x16x4xf32> to vector<128x4xf32>
    %c8 = arith.constant 8 : index
    %c0_41 = arith.constant 0 : index
    %c0_42 = arith.constant 0 : index
    %83 = vector.load %arg5[%c8, %c0_41, %c0_42] : memref<16x4x4xf32, #tpu.memory_space<vmem>>, vector<1x4x4xf32>
    %84 = vector.shape_cast %83 : vector<1x4x4xf32> to vector<4x4xf32>
    %cst_43 = arith.constant dense<0.000000e+00> : vector<128x4xf32>
    %85 = tpu.matmul %82, %84, %cst_43 {dimension_numbers = #tpu.dot_dimension_numbers<[1], [0], [0], [1], [0, 0, 1, 1], [], []>} : vector<128x4xf32>, vector<4x4xf32>, vector<128x4xf32> -> vector<128x4xf32>
    %86 = arith.addf %80, %85 : vector<128x4xf32>
    %87 = vector.extract_strided_slice %18 {offsets = [1, 1, 0], sizes = [8, 16, 4], strides = [1, 1, 1]} : vector<10x18x4xf32> to vector<8x16x4xf32>
    %88 = vector.shape_cast %87 : vector<8x16x4xf32> to vector<128x4xf32>
    %c9 = arith.constant 9 : index
    %c0_44 = arith.constant 0 : index
    %c0_45 = arith.constant 0 : index
    %89 = vector.load %arg5[%c9, %c0_44, %c0_45] : memref<16x4x4xf32, #tpu.memory_space<vmem>>, vector<1x4x4xf32>
    %90 = vector.shape_cast %89 : vector<1x4x4xf32> to vector<4x4xf32>
    %cst_46 = arith.constant dense<0.000000e+00> : vector<128x4xf32>
    %91 = tpu.matmul %88, %90, %cst_46 {dimension_numbers = #tpu.dot_dimension_numbers<[1], [0], [0], [1], [0, 0, 1, 1], [], []>} : vector<128x4xf32>, vector<4x4xf32>, vector<128x4xf32> -> vector<128x4xf32>
    %92 = arith.addf %86, %91 : vector<128x4xf32>
    %93 = vector.extract_strided_slice %18 {offsets = [2, 0, 0], sizes = [8, 16, 4], strides = [1, 1, 1]} : vector<10x18x4xf32> to vector<8x16x4xf32>
    %94 = vector.shape_cast %93 : vector<8x16x4xf32> to vector<128x4xf32>
    %c10 = arith.constant 10 : index
    %c0_47 = arith.constant 0 : index
    %c0_48 = arith.constant 0 : index
    %95 = vector.load %arg5[%c10, %c0_47, %c0_48] : memref<16x4x4xf32, #tpu.memory_space<vmem>>, vector<1x4x4xf32>
    %96 = vector.shape_cast %95 : vector<1x4x4xf32> to vector<4x4xf32>
    %cst_49 = arith.constant dense<0.000000e+00> : vector<128x4xf32>
    %97 = tpu.matmul %94, %96, %cst_49 {dimension_numbers = #tpu.dot_dimension_numbers<[1], [0], [0], [1], [0, 0, 1, 1], [], []>} : vector<128x4xf32>, vector<4x4xf32>, vector<128x4xf32> -> vector<128x4xf32>
    %98 = arith.addf %92, %97 : vector<128x4xf32>
    %99 = vector.extract_strided_slice %18 {offsets = [2, 1, 0], sizes = [8, 16, 4], strides = [1, 1, 1]} : vector<10x18x4xf32> to vector<8x16x4xf32>
    %100 = vector.shape_cast %99 : vector<8x16x4xf32> to vector<128x4xf32>
    %c11 = arith.constant 11 : index
    %c0_50 = arith.constant 0 : index
    %c0_51 = arith.constant 0 : index
    %101 = vector.load %arg5[%c11, %c0_50, %c0_51] : memref<16x4x4xf32, #tpu.memory_space<vmem>>, vector<1x4x4xf32>
    %102 = vector.shape_cast %101 : vector<1x4x4xf32> to vector<4x4xf32>
    %cst_52 = arith.constant dense<0.000000e+00> : vector<128x4xf32>
    %103 = tpu.matmul %100, %102, %cst_52 {dimension_numbers = #tpu.dot_dimension_numbers<[1], [0], [0], [1], [0, 0, 1, 1], [], []>} : vector<128x4xf32>, vector<4x4xf32>, vector<128x4xf32> -> vector<128x4xf32>
    %104 = arith.addf %98, %103 : vector<128x4xf32>
    %105 = vector.broadcast %19 : vector<1x4xf32> to vector<128x4xf32>
    %106 = arith.addf %104, %105 : vector<128x4xf32>
    %107 = vector.shape_cast %106 : vector<128x4xf32> to vector<8x16x4xf32>
    %cst_53 = arith.constant 0.000000e+00 : f32
    %108 = vector.broadcast %cst_53 : f32 to vector<128x4xf32>
    %109 = vector.extract_strided_slice %18 {offsets = [1, 1, 0], sizes = [8, 16, 4], strides = [1, 1, 1]} : vector<10x18x4xf32> to vector<8x16x4xf32>
    %110 = vector.shape_cast %109 : vector<8x16x4xf32> to vector<128x4xf32>
    %c12 = arith.constant 12 : index
    %c0_54 = arith.constant 0 : index
    %c0_55 = arith.constant 0 : index
    %111 = vector.load %arg5[%c12, %c0_54, %c0_55] : memref<16x4x4xf32, #tpu.memory_space<vmem>>, vector<1x4x4xf32>
    %112 = vector.shape_cast %111 : vector<1x4x4xf32> to vector<4x4xf32>
    %cst_56 = arith.constant dense<0.000000e+00> : vector<128x4xf32>
    %113 = tpu.matmul %110, %112, %cst_56 {dimension_numbers = #tpu.dot_dimension_numbers<[1], [0], [0], [1], [0, 0, 1, 1], [], []>} : vector<128x4xf32>, vector<4x4xf32>, vector<128x4xf32> -> vector<128x4xf32>
    %114 = arith.addf %108, %113 : vector<128x4xf32>
    %115 = vector.extract_strided_slice %18 {offsets = [1, 2, 0], sizes = [8, 16, 4], strides = [1, 1, 1]} : vector<10x18x4xf32> to vector<8x16x4xf32>
    %116 = vector.shape_cast %115 : vector<8x16x4xf32> to vector<128x4xf32>
    %c13 = arith.constant 13 : index
    %c0_57 = arith.constant 0 : index
    %c0_58 = arith.constant 0 : index
    %117 = vector.load %arg5[%c13, %c0_57, %c0_58] : memref<16x4x4xf32, #tpu.memory_space<vmem>>, vector<1x4x4xf32>
    %118 = vector.shape_cast %117 : vector<1x4x4xf32> to vector<4x4xf32>
    %cst_59 = arith.constant dense<0.000000e+00> : vector<128x4xf32>
    %119 = tpu.matmul %116, %118, %cst_59 {dimension_numbers = #tpu.dot_dimension_numbers<[1], [0], [0], [1], [0, 0, 1, 1], [], []>} : vector<128x4xf32>, vector<4x4xf32>, vector<128x4xf32> -> vector<128x4xf32>
    %120 = arith.addf %114, %119 : vector<128x4xf32>
    %121 = vector.extract_strided_slice %18 {offsets = [2, 1, 0], sizes = [8, 16, 4], strides = [1, 1, 1]} : vector<10x18x4xf32> to vector<8x16x4xf32>
    %122 = vector.shape_cast %121 : vector<8x16x4xf32> to vector<128x4xf32>
    %c14 = arith.constant 14 : index
    %c0_60 = arith.constant 0 : index
    %c0_61 = arith.constant 0 : index
    %123 = vector.load %arg5[%c14, %c0_60, %c0_61] : memref<16x4x4xf32, #tpu.memory_space<vmem>>, vector<1x4x4xf32>
    %124 = vector.shape_cast %123 : vector<1x4x4xf32> to vector<4x4xf32>
    %cst_62 = arith.constant dense<0.000000e+00> : vector<128x4xf32>
    %125 = tpu.matmul %122, %124, %cst_62 {dimension_numbers = #tpu.dot_dimension_numbers<[1], [0], [0], [1], [0, 0, 1, 1], [], []>} : vector<128x4xf32>, vector<4x4xf32>, vector<128x4xf32> -> vector<128x4xf32>
    %126 = arith.addf %120, %125 : vector<128x4xf32>
    %127 = vector.extract_strided_slice %18 {offsets = [2, 2, 0], sizes = [8, 16, 4], strides = [1, 1, 1]} : vector<10x18x4xf32> to vector<8x16x4xf32>
    %128 = vector.shape_cast %127 : vector<8x16x4xf32> to vector<128x4xf32>
    %c15 = arith.constant 15 : index
    %c0_63 = arith.constant 0 : index
    %c0_64 = arith.constant 0 : index
    %129 = vector.load %arg5[%c15, %c0_63, %c0_64] : memref<16x4x4xf32, #tpu.memory_space<vmem>>, vector<1x4x4xf32>
    %130 = vector.shape_cast %129 : vector<1x4x4xf32> to vector<4x4xf32>
    %cst_65 = arith.constant dense<0.000000e+00> : vector<128x4xf32>
    %131 = tpu.matmul %128, %130, %cst_65 {dimension_numbers = #tpu.dot_dimension_numbers<[1], [0], [0], [1], [0, 0, 1, 1], [], []>} : vector<128x4xf32>, vector<4x4xf32>, vector<128x4xf32> -> vector<128x4xf32>
    %132 = arith.addf %126, %131 : vector<128x4xf32>
    %133 = vector.broadcast %19 : vector<1x4xf32> to vector<128x4xf32>
    %134 = arith.addf %132, %133 : vector<128x4xf32>
    %135 = vector.shape_cast %134 : vector<128x4xf32> to vector<8x16x4xf32>
    %136 = vector.shape_cast %107 : vector<8x16x4xf32> to vector<8x16x1x4xf32>
    %137 = vector.shape_cast %135 : vector<8x16x4xf32> to vector<8x16x1x4xf32>
    %138 = tpu.concatenate %136, %137 in 2 : vector<8x16x1x4xf32>, vector<8x16x1x4xf32> -> vector<8x16x2x4xf32>
    %139 = vector.shape_cast %138 : vector<8x16x2x4xf32> to vector<8x32x4xf32>
    %140 = vector.shape_cast %79 : vector<8x32x4xf32> to vector<8x1x32x4xf32>
    %141 = vector.shape_cast %139 : vector<8x32x4xf32> to vector<8x1x32x4xf32>
    %142 = tpu.concatenate %140, %141 in 1 : vector<8x1x32x4xf32>, vector<8x1x32x4xf32> -> vector<8x2x32x4xf32>
    %143 = vector.shape_cast %142 : vector<8x2x32x4xf32> to vector<16x32x4xf32>
    %c0_66 = arith.constant 0 : index
    %c0_67 = arith.constant 0 : index
    %c0_68 = arith.constant 0 : index
    %c0_69 = arith.constant 0 : index
    %144 = vector.load %arg7[%c0_66, %c0_67, %c0_68, %c0_69] : memref<1x16x32x4xf32, #tpu.memory_space<vmem>>, vector<1x16x32x4xf32>
    %145 = vector.shape_cast %144 : vector<1x16x32x4xf32> to vector<16x32x4xf32>
    %146 = vector.shape_cast %143 : vector<16x32x4xf32> to vector<1x16x32x4xf32>
    tpu.vector_store %arg7[%c0_66, %c0_67, %c0_68, %c0_69], %146 {strides = array<i32>} : memref<1x16x32x4xf32, #tpu.memory_space<vmem>>, vector<1x16x32x4xf32>,
    return
  }
  func.func @transform_0(%arg0: i32, %arg1: i32) -> (i32, i32, i32, i32) {
    %c8_i32 = arith.constant 8 : i32
    %0 = arith.muli %arg1, %c8_i32 : i32
    %c1_i32 = arith.constant 1 : i32
    %1 = arith.subi %0, %c1_i32 : i32
    %c0_i32 = arith.constant 0 : i32
    %2 = arith.maxsi %1, %c0_i32 : i32
    %c0_i32_0 = arith.constant 0 : i32
    %c0_i32_1 = arith.constant 0 : i32
    %c0_i32_2 = arith.constant 0 : i32
    return %arg0, %2, %c0_i32_0, %c0_i32_1 : i32, i32, i32, i32
  }
  func.func @transform_1(%arg0: i32, %arg1: i32) -> (i32, i32, i32, i32) {
    %c0_i32 = arith.constant 0 : i32
    %c0_i32_0 = arith.constant 0 : i32
    %c0_i32_1 = arith.constant 0 : i32
    return %arg0, %arg1, %c0_i32, %c0_i32_0 : i32, i32, i32, i32
  }
  func.func @transform_2(%arg0: i32, %arg1: i32) -> (i32, i32, i32, i32) {
    %c1_i32 = arith.constant 1 : i32
    %0 = arith.addi %arg1, %c1_i32 : i32
    %c8_i32 = arith.constant 8 : i32
    %1 = arith.muli %0, %c8_i32 : i32
    %c15_i32 = arith.constant 15 : i32
    %2 = arith.minsi %1, %c15_i32 : i32
    %c0_i32 = arith.constant 0 : i32
    %c0_i32_0 = arith.constant 0 : i32
    %c0_i32_1 = arith.constant 0 : i32
    return %arg0, %2, %c0_i32, %c0_i32_0 : i32, i32, i32, i32
  }
  func.func @transform_3(%arg0: i32, %arg1: i32) -> (i32, i32, i32) {
    %c0_i32 = arith.constant 0 : i32
    %c0_i32_0 = arith.constant 0 : i32
    %c0_i32_1 = arith.constant 0 : i32
    %c0_i32_2 = arith.constant 0 : i32
    return %c0_i32, %c0_i32_0, %c0_i32_1 : i32, i32, i32
  }
  func.func @transform_4(%arg0: i32, %arg1: i32) -> (i32, i32) {
    %c0_i32 = arith.constant 0 : i32
    %c0_i32_0 = arith.constant 0 : i32
    %c0_i32_1 = arith.constant 0 : i32
    return %c0_i32, %c0_i32_0 : i32, i32
  }
  func.func @transform_5(%arg0: i32, %arg1: i32) -> (i32, i32, i32, i32) {
    %c0_i32 = arith.constant 0 : i32
    %c0_i32_0 = arith.constant 0 : i32
    %c0_i32_1 = arith.constant 0 : i32
    return %arg0, %arg1, %c0_i32, %c0_i32_0 : i32, i32, i32, i32
  }
}

</mosaic_0001>

<llo_original>
// kernel: _upsample_forward.1
$region0: #{_upsample_forward.1}
  #allocation0 [shape = 'u32[]', space=smem, size = 0x4, offset = 0x4, fixed_abs, tag = 'smem constant byte address 0x4 - core index']
  #allocation1 [shape = 'u32[144,128]{1,0:T(1,128)}', space=vmem, size = 0x12000, scoped, tag = 'internal scratch']
  %s0 = inlined_call_operand.vmem [shape: f32[2,16,16,4], index: 0, kind: input, shape index: {}, may-alias: {0,1,2}]
  %s1 = inlined_call_operand.vmem [shape: f32[2,16,16,4], index: 1, kind: input, shape index: {}, may-alias: {0,1,2}]
  %s2 = inlined_call_operand.vmem [shape: f32[2,16,16,4], index: 2, kind: input, shape index: {}, may-alias: {0,1,2}]
  %s3 = inlined_call_operand.vmem [shape: f32[16,4,4], index: 3, kind: input, shape index: {}]
  %s4 = inlined_call_operand.vmem [shape: f32[1,4], index: 4, kind: input, shape index: {}]
  %s5 = inlined_call_operand.vmem [shape: f32[2,32,32,4], index: 5, kind: output, shape index: {}]
  %s6 = sld [smem:[#allocation0]]
  $region53: #{_upsample_forward.1} parent=0
    _
  %s8 = ssub.s32 1, %s6
  %s9 = scalar_select 0, %s8, %s6
  loop: start=0, step=1, limit=6
  $region2: #{_upsample_forward.1} parent=0 // loop_pre_header
    _
  $region3: #{_upsample_forward.1} parent=0 // loop_header
    %s11 = sphi 0, %s15
    %p12 = scmp.ge.s32.totalorder %s11, 6
    %s18 = sphi 0, %s30
    %s19 = sphi 0, %s26
    %s20 = sphi 0, %s18
    %s21 = sphi 0, %s19
    %s22 = sphi 0, %s20
    %s23 = sphi 0, %s21
    %s43 = sphi 0, %s45
    %s46 = sphi 0, %s43
    %s47 = sphi 0, %s46
    %s63 = sphi 0, %s47
    %s71 = sphi 0, %s73
    %s74 = sphi 0, %s71
    %s75 = sphi 0, %s74
    %s91 = sphi 0, %s75
    %s107 = sphi 0, %s109
    %s110 = sphi 0, %s107
    %s111 = sphi 0, %s110
    %s127 = sphi 0, %s111
    %s131 = sphi 0, %s131
    %s133 = sphi 0, %s131
    %s134 = sphi 0, %s133
    %s148 = sphi 0, %s134
    %s152 = sphi 0, %s152
    %s154 = sphi 0, %s152
    %s155 = sphi 0, %s154
    %s169 = sphi 0, %s155
    %s177 = sphi 0, %s179
    %s180 = sphi 0, %s177
    %s181 = sphi 0, %s180
    %s197 = sphi 0, %s181
  $region4: #{_upsample_forward.1} parent=0 // loop_header_branch
    %14 = sbr.rel (%p12) target = $region8
  $region5: #{_upsample_forward.1} parent=0 // loop_body
    %s16 = ssub.s32 %s11, 1
    %s17 = ssub.s32 %s11, 2
    %s24 = sadd.s32 1, %s19
    %p25 = scmp.ge.s32.totalorder %s24, 2
    %s26 = scalar_select %p25, 0, %s24
    %s27 = sadd.s32 1, %s18
    %s28 = scalar_select %p25, %s27, %s18
    %p29 = scmp.ge.s32.totalorder %s28, 2
    %s30 = scalar_select %p29, 0, %s28
    %s31 = smul.u32 %s19, 8
    %s32 = ssub.s32 %s31, 1
    %p33 = scmp.gt.s32.totalorder %s32, 0
    %s34 = scalar_select %p33, %s32, 0
    %s35 = smul.u32 %s26, 8
    %s36 = ssub.s32 %s35, 1
    %p37 = scmp.gt.s32.totalorder %s36, 0
    %s38 = scalar_select %p37, %s36, 0
    %s39 = ssub.s32 %s18, %s30
    %s40 = ssub.s32 %s34, %s38
    %s41 = sor.u32 %s39, %s40
    %p42 = scmp.eq.s32.totalorder %s41, 0
    %s44 = sadd.s32 %s43, 1
    %s45 = scalar_select %p42, %s43, %s44
    %p48 = pneg %p42
    %p49 = scmp.eq.s32.totalorder %s11, 3
    %p50 = por %p48, %p49
    %p51 = scmp.ne.s32.totalorder %s43, %s46
    %p52 = scmp.eq.s32.totalorder %s11, 0
    %p53 = por %p51, %p52
    %p54 = scmp.ne.s32.totalorder %s43, %s46
    %p55 = scmp.eq.s32.totalorder %s16, 3
    %p56 = por %p54, %p55
    %p57 = scmp.ne.s32.totalorder %s46, %s47
    %p58 = scmp.eq.s32.totalorder %s16, 0
    %p59 = por %p57, %p58
    %p60 = scmp.ne.s32.totalorder %s46, %s47
    %p61 = scmp.eq.s32.totalorder %s17, 3
    %p62 = por %p60, %p61
    %p64 = scmp.ne.s32.totalorder %s47, %s63
    %p65 = scmp.eq.s32.totalorder %s17, 0
    %p66 = por %p64, %p65
    %s67 = ssub.s32 %s18, %s30
    %s68 = ssub.s32 %s19, %s26
    %s69 = sor.u32 %s67, %s68
    %p70 = scmp.eq.s32.totalorder %s69, 0
    %s72 = sadd.s32 %s71, 1
    %s73 = scalar_select %p70, %s71, %s72
    %p76 = pneg %p70
    %p77 = scmp.eq.s32.totalorder %s11, 3
    %p78 = por %p76, %p77
    %p79 = scmp.ne.s32.totalorder %s71, %s74
    %p80 = scmp.eq.s32.totalorder %s11, 0
    %p81 = por %p79, %p80
    %p82 = scmp.ne.s32.totalorder %s71, %s74
    %p83 = scmp.eq.s32.totalorder %s16, 3
    %p84 = por %p82, %p83
    %p85 = scmp.ne.s32.totalorder %s74, %s75
    %p86 = scmp.eq.s32.totalorder %s16, 0
    %p87 = por %p85, %p86
    %p88 = scmp.ne.s32.totalorder %s74, %s75
    %p89 = scmp.eq.s32.totalorder %s17, 3
    %p90 = por %p88, %p89
    %p92 = scmp.ne.s32.totalorder %s75, %s91
    %p93 = scmp.eq.s32.totalorder %s17, 0
    %p94 = por %p92, %p93
    %s95 = sadd.s32 %s19, 1
    %s96 = smul.u32 %s95, 8
    %p97 = scmp.lt.s32.totalorder %s96, 15
    %s98 = scalar_select %p97, %s96, 15
    %s99 = sadd.s32 %s26, 1
    %s100 = smul.u32 %s99, 8
    %p101 = scmp.lt.s32.totalorder %s100, 15
    %s102 = scalar_select %p101, %s100, 15
    %s103 = ssub.s32 %s18, %s30
    %s104 = ssub.s32 %s98, %s102
    %s105 = sor.u32 %s103, %s104
    %p106 = scmp.eq.s32.totalorder %s105, 0
    %s108 = sadd.s32 %s107, 1
    %s109 = scalar_select %p106, %s107, %s108
    %p112 = pneg %p106
    %p113 = scmp.eq.s32.totalorder %s11, 3
    %p114 = por %p112, %p113
    %p115 = scmp.ne.s32.totalorder %s107, %s110
    %p116 = scmp.eq.s32.totalorder %s11, 0
    %p117 = por %p115, %p116
    %p118 = scmp.ne.s32.totalorder %s107, %s110
    %p119 = scmp.eq.s32.totalorder %s16, 3
    %p120 = por %p118, %p119
    %p121 = scmp.ne.s32.totalorder %s110, %s111
    %p122 = scmp.eq.s32.totalorder %s16, 0
    %p123 = por %p121, %p122
    %p124 = scmp.ne.s32.totalorder %s110, %s111
    %p125 = scmp.eq.s32.totalorder %s17, 3
    %p126 = por %p124, %p125
    %p128 = scmp.ne.s32.totalorder %s111, %s127
    %p129 = scmp.eq.s32.totalorder %s17, 0
    %p130 = por %p128, %p129
    %s132 = sadd.s32 %s131, 1
    %p135 = scmp.eq.s32.totalorder %s11, 3
    %p136 = scmp.ne.s32.totalorder %s131, %s133
    %p137 = scmp.eq.s32.totalorder %s11, 0
    %p138 = por %p136, %p137
    %p139 = scmp.ne.s32.totalorder %s131, %s133
    %p140 = scmp.eq.s32.totalorder %s16, 3
    %p141 = por %p139, %p140
    %p142 = scmp.ne.s32.totalorder %s133, %s134
    %p143 = scmp.eq.s32.totalorder %s16, 0
    %p144 = por %p142, %p143
    %p145 = scmp.ne.s32.totalorder %s133, %s134
    %p146 = scmp.eq.s32.totalorder %s17, 3
    %p147 = por %p145, %p146
    %p149 = scmp.ne.s32.totalorder %s134, %s148
    %p150 = scmp.eq.s32.totalorder %s17, 0
    %p151 = por %p149, %p150
    %s153 = sadd.s32 %s152, 1
    %p156 = scmp.eq.s32.totalorder %s11, 3
    %p157 = scmp.ne.s32.totalorder %s152, %s154
    %p158 = scmp.eq.s32.totalorder %s11, 0
    %p159 = por %p157, %p158
    %p160 = scmp.ne.s32.totalorder %s152, %s154
    %p161 = scmp.eq.s32.totalorder %s16, 3
    %p162 = por %p160, %p161
    %p163 = scmp.ne.s32.totalorder %s154, %s155
    %p164 = scmp.eq.s32.totalorder %s16, 0
    %p165 = por %p163, %p164
    %p166 = scmp.ne.s32.totalorder %s154, %s155
    %p167 = scmp.eq.s32.totalorder %s17, 3
    %p168 = por %p166, %p167
    %p170 = scmp.ne.s32.totalorder %s155, %s169
    %p171 = scmp.eq.s32.totalorder %s17, 0
    %p172 = por %p170, %p171
    %s173 = ssub.s32 %s18, %s30
    %s174 = ssub.s32 %s19, %s26
    %s175 = sor.u32 %s173, %s174
    %p176 = scmp.eq.s32.totalorder %s175, 0
    %s178 = sadd.s32 %s177, 1
    %s179 = scalar_select %p176, %s177, %s178
    %p182 = pneg %p176
    %p183 = scmp.eq.s32.totalorder %s11, 3
    %p184 = por %p182, %p183
    %p185 = scmp.ne.s32.totalorder %s177, %s180
    %p186 = scmp.eq.s32.totalorder %s11, 0
    %p187 = por %p185, %p186
    %p188 = scmp.ne.s32.totalorder %s177, %s180
    %p189 = scmp.eq.s32.totalorder %s16, 3
    %p190 = por %p188, %p189
    %p191 = scmp.ne.s32.totalorder %s180, %s181
    %p192 = scmp.eq.s32.totalorder %s16, 0
    %p193 = por %p191, %p192
    %p194 = scmp.ne.s32.totalorder %s180, %s181
    %p195 = scmp.eq.s32.totalorder %s17, 3
    %p196 = por %p194, %p195
    %p198 = scmp.ne.s32.totalorder %s181, %s197
    %p199 = scmp.eq.s32.totalorder %s17, 0
    %p200 = por %p198, %p199
    %p201 = scmp.le.s32.totalorder 1, %s11
    %p202 = scmp.lt.s32.totalorder %s11, 5
    %p203 = pnand %p201, %p202
    %p204 = pneg %p203
    // Predicated region
    $region9: #{_upsample_forward.1} parent=5 // pred_check
      _
    $region10: #{_upsample_forward.1} parent=5 // pred_check_branch
      %206 = sbr.rel (%p203) target = $region12
    $region11: #{_upsample_forward.1} parent=5 // pred_region
      %s207 = ssub.s32 %s11, 1
      // Predicated region
      $region13: #{_upsample_forward.1} parent=11 // pred_check
        %p208 = pneg %p144
      $region14: #{_upsample_forward.1} parent=11 // pred_check_branch
        %210 = sbr.rel (%p208) target = $region16
      $region15: #{_upsample_forward.1} parent=11 // pred_region
        _
      $region16: #{_upsample_forward.1} parent=11 // pred_fallthru
        _
      // Predicated region
      $region17: #{_upsample_forward.1} parent=11 // pred_check
        %p211 = pneg %p165
      $region18: #{_upsample_forward.1} parent=11 // pred_check_branch
        %213 = sbr.rel (%p211) target = $region20
      $region19: #{_upsample_forward.1} parent=11 // pred_region
        _
      $region20: #{_upsample_forward.1} parent=11 // pred_fallthru
        _
    $region12: #{_upsample_forward.1} parent=5 // pred_fallthru
      _
    %p214 = scmp.lt.s32.totalorder %s11, 4
    // Predicated region
    $region21: #{_upsample_forward.1} parent=5 // pred_check
      %p215 = pneg %p214
    $region22: #{_upsample_forward.1} parent=5 // pred_check_branch
      %217 = sbr.rel (%p215) target = $region24
    $region23: #{_upsample_forward.1} parent=5 // pred_region
      // Predicated region
      $region25: #{_upsample_forward.1} parent=23 // pred_check
        %p218 = pneg %p53
      $region26: #{_upsample_forward.1} parent=23 // pred_check_branch
        %220 = sbr.rel (%p218) target = $region28
      $region27: #{_upsample_forward.1} parent=23 // pred_region
        %s221 = smul.u32 %s19, 8
        %s222 = ssub.s32 %s221, 1
        %p223 = scmp.gt.s32.totalorder %s222, 0
        %s224 = scalar_select %p223, %s222, 0
        %p225 = scmp.lt.s32.totalorder %s18, 1
        %s226 = scalar_select %p225, %s18, 1
        %p227 = scmp.lt.s32.totalorder %s224, 15
        %s228 = scalar_select %p227, %s224, 15
        %s229 = smul.addr %s228, 2
        %s230 = smul.addr %s226, 32
        %s231 = sadd.s32 %s229, %s230
        %s232 = smul.addr %s231, 8
        %s233 = scalar_lea.vmem %s0, %s232
        %s234 = smul.u32 %s19, 8
        %s235 = ssub.s32 %s234, 1
        %p236 = scmp.gt.s32.totalorder %s235, 0
        %s237 = scalar_select %p236, %s235, 0
      $region28: #{_upsample_forward.1} parent=23 // pred_fallthru
        _
      // Predicated region
      $region29: #{_upsample_forward.1} parent=23 // pred_check
        %p238 = pneg %p81
      $region30: #{_upsample_forward.1} parent=23 // pred_check_branch
        %240 = sbr.rel (%p238) target = $region32
      $region31: #{_upsample_forward.1} parent=23 // pred_region
        %s241 = smul.u32 8, %s19
        %p242 = scmp.lt.s32.totalorder %s18, 1
        %s243 = scalar_select %p242, %s18, 1
        %p244 = scmp.lt.s32.totalorder %s241, 15
        %s245 = scalar_select %p244, %s241, 15
        %s246 = smul.addr %s245, 2
        %s247 = smul.addr %s243, 32
        %s248 = sadd.s32 %s246, %s247
        %s249 = smul.addr %s248, 8
        %s250 = scalar_lea.vmem %s1, %s249
        %s251 = smul.u32 8, %s19
      $region32: #{_upsample_forward.1} parent=23 // pred_fallthru
        _
      // Predicated region
      $region33: #{_upsample_forward.1} parent=23 // pred_check
        %p252 = pneg %p117
      $region34: #{_upsample_forward.1} parent=23 // pred_check_branch
        %254 = sbr.rel (%p252) target = $region36
      $region35: #{_upsample_forward.1} parent=23 // pred_region
        %s255 = sadd.s32 %s19, 1
        %s256 = smul.u32 %s255, 8
        %p257 = scmp.lt.s32.totalorder %s256, 15
        %s258 = scalar_select %p257, %s256, 15
        %p259 = scmp.lt.s32.totalorder %s18, 1
        %s260 = scalar_select %p259, %s18, 1
        %p261 = scmp.lt.s32.totalorder %s258, 15
        %s262 = scalar_select %p261, %s258, 15
        %s263 = smul.addr %s262, 2
        %s264 = smul.addr %s260, 32
        %s265 = sadd.s32 %s263, %s264
        %s266 = smul.addr %s265, 8
        %s267 = scalar_lea.vmem %s2, %s266
        %s268 = sadd.s32 %s19, 1
        %s269 = smul.u32 %s268, 8
        %p270 = scmp.lt.s32.totalorder %s269, 15
        %s271 = scalar_select %p270, %s269, 15
      $region36: #{_upsample_forward.1} parent=23 // pred_fallthru
        _
    $region24: #{_upsample_forward.1} parent=5 // pred_fallthru
      _
    %p272 = scmp.le.s32.totalorder 1, %s11
    %p273 = scmp.lt.s32.totalorder %s11, 5
    %p274 = pnand %p272, %p273
    %p275 = pneg %p274
    // Predicated region
    $region37: #{_upsample_forward.1} parent=5 // pred_check
      _
    $region38: #{_upsample_forward.1} parent=5 // pred_check_branch
      %277 = sbr.rel (%p274) target = $region40
    $region39: #{_upsample_forward.1} parent=5 // pred_region
      %s278 = ssub.s32 %s11, 1
      %s279 = smul.u32 %s21, 8
      %s280 = ssub.s32 %s279, 1
      %p281 = scmp.gt.s32.totalorder %s280, 0
      %s282 = scalar_select %p281, %s280, 0
      %p283 = scmp.lt.s32.totalorder %s20, 1
      %s284 = scalar_select %p283, %s20, 1
      %p285 = scmp.lt.s32.totalorder %s282, 15
      %s286 = scalar_select %p285, %s282, 15
      %s287 = smul.addr %s286, 2
      %s288 = smul.addr %s284, 32
      %s289 = sadd.s32 %s287, %s288
      %s290 = smul.addr %s289, 8
      %s291 = scalar_lea.vmem %s0, %s290
      %p292 = pneg %p59
      %p293 = pneg %p56
      %s294 = smul.u32 8, %s21
      %p295 = scmp.lt.s32.totalorder %s20, 1
      %s296 = scalar_select %p295, %s20, 1
      %p297 = scmp.lt.s32.totalorder %s294, 15
      %s298 = scalar_select %p297, %s294, 15
      %s299 = smul.addr %s298, 2
      %s300 = smul.addr %s296, 32
      %s301 = sadd.s32 %s299, %s300
      %s302 = smul.addr %s301, 8
      %s303 = scalar_lea.vmem %s1, %s302
      %p304 = pneg %p87
      %p305 = pneg %p84
      %s306 = sadd.s32 %s21, 1
      %s307 = smul.u32 %s306, 8
      %p308 = scmp.lt.s32.totalorder %s307, 15
      %s309 = scalar_select %p308, %s307, 15
      %p310 = scmp.lt.s32.totalorder %s20, 1
      %s311 = scalar_select %p310, %s20, 1
      %p312 = scmp.lt.s32.totalorder %s309, 15
      %s313 = scalar_select %p312, %s309, 15
      %s314 = smul.addr %s313, 2
      %s315 = smul.addr %s311, 32
      %s316 = sadd.s32 %s314, %s315
      %s317 = smul.addr %s316, 8
      %s318 = scalar_lea.vmem %s2, %s317
      %p319 = pneg %p123
      %p320 = pneg %p120
      %p321 = pneg %p144
      %p322 = pneg %p141
      %p323 = pneg %p165
      %p324 = pneg %p162
      %p325 = pneg %p193
      %p326 = pneg %p190
      %s327 = smul.u32 16, %s21
      %p328 = scmp.lt.s32.totalorder %s20, 1
      %s329 = scalar_select %p328, %s20, 1
      %p330 = scmp.lt.s32.totalorder %s327, 31
      %s331 = scalar_select %p330, %s327, 31
      %s332 = smul.addr %s331, 4
      %s333 = smul.addr %s329, 128
      %s334 = sadd.s32 %s332, %s333
      %s335 = smul.addr %s334, 8
      %s336 = scalar_lea.vmem %s5, %s335
      %s337 = smul.u32 %s21, 8
      %s338 = ssub.s32 %s337, 1
      %p339 = scmp.gt.s32.totalorder %s338, 0
      %s340 = scalar_select %p339, %s338, 0
      %p341 = scmp.lt.s32.totalorder %s20, 1
      %s342 = scalar_select %p341, %s20, 1
      %p343 = scmp.lt.s32.totalorder %s340, 15
      %s344 = scalar_select %p343, %s340, 15
      %s345 = smul.addr %s344, 2
      %s346 = smul.addr %s342, 32
      %s347 = sadd.s32 %s345, %s346
      %s348 = smul.addr %s347, 8
      %s349 = scalar_lea.vmem %s0, %s348
      %s350 = smul.u32 %s21, 8
      %s351 = ssub.s32 %s350, 1
      %p352 = scmp.gt.s32.totalorder %s351, 0
      %s353 = scalar_select %p352, %s351, 0
      %s354 = smul.u32 8, %s21
      %p355 = scmp.lt.s32.totalorder %s20, 1
      %s356 = scalar_select %p355, %s20, 1
      %p357 = scmp.lt.s32.totalorder %s354, 15
      %s358 = scalar_select %p357, %s354, 15
      %s359 = smul.addr %s358, 2
      %s360 = smul.addr %s356, 32
      %s361 = sadd.s32 %s359, %s360
      %s362 = smul.addr %s361, 8
      %s363 = scalar_lea.vmem %s1, %s362
      %s364 = smul.u32 8, %s21
      %s365 = sadd.s32 %s21, 1
      %s366 = smul.u32 %s365, 8
      %p367 = scmp.lt.s32.totalorder %s366, 15
      %s368 = scalar_select %p367, %s366, 15
      %p369 = scmp.lt.s32.totalorder %s20, 1
      %s370 = scalar_select %p369, %s20, 1
      %p371 = scmp.lt.s32.totalorder %s368, 15
      %s372 = scalar_select %p371, %s368, 15
      %s373 = smul.addr %s372, 2
      %s374 = smul.addr %s370, 32
      %s375 = sadd.s32 %s373, %s374
      %s376 = smul.addr %s375, 8
      %s377 = scalar_lea.vmem %s2, %s376
      %s378 = sadd.s32 %s21, 1
      %s379 = smul.u32 %s378, 8
      %p380 = scmp.lt.s32.totalorder %s379, 15
      %s381 = scalar_select %p380, %s379, 15
      %s382 = smul.u32 16, %s21
      %p383 = scmp.lt.s32.totalorder %s20, 1
      %s384 = scalar_select %p383, %s20, 1
      %p385 = scmp.lt.s32.totalorder %s382, 31
      %s386 = scalar_select %p385, %s382, 31
      %s387 = smul.addr %s386, 4
      %s388 = smul.addr %s384, 128
      %s389 = sadd.s32 %s387, %s388
      %s390 = smul.addr %s389, 8
      %s391 = scalar_lea.vmem %s5, %s390
      %s392 = smul.u32 16, %s21
      %v393 = vld [vmem:[%s349] sm:$0xff]
      %v394 = vld [vmem:[%s349 + $0x8] sm:$0xff]
      %p395 = scmp.gt.s32.totalorder %s21, 0
      %s396 = scalar_select %p395, 1, 0
      %s397 = scvt.s32.f32 %s396
      %v398 = vstv %s397
      %v399 = vmul.f32 %v393, %v398
      %v400 = vmul.f32 %v394, %v398
      %v401 = vld [vmem:[%s377] sm:$0xff]
      %v402 = vld [vmem:[%s377 + $0x8] sm:$0xff]
      %p403 = scmp.lt.s32.totalorder %s21, 1
      %s404 = scalar_select %p403, 1, 0
      %s405 = scvt.s32.f32 %s404
      %v406 = vstv %s405
      %v407 = vmul.f32 %v401, %v406
      %v408 = vmul.f32 %v402, %v406
      %v409 = vld [vmem:[%s363] sm:$0xff]
      %v410 = vld [vmem:[%s363 + $0x8] sm:$0xff]
      %v411 = vld [vmem:[%s363 + $0x10] sm:$0xff]
      %v412 = vld [vmem:[%s363 + $0x18] sm:$0xff]
      %v413 = vld [vmem:[%s363 + $0x20] sm:$0xff]
      %v414 = vld [vmem:[%s363 + $0x28] sm:$0xff]
      %v415 = vld [vmem:[%s363 + $0x30] sm:$0xff]
      %v416 = vld [vmem:[%s363 + $0x38] sm:$0xff]
      %v417 = vld [vmem:[%s363 + $0x40] sm:$0xff]
      %v418 = vld [vmem:[%s363 + $0x48] sm:$0xff]
      %v419 = vld [vmem:[%s363 + $0x50] sm:$0xff]
      %v420 = vld [vmem:[%s363 + $0x58] sm:$0xff]
      %v421 = vld [vmem:[%s363 + $0x60] sm:$0xff]
      %v422 = vld [vmem:[%s363 + $0x68] sm:$0xff]
      %v423 = vld [vmem:[%s363 + $0x70] sm:$0xff]
      %v424 = vld [vmem:[%s363 + $0x78] sm:$0xff]
      %vm445 = vcmask 1040384
      %v446 = vrot.slane %v399, 7
      %v447 = vrot.slane %v400, 7
      %v448 = vsel %vm445, %v446, %v447
      %v449 = vrot.slane %v409, 7
      %v450 = vrot.slane %v410, 7
      %v451 = vsel %vm445, %v449, %v450
      %v452 = vrot.slane %v411, 7
      %v453 = vrot.slane %v412, 7
      %v454 = vsel %vm445, %v452, %v453
      %v455 = vrot.slane %v413, 7
      %v456 = vrot.slane %v414, 7
      %v457 = vsel %vm445, %v455, %v456
      %v458 = vrot.slane %v415, 7
      %v459 = vrot.slane %v416, 7
      %v460 = vsel %vm445, %v458, %v459
      %v461 = vrot.slane %v417, 7
      %v462 = vrot.slane %v418, 7
      %v463 = vsel %vm445, %v461, %v462
      %v464 = vrot.slane %v419, 7
      %v465 = vrot.slane %v420, 7
      %v466 = vsel %vm445, %v464, %v465
      %v467 = vrot.slane %v421, 7
      %v468 = vrot.slane %v422, 7
      %v469 = vsel %vm445, %v467, %v468
      %v470 = vrot.slane %v423, 7
      %v471 = vrot.slane %v424, 7
      %v472 = vsel %vm445, %v470, %v471
      %v473 = vrot.slane %v407, 7
      %v474 = vrot.slane %v408, 7
      %v475 = vsel %vm445, %v473, %v474
      %v496 = vsel %vm445, 0.0, %v446
      %v497 = vsel %vm445, 0.0, %v449
      %v498 = vsel %vm445, 0.0, %v452
      %v499 = vsel %vm445, 0.0, %v455
      %v500 = vsel %vm445, 0.0, %v458
      %v501 = vsel %vm445, 0.0, %v461
      %v502 = vsel %vm445, 0.0, %v464
      %v503 = vsel %vm445, 0.0, %v467
      %v504 = vsel %vm445, 0.0, %v470
      %v505 = vsel %vm445, 0.0, %v473
      %v506 = vsel %vm445, %v447, 0.0
      %v507 = vsel %vm445, %v450, 0.0
      %v508 = vsel %vm445, %v453, 0.0
      %v509 = vsel %vm445, %v456, 0.0
      %v510 = vsel %vm445, %v459, 0.0
      %v511 = vsel %vm445, %v462, 0.0
      %v512 = vsel %vm445, %v465, 0.0
      %v513 = vsel %vm445, %v468, 0.0
      %v514 = vsel %vm445, %v471, 0.0
      %v515 = vsel %vm445, %v474, 0.0
      %v516 = vld [vmem:[%s4] sm:$0x1]
      %v517 = vld [vmem:[%s3] sm:$0xf]
      %vm534 = vcmask 1046528
      %v535 = vrot.slane %v496, 1
      %v536 = vrot.slane %v448, 1
      %v537 = vsel %vm534, %v535, %v536
      %v538 = vrot.slane %v506, 1
      %v539 = vsel %vm534, %v536, %v538
      %v540 = vrot.slane %v497, 1
      %v541 = vrot.slane %v451, 1
      %v542 = vsel %vm534, %v540, %v541
      %v543 = vrot.slane %v507, 1
      %v544 = vsel %vm534, %v541, %v543
      %v545 = vrot.slane %v498, 1
      %v546 = vrot.slane %v454, 1
      %v547 = vsel %vm534, %v545, %v546
      %v548 = vrot.slane %v508, 1
      %v549 = vsel %vm534, %v546, %v548
      %v550 = vrot.slane %v499, 1
      %v551 = vrot.slane %v457, 1
      %v552 = vsel %vm534, %v550, %v551
      %v553 = vrot.slane %v509, 1
      %v554 = vsel %vm534, %v551, %v553
      %v555 = vrot.slane %v500, 1
      %v556 = vrot.slane %v460, 1
      %v557 = vsel %vm534, %v555, %v556
      %v558 = vrot.slane %v510, 1
      %v559 = vsel %vm534, %v556, %v558
      %v560 = vrot.slane %v501, 1
      %v561 = vrot.slane %v463, 1
      %v562 = vsel %vm534, %v560, %v561
      %v563 = vrot.slane %v511, 1
      %v564 = vsel %vm534, %v561, %v563
      %v565 = vrot.slane %v502, 1
      %v566 = vrot.slane %v466, 1
      %v567 = vsel %vm534, %v565, %v566
      %v568 = vrot.slane %v512, 1
      %v569 = vsel %vm534, %v566, %v568
      %v570 = vrot.slane %v503, 1
      %v571 = vrot.slane %v469, 1
      %v572 = vsel %vm534, %v570, %v571
      %v573 = vrot.slane %v513, 1
      %v574 = vsel %vm534, %v571, %v573
      %s575 = scalar_lea.vmem %s3, 4
      %v576 = vld [vmem:[%s575] sm:$0xf]
      %vm577 = vcmask 31744
      %v578 = vsel %vm577, %v537, 0
      %v580 = vsel %vm577, %v539, 0
      %v582 = vsel %vm577, %v542, 0
      %v584 = vsel %vm577, %v544, 0
      %v586 = vsel %vm577, %v547, 0
      %v588 = vsel %vm577, %v549, 0
      %v590 = vsel %vm577, %v552, 0
      %v592 = vsel %vm577, %v554, 0
      %v594 = vsel %vm577, %v557, 0
      %v596 = vsel %vm577, %v559, 0
      %v598 = vsel %vm577, %v562, 0
      %v600 = vsel %vm577, %v564, 0
      %v602 = vsel %vm577, %v567, 0
      %v604 = vsel %vm577, %v569, 0
      %v606 = vsel %vm577, %v572, 0
      %v608 = vsel %vm577, %v574, 0
      %vm610 = vcmask 1043456
      %v612 = vsel %vm610, %v576, 0
      %614 = vmatprep.subr.mxu0 0.0
      %615 = vmatpush1.msra.mxu0 0.0
      %616 = vmatprep.subr.mxu0 0.0
      %617 = vmatpush1.msra.mxu0 0.0
      %618 = vmatprep.subr.mxu0 0.0
      %619 = vmatpush1.msra.mxu0 0.0
      %620 = vmatprep.subr.mxu0 0.0
      %621 = vmatpush1.msra.mxu0 0.0
      %622 = vmatprep.subr.mxu0 0.0
      %623 = vmatpush1.msra.mxu0 0.0
      %624 = vmatprep.subr.mxu0 0.0
      %625 = vmatpush1.msra.mxu0 0.0
      %626 = vmatprep.subr.mxu0 0.0
      %627 = vmatpush1.msra.mxu0 0.0
      %628 = vmatprep.subr.mxu0 0.0
      %629 = vmatpush1.msra.mxu0 0.0
      %630 = vmatprep.subr.mxu0 0.0
      %631 = vmatpush1.msra.mxu0 0.0
      %632 = vmatprep.subr.mxu0 0.0
      %633 = vmatpush1.msra.mxu0 0.0
      %634 = vmatprep.subr.mxu0 0.0
      %635 = vmatpush1.msra.mxu0 0.0
      %636 = vmatprep.subr.mxu0 0.0
      %637 = vmatpush1.msra.mxu0 0.0
      %638 = vmatprep.subr.mxu0 0.0
      %639 = vmatpush1.msra.mxu0 0.0
      %640 = vmatprep.subr.mxu0 0.0
      %641 = vmatpush1.msra.mxu0 0.0
      %642 = vmatprep.subr.mxu0 0.0
      %643 = vmatpush1.msra.mxu0 0.0
      %644 = vmatprep.subr.mxu0 0.0
      %645 = vmatpush1.msra.mxu0 %v612
      %646 = vmatprep.subr.mxu0 0.0
      %647 = vmatpush2.msra.mxu0 0.0
      %648 = vmatprep.subr.mxu0 0.0
      %649 = vmatpush2.msra.mxu0 0.0
      %650 = vmatprep.subr.mxu0 0.0
      %651 = vmatpush2.msra.mxu0 0.0
      %652 = vmatprep.subr.mxu0 0.0
      %653 = vmatpush2.msra.mxu0 0.0
      %654 = vmatprep.subr.mxu0 0.0
      %655 = vmatpush2.msra.mxu0 0.0
      %656 = vmatprep.subr.mxu0 0.0
      %657 = vmatpush2.msra.mxu0 0.0
      %658 = vmatprep.subr.mxu0 0.0
      %659 = vmatpush2.msra.mxu0 0.0
      %660 = vmatprep.subr.mxu0 0.0
      %661 = vmatpush2.msra.mxu0 0.0
      %662 = vmatprep.subr.mxu0 0.0
      %663 = vmatpush2.msra.mxu0 0.0
      %664 = vmatprep.subr.mxu0 0.0
      %665 = vmatpush2.msra.mxu0 0.0
      %666 = vmatprep.subr.mxu0 0.0
      %667 = vmatpush2.msra.mxu0 0.0
      %668 = vmatprep.subr.mxu0 0.0
      %669 = vmatpush2.msra.mxu0 0.0
      %670 = vmatprep.subr.mxu0 0.0
      %671 = vmatpush2.msra.mxu0 0.0
      %672 = vmatprep.subr.mxu0 0.0
      %673 = vmatpush2.msra.mxu0 0.0
      %674 = vmatprep.subr.mxu0 0.0
      %675 = vmatpush2.msra.mxu0 0.0
      %676 = vmatprep.subr.mxu0 0.0
      %677 = vmatpush2.msra.mxu0 0.0
      %678 = vmatprep.mubr.f32.mxu0 0.0
      %679 = vmatmul.mubr.f32.gmra.mxu0 %v578
      %v680 = vpop.f32.mrf.mxu0
      %v681 = vadd.f32 0.0, %v680
      %v682 = vpop.f32.mrf.mxu0
      %683 = vmatprep.mubr.f32.mxu0 0.0
      %684 = vmatmul.mubr.f32.gmra.mxu0 %v580
      %v685 = vpop.f32.mrf.mxu0
      %v686 = vadd.f32 0.0, %v685
      %v687 = vpop.f32.mrf.mxu0
      %688 = vmatprep.mubr.f32.mxu0 0.0
      %689 = vmatmul.mubr.f32.gmra.mxu0 %v582
      %v690 = vpop.f32.mrf.mxu0
      %v691 = vadd.f32 0.0, %v690
      %v692 = vpop.f32.mrf.mxu0
      %693 = vmatprep.mubr.f32.mxu0 0.0
      %694 = vmatmul.mubr.f32.gmra.mxu0 %v584
      %v695 = vpop.f32.mrf.mxu0
      %v696 = vadd.f32 0.0, %v695
      %v697 = vpop.f32.mrf.mxu0
      %698 = vmatprep.mubr.f32.mxu0 0.0
      %699 = vmatmul.mubr.f32.gmra.mxu0 %v586
      %v700 = vpop.f32.mrf.mxu0
      %v701 = vadd.f32 0.0, %v700
      %v702 = vpop.f32.mrf.mxu0
      %703 = vmatprep.mubr.f32.mxu0 0.0
      %704 = vmatmul.mubr.f32.gmra.mxu0 %v588
      %v705 = vpop.f32.mrf.mxu0
      %v706 = vadd.f32 0.0, %v705
      %v707 = vpop.f32.mrf.mxu0
      %708 = vmatprep.mubr.f32.mxu0 0.0
      %709 = vmatmul.mubr.f32.gmra.mxu0 %v590
      %v710 = vpop.f32.mrf.mxu0
      %v711 = vadd.f32 0.0, %v710
      %v712 = vpop.f32.mrf.mxu0
      %713 = vmatprep.mubr.f32.mxu0 0.0
      %714 = vmatmul.mubr.f32.gmra.mxu0 %v592
      %v715 = vpop.f32.mrf.mxu0
      %v716 = vadd.f32 0.0, %v715
      %v717 = vpop.f32.mrf.mxu0
      %718 = vmatprep.mubr.f32.mxu0 0.0
      %719 = vmatmul.mubr.f32.gmra.mxu0 %v594
      %v720 = vpop.f32.mrf.mxu0
      %v721 = vadd.f32 0.0, %v720
      %v722 = vpop.f32.mrf.mxu0
      %723 = vmatprep.mubr.f32.mxu0 0.0
      %724 = vmatmul.mubr.f32.gmra.mxu0 %v596
      %v725 = vpop.f32.mrf.mxu0
      %v726 = vadd.f32 0.0, %v725
      %v727 = vpop.f32.mrf.mxu0
      %728 = vmatprep.mubr.f32.mxu0 0.0
      %729 = vmatmul.mubr.f32.gmra.mxu0 %v598
      %v730 = vpop.f32.mrf.mxu0
      %v731 = vadd.f32 0.0, %v730
      %v732 = vpop.f32.mrf.mxu0
      %733 = vmatprep.mubr.f32.mxu0 0.0
      %734 = vmatmul.mubr.f32.gmra.mxu0 %v600
      %v735 = vpop.f32.mrf.mxu0
      %v736 = vadd.f32 0.0, %v735
      %v737 = vpop.f32.mrf.mxu0
      %738 = vmatprep.mubr.f32.mxu0 0.0
      %739 = vmatmul.mubr.f32.gmra.mxu0 %v602
      %v740 = vpop.f32.mrf.mxu0
      %v741 = vadd.f32 0.0, %v740
      %v742 = vpop.f32.mrf.mxu0
      %743 = vmatprep.mubr.f32.mxu0 0.0
      %744 = vmatmul.mubr.f32.gmra.mxu0 %v604
      %v745 = vpop.f32.mrf.mxu0
      %v746 = vadd.f32 0.0, %v745
      %v747 = vpop.f32.mrf.mxu0
      %748 = vmatprep.mubr.f32.mxu0 0.0
      %749 = vmatmul.mubr.f32.gmra.mxu0 %v606
      %v750 = vpop.f32.mrf.mxu0
      %v751 = vadd.f32 0.0, %v750
      %v752 = vpop.f32.mrf.mxu0
      %753 = vmatprep.mubr.f32.mxu0 0.0
      %754 = vmatmul.mubr.f32.gmra.mxu0 %v608
      %v755 = vpop.f32.mrf.mxu0
      %v756 = vadd.f32 0.0, %v755
      %v757 = vpop.f32.mrf.mxu0
      %758 = vdwg.mxu0
      %v759 = vsel %vm577, %v496, 0
      %v761 = vsel %vm577, %v448, 0
      %v763 = vsel %vm577, %v497, 0
      %v765 = vsel %vm577, %v451, 0
      %v767 = vsel %vm577, %v498, 0
      %v769 = vsel %vm577, %v454, 0
      %v771 = vsel %vm577, %v499, 0
      %v773 = vsel %vm577, %v457, 0
      %v775 = vsel %vm577, %v500, 0
      %v777 = vsel %vm577, %v460, 0
      %v779 = vsel %vm577, %v501, 0
      %v781 = vsel %vm577, %v463, 0
      %v783 = vsel %vm577, %v502, 0
      %v785 = vsel %vm577, %v466, 0
      %v787 = vsel %vm577, %v503, 0
      %v789 = vsel %vm577, %v469, 0
      %v792 = vsel %vm610, %v517, 0
      %794 = vmatprep.subr.mxu0 0.0
      %795 = vmatpush1.msra.mxu0 0.0
      %796 = vmatprep.subr.mxu0 0.0
      %797 = vmatpush1.msra.mxu0 0.0
      %798 = vmatprep.subr.mxu0 0.0
      %799 = vmatpush1.msra.mxu0 0.0
      %800 = vmatprep.subr.mxu0 0.0
      %801 = vmatpush1.msra.mxu0 0.0
      %802 = vmatprep.subr.mxu0 0.0
      %803 = vmatpush1.msra.mxu0 0.0
      %804 = vmatprep.subr.mxu0 0.0
      %805 = vmatpush1.msra.mxu0 0.0
      %806 = vmatprep.subr.mxu0 0.0
      %807 = vmatpush1.msra.mxu0 0.0
      %808 = vmatprep.subr.mxu0 0.0
      %809 = vmatpush1.msra.mxu0 0.0
      %810 = vmatprep.subr.mxu0 0.0
      %811 = vmatpush1.msra.mxu0 0.0
      %812 = vmatprep.subr.mxu0 0.0
      %813 = vmatpush1.msra.mxu0 0.0
      %814 = vmatprep.subr.mxu0 0.0
      %815 = vmatpush1.msra.mxu0 0.0
      %816 = vmatprep.subr.mxu0 0.0
      %817 = vmatpush1.msra.mxu0 0.0
      %818 = vmatprep.subr.mxu0 0.0
      %819 = vmatpush1.msra.mxu0 0.0
      %820 = vmatprep.subr.mxu0 0.0
      %821 = vmatpush1.msra.mxu0 0.0
      %822 = vmatprep.subr.mxu0 0.0
      %823 = vmatpush1.msra.mxu0 0.0
      %824 = vmatprep.subr.mxu0 0.0
      %825 = vmatpush1.msra.mxu0 %v792
      %826 = vmatprep.subr.mxu0 0.0
      %827 = vmatpush2.msra.mxu0 0.0
      %828 = vmatprep.subr.mxu0 0.0
      %829 = vmatpush2.msra.mxu0 0.0
      %830 = vmatprep.subr.mxu0 0.0
      %831 = vmatpush2.msra.mxu0 0.0
      %832 = vmatprep.subr.mxu0 0.0
      %833 = vmatpush2.msra.mxu0 0.0
      %834 = vmatprep.subr.mxu0 0.0
      %835 = vmatpush2.msra.mxu0 0.0
      %836 = vmatprep.subr.mxu0 0.0
      %837 = vmatpush2.msra.mxu0 0.0
      %838 = vmatprep.subr.mxu0 0.0
      %839 = vmatpush2.msra.mxu0 0.0
      %840 = vmatprep.subr.mxu0 0.0
      %841 = vmatpush2.msra.mxu0 0.0
      %842 = vmatprep.subr.mxu0 0.0
      %843 = vmatpush2.msra.mxu0 0.0
      %844 = vmatprep.subr.mxu0 0.0
      %845 = vmatpush2.msra.mxu0 0.0
      %846 = vmatprep.subr.mxu0 0.0
      %847 = vmatpush2.msra.mxu0 0.0
      %848 = vmatprep.subr.mxu0 0.0
      %849 = vmatpush2.msra.mxu0 0.0
      %850 = vmatprep.subr.mxu0 0.0
      %851 = vmatpush2.msra.mxu0 0.0
      %852 = vmatprep.subr.mxu0 0.0
      %853 = vmatpush2.msra.mxu0 0.0
      %854 = vmatprep.subr.mxu0 0.0
      %855 = vmatpush2.msra.mxu0 0.0
      %856 = vmatprep.subr.mxu0 0.0
      %857 = vmatpush2.msra.mxu0 0.0
      %858 = vmatprep.mubr.f32.mxu0 0.0
      %859 = vmatmul.mubr.f32.gmra.mxu0 %v759
      %v860 = vpop.f32.mrf.mxu0
      %v861 = vadd.f32 %v681, %v860
      %v862 = vpop.f32.mrf.mxu0
      %863 = vmatprep.mubr.f32.mxu0 0.0
      %864 = vmatmul.mubr.f32.gmra.mxu0 %v761
      %v865 = vpop.f32.mrf.mxu0
      %v866 = vadd.f32 %v686, %v865
      %v867 = vpop.f32.mrf.mxu0
      %868 = vmatprep.mubr.f32.mxu0 0.0
      %869 = vmatmul.mubr.f32.gmra.mxu0 %v763
      %v870 = vpop.f32.mrf.mxu0
      %v871 = vadd.f32 %v691, %v870
      %v872 = vpop.f32.mrf.mxu0
      %873 = vmatprep.mubr.f32.mxu0 0.0
      %874 = vmatmul.mubr.f32.gmra.mxu0 %v765
      %v875 = vpop.f32.mrf.mxu0
      %v876 = vadd.f32 %v696, %v875
      %v877 = vpop.f32.mrf.mxu0
      %878 = vmatprep.mubr.f32.mxu0 0.0
      %879 = vmatmul.mubr.f32.gmra.mxu0 %v767
      %v880 = vpop.f32.mrf.mxu0
      %v881 = vadd.f32 %v701, %v880
      %v882 = vpop.f32.mrf.mxu0
      %883 = vmatprep.mubr.f32.mxu0 0.0
      %884 = vmatmul.mubr.f32.gmra.mxu0 %v769
      %v885 = vpop.f32.mrf.mxu0
      %v886 = vadd.f32 %v706, %v885
      %v887 = vpop.f32.mrf.mxu0
      %888 = vmatprep.mubr.f32.mxu0 0.0
      %889 = vmatmul.mubr.f32.gmra.mxu0 %v771
      %v890 = vpop.f32.mrf.mxu0
      %v891 = vadd.f32 %v711, %v890
      %v892 = vpop.f32.mrf.mxu0
      %893 = vmatprep.mubr.f32.mxu0 0.0
      %894 = vmatmul.mubr.f32.gmra.mxu0 %v773
      %v895 = vpop.f32.mrf.mxu0
      %v896 = vadd.f32 %v716, %v895
      %v897 = vpop.f32.mrf.mxu0
      %898 = vmatprep.mubr.f32.mxu0 0.0
      %899 = vmatmul.mubr.f32.gmra.mxu0 %v775
      %v900 = vpop.f32.mrf.mxu0
      %v901 = vadd.f32 %v721, %v900
      %v902 = vpop.f32.mrf.mxu0
      %903 = vmatprep.mubr.f32.mxu0 0.0
      %904 = vmatmul.mubr.f32.gmra.mxu0 %v777
      %v905 = vpop.f32.mrf.mxu0
      %v906 = vadd.f32 %v726, %v905
      %v907 = vpop.f32.mrf.mxu0
      %908 = vmatprep.mubr.f32.mxu0 0.0
      %909 = vmatmul.mubr.f32.gmra.mxu0 %v779
      %v910 = vpop.f32.mrf.mxu0
      %v911 = vadd.f32 %v731, %v910
      %v912 = vpop.f32.mrf.mxu0
      %913 = vmatprep.mubr.f32.mxu0 0.0
      %914 = vmatmul.mubr.f32.gmra.mxu0 %v781
      %v915 = vpop.f32.mrf.mxu0
      %v916 = vadd.f32 %v736, %v915
      %v917 = vpop.f32.mrf.mxu0
      %918 = vmatprep.mubr.f32.mxu0 0.0
      %919 = vmatmul.mubr.f32.gmra.mxu0 %v783
      %v920 = vpop.f32.mrf.mxu0
      %v921 = vadd.f32 %v741, %v920
      %v922 = vpop.f32.mrf.mxu0
      %923 = vmatprep.mubr.f32.mxu0 0.0
      %924 = vmatmul.mubr.f32.gmra.mxu0 %v785
      %v925 = vpop.f32.mrf.mxu0
      %v926 = vadd.f32 %v746, %v925
      %v927 = vpop.f32.mrf.mxu0
      %928 = vmatprep.mubr.f32.mxu0 0.0
      %929 = vmatmul.mubr.f32.gmra.mxu0 %v787
      %v930 = vpop.f32.mrf.mxu0
      %v931 = vadd.f32 %v751, %v930
      %v932 = vpop.f32.mrf.mxu0
      %933 = vmatprep.mubr.f32.mxu0 0.0
      %934 = vmatmul.mubr.f32.gmra.mxu0 %v789
      %v935 = vpop.f32.mrf.mxu0
      %v936 = vadd.f32 %v756, %v935
      %v937 = vpop.f32.mrf.mxu0
      %938 = vdwg.mxu0
      %s939 = scalar_lea.vmem %s3, 8
      %v940 = vld [vmem:[%s939] sm:$0xf]
      %v942 = vsel %vm577, %v504, 0
      %v944 = vsel %vm577, %v472, 0
      %v947 = vsel %vm610, %v940, 0
      %949 = vmatprep.subr.mxu0 0.0
      %950 = vmatpush1.msra.mxu0 0.0
      %951 = vmatprep.subr.mxu0 0.0
      %952 = vmatpush1.msra.mxu0 0.0
      %953 = vmatprep.subr.mxu0 0.0
      %954 = vmatpush1.msra.mxu0 0.0
      %955 = vmatprep.subr.mxu0 0.0
      %956 = vmatpush1.msra.mxu0 0.0
      %957 = vmatprep.subr.mxu0 0.0
      %958 = vmatpush1.msra.mxu0 0.0
      %959 = vmatprep.subr.mxu0 0.0
      %960 = vmatpush1.msra.mxu0 0.0
      %961 = vmatprep.subr.mxu0 0.0
      %962 = vmatpush1.msra.mxu0 0.0
      %963 = vmatprep.subr.mxu0 0.0
      %964 = vmatpush1.msra.mxu0 0.0
      %965 = vmatprep.subr.mxu0 0.0
      %966 = vmatpush1.msra.mxu0 0.0
      %967 = vmatprep.subr.mxu0 0.0
      %968 = vmatpush1.msra.mxu0 0.0
      %969 = vmatprep.subr.mxu0 0.0
      %970 = vmatpush1.msra.mxu0 0.0
      %971 = vmatprep.subr.mxu0 0.0
      %972 = vmatpush1.msra.mxu0 0.0
      %973 = vmatprep.subr.mxu0 0.0
      %974 = vmatpush1.msra.mxu0 0.0
      %975 = vmatprep.subr.mxu0 0.0
      %976 = vmatpush1.msra.mxu0 0.0
      %977 = vmatprep.subr.mxu0 0.0
      %978 = vmatpush1.msra.mxu0 0.0
      %979 = vmatprep.subr.mxu0 0.0
      %980 = vmatpush1.msra.mxu0 %v947
      %981 = vmatprep.subr.mxu0 0.0
      %982 = vmatpush2.msra.mxu0 0.0
      %983 = vmatprep.subr.mxu0 0.0
      %984 = vmatpush2.msra.mxu0 0.0
      %985 = vmatprep.subr.mxu0 0.0
      %986 = vmatpush2.msra.mxu0 0.0
      %987 = vmatprep.subr.mxu0 0.0
      %988 = vmatpush2.msra.mxu0 0.0
      %989 = vmatprep.subr.mxu0 0.0
      %990 = vmatpush2.msra.mxu0 0.0
      %991 = vmatprep.subr.mxu0 0.0
      %992 = vmatpush2.msra.mxu0 0.0
      %993 = vmatprep.subr.mxu0 0.0
      %994 = vmatpush2.msra.mxu0 0.0
      %995 = vmatprep.subr.mxu0 0.0
      %996 = vmatpush2.msra.mxu0 0.0
      %997 = vmatprep.subr.mxu0 0.0
      %998 = vmatpush2.msra.mxu0 0.0
      %999 = vmatprep.subr.mxu0 0.0
      %1000 = vmatpush2.msra.mxu0 0.0
      %1001 = vmatprep.subr.mxu0 0.0
      %1002 = vmatpush2.msra.mxu0 0.0
      %1003 = vmatprep.subr.mxu0 0.0
      %1004 = vmatpush2.msra.mxu0 0.0
      %1005 = vmatprep.subr.mxu0 0.0
      %1006 = vmatpush2.msra.mxu0 0.0
      %1007 = vmatprep.subr.mxu0 0.0
      %1008 = vmatpush2.msra.mxu0 0.0
      %1009 = vmatprep.subr.mxu0 0.0
      %1010 = vmatpush2.msra.mxu0 0.0
      %1011 = vmatprep.subr.mxu0 0.0
      %1012 = vmatpush2.msra.mxu0 0.0
      %1013 = vmatprep.mubr.f32.mxu0 0.0
      %1014 = vmatmul.mubr.f32.gmra.mxu0 %v763
      %v1015 = vpop.f32.mrf.mxu0
      %v1016 = vadd.f32 0.0, %v1015
      %v1017 = vpop.f32.mrf.mxu0
      %1018 = vmatprep.mubr.f32.mxu0 0.0
      %1019 = vmatmul.mubr.f32.gmra.mxu0 %v765
      %v1020 = vpop.f32.mrf.mxu0
      %v1021 = vadd.f32 0.0, %v1020
      %v1022 = vpop.f32.mrf.mxu0
      %1023 = vmatprep.mubr.f32.mxu0 0.0
      %1024 = vmatmul.mubr.f32.gmra.mxu0 %v767
      %v1025 = vpop.f32.mrf.mxu0
      %v1026 = vadd.f32 0.0, %v1025
      %v1027 = vpop.f32.mrf.mxu0
      %1028 = vmatprep.mubr.f32.mxu0 0.0
      %1029 = vmatmul.mubr.f32.gmra.mxu0 %v769
      %v1030 = vpop.f32.mrf.mxu0
      %v1031 = vadd.f32 0.0, %v1030
      %v1032 = vpop.f32.mrf.mxu0
      %1033 = vmatprep.mubr.f32.mxu0 0.0
      %1034 = vmatmul.mubr.f32.gmra.mxu0 %v771
      %v1035 = vpop.f32.mrf.mxu0
      %v1036 = vadd.f32 0.0, %v1035
      %v1037 = vpop.f32.mrf.mxu0
      %1038 = vmatprep.mubr.f32.mxu0 0.0
      %1039 = vmatmul.mubr.f32.gmra.mxu0 %v773
      %v1040 = vpop.f32.mrf.mxu0
      %v1041 = vadd.f32 0.0, %v1040
      %v1042 = vpop.f32.mrf.mxu0
      %1043 = vmatprep.mubr.f32.mxu0 0.0
      %1044 = vmatmul.mubr.f32.gmra.mxu0 %v775
      %v1045 = vpop.f32.mrf.mxu0
      %v1046 = vadd.f32 0.0, %v1045
      %v1047 = vpop.f32.mrf.mxu0
      %1048 = vmatprep.mubr.f32.mxu0 0.0
      %1049 = vmatmul.mubr.f32.gmra.mxu0 %v777
      %v1050 = vpop.f32.mrf.mxu0
      %v1051 = vadd.f32 0.0, %v1050
      %v1052 = vpop.f32.mrf.mxu0
      %1053 = vmatprep.mubr.f32.mxu0 0.0
      %1054 = vmatmul.mubr.f32.gmra.mxu0 %v779
      %v1055 = vpop.f32.mrf.mxu0
      %v1056 = vadd.f32 0.0, %v1055
      %v1057 = vpop.f32.mrf.mxu0
      %1058 = vmatprep.mubr.f32.mxu0 0.0
      %1059 = vmatmul.mubr.f32.gmra.mxu0 %v781
      %v1060 = vpop.f32.mrf.mxu0
      %v1061 = vadd.f32 0.0, %v1060
      %v1062 = vpop.f32.mrf.mxu0
      %1063 = vmatprep.mubr.f32.mxu0 0.0
      %1064 = vmatmul.mubr.f32.gmra.mxu0 %v783
      %v1065 = vpop.f32.mrf.mxu0
      %v1066 = vadd.f32 0.0, %v1065
      %v1067 = vpop.f32.mrf.mxu0
      %1068 = vmatprep.mubr.f32.mxu0 0.0
      %1069 = vmatmul.mubr.f32.gmra.mxu0 %v785
      %v1070 = vpop.f32.mrf.mxu0
      %v1071 = vadd.f32 0.0, %v1070
      %v1072 = vpop.f32.mrf.mxu0
      %1073 = vmatprep.mubr.f32.mxu0 0.0
      %1074 = vmatmul.mubr.f32.gmra.mxu0 %v787
      %v1075 = vpop.f32.mrf.mxu0
      %v1076 = vadd.f32 0.0, %v1075
      %v1077 = vpop.f32.mrf.mxu0
      %1078 = vmatprep.mubr.f32.mxu0 0.0
      %1079 = vmatmul.mubr.f32.gmra.mxu0 %v789
      %v1080 = vpop.f32.mrf.mxu0
      %v1081 = vadd.f32 0.0, %v1080
      %v1082 = vpop.f32.mrf.mxu0
      %1083 = vmatprep.mubr.f32.mxu0 0.0
      %1084 = vmatmul.mubr.f32.gmra.mxu0 %v942
      %v1085 = vpop.f32.mrf.mxu0
      %v1086 = vadd.f32 0.0, %v1085
      %v1087 = vpop.f32.mrf.mxu0
      %1088 = vmatprep.mubr.f32.mxu0 0.0
      %1089 = vmatmul.mubr.f32.gmra.mxu0 %v944
      %v1090 = vpop.f32.mrf.mxu0
      %v1091 = vadd.f32 0.0, %v1090
      %v1092 = vpop.f32.mrf.mxu0
      %1093 = vdwg.mxu0
      %v1094 = vadd.f32 %v861, %v1016
      %v1095 = vadd.f32 %v866, %v1021
      %v1096 = vadd.f32 %v871, %v1026
      %v1097 = vadd.f32 %v876, %v1031
      %v1098 = vadd.f32 %v881, %v1036
      %v1099 = vadd.f32 %v886, %v1041
      %v1100 = vadd.f32 %v891, %v1046
      %v1101 = vadd.f32 %v896, %v1051
      %v1102 = vadd.f32 %v901, %v1056
      %v1103 = vadd.f32 %v906, %v1061
      %v1104 = vadd.f32 %v911, %v1066
      %v1105 = vadd.f32 %v916, %v1071
      %v1106 = vadd.f32 %v921, %v1076
      %v1107 = vadd.f32 %v926, %v1081
      %v1108 = vadd.f32 %v931, %v1086
      %v1109 = vadd.f32 %v936, %v1091
      %v1111 = vrot.slane %v504, 1
      %v1112 = vrot.slane %v472, 1
      %v1113 = vsel %vm534, %v1111, %v1112
      %v1114 = vrot.slane %v514, 1
      %v1115 = vsel %vm534, %v1112, %v1114
      %s1116 = scalar_lea.vmem %s3, 12
      %v1117 = vld [vmem:[%s1116] sm:$0xf]
      %v1118 = vsel %vm577, %v1113, 0
      %v1120 = vsel %vm577, %v1115, 0
      %v1123 = vsel %vm610, %v1117, 0
      %1125 = vmatprep.subr.mxu0 0.0
      %1126 = vmatpush1.msra.mxu0 0.0
      %1127 = vmatprep.subr.mxu0 0.0
      %1128 = vmatpush1.msra.mxu0 0.0
      %1129 = vmatprep.subr.mxu0 0.0
      %1130 = vmatpush1.msra.mxu0 0.0
      %1131 = vmatprep.subr.mxu0 0.0
      %1132 = vmatpush1.msra.mxu0 0.0
      %1133 = vmatprep.subr.mxu0 0.0
      %1134 = vmatpush1.msra.mxu0 0.0
      %1135 = vmatprep.subr.mxu0 0.0
      %1136 = vmatpush1.msra.mxu0 0.0
      %1137 = vmatprep.subr.mxu0 0.0
      %1138 = vmatpush1.msra.mxu0 0.0
      %1139 = vmatprep.subr.mxu0 0.0
      %1140 = vmatpush1.msra.mxu0 0.0
      %1141 = vmatprep.subr.mxu0 0.0
      %1142 = vmatpush1.msra.mxu0 0.0
      %1143 = vmatprep.subr.mxu0 0.0
      %1144 = vmatpush1.msra.mxu0 0.0
      %1145 = vmatprep.subr.mxu0 0.0
      %1146 = vmatpush1.msra.mxu0 0.0
      %1147 = vmatprep.subr.mxu0 0.0
      %1148 = vmatpush1.msra.mxu0 0.0
      %1149 = vmatprep.subr.mxu0 0.0
      %1150 = vmatpush1.msra.mxu0 0.0
      %1151 = vmatprep.subr.mxu0 0.0
      %1152 = vmatpush1.msra.mxu0 0.0
      %1153 = vmatprep.subr.mxu0 0.0
      %1154 = vmatpush1.msra.mxu0 0.0
      %1155 = vmatprep.subr.mxu0 0.0
      %1156 = vmatpush1.msra.mxu0 %v1123
      %1157 = vmatprep.subr.mxu0 0.0
      %1158 = vmatpush2.msra.mxu0 0.0
      %1159 = vmatprep.subr.mxu0 0.0
      %1160 = vmatpush2.msra.mxu0 0.0
      %1161 = vmatprep.subr.mxu0 0.0
      %1162 = vmatpush2.msra.mxu0 0.0
      %1163 = vmatprep.subr.mxu0 0.0
      %1164 = vmatpush2.msra.mxu0 0.0
      %1165 = vmatprep.subr.mxu0 0.0
      %1166 = vmatpush2.msra.mxu0 0.0
      %1167 = vmatprep.subr.mxu0 0.0
      %1168 = vmatpush2.msra.mxu0 0.0
      %1169 = vmatprep.subr.mxu0 0.0
      %1170 = vmatpush2.msra.mxu0 0.0
      %1171 = vmatprep.subr.mxu0 0.0
      %1172 = vmatpush2.msra.mxu0 0.0
      %1173 = vmatprep.subr.mxu0 0.0
      %1174 = vmatpush2.msra.mxu0 0.0
      %1175 = vmatprep.subr.mxu0 0.0
      %1176 = vmatpush2.msra.mxu0 0.0
      %1177 = vmatprep.subr.mxu0 0.0
      %1178 = vmatpush2.msra.mxu0 0.0
      %1179 = vmatprep.subr.mxu0 0.0
      %1180 = vmatpush2.msra.mxu0 0.0
      %1181 = vmatprep.subr.mxu0 0.0
      %1182 = vmatpush2.msra.mxu0 0.0
      %1183 = vmatprep.subr.mxu0 0.0
      %1184 = vmatpush2.msra.mxu0 0.0
      %1185 = vmatprep.subr.mxu0 0.0
      %1186 = vmatpush2.msra.mxu0 0.0
      %1187 = vmatprep.subr.mxu0 0.0
      %1188 = vmatpush2.msra.mxu0 0.0
      %1189 = vmatprep.mubr.f32.mxu0 0.0
      %1190 = vmatmul.mubr.f32.gmra.mxu0 %v582
      %v1191 = vpop.f32.mrf.mxu0
      %v1192 = vadd.f32 0.0, %v1191
      %v1193 = vpop.f32.mrf.mxu0
      %1194 = vmatprep.mubr.f32.mxu0 0.0
      %1195 = vmatmul.mubr.f32.gmra.mxu0 %v584
      %v1196 = vpop.f32.mrf.mxu0
      %v1197 = vadd.f32 0.0, %v1196
      %v1198 = vpop.f32.mrf.mxu0
      %1199 = vmatprep.mubr.f32.mxu0 0.0
      %1200 = vmatmul.mubr.f32.gmra.mxu0 %v586
      %v1201 = vpop.f32.mrf.mxu0
      %v1202 = vadd.f32 0.0, %v1201
      %v1203 = vpop.f32.mrf.mxu0
      %1204 = vmatprep.mubr.f32.mxu0 0.0
      %1205 = vmatmul.mubr.f32.gmra.mxu0 %v588
      %v1206 = vpop.f32.mrf.mxu0
      %v1207 = vadd.f32 0.0, %v1206
      %v1208 = vpop.f32.mrf.mxu0
      %1209 = vmatprep.mubr.f32.mxu0 0.0
      %1210 = vmatmul.mubr.f32.gmra.mxu0 %v590
      %v1211 = vpop.f32.mrf.mxu0
      %v1212 = vadd.f32 0.0, %v1211
      %v1213 = vpop.f32.mrf.mxu0
      %1214 = vmatprep.mubr.f32.mxu0 0.0
      %1215 = vmatmul.mubr.f32.gmra.mxu0 %v592
      %v1216 = vpop.f32.mrf.mxu0
      %v1217 = vadd.f32 0.0, %v1216
      %v1218 = vpop.f32.mrf.mxu0
      %1219 = vmatprep.mubr.f32.mxu0 0.0
      %1220 = vmatmul.mubr.f32.gmra.mxu0 %v594
      %v1221 = vpop.f32.mrf.mxu0
      %v1222 = vadd.f32 0.0, %v1221
      %v1223 = vpop.f32.mrf.mxu0
      %1224 = vmatprep.mubr.f32.mxu0 0.0
      %1225 = vmatmul.mubr.f32.gmra.mxu0 %v596
      %v1226 = vpop.f32.mrf.mxu0
      %v1227 = vadd.f32 0.0, %v1226
      %v1228 = vpop.f32.mrf.mxu0
      %1229 = vmatprep.mubr.f32.mxu0 0.0
      %1230 = vmatmul.mubr.f32.gmra.mxu0 %v598
      %v1231 = vpop.f32.mrf.mxu0
      %v1232 = vadd.f32 0.0, %v1231
      %v1233 = vpop.f32.mrf.mxu0
      %1234 = vmatprep.mubr.f32.mxu0 0.0
      %1235 = vmatmul.mubr.f32.gmra.mxu0 %v600
      %v1236 = vpop.f32.mrf.mxu0
      %v1237 = vadd.f32 0.0, %v1236
      %v1238 = vpop.f32.mrf.mxu0
      %1239 = vmatprep.mubr.f32.mxu0 0.0
      %1240 = vmatmul.mubr.f32.gmra.mxu0 %v602
      %v1241 = vpop.f32.mrf.mxu0
      %v1242 = vadd.f32 0.0, %v1241
      %v1243 = vpop.f32.mrf.mxu0
      %1244 = vmatprep.mubr.f32.mxu0 0.0
      %1245 = vmatmul.mubr.f32.gmra.mxu0 %v604
      %v1246 = vpop.f32.mrf.mxu0
      %v1247 = vadd.f32 0.0, %v1246
      %v1248 = vpop.f32.mrf.mxu0
      %1249 = vmatprep.mubr.f32.mxu0 0.0
      %1250 = vmatmul.mubr.f32.gmra.mxu0 %v606
      %v1251 = vpop.f32.mrf.mxu0
      %v1252 = vadd.f32 0.0, %v1251
      %v1253 = vpop.f32.mrf.mxu0
      %1254 = vmatprep.mubr.f32.mxu0 0.0
      %1255 = vmatmul.mubr.f32.gmra.mxu0 %v608
      %v1256 = vpop.f32.mrf.mxu0
      %v1257 = vadd.f32 0.0, %v1256
      %v1258 = vpop.f32.mrf.mxu0
      %1259 = vmatprep.mubr.f32.mxu0 0.0
      %1260 = vmatmul.mubr.f32.gmra.mxu0 %v1118
      %v1261 = vpop.f32.mrf.mxu0
      %v1262 = vadd.f32 0.0, %v1261
      %v1263 = vpop.f32.mrf.mxu0
      %1264 = vmatprep.mubr.f32.mxu0 0.0
      %1265 = vmatmul.mubr.f32.gmra.mxu0 %v1120
      %v1266 = vpop.f32.mrf.mxu0
      %v1267 = vadd.f32 0.0, %v1266
      %v1268 = vpop.f32.mrf.mxu0
      %1269 = vdwg.mxu0
      %v1270 = vadd.f32 %v1094, %v1192
      %v1271 = vadd.f32 %v1095, %v1197
      %v1272 = vadd.f32 %v1096, %v1202
      %v1273 = vadd.f32 %v1097, %v1207
      %v1274 = vadd.f32 %v1098, %v1212
      %v1275 = vadd.f32 %v1099, %v1217
      %v1276 = vadd.f32 %v1100, %v1222
      %v1277 = vadd.f32 %v1101, %v1227
      %v1278 = vadd.f32 %v1102, %v1232
      %v1279 = vadd.f32 %v1103, %v1237
      %v1280 = vadd.f32 %v1104, %v1242
      %v1281 = vadd.f32 %v1105, %v1247
      %v1282 = vadd.f32 %v1106, %v1252
      %v1283 = vadd.f32 %v1107, %v1257
      %v1284 = vadd.f32 %v1108, %v1262
      %v1285 = vadd.f32 %v1109, %v1267
      %v1287 = vlaneseq
      %v1288 = vshrl.u32 %v1287, 7
      %v1289 = vsub.s32 0, %v1288
      %v1290 = vrot.slane %v516, %v1289
      %v1292 = vadd.f32 %v1270, %v1290
      %v1293 = vadd.f32 %v1271, %v1290
      %v1294 = vadd.f32 %v1272, %v1290
      %v1295 = vadd.f32 %v1273, %v1290
      %v1296 = vadd.f32 %v1274, %v1290
      %v1297 = vadd.f32 %v1275, %v1290
      %v1298 = vadd.f32 %v1276, %v1290
      %v1299 = vadd.f32 %v1277, %v1290
      %v1300 = vadd.f32 %v1278, %v1290
      %v1301 = vadd.f32 %v1279, %v1290
      %v1302 = vadd.f32 %v1280, %v1290
      %v1303 = vadd.f32 %v1281, %v1290
      %v1304 = vadd.f32 %v1282, %v1290
      %v1305 = vadd.f32 %v1283, %v1290
      %v1306 = vadd.f32 %v1284, %v1290
      %v1307 = vadd.f32 %v1285, %v1290
      %s1308 = scalar_lea.vmem %s3, 16
      %v1309 = vld [vmem:[%s1308] sm:$0xf]
      %vm1310 = vcmask 1045504
      %v1311 = vrot.slane %v496, 2
      %v1312 = vrot.slane %v448, 2
      %v1313 = vsel %vm1310, %v1311, %v1312
      %v1314 = vrot.slane %v506, 2
      %v1315 = vsel %vm1310, %v1312, %v1314
      %v1316 = vrot.slane %v497, 2
      %v1317 = vrot.slane %v451, 2
      %v1318 = vsel %vm1310, %v1316, %v1317
      %v1319 = vrot.slane %v507, 2
      %v1320 = vsel %vm1310, %v1317, %v1319
      %v1321 = vrot.slane %v498, 2
      %v1322 = vrot.slane %v454, 2
      %v1323 = vsel %vm1310, %v1321, %v1322
      %v1324 = vrot.slane %v508, 2
      %v1325 = vsel %vm1310, %v1322, %v1324
      %v1326 = vrot.slane %v499, 2
      %v1327 = vrot.slane %v457, 2
      %v1328 = vsel %vm1310, %v1326, %v1327
      %v1329 = vrot.slane %v509, 2
      %v1330 = vsel %vm1310, %v1327, %v1329
      %v1331 = vrot.slane %v500, 2
      %v1332 = vrot.slane %v460, 2
      %v1333 = vsel %vm1310, %v1331, %v1332
      %v1334 = vrot.slane %v510, 2
      %v1335 = vsel %vm1310, %v1332, %v1334
      %v1336 = vrot.slane %v501, 2
      %v1337 = vrot.slane %v463, 2
      %v1338 = vsel %vm1310, %v1336, %v1337
      %v1339 = vrot.slane %v511, 2
      %v1340 = vsel %vm1310, %v1337, %v1339
      %v1341 = vrot.slane %v502, 2
      %v1342 = vrot.slane %v466, 2
      %v1343 = vsel %vm1310, %v1341, %v1342
      %v1344 = vrot.slane %v512, 2
      %v1345 = vsel %vm1310, %v1342, %v1344
      %v1346 = vrot.slane %v503, 2
      %v1347 = vrot.slane %v469, 2
      %v1348 = vsel %vm1310, %v1346, %v1347
      %v1349 = vrot.slane %v513, 2
      %v1350 = vsel %vm1310, %v1347, %v1349
      %s1351 = scalar_lea.vmem %s3, 20
      %v1352 = vld [vmem:[%s1351] sm:$0xf]
      %v1353 = vsel %vm577, %v1313, 0
      %v1355 = vsel %vm577, %v1315, 0
      %v1357 = vsel %vm577, %v1318, 0
      %v1359 = vsel %vm577, %v1320, 0
      %v1361 = vsel %vm577, %v1323, 0
      %v1363 = vsel %vm577, %v1325, 0
      %v1365 = vsel %vm577, %v1328, 0
      %v1367 = vsel %vm577, %v1330, 0
      %v1369 = vsel %vm577, %v1333, 0
      %v1371 = vsel %vm577, %v1335, 0
      %v1373 = vsel %vm577, %v1338, 0
      %v1375 = vsel %vm577, %v1340, 0
      %v1377 = vsel %vm577, %v1343, 0
      %v1379 = vsel %vm577, %v1345, 0
      %v1381 = vsel %vm577, %v1348, 0
      %v1383 = vsel %vm577, %v1350, 0
      %v1386 = vsel %vm610, %v1352, 0
      %1388 = vmatprep.subr.mxu0 0.0
      %1389 = vmatpush1.msra.mxu0 0.0
      %1390 = vmatprep.subr.mxu0 0.0
      %1391 = vmatpush1.msra.mxu0 0.0
      %1392 = vmatprep.subr.mxu0 0.0
      %1393 = vmatpush1.msra.mxu0 0.0
      %1394 = vmatprep.subr.mxu0 0.0
      %1395 = vmatpush1.msra.mxu0 0.0
      %1396 = vmatprep.subr.mxu0 0.0
      %1397 = vmatpush1.msra.mxu0 0.0
      %1398 = vmatprep.subr.mxu0 0.0
      %1399 = vmatpush1.msra.mxu0 0.0
      %1400 = vmatprep.subr.mxu0 0.0
      %1401 = vmatpush1.msra.mxu0 0.0
      %1402 = vmatprep.subr.mxu0 0.0
      %1403 = vmatpush1.msra.mxu0 0.0
      %1404 = vmatprep.subr.mxu0 0.0
      %1405 = vmatpush1.msra.mxu0 0.0
      %1406 = vmatprep.subr.mxu0 0.0
      %1407 = vmatpush1.msra.mxu0 0.0
      %1408 = vmatprep.subr.mxu0 0.0
      %1409 = vmatpush1.msra.mxu0 0.0
      %1410 = vmatprep.subr.mxu0 0.0
      %1411 = vmatpush1.msra.mxu0 0.0
      %1412 = vmatprep.subr.mxu0 0.0
      %1413 = vmatpush1.msra.mxu0 0.0
      %1414 = vmatprep.subr.mxu0 0.0
      %1415 = vmatpush1.msra.mxu0 0.0
      %1416 = vmatprep.subr.mxu0 0.0
      %1417 = vmatpush1.msra.mxu0 0.0
      %1418 = vmatprep.subr.mxu0 0.0
      %1419 = vmatpush1.msra.mxu0 %v1386
      %1420 = vmatprep.subr.mxu0 0.0
      %1421 = vmatpush2.msra.mxu0 0.0
      %1422 = vmatprep.subr.mxu0 0.0
      %1423 = vmatpush2.msra.mxu0 0.0
      %1424 = vmatprep.subr.mxu0 0.0
      %1425 = vmatpush2.msra.mxu0 0.0
      %1426 = vmatprep.subr.mxu0 0.0
      %1427 = vmatpush2.msra.mxu0 0.0
      %1428 = vmatprep.subr.mxu0 0.0
      %1429 = vmatpush2.msra.mxu0 0.0
      %1430 = vmatprep.subr.mxu0 0.0
      %1431 = vmatpush2.msra.mxu0 0.0
      %1432 = vmatprep.subr.mxu0 0.0
      %1433 = vmatpush2.msra.mxu0 0.0
      %1434 = vmatprep.subr.mxu0 0.0
      %1435 = vmatpush2.msra.mxu0 0.0
      %1436 = vmatprep.subr.mxu0 0.0
      %1437 = vmatpush2.msra.mxu0 0.0
      %1438 = vmatprep.subr.mxu0 0.0
      %1439 = vmatpush2.msra.mxu0 0.0
      %1440 = vmatprep.subr.mxu0 0.0
      %1441 = vmatpush2.msra.mxu0 0.0
      %1442 = vmatprep.subr.mxu0 0.0
      %1443 = vmatpush2.msra.mxu0 0.0
      %1444 = vmatprep.subr.mxu0 0.0
      %1445 = vmatpush2.msra.mxu0 0.0
      %1446 = vmatprep.subr.mxu0 0.0
      %1447 = vmatpush2.msra.mxu0 0.0
      %1448 = vmatprep.subr.mxu0 0.0
      %1449 = vmatpush2.msra.mxu0 0.0
      %1450 = vmatprep.subr.mxu0 0.0
      %1451 = vmatpush2.msra.mxu0 0.0
      %1452 = vmatprep.mubr.f32.mxu0 0.0
      %1453 = vmatmul.mubr.f32.gmra.mxu0 %v1353
      %v1454 = vpop.f32.mrf.mxu0
      %v1455 = vadd.f32 0.0, %v1454
      %v1456 = vpop.f32.mrf.mxu0
      %1457 = vmatprep.mubr.f32.mxu0 0.0
      %1458 = vmatmul.mubr.f32.gmra.mxu0 %v1355
      %v1459 = vpop.f32.mrf.mxu0
      %v1460 = vadd.f32 0.0, %v1459
      %v1461 = vpop.f32.mrf.mxu0
      %1462 = vmatprep.mubr.f32.mxu0 0.0
      %1463 = vmatmul.mubr.f32.gmra.mxu0 %v1357
      %v1464 = vpop.f32.mrf.mxu0
      %v1465 = vadd.f32 0.0, %v1464
      %v1466 = vpop.f32.mrf.mxu0
      %1467 = vmatprep.mubr.f32.mxu0 0.0
      %1468 = vmatmul.mubr.f32.gmra.mxu0 %v1359
      %v1469 = vpop.f32.mrf.mxu0
      %v1470 = vadd.f32 0.0, %v1469
      %v1471 = vpop.f32.mrf.mxu0
      %1472 = vmatprep.mubr.f32.mxu0 0.0
      %1473 = vmatmul.mubr.f32.gmra.mxu0 %v1361
      %v1474 = vpop.f32.mrf.mxu0
      %v1475 = vadd.f32 0.0, %v1474
      %v1476 = vpop.f32.mrf.mxu0
      %1477 = vmatprep.mubr.f32.mxu0 0.0
      %1478 = vmatmul.mubr.f32.gmra.mxu0 %v1363
      %v1479 = vpop.f32.mrf.mxu0
      %v1480 = vadd.f32 0.0, %v1479
      %v1481 = vpop.f32.mrf.mxu0
      %1482 = vmatprep.mubr.f32.mxu0 0.0
      %1483 = vmatmul.mubr.f32.gmra.mxu0 %v1365
      %v1484 = vpop.f32.mrf.mxu0
      %v1485 = vadd.f32 0.0, %v1484
      %v1486 = vpop.f32.mrf.mxu0
      %1487 = vmatprep.mubr.f32.mxu0 0.0
      %1488 = vmatmul.mubr.f32.gmra.mxu0 %v1367
      %v1489 = vpop.f32.mrf.mxu0
      %v1490 = vadd.f32 0.0, %v1489
      %v1491 = vpop.f32.mrf.mxu0
      %1492 = vmatprep.mubr.f32.mxu0 0.0
      %1493 = vmatmul.mubr.f32.gmra.mxu0 %v1369
      %v1494 = vpop.f32.mrf.mxu0
      %v1495 = vadd.f32 0.0, %v1494
      %v1496 = vpop.f32.mrf.mxu0
      %1497 = vmatprep.mubr.f32.mxu0 0.0
      %1498 = vmatmul.mubr.f32.gmra.mxu0 %v1371
      %v1499 = vpop.f32.mrf.mxu0
      %v1500 = vadd.f32 0.0, %v1499
      %v1501 = vpop.f32.mrf.mxu0
      %1502 = vmatprep.mubr.f32.mxu0 0.0
      %1503 = vmatmul.mubr.f32.gmra.mxu0 %v1373
      %v1504 = vpop.f32.mrf.mxu0
      %v1505 = vadd.f32 0.0, %v1504
      %v1506 = vpop.f32.mrf.mxu0
      %1507 = vmatprep.mubr.f32.mxu0 0.0
      %1508 = vmatmul.mubr.f32.gmra.mxu0 %v1375
      %v1509 = vpop.f32.mrf.mxu0
      %v1510 = vadd.f32 0.0, %v1509
      %v1511 = vpop.f32.mrf.mxu0
      %1512 = vmatprep.mubr.f32.mxu0 0.0
      %1513 = vmatmul.mubr.f32.gmra.mxu0 %v1377
      %v1514 = vpop.f32.mrf.mxu0
      %v1515 = vadd.f32 0.0, %v1514
      %v1516 = vpop.f32.mrf.mxu0
      %1517 = vmatprep.mubr.f32.mxu0 0.0
      %1518 = vmatmul.mubr.f32.gmra.mxu0 %v1379
      %v1519 = vpop.f32.mrf.mxu0
      %v1520 = vadd.f32 0.0, %v1519
      %v1521 = vpop.f32.mrf.mxu0
      %1522 = vmatprep.mubr.f32.mxu0 0.0
      %1523 = vmatmul.mubr.f32.gmra.mxu0 %v1381
      %v1524 = vpop.f32.mrf.mxu0
      %v1525 = vadd.f32 0.0, %v1524
      %v1526 = vpop.f32.mrf.mxu0
      %1527 = vmatprep.mubr.f32.mxu0 0.0
      %1528 = vmatmul.mubr.f32.gmra.mxu0 %v1383
      %v1529 = vpop.f32.mrf.mxu0
      %v1530 = vadd.f32 0.0, %v1529
      %v1531 = vpop.f32.mrf.mxu0
      %1532 = vdwg.mxu0
      %v1534 = vsel %vm610, %v1309, 0
      %1536 = vmatprep.subr.mxu0 0.0
      %1537 = vmatpush1.msra.mxu0 0.0
      %1538 = vmatprep.subr.mxu0 0.0
      %1539 = vmatpush1.msra.mxu0 0.0
      %1540 = vmatprep.subr.mxu0 0.0
      %1541 = vmatpush1.msra.mxu0 0.0
      %1542 = vmatprep.subr.mxu0 0.0
      %1543 = vmatpush1.msra.mxu0 0.0
      %1544 = vmatprep.subr.mxu0 0.0
      %1545 = vmatpush1.msra.mxu0 0.0
      %1546 = vmatprep.subr.mxu0 0.0
      %1547 = vmatpush1.msra.mxu0 0.0
      %1548 = vmatprep.subr.mxu0 0.0
      %1549 = vmatpush1.msra.mxu0 0.0
      %1550 = vmatprep.subr.mxu0 0.0
      %1551 = vmatpush1.msra.mxu0 0.0
      %1552 = vmatprep.subr.mxu0 0.0
      %1553 = vmatpush1.msra.mxu0 0.0
      %1554 = vmatprep.subr.mxu0 0.0
      %1555 = vmatpush1.msra.mxu0 0.0
      %1556 = vmatprep.subr.mxu0 0.0
      %1557 = vmatpush1.msra.mxu0 0.0
      %1558 = vmatprep.subr.mxu0 0.0
      %1559 = vmatpush1.msra.mxu0 0.0
      %1560 = vmatprep.subr.mxu0 0.0
      %1561 = vmatpush1.msra.mxu0 0.0
      %1562 = vmatprep.subr.mxu0 0.0
      %1563 = vmatpush1.msra.mxu0 0.0
      %1564 = vmatprep.subr.mxu0 0.0
      %1565 = vmatpush1.msra.mxu0 0.0
      %1566 = vmatprep.subr.mxu0 0.0
      %1567 = vmatpush1.msra.mxu0 %v1534
      %1568 = vmatprep.subr.mxu0 0.0
      %1569 = vmatpush2.msra.mxu0 0.0
      %1570 = vmatprep.subr.mxu0 0.0
      %1571 = vmatpush2.msra.mxu0 0.0
      %1572 = vmatprep.subr.mxu0 0.0
      %1573 = vmatpush2.msra.mxu0 0.0
      %1574 = vmatprep.subr.mxu0 0.0
      %1575 = vmatpush2.msra.mxu0 0.0
      %1576 = vmatprep.subr.mxu0 0.0
      %1577 = vmatpush2.msra.mxu0 0.0
      %1578 = vmatprep.subr.mxu0 0.0
      %1579 = vmatpush2.msra.mxu0 0.0
      %1580 = vmatprep.subr.mxu0 0.0
      %1581 = vmatpush2.msra.mxu0 0.0
      %1582 = vmatprep.subr.mxu0 0.0
      %1583 = vmatpush2.msra.mxu0 0.0
      %1584 = vmatprep.subr.mxu0 0.0
      %1585 = vmatpush2.msra.mxu0 0.0
      %1586 = vmatprep.subr.mxu0 0.0
      %1587 = vmatpush2.msra.mxu0 0.0
      %1588 = vmatprep.subr.mxu0 0.0
      %1589 = vmatpush2.msra.mxu0 0.0
      %1590 = vmatprep.subr.mxu0 0.0
      %1591 = vmatpush2.msra.mxu0 0.0
      %1592 = vmatprep.subr.mxu0 0.0
      %1593 = vmatpush2.msra.mxu0 0.0
      %1594 = vmatprep.subr.mxu0 0.0
      %1595 = vmatpush2.msra.mxu0 0.0
      %1596 = vmatprep.subr.mxu0 0.0
      %1597 = vmatpush2.msra.mxu0 0.0
      %1598 = vmatprep.subr.mxu0 0.0
      %1599 = vmatpush2.msra.mxu0 0.0
      %1600 = vmatprep.mubr.f32.mxu0 0.0
      %1601 = vmatmul.mubr.f32.gmra.mxu0 %v578
      %v1602 = vpop.f32.mrf.mxu0
      %v1603 = vadd.f32 %v1455, %v1602
      %v1604 = vpop.f32.mrf.mxu0
      %1605 = vmatprep.mubr.f32.mxu0 0.0
      %1606 = vmatmul.mubr.f32.gmra.mxu0 %v580
      %v1607 = vpop.f32.mrf.mxu0
      %v1608 = vadd.f32 %v1460, %v1607
      %v1609 = vpop.f32.mrf.mxu0
      %1610 = vmatprep.mubr.f32.mxu0 0.0
      %1611 = vmatmul.mubr.f32.gmra.mxu0 %v582
      %v1612 = vpop.f32.mrf.mxu0
      %v1613 = vadd.f32 %v1465, %v1612
      %v1614 = vpop.f32.mrf.mxu0
      %1615 = vmatprep.mubr.f32.mxu0 0.0
      %1616 = vmatmul.mubr.f32.gmra.mxu0 %v584
      %v1617 = vpop.f32.mrf.mxu0
      %v1618 = vadd.f32 %v1470, %v1617
      %v1619 = vpop.f32.mrf.mxu0
      %1620 = vmatprep.mubr.f32.mxu0 0.0
      %1621 = vmatmul.mubr.f32.gmra.mxu0 %v586
      %v1622 = vpop.f32.mrf.mxu0
      %v1623 = vadd.f32 %v1475, %v1622
      %v1624 = vpop.f32.mrf.mxu0
      %1625 = vmatprep.mubr.f32.mxu0 0.0
      %1626 = vmatmul.mubr.f32.gmra.mxu0 %v588
      %v1627 = vpop.f32.mrf.mxu0
      %v1628 = vadd.f32 %v1480, %v1627
      %v1629 = vpop.f32.mrf.mxu0
      %1630 = vmatprep.mubr.f32.mxu0 0.0
      %1631 = vmatmul.mubr.f32.gmra.mxu0 %v590
      %v1632 = vpop.f32.mrf.mxu0
      %v1633 = vadd.f32 %v1485, %v1632
      %v1634 = vpop.f32.mrf.mxu0
      %1635 = vmatprep.mubr.f32.mxu0 0.0
      %1636 = vmatmul.mubr.f32.gmra.mxu0 %v592
      %v1637 = vpop.f32.mrf.mxu0
      %v1638 = vadd.f32 %v1490, %v1637
      %v1639 = vpop.f32.mrf.mxu0
      %1640 = vmatprep.mubr.f32.mxu0 0.0
      %1641 = vmatmul.mubr.f32.gmra.mxu0 %v594
      %v1642 = vpop.f32.mrf.mxu0
      %v1643 = vadd.f32 %v1495, %v1642
      %v1644 = vpop.f32.mrf.mxu0
      %1645 = vmatprep.mubr.f32.mxu0 0.0
      %1646 = vmatmul.mubr.f32.gmra.mxu0 %v596
      %v1647 = vpop.f32.mrf.mxu0
      %v1648 = vadd.f32 %v1500, %v1647
      %v1649 = vpop.f32.mrf.mxu0
      %1650 = vmatprep.mubr.f32.mxu0 0.0
      %1651 = vmatmul.mubr.f32.gmra.mxu0 %v598
      %v1652 = vpop.f32.mrf.mxu0
      %v1653 = vadd.f32 %v1505, %v1652
      %v1654 = vpop.f32.mrf.mxu0
      %1655 = vmatprep.mubr.f32.mxu0 0.0
      %1656 = vmatmul.mubr.f32.gmra.mxu0 %v600
      %v1657 = vpop.f32.mrf.mxu0
      %v1658 = vadd.f32 %v1510, %v1657
      %v1659 = vpop.f32.mrf.mxu0
      %1660 = vmatprep.mubr.f32.mxu0 0.0
      %1661 = vmatmul.mubr.f32.gmra.mxu0 %v602
      %v1662 = vpop.f32.mrf.mxu0
      %v1663 = vadd.f32 %v1515, %v1662
      %v1664 = vpop.f32.mrf.mxu0
      %1665 = vmatprep.mubr.f32.mxu0 0.0
      %1666 = vmatmul.mubr.f32.gmra.mxu0 %v604
      %v1667 = vpop.f32.mrf.mxu0
      %v1668 = vadd.f32 %v1520, %v1667
      %v1669 = vpop.f32.mrf.mxu0
      %1670 = vmatprep.mubr.f32.mxu0 0.0
      %1671 = vmatmul.mubr.f32.gmra.mxu0 %v606
      %v1672 = vpop.f32.mrf.mxu0
      %v1673 = vadd.f32 %v1525, %v1672
      %v1674 = vpop.f32.mrf.mxu0
      %1675 = vmatprep.mubr.f32.mxu0 0.0
      %1676 = vmatmul.mubr.f32.gmra.mxu0 %v608
      %v1677 = vpop.f32.mrf.mxu0
      %v1678 = vadd.f32 %v1530, %v1677
      %v1679 = vpop.f32.mrf.mxu0
      %1680 = vdwg.mxu0
      %s1681 = scalar_lea.vmem %s3, 24
      %v1682 = vld [vmem:[%s1681] sm:$0xf]
      %v1684 = vsel %vm610, %v1682, 0
      %1686 = vmatprep.subr.mxu0 0.0
      %1687 = vmatpush1.msra.mxu0 0.0
      %1688 = vmatprep.subr.mxu0 0.0
      %1689 = vmatpush1.msra.mxu0 0.0
      %1690 = vmatprep.subr.mxu0 0.0
      %1691 = vmatpush1.msra.mxu0 0.0
      %1692 = vmatprep.subr.mxu0 0.0
      %1693 = vmatpush1.msra.mxu0 0.0
      %1694 = vmatprep.subr.mxu0 0.0
      %1695 = vmatpush1.msra.mxu0 0.0
      %1696 = vmatprep.subr.mxu0 0.0
      %1697 = vmatpush1.msra.mxu0 0.0
      %1698 = vmatprep.subr.mxu0 0.0
      %1699 = vmatpush1.msra.mxu0 0.0
      %1700 = vmatprep.subr.mxu0 0.0
      %1701 = vmatpush1.msra.mxu0 0.0
      %1702 = vmatprep.subr.mxu0 0.0
      %1703 = vmatpush1.msra.mxu0 0.0
      %1704 = vmatprep.subr.mxu0 0.0
      %1705 = vmatpush1.msra.mxu0 0.0
      %1706 = vmatprep.subr.mxu0 0.0
      %1707 = vmatpush1.msra.mxu0 0.0
      %1708 = vmatprep.subr.mxu0 0.0
      %1709 = vmatpush1.msra.mxu0 0.0
      %1710 = vmatprep.subr.mxu0 0.0
      %1711 = vmatpush1.msra.mxu0 0.0
      %1712 = vmatprep.subr.mxu0 0.0
      %1713 = vmatpush1.msra.mxu0 0.0
      %1714 = vmatprep.subr.mxu0 0.0
      %1715 = vmatpush1.msra.mxu0 0.0
      %1716 = vmatprep.subr.mxu0 0.0
      %1717 = vmatpush1.msra.mxu0 %v1684
      %1718 = vmatprep.subr.mxu0 0.0
      %1719 = vmatpush2.msra.mxu0 0.0
      %1720 = vmatprep.subr.mxu0 0.0
      %1721 = vmatpush2.msra.mxu0 0.0
      %1722 = vmatprep.subr.mxu0 0.0
      %1723 = vmatpush2.msra.mxu0 0.0
      %1724 = vmatprep.subr.mxu0 0.0
      %1725 = vmatpush2.msra.mxu0 0.0
      %1726 = vmatprep.subr.mxu0 0.0
      %1727 = vmatpush2.msra.mxu0 0.0
      %1728 = vmatprep.subr.mxu0 0.0
      %1729 = vmatpush2.msra.mxu0 0.0
      %1730 = vmatprep.subr.mxu0 0.0
      %1731 = vmatpush2.msra.mxu0 0.0
      %1732 = vmatprep.subr.mxu0 0.0
      %1733 = vmatpush2.msra.mxu0 0.0
      %1734 = vmatprep.subr.mxu0 0.0
      %1735 = vmatpush2.msra.mxu0 0.0
      %1736 = vmatprep.subr.mxu0 0.0
      %1737 = vmatpush2.msra.mxu0 0.0
      %1738 = vmatprep.subr.mxu0 0.0
      %1739 = vmatpush2.msra.mxu0 0.0
      %1740 = vmatprep.subr.mxu0 0.0
      %1741 = vmatpush2.msra.mxu0 0.0
      %1742 = vmatprep.subr.mxu0 0.0
      %1743 = vmatpush2.msra.mxu0 0.0
      %1744 = vmatprep.subr.mxu0 0.0
      %1745 = vmatpush2.msra.mxu0 0.0
      %1746 = vmatprep.subr.mxu0 0.0
      %1747 = vmatpush2.msra.mxu0 0.0
      %1748 = vmatprep.subr.mxu0 0.0
      %1749 = vmatpush2.msra.mxu0 0.0
      %1750 = vmatprep.mubr.f32.mxu0 0.0
      %1751 = vmatmul.mubr.f32.gmra.mxu0 %v582
      %v1752 = vpop.f32.mrf.mxu0
      %v1753 = vadd.f32 0.0, %v1752
      %v1754 = vpop.f32.mrf.mxu0
      %1755 = vmatprep.mubr.f32.mxu0 0.0
      %1756 = vmatmul.mubr.f32.gmra.mxu0 %v584
      %v1757 = vpop.f32.mrf.mxu0
      %v1758 = vadd.f32 0.0, %v1757
      %v1759 = vpop.f32.mrf.mxu0
      %1760 = vmatprep.mubr.f32.mxu0 0.0
      %1761 = vmatmul.mubr.f32.gmra.mxu0 %v586
      %v1762 = vpop.f32.mrf.mxu0
      %v1763 = vadd.f32 0.0, %v1762
      %v1764 = vpop.f32.mrf.mxu0
      %1765 = vmatprep.mubr.f32.mxu0 0.0
      %1766 = vmatmul.mubr.f32.gmra.mxu0 %v588
      %v1767 = vpop.f32.mrf.mxu0
      %v1768 = vadd.f32 0.0, %v1767
      %v1769 = vpop.f32.mrf.mxu0
      %1770 = vmatprep.mubr.f32.mxu0 0.0
      %1771 = vmatmul.mubr.f32.gmra.mxu0 %v590
      %v1772 = vpop.f32.mrf.mxu0
      %v1773 = vadd.f32 0.0, %v1772
      %v1774 = vpop.f32.mrf.mxu0
      %1775 = vmatprep.mubr.f32.mxu0 0.0
      %1776 = vmatmul.mubr.f32.gmra.mxu0 %v592
      %v1777 = vpop.f32.mrf.mxu0
      %v1778 = vadd.f32 0.0, %v1777
      %v1779 = vpop.f32.mrf.mxu0
      %1780 = vmatprep.mubr.f32.mxu0 0.0
      %1781 = vmatmul.mubr.f32.gmra.mxu0 %v594
      %v1782 = vpop.f32.mrf.mxu0
      %v1783 = vadd.f32 0.0, %v1782
      %v1784 = vpop.f32.mrf.mxu0
      %1785 = vmatprep.mubr.f32.mxu0 0.0
      %1786 = vmatmul.mubr.f32.gmra.mxu0 %v596
      %v1787 = vpop.f32.mrf.mxu0
      %v1788 = vadd.f32 0.0, %v1787
      %v1789 = vpop.f32.mrf.mxu0
      %1790 = vmatprep.mubr.f32.mxu0 0.0
      %1791 = vmatmul.mubr.f32.gmra.mxu0 %v598
      %v1792 = vpop.f32.mrf.mxu0
      %v1793 = vadd.f32 0.0, %v1792
      %v1794 = vpop.f32.mrf.mxu0
      %1795 = vmatprep.mubr.f32.mxu0 0.0
      %1796 = vmatmul.mubr.f32.gmra.mxu0 %v600
      %v1797 = vpop.f32.mrf.mxu0
      %v1798 = vadd.f32 0.0, %v1797
      %v1799 = vpop.f32.mrf.mxu0
      %1800 = vmatprep.mubr.f32.mxu0 0.0
      %1801 = vmatmul.mubr.f32.gmra.mxu0 %v602
      %v1802 = vpop.f32.mrf.mxu0
      %v1803 = vadd.f32 0.0, %v1802
      %v1804 = vpop.f32.mrf.mxu0
      %1805 = vmatprep.mubr.f32.mxu0 0.0
      %1806 = vmatmul.mubr.f32.gmra.mxu0 %v604
      %v1807 = vpop.f32.mrf.mxu0
      %v1808 = vadd.f32 0.0, %v1807
      %v1809 = vpop.f32.mrf.mxu0
      %1810 = vmatprep.mubr.f32.mxu0 0.0
      %1811 = vmatmul.mubr.f32.gmra.mxu0 %v606
      %v1812 = vpop.f32.mrf.mxu0
      %v1813 = vadd.f32 0.0, %v1812
      %v1814 = vpop.f32.mrf.mxu0
      %1815 = vmatprep.mubr.f32.mxu0 0.0
      %1816 = vmatmul.mubr.f32.gmra.mxu0 %v608
      %v1817 = vpop.f32.mrf.mxu0
      %v1818 = vadd.f32 0.0, %v1817
      %v1819 = vpop.f32.mrf.mxu0
      %1820 = vmatprep.mubr.f32.mxu0 0.0
      %1821 = vmatmul.mubr.f32.gmra.mxu0 %v1118
      %v1822 = vpop.f32.mrf.mxu0
      %v1823 = vadd.f32 0.0, %v1822
      %v1824 = vpop.f32.mrf.mxu0
      %1825 = vmatprep.mubr.f32.mxu0 0.0
      %1826 = vmatmul.mubr.f32.gmra.mxu0 %v1120
      %v1827 = vpop.f32.mrf.mxu0
      %v1828 = vadd.f32 0.0, %v1827
      %v1829 = vpop.f32.mrf.mxu0
      %1830 = vdwg.mxu0
      %v1831 = vadd.f32 %v1603, %v1753
      %v1832 = vadd.f32 %v1608, %v1758
      %v1833 = vadd.f32 %v1613, %v1763
      %v1834 = vadd.f32 %v1618, %v1768
      %v1835 = vadd.f32 %v1623, %v1773
      %v1836 = vadd.f32 %v1628, %v1778
      %v1837 = vadd.f32 %v1633, %v1783
      %v1838 = vadd.f32 %v1638, %v1788
      %v1839 = vadd.f32 %v1643, %v1793
      %v1840 = vadd.f32 %v1648, %v1798
      %v1841 = vadd.f32 %v1653, %v1803
      %v1842 = vadd.f32 %v1658, %v1808
      %v1843 = vadd.f32 %v1663, %v1813
      %v1844 = vadd.f32 %v1668, %v1818
      %v1845 = vadd.f32 %v1673, %v1823
      %v1846 = vadd.f32 %v1678, %v1828
      %v1847 = vrot.slane %v504, 2
      %v1848 = vrot.slane %v472, 2
      %v1849 = vsel %vm1310, %v1847, %v1848
      %v1850 = vrot.slane %v514, 2
      %v1851 = vsel %vm1310, %v1848, %v1850
      %s1852 = scalar_lea.vmem %s3, 28
      %v1853 = vld [vmem:[%s1852] sm:$0xf]
      %v1854 = vsel %vm577, %v1849, 0
      %v1856 = vsel %vm577, %v1851, 0
      %v1859 = vsel %vm610, %v1853, 0
      %1861 = vmatprep.subr.mxu0 0.0
      %1862 = vmatpush1.msra.mxu0 0.0
      %1863 = vmatprep.subr.mxu0 0.0
      %1864 = vmatpush1.msra.mxu0 0.0
      %1865 = vmatprep.subr.mxu0 0.0
      %1866 = vmatpush1.msra.mxu0 0.0
      %1867 = vmatprep.subr.mxu0 0.0
      %1868 = vmatpush1.msra.mxu0 0.0
      %1869 = vmatprep.subr.mxu0 0.0
      %1870 = vmatpush1.msra.mxu0 0.0
      %1871 = vmatprep.subr.mxu0 0.0
      %1872 = vmatpush1.msra.mxu0 0.0
      %1873 = vmatprep.subr.mxu0 0.0
      %1874 = vmatpush1.msra.mxu0 0.0
      %1875 = vmatprep.subr.mxu0 0.0
      %1876 = vmatpush1.msra.mxu0 0.0
      %1877 = vmatprep.subr.mxu0 0.0
      %1878 = vmatpush1.msra.mxu0 0.0
      %1879 = vmatprep.subr.mxu0 0.0
      %1880 = vmatpush1.msra.mxu0 0.0
      %1881 = vmatprep.subr.mxu0 0.0
      %1882 = vmatpush1.msra.mxu0 0.0
      %1883 = vmatprep.subr.mxu0 0.0
      %1884 = vmatpush1.msra.mxu0 0.0
      %1885 = vmatprep.subr.mxu0 0.0
      %1886 = vmatpush1.msra.mxu0 0.0
      %1887 = vmatprep.subr.mxu0 0.0
      %1888 = vmatpush1.msra.mxu0 0.0
      %1889 = vmatprep.subr.mxu0 0.0
      %1890 = vmatpush1.msra.mxu0 0.0
      %1891 = vmatprep.subr.mxu0 0.0
      %1892 = vmatpush1.msra.mxu0 %v1859
      %1893 = vmatprep.subr.mxu0 0.0
      %1894 = vmatpush2.msra.mxu0 0.0
      %1895 = vmatprep.subr.mxu0 0.0
      %1896 = vmatpush2.msra.mxu0 0.0
      %1897 = vmatprep.subr.mxu0 0.0
      %1898 = vmatpush2.msra.mxu0 0.0
      %1899 = vmatprep.subr.mxu0 0.0
      %1900 = vmatpush2.msra.mxu0 0.0
      %1901 = vmatprep.subr.mxu0 0.0
      %1902 = vmatpush2.msra.mxu0 0.0
      %1903 = vmatprep.subr.mxu0 0.0
      %1904 = vmatpush2.msra.mxu0 0.0
      %1905 = vmatprep.subr.mxu0 0.0
      %1906 = vmatpush2.msra.mxu0 0.0
      %1907 = vmatprep.subr.mxu0 0.0
      %1908 = vmatpush2.msra.mxu0 0.0
      %1909 = vmatprep.subr.mxu0 0.0
      %1910 = vmatpush2.msra.mxu0 0.0
      %1911 = vmatprep.subr.mxu0 0.0
      %1912 = vmatpush2.msra.mxu0 0.0
      %1913 = vmatprep.subr.mxu0 0.0
      %1914 = vmatpush2.msra.mxu0 0.0
      %1915 = vmatprep.subr.mxu0 0.0
      %1916 = vmatpush2.msra.mxu0 0.0
      %1917 = vmatprep.subr.mxu0 0.0
      %1918 = vmatpush2.msra.mxu0 0.0
      %1919 = vmatprep.subr.mxu0 0.0
      %1920 = vmatpush2.msra.mxu0 0.0
      %1921 = vmatprep.subr.mxu0 0.0
      %1922 = vmatpush2.msra.mxu0 0.0
      %1923 = vmatprep.subr.mxu0 0.0
      %1924 = vmatpush2.msra.mxu0 0.0
      %1925 = vmatprep.mubr.f32.mxu0 0.0
      %1926 = vmatmul.mubr.f32.gmra.mxu0 %v1357
      %v1927 = vpop.f32.mrf.mxu0
      %v1928 = vadd.f32 0.0, %v1927
      %v1929 = vpop.f32.mrf.mxu0
      %1930 = vmatprep.mubr.f32.mxu0 0.0
      %1931 = vmatmul.mubr.f32.gmra.mxu0 %v1359
      %v1932 = vpop.f32.mrf.mxu0
      %v1933 = vadd.f32 0.0, %v1932
      %v1934 = vpop.f32.mrf.mxu0
      %1935 = vmatprep.mubr.f32.mxu0 0.0
      %1936 = vmatmul.mubr.f32.gmra.mxu0 %v1361
      %v1937 = vpop.f32.mrf.mxu0
      %v1938 = vadd.f32 0.0, %v1937
      %v1939 = vpop.f32.mrf.mxu0
      %1940 = vmatprep.mubr.f32.mxu0 0.0
      %1941 = vmatmul.mubr.f32.gmra.mxu0 %v1363
      %v1942 = vpop.f32.mrf.mxu0
      %v1943 = vadd.f32 0.0, %v1942
      %v1944 = vpop.f32.mrf.mxu0
      %1945 = vmatprep.mubr.f32.mxu0 0.0
      %1946 = vmatmul.mubr.f32.gmra.mxu0 %v1365
      %v1947 = vpop.f32.mrf.mxu0
      %v1948 = vadd.f32 0.0, %v1947
      %v1949 = vpop.f32.mrf.mxu0
      %1950 = vmatprep.mubr.f32.mxu0 0.0
      %1951 = vmatmul.mubr.f32.gmra.mxu0 %v1367
      %v1952 = vpop.f32.mrf.mxu0
      %v1953 = vadd.f32 0.0, %v1952
      %v1954 = vpop.f32.mrf.mxu0
      %1955 = vmatprep.mubr.f32.mxu0 0.0
      %1956 = vmatmul.mubr.f32.gmra.mxu0 %v1369
      %v1957 = vpop.f32.mrf.mxu0
      %v1958 = vadd.f32 0.0, %v1957
      %v1959 = vpop.f32.mrf.mxu0
      %1960 = vmatprep.mubr.f32.mxu0 0.0
      %1961 = vmatmul.mubr.f32.gmra.mxu0 %v1371
      %v1962 = vpop.f32.mrf.mxu0
      %v1963 = vadd.f32 0.0, %v1962
      %v1964 = vpop.f32.mrf.mxu0
      %1965 = vmatprep.mubr.f32.mxu0 0.0
      %1966 = vmatmul.mubr.f32.gmra.mxu0 %v1373
      %v1967 = vpop.f32.mrf.mxu0
      %v1968 = vadd.f32 0.0, %v1967
      %v1969 = vpop.f32.mrf.mxu0
      %1970 = vmatprep.mubr.f32.mxu0 0.0
      %1971 = vmatmul.mubr.f32.gmra.mxu0 %v1375
      %v1972 = vpop.f32.mrf.mxu0
      %v1973 = vadd.f32 0.0, %v1972
      %v1974 = vpop.f32.mrf.mxu0
      %1975 = vmatprep.mubr.f32.mxu0 0.0
      %1976 = vmatmul.mubr.f32.gmra.mxu0 %v1377
      %v1977 = vpop.f32.mrf.mxu0
      %v1978 = vadd.f32 0.0, %v1977
      %v1979 = vpop.f32.mrf.mxu0
      %1980 = vmatprep.mubr.f32.mxu0 0.0
      %1981 = vmatmul.mubr.f32.gmra.mxu0 %v1379
      %v1982 = vpop.f32.mrf.mxu0
      %v1983 = vadd.f32 0.0, %v1982
      %v1984 = vpop.f32.mrf.mxu0
      %1985 = vmatprep.mubr.f32.mxu0 0.0
      %1986 = vmatmul.mubr.f32.gmra.mxu0 %v1381
      %v1987 = vpop.f32.mrf.mxu0
      %v1988 = vadd.f32 0.0, %v1987
      %v1989 = vpop.f32.mrf.mxu0
      %1990 = vmatprep.mubr.f32.mxu0 0.0
      %1991 = vmatmul.mubr.f32.gmra.mxu0 %v1383
      %v1992 = vpop.f32.mrf.mxu0
      %v1993 = vadd.f32 0.0, %v1992
      %v1994 = vpop.f32.mrf.mxu0
      %1995 = vmatprep.mubr.f32.mxu0 0.0
      %1996 = vmatmul.mubr.f32.gmra.mxu0 %v1854
      %v1997 = vpop.f32.mrf.mxu0
      %v1998 = vadd.f32 0.0, %v1997
      %v1999 = vpop.f32.mrf.mxu0
      %2000 = vmatprep.mubr.f32.mxu0 0.0
      %2001 = vmatmul.mubr.f32.gmra.mxu0 %v1856
      %v2002 = vpop.f32.mrf.mxu0
      %v2003 = vadd.f32 0.0, %v2002
      %v2004 = vpop.f32.mrf.mxu0
      %2005 = vdwg.mxu0
      %v2006 = vadd.f32 %v1831, %v1928
      %v2007 = vadd.f32 %v1832, %v1933
      %v2008 = vadd.f32 %v1833, %v1938
      %v2009 = vadd.f32 %v1834, %v1943
      %v2010 = vadd.f32 %v1835, %v1948
      %v2011 = vadd.f32 %v1836, %v1953
      %v2012 = vadd.f32 %v1837, %v1958
      %v2013 = vadd.f32 %v1838, %v1963
      %v2014 = vadd.f32 %v1839, %v1968
      %v2015 = vadd.f32 %v1840, %v1973
      %v2016 = vadd.f32 %v1841, %v1978
      %v2017 = vadd.f32 %v1842, %v1983
      %v2018 = vadd.f32 %v1843, %v1988
      %v2019 = vadd.f32 %v1844, %v1993
      %v2020 = vadd.f32 %v1845, %v1998
      %v2021 = vadd.f32 %v1846, %v2003
      %v2022 = vadd.f32 %v2006, %v1290
      %v2023 = vadd.f32 %v2007, %v1290
      %v2024 = vadd.f32 %v2008, %v1290
      %v2025 = vadd.f32 %v2009, %v1290
      %v2026 = vadd.f32 %v2010, %v1290
      %v2027 = vadd.f32 %v2011, %v1290
      %v2028 = vadd.f32 %v2012, %v1290
      %v2029 = vadd.f32 %v2013, %v1290
      %v2030 = vadd.f32 %v2014, %v1290
      %v2031 = vadd.f32 %v2015, %v1290
      %v2032 = vadd.f32 %v2016, %v1290
      %v2033 = vadd.f32 %v2017, %v1290
      %v2034 = vadd.f32 %v2018, %v1290
      %v2035 = vadd.f32 %v2019, %v1290
      %v2036 = vadd.f32 %v2020, %v1290
      %v2037 = vadd.f32 %v2021, %v1290
      %v2054 = vcombine.high %v1292, %v1292
      %v2056 = vunpack.c.l.s4 1966171168
      %v2057 = vunpack.c.0.s8 %v2056
      %v2058 = vlaneseq
      %v2059 = vshrl.u32 %v2058, 7
      %v2060 = vsub.s32 %v2057, %v2059
      %v2061 = vrot.slane %v1292, %v2060
      %v2063 = vunpack.c.l.s4 1966171168
      %v2064 = vunpack.c.0.s8 %v2063
      %v2065 = vlaneseq
      %v2066 = vshrl.u32 %v2065, 7
      %v2067 = vsub.s32 %v2064, %v2066
      %v2068 = vrot.slane %v2054, %v2067
      %v2069 = vcombine.high %v2061, %v2061
      %v2070 = vcombine.high %v2068, %v2068
      %v2072 = vunpack.c.l.s4 1966171168
      %v2073 = vunpack.c.0.s8 %v2072
      %v2074 = vlaneseq
      %v2075 = vshrl.u32 %v2074, 7
      %v2076 = vsub.s32 %v2073, %v2075
      %v2077 = vrot.slane %v2061, %v2076
      %v2079 = vunpack.c.l.s4 1966171168
      %v2080 = vunpack.c.0.s8 %v2079
      %v2081 = vlaneseq
      %v2082 = vshrl.u32 %v2081, 7
      %v2083 = vsub.s32 %v2080, %v2082
      %v2084 = vrot.slane %v2068, %v2083
      %v2086 = vunpack.c.l.s4 1966171168
      %v2087 = vunpack.c.0.s8 %v2086
      %v2088 = vlaneseq
      %v2089 = vshrl.u32 %v2088, 7
      %v2090 = vsub.s32 %v2087, %v2089
      %v2091 = vrot.slane %v2069, %v2090
      %v2093 = vunpack.c.l.s4 1966171168
      %v2094 = vunpack.c.0.s8 %v2093
      %v2095 = vlaneseq
      %v2096 = vshrl.u32 %v2095, 7
      %v2097 = vsub.s32 %v2094, %v2096
      %v2098 = vrot.slane %v2070, %v2097
      %v2099 = vcombine.high %v2077, %v2077
      %v2100 = vcombine.high %v2084, %v2084
      %v2101 = vcombine.high %v2091, %v2091
      %v2102 = vcombine.high %v2098, %v2098
      %v2103 = vcombine.high %v1293, %v1293
      %v2105 = vunpack.c.l.s4 1966171168
      %v2106 = vunpack.c.0.s8 %v2105
      %v2107 = vlaneseq
      %v2108 = vshrl.u32 %v2107, 7
      %v2109 = vsub.s32 %v2106, %v2108
      %v2110 = vrot.slane %v1293, %v2109
      %v2112 = vunpack.c.l.s4 1966171168
      %v2113 = vunpack.c.0.s8 %v2112
      %v2114 = vlaneseq
      %v2115 = vshrl.u32 %v2114, 7
      %v2116 = vsub.s32 %v2113, %v2115
      %v2117 = vrot.slane %v2103, %v2116
      %v2118 = vcombine.high %v2110, %v2110
      %v2119 = vcombine.high %v2117, %v2117
      %v2121 = vunpack.c.l.s4 1966171168
      %v2122 = vunpack.c.0.s8 %v2121
      %v2123 = vlaneseq
      %v2124 = vshrl.u32 %v2123, 7
      %v2125 = vsub.s32 %v2122, %v2124
      %v2126 = vrot.slane %v2110, %v2125
      %v2128 = vunpack.c.l.s4 1966171168
      %v2129 = vunpack.c.0.s8 %v2128
      %v2130 = vlaneseq
      %v2131 = vshrl.u32 %v2130, 7
      %v2132 = vsub.s32 %v2129, %v2131
      %v2133 = vrot.slane %v2117, %v2132
      %v2135 = vunpack.c.l.s4 1966171168
      %v2136 = vunpack.c.0.s8 %v2135
      %v2137 = vlaneseq
      %v2138 = vshrl.u32 %v2137, 7
      %v2139 = vsub.s32 %v2136, %v2138
      %v2140 = vrot.slane %v2118, %v2139
      %v2142 = vunpack.c.l.s4 1966171168
      %v2143 = vunpack.c.0.s8 %v2142
      %v2144 = vlaneseq
      %v2145 = vshrl.u32 %v2144, 7
      %v2146 = vsub.s32 %v2143, %v2145
      %v2147 = vrot.slane %v2119, %v2146
      %v2148 = vcombine.high %v2126, %v2126
      %v2149 = vcombine.high %v2133, %v2133
      %v2150 = vcombine.high %v2140, %v2140
      %v2151 = vcombine.high %v2147, %v2147
      %v2152 = vcombine.high %v1294, %v1294
      %v2154 = vunpack.c.l.s4 1966171168
      %v2155 = vunpack.c.0.s8 %v2154
      %v2156 = vlaneseq
      %v2157 = vshrl.u32 %v2156, 7
      %v2158 = vsub.s32 %v2155, %v2157
      %v2159 = vrot.slane %v1294, %v2158
      %v2161 = vunpack.c.l.s4 1966171168
      %v2162 = vunpack.c.0.s8 %v2161
      %v2163 = vlaneseq
      %v2164 = vshrl.u32 %v2163, 7
      %v2165 = vsub.s32 %v2162, %v2164
      %v2166 = vrot.slane %v2152, %v2165
      %v2167 = vcombine.high %v2159, %v2159
      %v2168 = vcombine.high %v2166, %v2166
      %v2170 = vunpack.c.l.s4 1966171168
      %v2171 = vunpack.c.0.s8 %v2170
      %v2172 = vlaneseq
      %v2173 = vshrl.u32 %v2172, 7
      %v2174 = vsub.s32 %v2171, %v2173
      %v2175 = vrot.slane %v2159, %v2174
      %v2177 = vunpack.c.l.s4 1966171168
      %v2178 = vunpack.c.0.s8 %v2177
      %v2179 = vlaneseq
      %v2180 = vshrl.u32 %v2179, 7
      %v2181 = vsub.s32 %v2178, %v2180
      %v2182 = vrot.slane %v2166, %v2181
      %v2184 = vunpack.c.l.s4 1966171168
      %v2185 = vunpack.c.0.s8 %v2184
      %v2186 = vlaneseq
      %v2187 = vshrl.u32 %v2186, 7
      %v2188 = vsub.s32 %v2185, %v2187
      %v2189 = vrot.slane %v2167, %v2188
      %v2191 = vunpack.c.l.s4 1966171168
      %v2192 = vunpack.c.0.s8 %v2191
      %v2193 = vlaneseq
      %v2194 = vshrl.u32 %v2193, 7
      %v2195 = vsub.s32 %v2192, %v2194
      %v2196 = vrot.slane %v2168, %v2195
      %v2197 = vcombine.high %v2175, %v2175
      %v2198 = vcombine.high %v2182, %v2182
      %v2199 = vcombine.high %v2189, %v2189
      %v2200 = vcombine.high %v2196, %v2196
      %v2201 = vcombine.high %v1295, %v1295
      %v2203 = vunpack.c.l.s4 1966171168
      %v2204 = vunpack.c.0.s8 %v2203
      %v2205 = vlaneseq
      %v2206 = vshrl.u32 %v2205, 7
      %v2207 = vsub.s32 %v2204, %v2206
      %v2208 = vrot.slane %v1295, %v2207
      %v2210 = vunpack.c.l.s4 1966171168
      %v2211 = vunpack.c.0.s8 %v2210
      %v2212 = vlaneseq
      %v2213 = vshrl.u32 %v2212, 7
      %v2214 = vsub.s32 %v2211, %v2213
      %v2215 = vrot.slane %v2201, %v2214
      %v2216 = vcombine.high %v2208, %v2208
      %v2217 = vcombine.high %v2215, %v2215
      %v2219 = vunpack.c.l.s4 1966171168
      %v2220 = vunpack.c.0.s8 %v2219
      %v2221 = vlaneseq
      %v2222 = vshrl.u32 %v2221, 7
      %v2223 = vsub.s32 %v2220, %v2222
      %v2224 = vrot.slane %v2208, %v2223
      %v2226 = vunpack.c.l.s4 1966171168
      %v2227 = vunpack.c.0.s8 %v2226
      %v2228 = vlaneseq
      %v2229 = vshrl.u32 %v2228, 7
      %v2230 = vsub.s32 %v2227, %v2229
      %v2231 = vrot.slane %v2215, %v2230
      %v2233 = vunpack.c.l.s4 1966171168
      %v2234 = vunpack.c.0.s8 %v2233
      %v2235 = vlaneseq
      %v2236 = vshrl.u32 %v2235, 7
      %v2237 = vsub.s32 %v2234, %v2236
      %v2238 = vrot.slane %v2216, %v2237
      %v2240 = vunpack.c.l.s4 1966171168
      %v2241 = vunpack.c.0.s8 %v2240
      %v2242 = vlaneseq
      %v2243 = vshrl.u32 %v2242, 7
      %v2244 = vsub.s32 %v2241, %v2243
      %v2245 = vrot.slane %v2217, %v2244
      %v2246 = vcombine.high %v2224, %v2224
      %v2247 = vcombine.high %v2231, %v2231
      %v2248 = vcombine.high %v2238, %v2238
      %v2249 = vcombine.high %v2245, %v2245
      %v2250 = vcombine.high %v1296, %v1296
      %v2252 = vunpack.c.l.s4 1966171168
      %v2253 = vunpack.c.0.s8 %v2252
      %v2254 = vlaneseq
      %v2255 = vshrl.u32 %v2254, 7
      %v2256 = vsub.s32 %v2253, %v2255
      %v2257 = vrot.slane %v1296, %v2256
      %v2259 = vunpack.c.l.s4 1966171168
      %v2260 = vunpack.c.0.s8 %v2259
      %v2261 = vlaneseq
      %v2262 = vshrl.u32 %v2261, 7
      %v2263 = vsub.s32 %v2260, %v2262
      %v2264 = vrot.slane %v2250, %v2263
      %v2265 = vcombine.high %v2257, %v2257
      %v2266 = vcombine.high %v2264, %v2264
      %v2268 = vunpack.c.l.s4 1966171168
      %v2269 = vunpack.c.0.s8 %v2268
      %v2270 = vlaneseq
      %v2271 = vshrl.u32 %v2270, 7
      %v2272 = vsub.s32 %v2269, %v2271
      %v2273 = vrot.slane %v2257, %v2272
      %v2275 = vunpack.c.l.s4 1966171168
      %v2276 = vunpack.c.0.s8 %v2275
      %v2277 = vlaneseq
      %v2278 = vshrl.u32 %v2277, 7
      %v2279 = vsub.s32 %v2276, %v2278
      %v2280 = vrot.slane %v2264, %v2279
      %v2282 = vunpack.c.l.s4 1966171168
      %v2283 = vunpack.c.0.s8 %v2282
      %v2284 = vlaneseq
      %v2285 = vshrl.u32 %v2284, 7
      %v2286 = vsub.s32 %v2283, %v2285
      %v2287 = vrot.slane %v2265, %v2286
      %v2289 = vunpack.c.l.s4 1966171168
      %v2290 = vunpack.c.0.s8 %v2289
      %v2291 = vlaneseq
      %v2292 = vshrl.u32 %v2291, 7
      %v2293 = vsub.s32 %v2290, %v2292
      %v2294 = vrot.slane %v2266, %v2293
      %v2295 = vcombine.high %v2273, %v2273
      %v2296 = vcombine.high %v2280, %v2280
      %v2297 = vcombine.high %v2287, %v2287
      %v2298 = vcombine.high %v2294, %v2294
      %v2299 = vcombine.high %v1297, %v1297
      %v2301 = vunpack.c.l.s4 1966171168
      %v2302 = vunpack.c.0.s8 %v2301
      %v2303 = vlaneseq
      %v2304 = vshrl.u32 %v2303, 7
      %v2305 = vsub.s32 %v2302, %v2304
      %v2306 = vrot.slane %v1297, %v2305
      %v2308 = vunpack.c.l.s4 1966171168
      %v2309 = vunpack.c.0.s8 %v2308
      %v2310 = vlaneseq
      %v2311 = vshrl.u32 %v2310, 7
      %v2312 = vsub.s32 %v2309, %v2311
      %v2313 = vrot.slane %v2299, %v2312
      %v2314 = vcombine.high %v2306, %v2306
      %v2315 = vcombine.high %v2313, %v2313
      %v2317 = vunpack.c.l.s4 1966171168
      %v2318 = vunpack.c.0.s8 %v2317
      %v2319 = vlaneseq
      %v2320 = vshrl.u32 %v2319, 7
      %v2321 = vsub.s32 %v2318, %v2320
      %v2322 = vrot.slane %v2306, %v2321
      %v2324 = vunpack.c.l.s4 1966171168
      %v2325 = vunpack.c.0.s8 %v2324
      %v2326 = vlaneseq
      %v2327 = vshrl.u32 %v2326, 7
      %v2328 = vsub.s32 %v2325, %v2327
      %v2329 = vrot.slane %v2313, %v2328
      %v2331 = vunpack.c.l.s4 1966171168
      %v2332 = vunpack.c.0.s8 %v2331
      %v2333 = vlaneseq
      %v2334 = vshrl.u32 %v2333, 7
      %v2335 = vsub.s32 %v2332, %v2334
      %v2336 = vrot.slane %v2314, %v2335
      %v2338 = vunpack.c.l.s4 1966171168
      %v2339 = vunpack.c.0.s8 %v2338
      %v2340 = vlaneseq
      %v2341 = vshrl.u32 %v2340, 7
      %v2342 = vsub.s32 %v2339, %v2341
      %v2343 = vrot.slane %v2315, %v2342
      %v2344 = vcombine.high %v2322, %v2322
      %v2345 = vcombine.high %v2329, %v2329
      %v2346 = vcombine.high %v2336, %v2336
      %v2347 = vcombine.high %v2343, %v2343
      %v2348 = vcombine.high %v1298, %v1298
      %v2350 = vunpack.c.l.s4 1966171168
      %v2351 = vunpack.c.0.s8 %v2350
      %v2352 = vlaneseq
      %v2353 = vshrl.u32 %v2352, 7
      %v2354 = vsub.s32 %v2351, %v2353
      %v2355 = vrot.slane %v1298, %v2354
      %v2357 = vunpack.c.l.s4 1966171168
      %v2358 = vunpack.c.0.s8 %v2357
      %v2359 = vlaneseq
      %v2360 = vshrl.u32 %v2359, 7
      %v2361 = vsub.s32 %v2358, %v2360
      %v2362 = vrot.slane %v2348, %v2361
      %v2363 = vcombine.high %v2355, %v2355
      %v2364 = vcombine.high %v2362, %v2362
      %v2366 = vunpack.c.l.s4 1966171168
      %v2367 = vunpack.c.0.s8 %v2366
      %v2368 = vlaneseq
      %v2369 = vshrl.u32 %v2368, 7
      %v2370 = vsub.s32 %v2367, %v2369
      %v2371 = vrot.slane %v2355, %v2370
      %v2373 = vunpack.c.l.s4 1966171168
      %v2374 = vunpack.c.0.s8 %v2373
      %v2375 = vlaneseq
      %v2376 = vshrl.u32 %v2375, 7
      %v2377 = vsub.s32 %v2374, %v2376
      %v2378 = vrot.slane %v2362, %v2377
      %v2380 = vunpack.c.l.s4 1966171168
      %v2381 = vunpack.c.0.s8 %v2380
      %v2382 = vlaneseq
      %v2383 = vshrl.u32 %v2382, 7
      %v2384 = vsub.s32 %v2381, %v2383
      %v2385 = vrot.slane %v2363, %v2384
      %v2387 = vunpack.c.l.s4 1966171168
      %v2388 = vunpack.c.0.s8 %v2387
      %v2389 = vlaneseq
      %v2390 = vshrl.u32 %v2389, 7
      %v2391 = vsub.s32 %v2388, %v2390
      %v2392 = vrot.slane %v2364, %v2391
      %v2393 = vcombine.high %v2371, %v2371
      %v2394 = vcombine.high %v2378, %v2378
      %v2395 = vcombine.high %v2385, %v2385
      %v2396 = vcombine.high %v2392, %v2392
      %v2397 = vcombine.high %v1299, %v1299
      %v2399 = vunpack.c.l.s4 1966171168
      %v2400 = vunpack.c.0.s8 %v2399
      %v2401 = vlaneseq
      %v2402 = vshrl.u32 %v2401, 7
      %v2403 = vsub.s32 %v2400, %v2402
      %v2404 = vrot.slane %v1299, %v2403
      %v2406 = vunpack.c.l.s4 1966171168
      %v2407 = vunpack.c.0.s8 %v2406
      %v2408 = vlaneseq
      %v2409 = vshrl.u32 %v2408, 7
      %v2410 = vsub.s32 %v2407, %v2409
      %v2411 = vrot.slane %v2397, %v2410
      %v2412 = vcombine.high %v2404, %v2404
      %v2413 = vcombine.high %v2411, %v2411
      %v2415 = vunpack.c.l.s4 1966171168
      %v2416 = vunpack.c.0.s8 %v2415
      %v2417 = vlaneseq
      %v2418 = vshrl.u32 %v2417, 7
      %v2419 = vsub.s32 %v2416, %v2418
      %v2420 = vrot.slane %v2404, %v2419
      %v2422 = vunpack.c.l.s4 1966171168
      %v2423 = vunpack.c.0.s8 %v2422
      %v2424 = vlaneseq
      %v2425 = vshrl.u32 %v2424, 7
      %v2426 = vsub.s32 %v2423, %v2425
      %v2427 = vrot.slane %v2411, %v2426
      %v2429 = vunpack.c.l.s4 1966171168
      %v2430 = vunpack.c.0.s8 %v2429
      %v2431 = vlaneseq
      %v2432 = vshrl.u32 %v2431, 7
      %v2433 = vsub.s32 %v2430, %v2432
      %v2434 = vrot.slane %v2412, %v2433
      %v2436 = vunpack.c.l.s4 1966171168
      %v2437 = vunpack.c.0.s8 %v2436
      %v2438 = vlaneseq
      %v2439 = vshrl.u32 %v2438, 7
      %v2440 = vsub.s32 %v2437, %v2439
      %v2441 = vrot.slane %v2413, %v2440
      %v2442 = vcombine.high %v2420, %v2420
      %v2443 = vcombine.high %v2427, %v2427
      %v2444 = vcombine.high %v2434, %v2434
      %v2445 = vcombine.high %v2441, %v2441
      %v2446 = vcombine.high %v1300, %v1300
      %v2448 = vunpack.c.l.s4 1966171168
      %v2449 = vunpack.c.0.s8 %v2448
      %v2450 = vlaneseq
      %v2451 = vshrl.u32 %v2450, 7
      %v2452 = vsub.s32 %v2449, %v2451
      %v2453 = vrot.slane %v1300, %v2452
      %v2455 = vunpack.c.l.s4 1966171168
      %v2456 = vunpack.c.0.s8 %v2455
      %v2457 = vlaneseq
      %v2458 = vshrl.u32 %v2457, 7
      %v2459 = vsub.s32 %v2456, %v2458
      %v2460 = vrot.slane %v2446, %v2459
      %v2461 = vcombine.high %v2453, %v2453
      %v2462 = vcombine.high %v2460, %v2460
      %v2464 = vunpack.c.l.s4 1966171168
      %v2465 = vunpack.c.0.s8 %v2464
      %v2466 = vlaneseq
      %v2467 = vshrl.u32 %v2466, 7
      %v2468 = vsub.s32 %v2465, %v2467
      %v2469 = vrot.slane %v2453, %v2468
      %v2471 = vunpack.c.l.s4 1966171168
      %v2472 = vunpack.c.0.s8 %v2471
      %v2473 = vlaneseq
      %v2474 = vshrl.u32 %v2473, 7
      %v2475 = vsub.s32 %v2472, %v2474
      %v2476 = vrot.slane %v2460, %v2475
      %v2478 = vunpack.c.l.s4 1966171168
      %v2479 = vunpack.c.0.s8 %v2478
      %v2480 = vlaneseq
      %v2481 = vshrl.u32 %v2480, 7
      %v2482 = vsub.s32 %v2479, %v2481
      %v2483 = vrot.slane %v2461, %v2482
      %v2485 = vunpack.c.l.s4 1966171168
      %v2486 = vunpack.c.0.s8 %v2485
      %v2487 = vlaneseq
      %v2488 = vshrl.u32 %v2487, 7
      %v2489 = vsub.s32 %v2486, %v2488
      %v2490 = vrot.slane %v2462, %v2489
      %v2491 = vcombine.high %v2469, %v2469
      %v2492 = vcombine.high %v2476, %v2476
      %v2493 = vcombine.high %v2483, %v2483
      %v2494 = vcombine.high %v2490, %v2490
      %v2495 = vcombine.high %v1301, %v1301
      %v2497 = vunpack.c.l.s4 1966171168
      %v2498 = vunpack.c.0.s8 %v2497
      %v2499 = vlaneseq
      %v2500 = vshrl.u32 %v2499, 7
      %v2501 = vsub.s32 %v2498, %v2500
      %v2502 = vrot.slane %v1301, %v2501
      %v2504 = vunpack.c.l.s4 1966171168
      %v2505 = vunpack.c.0.s8 %v2504
      %v2506 = vlaneseq
      %v2507 = vshrl.u32 %v2506, 7
      %v2508 = vsub.s32 %v2505, %v2507
      %v2509 = vrot.slane %v2495, %v2508
      %v2510 = vcombine.high %v2502, %v2502
      %v2511 = vcombine.high %v2509, %v2509
      %v2513 = vunpack.c.l.s4 1966171168
      %v2514 = vunpack.c.0.s8 %v2513
      %v2515 = vlaneseq
      %v2516 = vshrl.u32 %v2515, 7
      %v2517 = vsub.s32 %v2514, %v2516
      %v2518 = vrot.slane %v2502, %v2517
      %v2520 = vunpack.c.l.s4 1966171168
      %v2521 = vunpack.c.0.s8 %v2520
      %v2522 = vlaneseq
      %v2523 = vshrl.u32 %v2522, 7
      %v2524 = vsub.s32 %v2521, %v2523
      %v2525 = vrot.slane %v2509, %v2524
      %v2527 = vunpack.c.l.s4 1966171168
      %v2528 = vunpack.c.0.s8 %v2527
      %v2529 = vlaneseq
      %v2530 = vshrl.u32 %v2529, 7
      %v2531 = vsub.s32 %v2528, %v2530
      %v2532 = vrot.slane %v2510, %v2531
      %v2534 = vunpack.c.l.s4 1966171168
      %v2535 = vunpack.c.0.s8 %v2534
      %v2536 = vlaneseq
      %v2537 = vshrl.u32 %v2536, 7
      %v2538 = vsub.s32 %v2535, %v2537
      %v2539 = vrot.slane %v2511, %v2538
      %v2540 = vcombine.high %v2518, %v2518
      %v2541 = vcombine.high %v2525, %v2525
      %v2542 = vcombine.high %v2532, %v2532
      %v2543 = vcombine.high %v2539, %v2539
      %v2544 = vcombine.high %v1302, %v1302
      %v2546 = vunpack.c.l.s4 1966171168
      %v2547 = vunpack.c.0.s8 %v2546
      %v2548 = vlaneseq
      %v2549 = vshrl.u32 %v2548, 7
      %v2550 = vsub.s32 %v2547, %v2549
      %v2551 = vrot.slane %v1302, %v2550
      %v2553 = vunpack.c.l.s4 1966171168
      %v2554 = vunpack.c.0.s8 %v2553
      %v2555 = vlaneseq
      %v2556 = vshrl.u32 %v2555, 7
      %v2557 = vsub.s32 %v2554, %v2556
      %v2558 = vrot.slane %v2544, %v2557
      %v2559 = vcombine.high %v2551, %v2551
      %v2560 = vcombine.high %v2558, %v2558
      %v2562 = vunpack.c.l.s4 1966171168
      %v2563 = vunpack.c.0.s8 %v2562
      %v2564 = vlaneseq
      %v2565 = vshrl.u32 %v2564, 7
      %v2566 = vsub.s32 %v2563, %v2565
      %v2567 = vrot.slane %v2551, %v2566
      %v2569 = vunpack.c.l.s4 1966171168
      %v2570 = vunpack.c.0.s8 %v2569
      %v2571 = vlaneseq
      %v2572 = vshrl.u32 %v2571, 7
      %v2573 = vsub.s32 %v2570, %v2572
      %v2574 = vrot.slane %v2558, %v2573
      %v2576 = vunpack.c.l.s4 1966171168
      %v2577 = vunpack.c.0.s8 %v2576
      %v2578 = vlaneseq
      %v2579 = vshrl.u32 %v2578, 7
      %v2580 = vsub.s32 %v2577, %v2579
      %v2581 = vrot.slane %v2559, %v2580
      %v2583 = vunpack.c.l.s4 1966171168
      %v2584 = vunpack.c.0.s8 %v2583
      %v2585 = vlaneseq
      %v2586 = vshrl.u32 %v2585, 7
      %v2587 = vsub.s32 %v2584, %v2586
      %v2588 = vrot.slane %v2560, %v2587
      %v2589 = vcombine.high %v2567, %v2567
      %v2590 = vcombine.high %v2574, %v2574
      %v2591 = vcombine.high %v2581, %v2581
      %v2592 = vcombine.high %v2588, %v2588
      %v2593 = vcombine.high %v1303, %v1303
      %v2595 = vunpack.c.l.s4 1966171168
      %v2596 = vunpack.c.0.s8 %v2595
      %v2597 = vlaneseq
      %v2598 = vshrl.u32 %v2597, 7
      %v2599 = vsub.s32 %v2596, %v2598
      %v2600 = vrot.slane %v1303, %v2599
      %v2602 = vunpack.c.l.s4 1966171168
      %v2603 = vunpack.c.0.s8 %v2602
      %v2604 = vlaneseq
      %v2605 = vshrl.u32 %v2604, 7
      %v2606 = vsub.s32 %v2603, %v2605
      %v2607 = vrot.slane %v2593, %v2606
      %v2608 = vcombine.high %v2600, %v2600
      %v2609 = vcombine.high %v2607, %v2607
      %v2611 = vunpack.c.l.s4 1966171168
      %v2612 = vunpack.c.0.s8 %v2611
      %v2613 = vlaneseq
      %v2614 = vshrl.u32 %v2613, 7
      %v2615 = vsub.s32 %v2612, %v2614
      %v2616 = vrot.slane %v2600, %v2615
      %v2618 = vunpack.c.l.s4 1966171168
      %v2619 = vunpack.c.0.s8 %v2618
      %v2620 = vlaneseq
      %v2621 = vshrl.u32 %v2620, 7
      %v2622 = vsub.s32 %v2619, %v2621
      %v2623 = vrot.slane %v2607, %v2622
      %v2625 = vunpack.c.l.s4 1966171168
      %v2626 = vunpack.c.0.s8 %v2625
      %v2627 = vlaneseq
      %v2628 = vshrl.u32 %v2627, 7
      %v2629 = vsub.s32 %v2626, %v2628
      %v2630 = vrot.slane %v2608, %v2629
      %v2632 = vunpack.c.l.s4 1966171168
      %v2633 = vunpack.c.0.s8 %v2632
      %v2634 = vlaneseq
      %v2635 = vshrl.u32 %v2634, 7
      %v2636 = vsub.s32 %v2633, %v2635
      %v2637 = vrot.slane %v2609, %v2636
      %v2638 = vcombine.high %v2616, %v2616
      %v2639 = vcombine.high %v2623, %v2623
      %v2640 = vcombine.high %v2630, %v2630
      %v2641 = vcombine.high %v2637, %v2637
      %v2642 = vcombine.high %v1304, %v1304
      %v2644 = vunpack.c.l.s4 1966171168
      %v2645 = vunpack.c.0.s8 %v2644
      %v2646 = vlaneseq
      %v2647 = vshrl.u32 %v2646, 7
      %v2648 = vsub.s32 %v2645, %v2647
      %v2649 = vrot.slane %v1304, %v2648
      %v2651 = vunpack.c.l.s4 1966171168
      %v2652 = vunpack.c.0.s8 %v2651
      %v2653 = vlaneseq
      %v2654 = vshrl.u32 %v2653, 7
      %v2655 = vsub.s32 %v2652, %v2654
      %v2656 = vrot.slane %v2642, %v2655
      %v2657 = vcombine.high %v2649, %v2649
      %v2658 = vcombine.high %v2656, %v2656
      %v2660 = vunpack.c.l.s4 1966171168
      %v2661 = vunpack.c.0.s8 %v2660
      %v2662 = vlaneseq
      %v2663 = vshrl.u32 %v2662, 7
      %v2664 = vsub.s32 %v2661, %v2663
      %v2665 = vrot.slane %v2649, %v2664
      %v2667 = vunpack.c.l.s4 1966171168
      %v2668 = vunpack.c.0.s8 %v2667
      %v2669 = vlaneseq
      %v2670 = vshrl.u32 %v2669, 7
      %v2671 = vsub.s32 %v2668, %v2670
      %v2672 = vrot.slane %v2656, %v2671
      %v2674 = vunpack.c.l.s4 1966171168
      %v2675 = vunpack.c.0.s8 %v2674
      %v2676 = vlaneseq
      %v2677 = vshrl.u32 %v2676, 7
      %v2678 = vsub.s32 %v2675, %v2677
      %v2679 = vrot.slane %v2657, %v2678
      %v2681 = vunpack.c.l.s4 1966171168
      %v2682 = vunpack.c.0.s8 %v2681
      %v2683 = vlaneseq
      %v2684 = vshrl.u32 %v2683, 7
      %v2685 = vsub.s32 %v2682, %v2684
      %v2686 = vrot.slane %v2658, %v2685
      %v2687 = vcombine.high %v2665, %v2665
      %v2688 = vcombine.high %v2672, %v2672
      %v2689 = vcombine.high %v2679, %v2679
      %v2690 = vcombine.high %v2686, %v2686
      %v2691 = vcombine.high %v1305, %v1305
      %v2693 = vunpack.c.l.s4 1966171168
      %v2694 = vunpack.c.0.s8 %v2693
      %v2695 = vlaneseq
      %v2696 = vshrl.u32 %v2695, 7
      %v2697 = vsub.s32 %v2694, %v2696
      %v2698 = vrot.slane %v1305, %v2697
      %v2700 = vunpack.c.l.s4 1966171168
      %v2701 = vunpack.c.0.s8 %v2700
      %v2702 = vlaneseq
      %v2703 = vshrl.u32 %v2702, 7
      %v2704 = vsub.s32 %v2701, %v2703
      %v2705 = vrot.slane %v2691, %v2704
      %v2706 = vcombine.high %v2698, %v2698
      %v2707 = vcombine.high %v2705, %v2705
      %v2709 = vunpack.c.l.s4 1966171168
      %v2710 = vunpack.c.0.s8 %v2709
      %v2711 = vlaneseq
      %v2712 = vshrl.u32 %v2711, 7
      %v2713 = vsub.s32 %v2710, %v2712
      %v2714 = vrot.slane %v2698, %v2713
      %v2716 = vunpack.c.l.s4 1966171168
      %v2717 = vunpack.c.0.s8 %v2716
      %v2718 = vlaneseq
      %v2719 = vshrl.u32 %v2718, 7
      %v2720 = vsub.s32 %v2717, %v2719
      %v2721 = vrot.slane %v2705, %v2720
      %v2723 = vunpack.c.l.s4 1966171168
      %v2724 = vunpack.c.0.s8 %v2723
      %v2725 = vlaneseq
      %v2726 = vshrl.u32 %v2725, 7
      %v2727 = vsub.s32 %v2724, %v2726
      %v2728 = vrot.slane %v2706, %v2727
      %v2730 = vunpack.c.l.s4 1966171168
      %v2731 = vunpack.c.0.s8 %v2730
      %v2732 = vlaneseq
      %v2733 = vshrl.u32 %v2732, 7
      %v2734 = vsub.s32 %v2731, %v2733
      %v2735 = vrot.slane %v2707, %v2734
      %v2736 = vcombine.high %v2714, %v2714
      %v2737 = vcombine.high %v2721, %v2721
      %v2738 = vcombine.high %v2728, %v2728
      %v2739 = vcombine.high %v2735, %v2735
      %v2740 = vcombine.high %v1306, %v1306
      %v2742 = vunpack.c.l.s4 1966171168
      %v2743 = vunpack.c.0.s8 %v2742
      %v2744 = vlaneseq
      %v2745 = vshrl.u32 %v2744, 7
      %v2746 = vsub.s32 %v2743, %v2745
      %v2747 = vrot.slane %v1306, %v2746
      %v2749 = vunpack.c.l.s4 1966171168
      %v2750 = vunpack.c.0.s8 %v2749
      %v2751 = vlaneseq
      %v2752 = vshrl.u32 %v2751, 7
      %v2753 = vsub.s32 %v2750, %v2752
      %v2754 = vrot.slane %v2740, %v2753
      %v2755 = vcombine.high %v2747, %v2747
      %v2756 = vcombine.high %v2754, %v2754
      %v2758 = vunpack.c.l.s4 1966171168
      %v2759 = vunpack.c.0.s8 %v2758
      %v2760 = vlaneseq
      %v2761 = vshrl.u32 %v2760, 7
      %v2762 = vsub.s32 %v2759, %v2761
      %v2763 = vrot.slane %v2747, %v2762
      %v2765 = vunpack.c.l.s4 1966171168
      %v2766 = vunpack.c.0.s8 %v2765
      %v2767 = vlaneseq
      %v2768 = vshrl.u32 %v2767, 7
      %v2769 = vsub.s32 %v2766, %v2768
      %v2770 = vrot.slane %v2754, %v2769
      %v2772 = vunpack.c.l.s4 1966171168
      %v2773 = vunpack.c.0.s8 %v2772
      %v2774 = vlaneseq
      %v2775 = vshrl.u32 %v2774, 7
      %v2776 = vsub.s32 %v2773, %v2775
      %v2777 = vrot.slane %v2755, %v2776
      %v2779 = vunpack.c.l.s4 1966171168
      %v2780 = vunpack.c.0.s8 %v2779
      %v2781 = vlaneseq
      %v2782 = vshrl.u32 %v2781, 7
      %v2783 = vsub.s32 %v2780, %v2782
      %v2784 = vrot.slane %v2756, %v2783
      %v2785 = vcombine.high %v2763, %v2763
      %v2786 = vcombine.high %v2770, %v2770
      %v2787 = vcombine.high %v2777, %v2777
      %v2788 = vcombine.high %v2784, %v2784
      %v2789 = vcombine.high %v1307, %v1307
      %v2791 = vunpack.c.l.s4 1966171168
      %v2792 = vunpack.c.0.s8 %v2791
      %v2793 = vlaneseq
      %v2794 = vshrl.u32 %v2793, 7
      %v2795 = vsub.s32 %v2792, %v2794
      %v2796 = vrot.slane %v1307, %v2795
      %v2798 = vunpack.c.l.s4 1966171168
      %v2799 = vunpack.c.0.s8 %v2798
      %v2800 = vlaneseq
      %v2801 = vshrl.u32 %v2800, 7
      %v2802 = vsub.s32 %v2799, %v2801
      %v2803 = vrot.slane %v2789, %v2802
      %v2804 = vcombine.high %v2796, %v2796
      %v2805 = vcombine.high %v2803, %v2803
      %v2807 = vunpack.c.l.s4 1966171168
      %v2808 = vunpack.c.0.s8 %v2807
      %v2809 = vlaneseq
      %v2810 = vshrl.u32 %v2809, 7
      %v2811 = vsub.s32 %v2808, %v2810
      %v2812 = vrot.slane %v2796, %v2811
      %v2814 = vunpack.c.l.s4 1966171168
      %v2815 = vunpack.c.0.s8 %v2814
      %v2816 = vlaneseq
      %v2817 = vshrl.u32 %v2816, 7
      %v2818 = vsub.s32 %v2815, %v2817
      %v2819 = vrot.slane %v2803, %v2818
      %v2821 = vunpack.c.l.s4 1966171168
      %v2822 = vunpack.c.0.s8 %v2821
      %v2823 = vlaneseq
      %v2824 = vshrl.u32 %v2823, 7
      %v2825 = vsub.s32 %v2822, %v2824
      %v2826 = vrot.slane %v2804, %v2825
      %v2828 = vunpack.c.l.s4 1966171168
      %v2829 = vunpack.c.0.s8 %v2828
      %v2830 = vlaneseq
      %v2831 = vshrl.u32 %v2830, 7
      %v2832 = vsub.s32 %v2829, %v2831
      %v2833 = vrot.slane %v2805, %v2832
      %v2834 = vcombine.high %v2812, %v2812
      %v2835 = vcombine.high %v2819, %v2819
      %v2836 = vcombine.high %v2826, %v2826
      %v2837 = vcombine.high %v2833, %v2833
      %v2982 = vcombine.high %v2022, %v2022
      %v2984 = vunpack.c.l.s4 1966171168
      %v2985 = vunpack.c.0.s8 %v2984
      %v2986 = vlaneseq
      %v2987 = vshrl.u32 %v2986, 7
      %v2988 = vsub.s32 %v2985, %v2987
      %v2989 = vrot.slane %v2022, %v2988
      %v2991 = vunpack.c.l.s4 1966171168
      %v2992 = vunpack.c.0.s8 %v2991
      %v2993 = vlaneseq
      %v2994 = vshrl.u32 %v2993, 7
      %v2995 = vsub.s32 %v2992, %v2994
      %v2996 = vrot.slane %v2982, %v2995
      %v2997 = vcombine.high %v2989, %v2989
      %v2998 = vcombine.high %v2996, %v2996
      %v3000 = vunpack.c.l.s4 1966171168
      %v3001 = vunpack.c.0.s8 %v3000
      %v3002 = vlaneseq
      %v3003 = vshrl.u32 %v3002, 7
      %v3004 = vsub.s32 %v3001, %v3003
      %v3005 = vrot.slane %v2989, %v3004
      %v3007 = vunpack.c.l.s4 1966171168
      %v3008 = vunpack.c.0.s8 %v3007
      %v3009 = vlaneseq
      %v3010 = vshrl.u32 %v3009, 7
      %v3011 = vsub.s32 %v3008, %v3010
      %v3012 = vrot.slane %v2996, %v3011
      %v3014 = vunpack.c.l.s4 1966171168
      %v3015 = vunpack.c.0.s8 %v3014
      %v3016 = vlaneseq
      %v3017 = vshrl.u32 %v3016, 7
      %v3018 = vsub.s32 %v3015, %v3017
      %v3019 = vrot.slane %v2997, %v3018
      %v3021 = vunpack.c.l.s4 1966171168
      %v3022 = vunpack.c.0.s8 %v3021
      %v3023 = vlaneseq
      %v3024 = vshrl.u32 %v3023, 7
      %v3025 = vsub.s32 %v3022, %v3024
      %v3026 = vrot.slane %v2998, %v3025
      %v3027 = vcombine.high %v3005, %v3005
      %v3028 = vcombine.high %v3012, %v3012
      %v3029 = vcombine.high %v3019, %v3019
      %v3030 = vcombine.high %v3026, %v3026
      %v3031 = vcombine.high %v2023, %v2023
      %v3033 = vunpack.c.l.s4 1966171168
      %v3034 = vunpack.c.0.s8 %v3033
      %v3035 = vlaneseq
      %v3036 = vshrl.u32 %v3035, 7
      %v3037 = vsub.s32 %v3034, %v3036
      %v3038 = vrot.slane %v2023, %v3037
      %v3040 = vunpack.c.l.s4 1966171168
      %v3041 = vunpack.c.0.s8 %v3040
      %v3042 = vlaneseq
      %v3043 = vshrl.u32 %v3042, 7
      %v3044 = vsub.s32 %v3041, %v3043
      %v3045 = vrot.slane %v3031, %v3044
      %v3046 = vcombine.high %v3038, %v3038
      %v3047 = vcombine.high %v3045, %v3045
      %v3049 = vunpack.c.l.s4 1966171168
      %v3050 = vunpack.c.0.s8 %v3049
      %v3051 = vlaneseq
      %v3052 = vshrl.u32 %v3051, 7
      %v3053 = vsub.s32 %v3050, %v3052
      %v3054 = vrot.slane %v3038, %v3053
      %v3056 = vunpack.c.l.s4 1966171168
      %v3057 = vunpack.c.0.s8 %v3056
      %v3058 = vlaneseq
      %v3059 = vshrl.u32 %v3058, 7
      %v3060 = vsub.s32 %v3057, %v3059
      %v3061 = vrot.slane %v3045, %v3060
      %v3063 = vunpack.c.l.s4 1966171168
      %v3064 = vunpack.c.0.s8 %v3063
      %v3065 = vlaneseq
      %v3066 = vshrl.u32 %v3065, 7
      %v3067 = vsub.s32 %v3064, %v3066
      %v3068 = vrot.slane %v3046, %v3067
      %v3070 = vunpack.c.l.s4 1966171168
      %v3071 = vunpack.c.0.s8 %v3070
      %v3072 = vlaneseq
      %v3073 = vshrl.u32 %v3072, 7
      %v3074 = vsub.s32 %v3071, %v3073
      %v3075 = vrot.slane %v3047, %v3074
      %v3076 = vcombine.high %v3054, %v3054
      %v3077 = vcombine.high %v3061, %v3061
      %v3078 = vcombine.high %v3068, %v3068
      %v3079 = vcombine.high %v3075, %v3075
      %v3080 = vcombine.high %v2024, %v2024
      %v3082 = vunpack.c.l.s4 1966171168
      %v3083 = vunpack.c.0.s8 %v3082
      %v3084 = vlaneseq
      %v3085 = vshrl.u32 %v3084, 7
      %v3086 = vsub.s32 %v3083, %v3085
      %v3087 = vrot.slane %v2024, %v3086
      %v3089 = vunpack.c.l.s4 1966171168
      %v3090 = vunpack.c.0.s8 %v3089
      %v3091 = vlaneseq
      %v3092 = vshrl.u32 %v3091, 7
      %v3093 = vsub.s32 %v3090, %v3092
      %v3094 = vrot.slane %v3080, %v3093
      %v3095 = vcombine.high %v3087, %v3087
      %v3096 = vcombine.high %v3094, %v3094
      %v3098 = vunpack.c.l.s4 1966171168
      %v3099 = vunpack.c.0.s8 %v3098
      %v3100 = vlaneseq
      %v3101 = vshrl.u32 %v3100, 7
      %v3102 = vsub.s32 %v3099, %v3101
      %v3103 = vrot.slane %v3087, %v3102
      %v3105 = vunpack.c.l.s4 1966171168
      %v3106 = vunpack.c.0.s8 %v3105
      %v3107 = vlaneseq
      %v3108 = vshrl.u32 %v3107, 7
      %v3109 = vsub.s32 %v3106, %v3108
      %v3110 = vrot.slane %v3094, %v3109
      %v3112 = vunpack.c.l.s4 1966171168
      %v3113 = vunpack.c.0.s8 %v3112
      %v3114 = vlaneseq
      %v3115 = vshrl.u32 %v3114, 7
      %v3116 = vsub.s32 %v3113, %v3115
      %v3117 = vrot.slane %v3095, %v3116
      %v3119 = vunpack.c.l.s4 1966171168
      %v3120 = vunpack.c.0.s8 %v3119
      %v3121 = vlaneseq
      %v3122 = vshrl.u32 %v3121, 7
      %v3123 = vsub.s32 %v3120, %v3122
      %v3124 = vrot.slane %v3096, %v3123
      %v3125 = vcombine.high %v3103, %v3103
      %v3126 = vcombine.high %v3110, %v3110
      %v3127 = vcombine.high %v3117, %v3117
      %v3128 = vcombine.high %v3124, %v3124
      %v3129 = vcombine.high %v2025, %v2025
      %v3131 = vunpack.c.l.s4 1966171168
      %v3132 = vunpack.c.0.s8 %v3131
      %v3133 = vlaneseq
      %v3134 = vshrl.u32 %v3133, 7
      %v3135 = vsub.s32 %v3132, %v3134
      %v3136 = vrot.slane %v2025, %v3135
      %v3138 = vunpack.c.l.s4 1966171168
      %v3139 = vunpack.c.0.s8 %v3138
      %v3140 = vlaneseq
      %v3141 = vshrl.u32 %v3140, 7
      %v3142 = vsub.s32 %v3139, %v3141
      %v3143 = vrot.slane %v3129, %v3142
      %v3144 = vcombine.high %v3136, %v3136
      %v3145 = vcombine.high %v3143, %v3143
      %v3147 = vunpack.c.l.s4 1966171168
      %v3148 = vunpack.c.0.s8 %v3147
      %v3149 = vlaneseq
      %v3150 = vshrl.u32 %v3149, 7
      %v3151 = vsub.s32 %v3148, %v3150
      %v3152 = vrot.slane %v3136, %v3151
      %v3154 = vunpack.c.l.s4 1966171168
      %v3155 = vunpack.c.0.s8 %v3154
      %v3156 = vlaneseq
      %v3157 = vshrl.u32 %v3156, 7
      %v3158 = vsub.s32 %v3155, %v3157
      %v3159 = vrot.slane %v3143, %v3158
      %v3161 = vunpack.c.l.s4 1966171168
      %v3162 = vunpack.c.0.s8 %v3161
      %v3163 = vlaneseq
      %v3164 = vshrl.u32 %v3163, 7
      %v3165 = vsub.s32 %v3162, %v3164
      %v3166 = vrot.slane %v3144, %v3165
      %v3168 = vunpack.c.l.s4 1966171168
      %v3169 = vunpack.c.0.s8 %v3168
      %v3170 = vlaneseq
      %v3171 = vshrl.u32 %v3170, 7
      %v3172 = vsub.s32 %v3169, %v3171
      %v3173 = vrot.slane %v3145, %v3172
      %v3174 = vcombine.high %v3152, %v3152
      %v3175 = vcombine.high %v3159, %v3159
      %v3176 = vcombine.high %v3166, %v3166
      %v3177 = vcombine.high %v3173, %v3173
      %v3178 = vcombine.high %v2026, %v2026
      %v3180 = vunpack.c.l.s4 1966171168
      %v3181 = vunpack.c.0.s8 %v3180
      %v3182 = vlaneseq
      %v3183 = vshrl.u32 %v3182, 7
      %v3184 = vsub.s32 %v3181, %v3183
      %v3185 = vrot.slane %v2026, %v3184
      %v3187 = vunpack.c.l.s4 1966171168
      %v3188 = vunpack.c.0.s8 %v3187
      %v3189 = vlaneseq
      %v3190 = vshrl.u32 %v3189, 7
      %v3191 = vsub.s32 %v3188, %v3190
      %v3192 = vrot.slane %v3178, %v3191
      %v3193 = vcombine.high %v3185, %v3185
      %v3194 = vcombine.high %v3192, %v3192
      %v3196 = vunpack.c.l.s4 1966171168
      %v3197 = vunpack.c.0.s8 %v3196
      %v3198 = vlaneseq
      %v3199 = vshrl.u32 %v3198, 7
      %v3200 = vsub.s32 %v3197, %v3199
      %v3201 = vrot.slane %v3185, %v3200
      %v3203 = vunpack.c.l.s4 1966171168
      %v3204 = vunpack.c.0.s8 %v3203
      %v3205 = vlaneseq
      %v3206 = vshrl.u32 %v3205, 7
      %v3207 = vsub.s32 %v3204, %v3206
      %v3208 = vrot.slane %v3192, %v3207
      %v3210 = vunpack.c.l.s4 1966171168
      %v3211 = vunpack.c.0.s8 %v3210
      %v3212 = vlaneseq
      %v3213 = vshrl.u32 %v3212, 7
      %v3214 = vsub.s32 %v3211, %v3213
      %v3215 = vrot.slane %v3193, %v3214
      %v3217 = vunpack.c.l.s4 1966171168
      %v3218 = vunpack.c.0.s8 %v3217
      %v3219 = vlaneseq
      %v3220 = vshrl.u32 %v3219, 7
      %v3221 = vsub.s32 %v3218, %v3220
      %v3222 = vrot.slane %v3194, %v3221
      %v3223 = vcombine.high %v3201, %v3201
      %v3224 = vcombine.high %v3208, %v3208
      %v3225 = vcombine.high %v3215, %v3215
      %v3226 = vcombine.high %v3222, %v3222
      %v3227 = vcombine.high %v2027, %v2027
      %v3229 = vunpack.c.l.s4 1966171168
      %v3230 = vunpack.c.0.s8 %v3229
      %v3231 = vlaneseq
      %v3232 = vshrl.u32 %v3231, 7
      %v3233 = vsub.s32 %v3230, %v3232
      %v3234 = vrot.slane %v2027, %v3233
      %v3236 = vunpack.c.l.s4 1966171168
      %v3237 = vunpack.c.0.s8 %v3236
      %v3238 = vlaneseq
      %v3239 = vshrl.u32 %v3238, 7
      %v3240 = vsub.s32 %v3237, %v3239
      %v3241 = vrot.slane %v3227, %v3240
      %v3242 = vcombine.high %v3234, %v3234
      %v3243 = vcombine.high %v3241, %v3241
      %v3245 = vunpack.c.l.s4 1966171168
      %v3246 = vunpack.c.0.s8 %v3245
      %v3247 = vlaneseq
      %v3248 = vshrl.u32 %v3247, 7
      %v3249 = vsub.s32 %v3246, %v3248
      %v3250 = vrot.slane %v3234, %v3249
      %v3252 = vunpack.c.l.s4 1966171168
      %v3253 = vunpack.c.0.s8 %v3252
      %v3254 = vlaneseq
      %v3255 = vshrl.u32 %v3254, 7
      %v3256 = vsub.s32 %v3253, %v3255
      %v3257 = vrot.slane %v3241, %v3256
      %v3259 = vunpack.c.l.s4 1966171168
      %v3260 = vunpack.c.0.s8 %v3259
      %v3261 = vlaneseq
      %v3262 = vshrl.u32 %v3261, 7
      %v3263 = vsub.s32 %v3260, %v3262
      %v3264 = vrot.slane %v3242, %v3263
      %v3266 = vunpack.c.l.s4 1966171168
      %v3267 = vunpack.c.0.s8 %v3266
      %v3268 = vlaneseq
      %v3269 = vshrl.u32 %v3268, 7
      %v3270 = vsub.s32 %v3267, %v3269
      %v3271 = vrot.slane %v3243, %v3270
      %v3272 = vcombine.high %v3250, %v3250
      %v3273 = vcombine.high %v3257, %v3257
      %v3274 = vcombine.high %v3264, %v3264
      %v3275 = vcombine.high %v3271, %v3271
      %v3276 = vcombine.high %v2028, %v2028
      %v3278 = vunpack.c.l.s4 1966171168
      %v3279 = vunpack.c.0.s8 %v3278
      %v3280 = vlaneseq
      %v3281 = vshrl.u32 %v3280, 7
      %v3282 = vsub.s32 %v3279, %v3281
      %v3283 = vrot.slane %v2028, %v3282
      %v3285 = vunpack.c.l.s4 1966171168
      %v3286 = vunpack.c.0.s8 %v3285
      %v3287 = vlaneseq
      %v3288 = vshrl.u32 %v3287, 7
      %v3289 = vsub.s32 %v3286, %v3288
      %v3290 = vrot.slane %v3276, %v3289
      %v3291 = vcombine.high %v3283, %v3283
      %v3292 = vcombine.high %v3290, %v3290
      %v3294 = vunpack.c.l.s4 1966171168
      %v3295 = vunpack.c.0.s8 %v3294
      %v3296 = vlaneseq
      %v3297 = vshrl.u32 %v3296, 7
      %v3298 = vsub.s32 %v3295, %v3297
      %v3299 = vrot.slane %v3283, %v3298
      %v3301 = vunpack.c.l.s4 1966171168
      %v3302 = vunpack.c.0.s8 %v3301
      %v3303 = vlaneseq
      %v3304 = vshrl.u32 %v3303, 7
      %v3305 = vsub.s32 %v3302, %v3304
      %v3306 = vrot.slane %v3290, %v3305
      %v3308 = vunpack.c.l.s4 1966171168
      %v3309 = vunpack.c.0.s8 %v3308
      %v3310 = vlaneseq
      %v3311 = vshrl.u32 %v3310, 7
      %v3312 = vsub.s32 %v3309, %v3311
      %v3313 = vrot.slane %v3291, %v3312
      %v3315 = vunpack.c.l.s4 1966171168
      %v3316 = vunpack.c.0.s8 %v3315
      %v3317 = vlaneseq
      %v3318 = vshrl.u32 %v3317, 7
      %v3319 = vsub.s32 %v3316, %v3318
      %v3320 = vrot.slane %v3292, %v3319
      %v3321 = vcombine.high %v3299, %v3299
      %v3322 = vcombine.high %v3306, %v3306
      %v3323 = vcombine.high %v3313, %v3313
      %v3324 = vcombine.high %v3320, %v3320
      %v3325 = vcombine.high %v2029, %v2029
      %v3327 = vunpack.c.l.s4 1966171168
      %v3328 = vunpack.c.0.s8 %v3327
      %v3329 = vlaneseq
      %v3330 = vshrl.u32 %v3329, 7
      %v3331 = vsub.s32 %v3328, %v3330
      %v3332 = vrot.slane %v2029, %v3331
      %v3334 = vunpack.c.l.s4 1966171168
      %v3335 = vunpack.c.0.s8 %v3334
      %v3336 = vlaneseq
      %v3337 = vshrl.u32 %v3336, 7
      %v3338 = vsub.s32 %v3335, %v3337
      %v3339 = vrot.slane %v3325, %v3338
      %v3340 = vcombine.high %v3332, %v3332
      %v3341 = vcombine.high %v3339, %v3339
      %v3343 = vunpack.c.l.s4 1966171168
      %v3344 = vunpack.c.0.s8 %v3343
      %v3345 = vlaneseq
      %v3346 = vshrl.u32 %v3345, 7
      %v3347 = vsub.s32 %v3344, %v3346
      %v3348 = vrot.slane %v3332, %v3347
      %v3350 = vunpack.c.l.s4 1966171168
      %v3351 = vunpack.c.0.s8 %v3350
      %v3352 = vlaneseq
      %v3353 = vshrl.u32 %v3352, 7
      %v3354 = vsub.s32 %v3351, %v3353
      %v3355 = vrot.slane %v3339, %v3354
      %v3357 = vunpack.c.l.s4 1966171168
      %v3358 = vunpack.c.0.s8 %v3357
      %v3359 = vlaneseq
      %v3360 = vshrl.u32 %v3359, 7
      %v3361 = vsub.s32 %v3358, %v3360
      %v3362 = vrot.slane %v3340, %v3361
      %v3364 = vunpack.c.l.s4 1966171168
      %v3365 = vunpack.c.0.s8 %v3364
      %v3366 = vlaneseq
      %v3367 = vshrl.u32 %v3366, 7
      %v3368 = vsub.s32 %v3365, %v3367
      %v3369 = vrot.slane %v3341, %v3368
      %v3370 = vcombine.high %v3348, %v3348
      %v3371 = vcombine.high %v3355, %v3355
      %v3372 = vcombine.high %v3362, %v3362
      %v3373 = vcombine.high %v3369, %v3369
      %v3374 = vcombine.high %v2030, %v2030
      %v3376 = vunpack.c.l.s4 1966171168
      %v3377 = vunpack.c.0.s8 %v3376
      %v3378 = vlaneseq
      %v3379 = vshrl.u32 %v3378, 7
      %v3380 = vsub.s32 %v3377, %v3379
      %v3381 = vrot.slane %v2030, %v3380
      %v3383 = vunpack.c.l.s4 1966171168
      %v3384 = vunpack.c.0.s8 %v3383
      %v3385 = vlaneseq
      %v3386 = vshrl.u32 %v3385, 7
      %v3387 = vsub.s32 %v3384, %v3386
      %v3388 = vrot.slane %v3374, %v3387
      %v3389 = vcombine.high %v3381, %v3381
      %v3390 = vcombine.high %v3388, %v3388
      %v3392 = vunpack.c.l.s4 1966171168
      %v3393 = vunpack.c.0.s8 %v3392
      %v3394 = vlaneseq
      %v3395 = vshrl.u32 %v3394, 7
      %v3396 = vsub.s32 %v3393, %v3395
      %v3397 = vrot.slane %v3381, %v3396
      %v3399 = vunpack.c.l.s4 1966171168
      %v3400 = vunpack.c.0.s8 %v3399
      %v3401 = vlaneseq
      %v3402 = vshrl.u32 %v3401, 7
      %v3403 = vsub.s32 %v3400, %v3402
      %v3404 = vrot.slane %v3388, %v3403
      %v3406 = vunpack.c.l.s4 1966171168
      %v3407 = vunpack.c.0.s8 %v3406
      %v3408 = vlaneseq
      %v3409 = vshrl.u32 %v3408, 7
      %v3410 = vsub.s32 %v3407, %v3409
      %v3411 = vrot.slane %v3389, %v3410
      %v3413 = vunpack.c.l.s4 1966171168
      %v3414 = vunpack.c.0.s8 %v3413
      %v3415 = vlaneseq
      %v3416 = vshrl.u32 %v3415, 7
      %v3417 = vsub.s32 %v3414, %v3416
      %v3418 = vrot.slane %v3390, %v3417
      %v3419 = vcombine.high %v3397, %v3397
      %v3420 = vcombine.high %v3404, %v3404
      %v3421 = vcombine.high %v3411, %v3411
      %v3422 = vcombine.high %v3418, %v3418
      %v3423 = vcombine.high %v2031, %v2031
      %v3425 = vunpack.c.l.s4 1966171168
      %v3426 = vunpack.c.0.s8 %v3425
      %v3427 = vlaneseq
      %v3428 = vshrl.u32 %v3427, 7
      %v3429 = vsub.s32 %v3426, %v3428
      %v3430 = vrot.slane %v2031, %v3429
      %v3432 = vunpack.c.l.s4 1966171168
      %v3433 = vunpack.c.0.s8 %v3432
      %v3434 = vlaneseq
      %v3435 = vshrl.u32 %v3434, 7
      %v3436 = vsub.s32 %v3433, %v3435
      %v3437 = vrot.slane %v3423, %v3436
      %v3438 = vcombine.high %v3430, %v3430
      %v3439 = vcombine.high %v3437, %v3437
      %v3441 = vunpack.c.l.s4 1966171168
      %v3442 = vunpack.c.0.s8 %v3441
      %v3443 = vlaneseq
      %v3444 = vshrl.u32 %v3443, 7
      %v3445 = vsub.s32 %v3442, %v3444
      %v3446 = vrot.slane %v3430, %v3445
      %v3448 = vunpack.c.l.s4 1966171168
      %v3449 = vunpack.c.0.s8 %v3448
      %v3450 = vlaneseq
      %v3451 = vshrl.u32 %v3450, 7
      %v3452 = vsub.s32 %v3449, %v3451
      %v3453 = vrot.slane %v3437, %v3452
      %v3455 = vunpack.c.l.s4 1966171168
      %v3456 = vunpack.c.0.s8 %v3455
      %v3457 = vlaneseq
      %v3458 = vshrl.u32 %v3457, 7
      %v3459 = vsub.s32 %v3456, %v3458
      %v3460 = vrot.slane %v3438, %v3459
      %v3462 = vunpack.c.l.s4 1966171168
      %v3463 = vunpack.c.0.s8 %v3462
      %v3464 = vlaneseq
      %v3465 = vshrl.u32 %v3464, 7
      %v3466 = vsub.s32 %v3463, %v3465
      %v3467 = vrot.slane %v3439, %v3466
      %v3468 = vcombine.high %v3446, %v3446
      %v3469 = vcombine.high %v3453, %v3453
      %v3470 = vcombine.high %v3460, %v3460
      %v3471 = vcombine.high %v3467, %v3467
      %v3472 = vcombine.high %v2032, %v2032
      %v3474 = vunpack.c.l.s4 1966171168
      %v3475 = vunpack.c.0.s8 %v3474
      %v3476 = vlaneseq
      %v3477 = vshrl.u32 %v3476, 7
      %v3478 = vsub.s32 %v3475, %v3477
      %v3479 = vrot.slane %v2032, %v3478
      %v3481 = vunpack.c.l.s4 1966171168
      %v3482 = vunpack.c.0.s8 %v3481
      %v3483 = vlaneseq
      %v3484 = vshrl.u32 %v3483, 7
      %v3485 = vsub.s32 %v3482, %v3484
      %v3486 = vrot.slane %v3472, %v3485
      %v3487 = vcombine.high %v3479, %v3479
      %v3488 = vcombine.high %v3486, %v3486
      %v3490 = vunpack.c.l.s4 1966171168
      %v3491 = vunpack.c.0.s8 %v3490
      %v3492 = vlaneseq
      %v3493 = vshrl.u32 %v3492, 7
      %v3494 = vsub.s32 %v3491, %v3493
      %v3495 = vrot.slane %v3479, %v3494
      %v3497 = vunpack.c.l.s4 1966171168
      %v3498 = vunpack.c.0.s8 %v3497
      %v3499 = vlaneseq
      %v3500 = vshrl.u32 %v3499, 7
      %v3501 = vsub.s32 %v3498, %v3500
      %v3502 = vrot.slane %v3486, %v3501
      %v3504 = vunpack.c.l.s4 1966171168
      %v3505 = vunpack.c.0.s8 %v3504
      %v3506 = vlaneseq
      %v3507 = vshrl.u32 %v3506, 7
      %v3508 = vsub.s32 %v3505, %v3507
      %v3509 = vrot.slane %v3487, %v3508
      %v3511 = vunpack.c.l.s4 1966171168
      %v3512 = vunpack.c.0.s8 %v3511
      %v3513 = vlaneseq
      %v3514 = vshrl.u32 %v3513, 7
      %v3515 = vsub.s32 %v3512, %v3514
      %v3516 = vrot.slane %v3488, %v3515
      %v3517 = vcombine.high %v3495, %v3495
      %v3518 = vcombine.high %v3502, %v3502
      %v3519 = vcombine.high %v3509, %v3509
      %v3520 = vcombine.high %v3516, %v3516
      %v3521 = vcombine.high %v2033, %v2033
      %v3523 = vunpack.c.l.s4 1966171168
      %v3524 = vunpack.c.0.s8 %v3523
      %v3525 = vlaneseq
      %v3526 = vshrl.u32 %v3525, 7
      %v3527 = vsub.s32 %v3524, %v3526
      %v3528 = vrot.slane %v2033, %v3527
      %v3530 = vunpack.c.l.s4 1966171168
      %v3531 = vunpack.c.0.s8 %v3530
      %v3532 = vlaneseq
      %v3533 = vshrl.u32 %v3532, 7
      %v3534 = vsub.s32 %v3531, %v3533
      %v3535 = vrot.slane %v3521, %v3534
      %v3536 = vcombine.high %v3528, %v3528
      %v3537 = vcombine.high %v3535, %v3535
      %v3539 = vunpack.c.l.s4 1966171168
      %v3540 = vunpack.c.0.s8 %v3539
      %v3541 = vlaneseq
      %v3542 = vshrl.u32 %v3541, 7
      %v3543 = vsub.s32 %v3540, %v3542
      %v3544 = vrot.slane %v3528, %v3543
      %v3546 = vunpack.c.l.s4 1966171168
      %v3547 = vunpack.c.0.s8 %v3546
      %v3548 = vlaneseq
      %v3549 = vshrl.u32 %v3548, 7
      %v3550 = vsub.s32 %v3547, %v3549
      %v3551 = vrot.slane %v3535, %v3550
      %v3553 = vunpack.c.l.s4 1966171168
      %v3554 = vunpack.c.0.s8 %v3553
      %v3555 = vlaneseq
      %v3556 = vshrl.u32 %v3555, 7
      %v3557 = vsub.s32 %v3554, %v3556
      %v3558 = vrot.slane %v3536, %v3557
      %v3560 = vunpack.c.l.s4 1966171168
      %v3561 = vunpack.c.0.s8 %v3560
      %v3562 = vlaneseq
      %v3563 = vshrl.u32 %v3562, 7
      %v3564 = vsub.s32 %v3561, %v3563
      %v3565 = vrot.slane %v3537, %v3564
      %v3566 = vcombine.high %v3544, %v3544
      %v3567 = vcombine.high %v3551, %v3551
      %v3568 = vcombine.high %v3558, %v3558
      %v3569 = vcombine.high %v3565, %v3565
      %v3570 = vcombine.high %v2034, %v2034
      %v3572 = vunpack.c.l.s4 1966171168
      %v3573 = vunpack.c.0.s8 %v3572
      %v3574 = vlaneseq
      %v3575 = vshrl.u32 %v3574, 7
      %v3576 = vsub.s32 %v3573, %v3575
      %v3577 = vrot.slane %v2034, %v3576
      %v3579 = vunpack.c.l.s4 1966171168
      %v3580 = vunpack.c.0.s8 %v3579
      %v3581 = vlaneseq
      %v3582 = vshrl.u32 %v3581, 7
      %v3583 = vsub.s32 %v3580, %v3582
      %v3584 = vrot.slane %v3570, %v3583
      %v3585 = vcombine.high %v3577, %v3577
      %v3586 = vcombine.high %v3584, %v3584
      %v3588 = vunpack.c.l.s4 1966171168
      %v3589 = vunpack.c.0.s8 %v3588
      %v3590 = vlaneseq
      %v3591 = vshrl.u32 %v3590, 7
      %v3592 = vsub.s32 %v3589, %v3591
      %v3593 = vrot.slane %v3577, %v3592
      %v3595 = vunpack.c.l.s4 1966171168
      %v3596 = vunpack.c.0.s8 %v3595
      %v3597 = vlaneseq
      %v3598 = vshrl.u32 %v3597, 7
      %v3599 = vsub.s32 %v3596, %v3598
      %v3600 = vrot.slane %v3584, %v3599
      %v3602 = vunpack.c.l.s4 1966171168
      %v3603 = vunpack.c.0.s8 %v3602
      %v3604 = vlaneseq
      %v3605 = vshrl.u32 %v3604, 7
      %v3606 = vsub.s32 %v3603, %v3605
      %v3607 = vrot.slane %v3585, %v3606
      %v3609 = vunpack.c.l.s4 1966171168
      %v3610 = vunpack.c.0.s8 %v3609
      %v3611 = vlaneseq
      %v3612 = vshrl.u32 %v3611, 7
      %v3613 = vsub.s32 %v3610, %v3612
      %v3614 = vrot.slane %v3586, %v3613
      %v3615 = vcombine.high %v3593, %v3593
      %v3616 = vcombine.high %v3600, %v3600
      %v3617 = vcombine.high %v3607, %v3607
      %v3618 = vcombine.high %v3614, %v3614
      %v3619 = vcombine.high %v2035, %v2035
      %v3621 = vunpack.c.l.s4 1966171168
      %v3622 = vunpack.c.0.s8 %v3621
      %v3623 = vlaneseq
      %v3624 = vshrl.u32 %v3623, 7
      %v3625 = vsub.s32 %v3622, %v3624
      %v3626 = vrot.slane %v2035, %v3625
      %v3628 = vunpack.c.l.s4 1966171168
      %v3629 = vunpack.c.0.s8 %v3628
      %v3630 = vlaneseq
      %v3631 = vshrl.u32 %v3630, 7
      %v3632 = vsub.s32 %v3629, %v3631
      %v3633 = vrot.slane %v3619, %v3632
      %v3634 = vcombine.high %v3626, %v3626
      %v3635 = vcombine.high %v3633, %v3633
      %v3637 = vunpack.c.l.s4 1966171168
      %v3638 = vunpack.c.0.s8 %v3637
      %v3639 = vlaneseq
      %v3640 = vshrl.u32 %v3639, 7
      %v3641 = vsub.s32 %v3638, %v3640
      %v3642 = vrot.slane %v3626, %v3641
      %v3644 = vunpack.c.l.s4 1966171168
      %v3645 = vunpack.c.0.s8 %v3644
      %v3646 = vlaneseq
      %v3647 = vshrl.u32 %v3646, 7
      %v3648 = vsub.s32 %v3645, %v3647
      %v3649 = vrot.slane %v3633, %v3648
      %v3651 = vunpack.c.l.s4 1966171168
      %v3652 = vunpack.c.0.s8 %v3651
      %v3653 = vlaneseq
      %v3654 = vshrl.u32 %v3653, 7
      %v3655 = vsub.s32 %v3652, %v3654
      %v3656 = vrot.slane %v3634, %v3655
      %v3658 = vunpack.c.l.s4 1966171168
      %v3659 = vunpack.c.0.s8 %v3658
      %v3660 = vlaneseq
      %v3661 = vshrl.u32 %v3660, 7
      %v3662 = vsub.s32 %v3659, %v3661
      %v3663 = vrot.slane %v3635, %v3662
      %v3664 = vcombine.high %v3642, %v3642
      %v3665 = vcombine.high %v3649, %v3649
      %v3666 = vcombine.high %v3656, %v3656
      %v3667 = vcombine.high %v3663, %v3663
      %v3668 = vcombine.high %v2036, %v2036
      %v3670 = vunpack.c.l.s4 1966171168
      %v3671 = vunpack.c.0.s8 %v3670
      %v3672 = vlaneseq
      %v3673 = vshrl.u32 %v3672, 7
      %v3674 = vsub.s32 %v3671, %v3673
      %v3675 = vrot.slane %v2036, %v3674
      %v3677 = vunpack.c.l.s4 1966171168
      %v3678 = vunpack.c.0.s8 %v3677
      %v3679 = vlaneseq
      %v3680 = vshrl.u32 %v3679, 7
      %v3681 = vsub.s32 %v3678, %v3680
      %v3682 = vrot.slane %v3668, %v3681
      %v3683 = vcombine.high %v3675, %v3675
      %v3684 = vcombine.high %v3682, %v3682
      %v3686 = vunpack.c.l.s4 1966171168
      %v3687 = vunpack.c.0.s8 %v3686
      %v3688 = vlaneseq
      %v3689 = vshrl.u32 %v3688, 7
      %v3690 = vsub.s32 %v3687, %v3689
      %v3691 = vrot.slane %v3675, %v3690
      %v3693 = vunpack.c.l.s4 1966171168
      %v3694 = vunpack.c.0.s8 %v3693
      %v3695 = vlaneseq
      %v3696 = vshrl.u32 %v3695, 7
      %v3697 = vsub.s32 %v3694, %v3696
      %v3698 = vrot.slane %v3682, %v3697
      %v3700 = vunpack.c.l.s4 1966171168
      %v3701 = vunpack.c.0.s8 %v3700
      %v3702 = vlaneseq
      %v3703 = vshrl.u32 %v3702, 7
      %v3704 = vsub.s32 %v3701, %v3703
      %v3705 = vrot.slane %v3683, %v3704
      %v3707 = vunpack.c.l.s4 1966171168
      %v3708 = vunpack.c.0.s8 %v3707
      %v3709 = vlaneseq
      %v3710 = vshrl.u32 %v3709, 7
      %v3711 = vsub.s32 %v3708, %v3710
      %v3712 = vrot.slane %v3684, %v3711
      %v3713 = vcombine.high %v3691, %v3691
      %v3714 = vcombine.high %v3698, %v3698
      %v3715 = vcombine.high %v3705, %v3705
      %v3716 = vcombine.high %v3712, %v3712
      %v3717 = vcombine.high %v2037, %v2037
      %v3719 = vunpack.c.l.s4 1966171168
      %v3720 = vunpack.c.0.s8 %v3719
      %v3721 = vlaneseq
      %v3722 = vshrl.u32 %v3721, 7
      %v3723 = vsub.s32 %v3720, %v3722
      %v3724 = vrot.slane %v2037, %v3723
      %v3726 = vunpack.c.l.s4 1966171168
      %v3727 = vunpack.c.0.s8 %v3726
      %v3728 = vlaneseq
      %v3729 = vshrl.u32 %v3728, 7
      %v3730 = vsub.s32 %v3727, %v3729
      %v3731 = vrot.slane %v3717, %v3730
      %v3732 = vcombine.high %v3724, %v3724
      %v3733 = vcombine.high %v3731, %v3731
      %v3735 = vunpack.c.l.s4 1966171168
      %v3736 = vunpack.c.0.s8 %v3735
      %v3737 = vlaneseq
      %v3738 = vshrl.u32 %v3737, 7
      %v3739 = vsub.s32 %v3736, %v3738
      %v3740 = vrot.slane %v3724, %v3739
      %v3742 = vunpack.c.l.s4 1966171168
      %v3743 = vunpack.c.0.s8 %v3742
      %v3744 = vlaneseq
      %v3745 = vshrl.u32 %v3744, 7
      %v3746 = vsub.s32 %v3743, %v3745
      %v3747 = vrot.slane %v3731, %v3746
      %v3749 = vunpack.c.l.s4 1966171168
      %v3750 = vunpack.c.0.s8 %v3749
      %v3751 = vlaneseq
      %v3752 = vshrl.u32 %v3751, 7
      %v3753 = vsub.s32 %v3750, %v3752
      %v3754 = vrot.slane %v3732, %v3753
      %v3756 = vunpack.c.l.s4 1966171168
      %v3757 = vunpack.c.0.s8 %v3756
      %v3758 = vlaneseq
      %v3759 = vshrl.u32 %v3758, 7
      %v3760 = vsub.s32 %v3757, %v3759
      %v3761 = vrot.slane %v3733, %v3760
      %v3762 = vcombine.high %v3740, %v3740
      %v3763 = vcombine.high %v3747, %v3747
      %v3764 = vcombine.high %v3754, %v3754
      %v3765 = vcombine.high %v3761, %v3761
      %v3766 = vlaneseq
      %v3767 = vshrl.u32 %v3766, 7
      %v3768 = vsub.s32 0, %v3767
      %v3769 = vrot.slane %v3005, %v3768
      %v3770 = vlaneseq
      %v3771 = vshrl.u32 %v3770, 7
      %v3772 = vsub.s32 0, %v3771
      %v3773 = vrot.slane %v3019, %v3772
      %v3774 = vlaneseq
      %v3775 = vshrl.u32 %v3774, 7
      %v3776 = vsub.s32 0, %v3775
      %v3777 = vrot.slane %v3027, %v3776
      %v3778 = vlaneseq
      %v3779 = vshrl.u32 %v3778, 7
      %v3780 = vsub.s32 0, %v3779
      %v3781 = vrot.slane %v3029, %v3780
      %v3782 = vlaneseq
      %v3783 = vshrl.u32 %v3782, 7
      %v3784 = vsub.s32 0, %v3783
      %v3785 = vrot.slane %v3012, %v3784
      %v3786 = vlaneseq
      %v3787 = vshrl.u32 %v3786, 7
      %v3788 = vsub.s32 0, %v3787
      %v3789 = vrot.slane %v3026, %v3788
      %v3790 = vlaneseq
      %v3791 = vshrl.u32 %v3790, 7
      %v3792 = vsub.s32 0, %v3791
      %v3793 = vrot.slane %v3028, %v3792
      %v3794 = vlaneseq
      %v3795 = vshrl.u32 %v3794, 7
      %v3796 = vsub.s32 0, %v3795
      %v3797 = vrot.slane %v3030, %v3796
      %v3798 = vlaneseq
      %v3799 = vshrl.u32 %v3798, 7
      %v3800 = vsub.s32 0, %v3799
      %v3801 = vrot.slane %v3054, %v3800
      %v3802 = vlaneseq
      %v3803 = vshrl.u32 %v3802, 7
      %v3804 = vsub.s32 0, %v3803
      %v3805 = vrot.slane %v3068, %v3804
      %v3806 = vlaneseq
      %v3807 = vshrl.u32 %v3806, 7
      %v3808 = vsub.s32 0, %v3807
      %v3809 = vrot.slane %v3076, %v3808
      %v3810 = vlaneseq
      %v3811 = vshrl.u32 %v3810, 7
      %v3812 = vsub.s32 0, %v3811
      %v3813 = vrot.slane %v3078, %v3812
      %v3814 = vlaneseq
      %v3815 = vshrl.u32 %v3814, 7
      %v3816 = vsub.s32 0, %v3815
      %v3817 = vrot.slane %v3061, %v3816
      %v3818 = vlaneseq
      %v3819 = vshrl.u32 %v3818, 7
      %v3820 = vsub.s32 0, %v3819
      %v3821 = vrot.slane %v3075, %v3820
      %v3822 = vlaneseq
      %v3823 = vshrl.u32 %v3822, 7
      %v3824 = vsub.s32 0, %v3823
      %v3825 = vrot.slane %v3077, %v3824
      %v3826 = vlaneseq
      %v3827 = vshrl.u32 %v3826, 7
      %v3828 = vsub.s32 0, %v3827
      %v3829 = vrot.slane %v3079, %v3828
      %v3830 = vlaneseq
      %v3831 = vshrl.u32 %v3830, 7
      %v3832 = vsub.s32 0, %v3831
      %v3833 = vrot.slane %v3103, %v3832
      %v3834 = vlaneseq
      %v3835 = vshrl.u32 %v3834, 7
      %v3836 = vsub.s32 0, %v3835
      %v3837 = vrot.slane %v3117, %v3836
      %v3838 = vlaneseq
      %v3839 = vshrl.u32 %v3838, 7
      %v3840 = vsub.s32 0, %v3839
      %v3841 = vrot.slane %v3125, %v3840
      %v3842 = vlaneseq
      %v3843 = vshrl.u32 %v3842, 7
      %v3844 = vsub.s32 0, %v3843
      %v3845 = vrot.slane %v3127, %v3844
      %v3846 = vlaneseq
      %v3847 = vshrl.u32 %v3846, 7
      %v3848 = vsub.s32 0, %v3847
      %v3849 = vrot.slane %v3110, %v3848
      %v3850 = vlaneseq
      %v3851 = vshrl.u32 %v3850, 7
      %v3852 = vsub.s32 0, %v3851
      %v3853 = vrot.slane %v3124, %v3852
      %v3854 = vlaneseq
      %v3855 = vshrl.u32 %v3854, 7
      %v3856 = vsub.s32 0, %v3855
      %v3857 = vrot.slane %v3126, %v3856
      %v3858 = vlaneseq
      %v3859 = vshrl.u32 %v3858, 7
      %v3860 = vsub.s32 0, %v3859
      %v3861 = vrot.slane %v3128, %v3860
      %v3862 = vlaneseq
      %v3863 = vshrl.u32 %v3862, 7
      %v3864 = vsub.s32 0, %v3863
      %v3865 = vrot.slane %v3152, %v3864
      %v3866 = vlaneseq
      %v3867 = vshrl.u32 %v3866, 7
      %v3868 = vsub.s32 0, %v3867
      %v3869 = vrot.slane %v3166, %v3868
      %v3870 = vlaneseq
      %v3871 = vshrl.u32 %v3870, 7
      %v3872 = vsub.s32 0, %v3871
      %v3873 = vrot.slane %v3174, %v3872
      %v3874 = vlaneseq
      %v3875 = vshrl.u32 %v3874, 7
      %v3876 = vsub.s32 0, %v3875
      %v3877 = vrot.slane %v3176, %v3876
      %v3878 = vlaneseq
      %v3879 = vshrl.u32 %v3878, 7
      %v3880 = vsub.s32 0, %v3879
      %v3881 = vrot.slane %v3159, %v3880
      %v3882 = vlaneseq
      %v3883 = vshrl.u32 %v3882, 7
      %v3884 = vsub.s32 0, %v3883
      %v3885 = vrot.slane %v3173, %v3884
      %v3886 = vlaneseq
      %v3887 = vshrl.u32 %v3886, 7
      %v3888 = vsub.s32 0, %v3887
      %v3889 = vrot.slane %v3175, %v3888
      %v3890 = vlaneseq
      %v3891 = vshrl.u32 %v3890, 7
      %v3892 = vsub.s32 0, %v3891
      %v3893 = vrot.slane %v3177, %v3892
      %v3894 = vlaneseq
      %v3895 = vshrl.u32 %v3894, 7
      %v3896 = vsub.s32 0, %v3895
      %v3897 = vrot.slane %v3201, %v3896
      %v3898 = vlaneseq
      %v3899 = vshrl.u32 %v3898, 7
      %v3900 = vsub.s32 0, %v3899
      %v3901 = vrot.slane %v3215, %v3900
      %v3902 = vlaneseq
      %v3903 = vshrl.u32 %v3902, 7
      %v3904 = vsub.s32 0, %v3903
      %v3905 = vrot.slane %v3223, %v3904
      %v3906 = vlaneseq
      %v3907 = vshrl.u32 %v3906, 7
      %v3908 = vsub.s32 0, %v3907
      %v3909 = vrot.slane %v3225, %v3908
      %v3910 = vlaneseq
      %v3911 = vshrl.u32 %v3910, 7
      %v3912 = vsub.s32 0, %v3911
      %v3913 = vrot.slane %v3208, %v3912
      %v3914 = vlaneseq
      %v3915 = vshrl.u32 %v3914, 7
      %v3916 = vsub.s32 0, %v3915
      %v3917 = vrot.slane %v3222, %v3916
      %v3918 = vlaneseq
      %v3919 = vshrl.u32 %v3918, 7
      %v3920 = vsub.s32 0, %v3919
      %v3921 = vrot.slane %v3224, %v3920
      %v3922 = vlaneseq
      %v3923 = vshrl.u32 %v3922, 7
      %v3924 = vsub.s32 0, %v3923
      %v3925 = vrot.slane %v3226, %v3924
      %v3926 = vlaneseq
      %v3927 = vshrl.u32 %v3926, 7
      %v3928 = vsub.s32 0, %v3927
      %v3929 = vrot.slane %v3250, %v3928
      %v3930 = vlaneseq
      %v3931 = vshrl.u32 %v3930, 7
      %v3932 = vsub.s32 0, %v3931
      %v3933 = vrot.slane %v3264, %v3932
      %v3934 = vlaneseq
      %v3935 = vshrl.u32 %v3934, 7
      %v3936 = vsub.s32 0, %v3935
      %v3937 = vrot.slane %v3272, %v3936
      %v3938 = vlaneseq
      %v3939 = vshrl.u32 %v3938, 7
      %v3940 = vsub.s32 0, %v3939
      %v3941 = vrot.slane %v3274, %v3940
      %v3942 = vlaneseq
      %v3943 = vshrl.u32 %v3942, 7
      %v3944 = vsub.s32 0, %v3943
      %v3945 = vrot.slane %v3257, %v3944
      %v3946 = vlaneseq
      %v3947 = vshrl.u32 %v3946, 7
      %v3948 = vsub.s32 0, %v3947
      %v3949 = vrot.slane %v3271, %v3948
      %v3950 = vlaneseq
      %v3951 = vshrl.u32 %v3950, 7
      %v3952 = vsub.s32 0, %v3951
      %v3953 = vrot.slane %v3273, %v3952
      %v3954 = vlaneseq
      %v3955 = vshrl.u32 %v3954, 7
      %v3956 = vsub.s32 0, %v3955
      %v3957 = vrot.slane %v3275, %v3956
      %v3958 = vlaneseq
      %v3959 = vshrl.u32 %v3958, 7
      %v3960 = vsub.s32 0, %v3959
      %v3961 = vrot.slane %v3299, %v3960
      %v3962 = vlaneseq
      %v3963 = vshrl.u32 %v3962, 7
      %v3964 = vsub.s32 0, %v3963
      %v3965 = vrot.slane %v3313, %v3964
      %v3966 = vlaneseq
      %v3967 = vshrl.u32 %v3966, 7
      %v3968 = vsub.s32 0, %v3967
      %v3969 = vrot.slane %v3321, %v3968
      %v3970 = vlaneseq
      %v3971 = vshrl.u32 %v3970, 7
      %v3972 = vsub.s32 0, %v3971
      %v3973 = vrot.slane %v3323, %v3972
      %v3974 = vlaneseq
      %v3975 = vshrl.u32 %v3974, 7
      %v3976 = vsub.s32 0, %v3975
      %v3977 = vrot.slane %v3306, %v3976
      %v3978 = vlaneseq
      %v3979 = vshrl.u32 %v3978, 7
      %v3980 = vsub.s32 0, %v3979
      %v3981 = vrot.slane %v3320, %v3980
      %v3982 = vlaneseq
      %v3983 = vshrl.u32 %v3982, 7
      %v3984 = vsub.s32 0, %v3983
      %v3985 = vrot.slane %v3322, %v3984
      %v3986 = vlaneseq
      %v3987 = vshrl.u32 %v3986, 7
      %v3988 = vsub.s32 0, %v3987
      %v3989 = vrot.slane %v3324, %v3988
      %v3990 = vlaneseq
      %v3991 = vshrl.u32 %v3990, 7
      %v3992 = vsub.s32 0, %v3991
      %v3993 = vrot.slane %v3348, %v3992
      %v3994 = vlaneseq
      %v3995 = vshrl.u32 %v3994, 7
      %v3996 = vsub.s32 0, %v3995
      %v3997 = vrot.slane %v3362, %v3996
      %v3998 = vlaneseq
      %v3999 = vshrl.u32 %v3998, 7
      %v4000 = vsub.s32 0, %v3999
      %v4001 = vrot.slane %v3370, %v4000
      %v4002 = vlaneseq
      %v4003 = vshrl.u32 %v4002, 7
      %v4004 = vsub.s32 0, %v4003
      %v4005 = vrot.slane %v3372, %v4004
      %v4006 = vlaneseq
      %v4007 = vshrl.u32 %v4006, 7
      %v4008 = vsub.s32 0, %v4007
      %v4009 = vrot.slane %v3355, %v4008
      %v4010 = vlaneseq
      %v4011 = vshrl.u32 %v4010, 7
      %v4012 = vsub.s32 0, %v4011
      %v4013 = vrot.slane %v3369, %v4012
      %v4014 = vlaneseq
      %v4015 = vshrl.u32 %v4014, 7
      %v4016 = vsub.s32 0, %v4015
      %v4017 = vrot.slane %v3371, %v4016
      %v4018 = vlaneseq
      %v4019 = vshrl.u32 %v4018, 7
      %v4020 = vsub.s32 0, %v4019
      %v4021 = vrot.slane %v3373, %v4020
      %v4022 = vlaneseq
      %v4023 = vshrl.u32 %v4022, 7
      %v4024 = vsub.s32 0, %v4023
      %v4025 = vrot.slane %v3397, %v4024
      %v4026 = vlaneseq
      %v4027 = vshrl.u32 %v4026, 7
      %v4028 = vsub.s32 0, %v4027
      %v4029 = vrot.slane %v3411, %v4028
      %v4030 = vlaneseq
      %v4031 = vshrl.u32 %v4030, 7
      %v4032 = vsub.s32 0, %v4031
      %v4033 = vrot.slane %v3419, %v4032
      %v4034 = vlaneseq
      %v4035 = vshrl.u32 %v4034, 7
      %v4036 = vsub.s32 0, %v4035
      %v4037 = vrot.slane %v3421, %v4036
      %v4038 = vlaneseq
      %v4039 = vshrl.u32 %v4038, 7
      %v4040 = vsub.s32 0, %v4039
      %v4041 = vrot.slane %v3404, %v4040
      %v4042 = vlaneseq
      %v4043 = vshrl.u32 %v4042, 7
      %v4044 = vsub.s32 0, %v4043
      %v4045 = vrot.slane %v3418, %v4044
      %v4046 = vlaneseq
      %v4047 = vshrl.u32 %v4046, 7
      %v4048 = vsub.s32 0, %v4047
      %v4049 = vrot.slane %v3420, %v4048
      %v4050 = vlaneseq
      %v4051 = vshrl.u32 %v4050, 7
      %v4052 = vsub.s32 0, %v4051
      %v4053 = vrot.slane %v3422, %v4052
      %v4054 = vlaneseq
      %v4055 = vshrl.u32 %v4054, 7
      %v4056 = vsub.s32 0, %v4055
      %v4057 = vrot.slane %v3446, %v4056
      %v4058 = vlaneseq
      %v4059 = vshrl.u32 %v4058, 7
      %v4060 = vsub.s32 0, %v4059
      %v4061 = vrot.slane %v3460, %v4060
      %v4062 = vlaneseq
      %v4063 = vshrl.u32 %v4062, 7
      %v4064 = vsub.s32 0, %v4063
      %v4065 = vrot.slane %v3468, %v4064
      %v4066 = vlaneseq
      %v4067 = vshrl.u32 %v4066, 7
      %v4068 = vsub.s32 0, %v4067
      %v4069 = vrot.slane %v3470, %v4068
      %v4070 = vlaneseq
      %v4071 = vshrl.u32 %v4070, 7
      %v4072 = vsub.s32 0, %v4071
      %v4073 = vrot.slane %v3453, %v4072
      %v4074 = vlaneseq
      %v4075 = vshrl.u32 %v4074, 7
      %v4076 = vsub.s32 0, %v4075
      %v4077 = vrot.slane %v3467, %v4076
      %v4078 = vlaneseq
      %v4079 = vshrl.u32 %v4078, 7
      %v4080 = vsub.s32 0, %v4079
      %v4081 = vrot.slane %v3469, %v4080
      %v4082 = vlaneseq
      %v4083 = vshrl.u32 %v4082, 7
      %v4084 = vsub.s32 0, %v4083
      %v4085 = vrot.slane %v3471, %v4084
      %v4086 = vlaneseq
      %v4087 = vshrl.u32 %v4086, 7
      %v4088 = vsub.s32 0, %v4087
      %v4089 = vrot.slane %v3495, %v4088
      %v4090 = vlaneseq
      %v4091 = vshrl.u32 %v4090, 7
      %v4092 = vsub.s32 0, %v4091
      %v4093 = vrot.slane %v3509, %v4092
      %v4094 = vlaneseq
      %v4095 = vshrl.u32 %v4094, 7
      %v4096 = vsub.s32 0, %v4095
      %v4097 = vrot.slane %v3517, %v4096
      %v4098 = vlaneseq
      %v4099 = vshrl.u32 %v4098, 7
      %v4100 = vsub.s32 0, %v4099
      %v4101 = vrot.slane %v3519, %v4100
      %v4102 = vlaneseq
      %v4103 = vshrl.u32 %v4102, 7
      %v4104 = vsub.s32 0, %v4103
      %v4105 = vrot.slane %v3502, %v4104
      %v4106 = vlaneseq
      %v4107 = vshrl.u32 %v4106, 7
      %v4108 = vsub.s32 0, %v4107
      %v4109 = vrot.slane %v3516, %v4108
      %v4110 = vlaneseq
      %v4111 = vshrl.u32 %v4110, 7
      %v4112 = vsub.s32 0, %v4111
      %v4113 = vrot.slane %v3518, %v4112
      %v4114 = vlaneseq
      %v4115 = vshrl.u32 %v4114, 7
      %v4116 = vsub.s32 0, %v4115
      %v4117 = vrot.slane %v3520, %v4116
      %v4118 = vlaneseq
      %v4119 = vshrl.u32 %v4118, 7
      %v4120 = vsub.s32 0, %v4119
      %v4121 = vrot.slane %v3544, %v4120
      %v4122 = vlaneseq
      %v4123 = vshrl.u32 %v4122, 7
      %v4124 = vsub.s32 0, %v4123
      %v4125 = vrot.slane %v3558, %v4124
      %v4126 = vlaneseq
      %v4127 = vshrl.u32 %v4126, 7
      %v4128 = vsub.s32 0, %v4127
      %v4129 = vrot.slane %v3566, %v4128
      %v4130 = vlaneseq
      %v4131 = vshrl.u32 %v4130, 7
      %v4132 = vsub.s32 0, %v4131
      %v4133 = vrot.slane %v3568, %v4132
      %v4134 = vlaneseq
      %v4135 = vshrl.u32 %v4134, 7
      %v4136 = vsub.s32 0, %v4135
      %v4137 = vrot.slane %v3551, %v4136
      %v4138 = vlaneseq
      %v4139 = vshrl.u32 %v4138, 7
      %v4140 = vsub.s32 0, %v4139
      %v4141 = vrot.slane %v3565, %v4140
      %v4142 = vlaneseq
      %v4143 = vshrl.u32 %v4142, 7
      %v4144 = vsub.s32 0, %v4143
      %v4145 = vrot.slane %v3567, %v4144
      %v4146 = vlaneseq
      %v4147 = vshrl.u32 %v4146, 7
      %v4148 = vsub.s32 0, %v4147
      %v4149 = vrot.slane %v3569, %v4148
      %v4150 = vlaneseq
      %v4151 = vshrl.u32 %v4150, 7
      %v4152 = vsub.s32 0, %v4151
      %v4153 = vrot.slane %v3593, %v4152
      %v4154 = vlaneseq
      %v4155 = vshrl.u32 %v4154, 7
      %v4156 = vsub.s32 0, %v4155
      %v4157 = vrot.slane %v3607, %v4156
      %v4158 = vlaneseq
      %v4159 = vshrl.u32 %v4158, 7
      %v4160 = vsub.s32 0, %v4159
      %v4161 = vrot.slane %v3615, %v4160
      %v4162 = vlaneseq
      %v4163 = vshrl.u32 %v4162, 7
      %v4164 = vsub.s32 0, %v4163
      %v4165 = vrot.slane %v3617, %v4164
      %v4166 = vlaneseq
      %v4167 = vshrl.u32 %v4166, 7
      %v4168 = vsub.s32 0, %v4167
      %v4169 = vrot.slane %v3600, %v4168
      %v4170 = vlaneseq
      %v4171 = vshrl.u32 %v4170, 7
      %v4172 = vsub.s32 0, %v4171
      %v4173 = vrot.slane %v3614, %v4172
      %v4174 = vlaneseq
      %v4175 = vshrl.u32 %v4174, 7
      %v4176 = vsub.s32 0, %v4175
      %v4177 = vrot.slane %v3616, %v4176
      %v4178 = vlaneseq
      %v4179 = vshrl.u32 %v4178, 7
      %v4180 = vsub.s32 0, %v4179
      %v4181 = vrot.slane %v3618, %v4180
      %v4182 = vlaneseq
      %v4183 = vshrl.u32 %v4182, 7
      %v4184 = vsub.s32 0, %v4183
      %v4185 = vrot.slane %v3642, %v4184
      %v4186 = vlaneseq
      %v4187 = vshrl.u32 %v4186, 7
      %v4188 = vsub.s32 0, %v4187
      %v4189 = vrot.slane %v3656, %v4188
      %v4190 = vlaneseq
      %v4191 = vshrl.u32 %v4190, 7
      %v4192 = vsub.s32 0, %v4191
      %v4193 = vrot.slane %v3664, %v4192
      %v4194 = vlaneseq
      %v4195 = vshrl.u32 %v4194, 7
      %v4196 = vsub.s32 0, %v4195
      %v4197 = vrot.slane %v3666, %v4196
      %v4198 = vlaneseq
      %v4199 = vshrl.u32 %v4198, 7
      %v4200 = vsub.s32 0, %v4199
      %v4201 = vrot.slane %v3649, %v4200
      %v4202 = vlaneseq
      %v4203 = vshrl.u32 %v4202, 7
      %v4204 = vsub.s32 0, %v4203
      %v4205 = vrot.slane %v3663, %v4204
      %v4206 = vlaneseq
      %v4207 = vshrl.u32 %v4206, 7
      %v4208 = vsub.s32 0, %v4207
      %v4209 = vrot.slane %v3665, %v4208
      %v4210 = vlaneseq
      %v4211 = vshrl.u32 %v4210, 7
      %v4212 = vsub.s32 0, %v4211
      %v4213 = vrot.slane %v3667, %v4212
      %v4214 = vlaneseq
      %v4215 = vshrl.u32 %v4214, 7
      %v4216 = vsub.s32 0, %v4215
      %v4217 = vrot.slane %v3691, %v4216
      %v4218 = vlaneseq
      %v4219 = vshrl.u32 %v4218, 7
      %v4220 = vsub.s32 0, %v4219
      %v4221 = vrot.slane %v3705, %v4220
      %v4222 = vlaneseq
      %v4223 = vshrl.u32 %v4222, 7
      %v4224 = vsub.s32 0, %v4223
      %v4225 = vrot.slane %v3713, %v4224
      %v4226 = vlaneseq
      %v4227 = vshrl.u32 %v4226, 7
      %v4228 = vsub.s32 0, %v4227
      %v4229 = vrot.slane %v3715, %v4228
      %v4230 = vlaneseq
      %v4231 = vshrl.u32 %v4230, 7
      %v4232 = vsub.s32 0, %v4231
      %v4233 = vrot.slane %v3698, %v4232
      %v4234 = vlaneseq
      %v4235 = vshrl.u32 %v4234, 7
      %v4236 = vsub.s32 0, %v4235
      %v4237 = vrot.slane %v3712, %v4236
      %v4238 = vlaneseq
      %v4239 = vshrl.u32 %v4238, 7
      %v4240 = vsub.s32 0, %v4239
      %v4241 = vrot.slane %v3714, %v4240
      %v4242 = vlaneseq
      %v4243 = vshrl.u32 %v4242, 7
      %v4244 = vsub.s32 0, %v4243
      %v4245 = vrot.slane %v3716, %v4244
      %v4246 = vlaneseq
      %v4247 = vshrl.u32 %v4246, 7
      %v4248 = vsub.s32 0, %v4247
      %v4249 = vrot.slane %v3740, %v4248
      %v4250 = vlaneseq
      %v4251 = vshrl.u32 %v4250, 7
      %v4252 = vsub.s32 0, %v4251
      %v4253 = vrot.slane %v3754, %v4252
      %v4254 = vlaneseq
      %v4255 = vshrl.u32 %v4254, 7
      %v4256 = vsub.s32 0, %v4255
      %v4257 = vrot.slane %v3762, %v4256
      %v4258 = vlaneseq
      %v4259 = vshrl.u32 %v4258, 7
      %v4260 = vsub.s32 0, %v4259
      %v4261 = vrot.slane %v3764, %v4260
      %v4262 = vlaneseq
      %v4263 = vshrl.u32 %v4262, 7
      %v4264 = vsub.s32 0, %v4263
      %v4265 = vrot.slane %v3747, %v4264
      %v4266 = vlaneseq
      %v4267 = vshrl.u32 %v4266, 7
      %v4268 = vsub.s32 0, %v4267
      %v4269 = vrot.slane %v3761, %v4268
      %v4270 = vlaneseq
      %v4271 = vshrl.u32 %v4270, 7
      %v4272 = vsub.s32 0, %v4271
      %v4273 = vrot.slane %v3763, %v4272
      %v4274 = vlaneseq
      %v4275 = vshrl.u32 %v4274, 7
      %v4276 = vsub.s32 0, %v4275
      %v4277 = vrot.slane %v3765, %v4276
      %v4406 = vsel %vm445, %v2077, %v3769
      %v4407 = vsel %vm445, %v2091, %v3773
      %v4408 = vsel %vm445, %v2099, %v3777
      %v4409 = vsel %vm445, %v2101, %v3781
      %v4410 = vsel %vm445, %v2084, %v3785
      %v4411 = vsel %vm445, %v2098, %v3789
      %v4412 = vsel %vm445, %v2100, %v3793
      %v4413 = vsel %vm445, %v2102, %v3797
      %v4414 = vsel %vm445, %v2126, %v3801
      %v4415 = vsel %vm445, %v2140, %v3805
      %v4416 = vsel %vm445, %v2148, %v3809
      %v4417 = vsel %vm445, %v2150, %v3813
      %v4418 = vsel %vm445, %v2133, %v3817
      %v4419 = vsel %vm445, %v2147, %v3821
      %v4420 = vsel %vm445, %v2149, %v3825
      %v4421 = vsel %vm445, %v2151, %v3829
      %v4422 = vsel %vm445, %v2175, %v3833
      %v4423 = vsel %vm445, %v2189, %v3837
      %v4424 = vsel %vm445, %v2197, %v3841
      %v4425 = vsel %vm445, %v2199, %v3845
      %v4426 = vsel %vm445, %v2182, %v3849
      %v4427 = vsel %vm445, %v2196, %v3853
      %v4428 = vsel %vm445, %v2198, %v3857
      %v4429 = vsel %vm445, %v2200, %v3861
      %v4430 = vsel %vm445, %v2224, %v3865
      %v4431 = vsel %vm445, %v2238, %v3869
      %v4432 = vsel %vm445, %v2246, %v3873
      %v4433 = vsel %vm445, %v2248, %v3877
      %v4434 = vsel %vm445, %v2231, %v3881
      %v4435 = vsel %vm445, %v2245, %v3885
      %v4436 = vsel %vm445, %v2247, %v3889
      %v4437 = vsel %vm445, %v2249, %v3893
      %v4438 = vsel %vm445, %v2273, %v3897
      %v4439 = vsel %vm445, %v2287, %v3901
      %v4440 = vsel %vm445, %v2295, %v3905
      %v4441 = vsel %vm445, %v2297, %v3909
      %v4442 = vsel %vm445, %v2280, %v3913
      %v4443 = vsel %vm445, %v2294, %v3917
      %v4444 = vsel %vm445, %v2296, %v3921
      %v4445 = vsel %vm445, %v2298, %v3925
      %v4446 = vsel %vm445, %v2322, %v3929
      %v4447 = vsel %vm445, %v2336, %v3933
      %v4448 = vsel %vm445, %v2344, %v3937
      %v4449 = vsel %vm445, %v2346, %v3941
      %v4450 = vsel %vm445, %v2329, %v3945
      %v4451 = vsel %vm445, %v2343, %v3949
      %v4452 = vsel %vm445, %v2345, %v3953
      %v4453 = vsel %vm445, %v2347, %v3957
      %v4454 = vsel %vm445, %v2371, %v3961
      %v4455 = vsel %vm445, %v2385, %v3965
      %v4456 = vsel %vm445, %v2393, %v3969
      %v4457 = vsel %vm445, %v2395, %v3973
      %v4458 = vsel %vm445, %v2378, %v3977
      %v4459 = vsel %vm445, %v2392, %v3981
      %v4460 = vsel %vm445, %v2394, %v3985
      %v4461 = vsel %vm445, %v2396, %v3989
      %v4462 = vsel %vm445, %v2420, %v3993
      %v4463 = vsel %vm445, %v2434, %v3997
      %v4464 = vsel %vm445, %v2442, %v4001
      %v4465 = vsel %vm445, %v2444, %v4005
      %v4466 = vsel %vm445, %v2427, %v4009
      %v4467 = vsel %vm445, %v2441, %v4013
      %v4468 = vsel %vm445, %v2443, %v4017
      %v4469 = vsel %vm445, %v2445, %v4021
      %v4470 = vsel %vm445, %v2469, %v4025
      %v4471 = vsel %vm445, %v2483, %v4029
      %v4472 = vsel %vm445, %v2491, %v4033
      %v4473 = vsel %vm445, %v2493, %v4037
      %v4474 = vsel %vm445, %v2476, %v4041
      %v4475 = vsel %vm445, %v2490, %v4045
      %v4476 = vsel %vm445, %v2492, %v4049
      %v4477 = vsel %vm445, %v2494, %v4053
      %v4478 = vsel %vm445, %v2518, %v4057
      %v4479 = vsel %vm445, %v2532, %v4061
      %v4480 = vsel %vm445, %v2540, %v4065
      %v4481 = vsel %vm445, %v2542, %v4069
      %v4482 = vsel %vm445, %v2525, %v4073
      %v4483 = vsel %vm445, %v2539, %v4077
      %v4484 = vsel %vm445, %v2541, %v4081
      %v4485 = vsel %vm445, %v2543, %v4085
      %v4486 = vsel %vm445, %v2567, %v4089
      %v4487 = vsel %vm445, %v2581, %v4093
      %v4488 = vsel %vm445, %v2589, %v4097
      %v4489 = vsel %vm445, %v2591, %v4101
      %v4490 = vsel %vm445, %v2574, %v4105
      %v4491 = vsel %vm445, %v2588, %v4109
      %v4492 = vsel %vm445, %v2590, %v4113
      %v4493 = vsel %vm445, %v2592, %v4117
      %v4494 = vsel %vm445, %v2616, %v4121
      %v4495 = vsel %vm445, %v2630, %v4125
      %v4496 = vsel %vm445, %v2638, %v4129
      %v4497 = vsel %vm445, %v2640, %v4133
      %v4498 = vsel %vm445, %v2623, %v4137
      %v4499 = vsel %vm445, %v2637, %v4141
      %v4500 = vsel %vm445, %v2639, %v4145
      %v4501 = vsel %vm445, %v2641, %v4149
      %v4502 = vsel %vm445, %v2665, %v4153
      %v4503 = vsel %vm445, %v2679, %v4157
      %v4504 = vsel %vm445, %v2687, %v4161
      %v4505 = vsel %vm445, %v2689, %v4165
      %v4506 = vsel %vm445, %v2672, %v4169
      %v4507 = vsel %vm445, %v2686, %v4173
      %v4508 = vsel %vm445, %v2688, %v4177
      %v4509 = vsel %vm445, %v2690, %v4181
      %v4510 = vsel %vm445, %v2714, %v4185
      %v4511 = vsel %vm445, %v2728, %v4189
      %v4512 = vsel %vm445, %v2736, %v4193
      %v4513 = vsel %vm445, %v2738, %v4197
      %v4514 = vsel %vm445, %v2721, %v4201
      %v4515 = vsel %vm445, %v2735, %v4205
      %v4516 = vsel %vm445, %v2737, %v4209
      %v4517 = vsel %vm445, %v2739, %v4213
      %v4518 = vsel %vm445, %v2763, %v4217
      %v4519 = vsel %vm445, %v2777, %v4221
      %v4520 = vsel %vm445, %v2785, %v4225
      %v4521 = vsel %vm445, %v2787, %v4229
      %v4522 = vsel %vm445, %v2770, %v4233
      %v4523 = vsel %vm445, %v2784, %v4237
      %v4524 = vsel %vm445, %v2786, %v4241
      %v4525 = vsel %vm445, %v2788, %v4245
      %v4526 = vsel %vm445, %v2812, %v4249
      %v4527 = vsel %vm445, %v2826, %v4253
      %v4528 = vsel %vm445, %v2834, %v4257
      %v4529 = vsel %vm445, %v2836, %v4261
      %v4530 = vsel %vm445, %v2819, %v4265
      %v4531 = vsel %vm445, %v2833, %v4269
      %v4532 = vsel %vm445, %v2835, %v4273
      %v4533 = vsel %vm445, %v2837, %v4277
      %s4534 = scalar_lea.vmem %s3, 32
      %v4535 = vld [vmem:[%s4534] sm:$0xf]
      %s4536 = scalar_lea.vmem %s3, 36
      %v4537 = vld [vmem:[%s4536] sm:$0xf]
      %v4539 = vsel %vm610, %v4537, 0
      %4541 = vmatprep.subr.mxu0 0.0
      %4542 = vmatpush1.msra.mxu0 0.0
      %4543 = vmatprep.subr.mxu0 0.0
      %4544 = vmatpush1.msra.mxu0 0.0
      %4545 = vmatprep.subr.mxu0 0.0
      %4546 = vmatpush1.msra.mxu0 0.0
      %4547 = vmatprep.subr.mxu0 0.0
      %4548 = vmatpush1.msra.mxu0 0.0
      %4549 = vmatprep.subr.mxu0 0.0
      %4550 = vmatpush1.msra.mxu0 0.0
      %4551 = vmatprep.subr.mxu0 0.0
      %4552 = vmatpush1.msra.mxu0 0.0
      %4553 = vmatprep.subr.mxu0 0.0
      %4554 = vmatpush1.msra.mxu0 0.0
      %4555 = vmatprep.subr.mxu0 0.0
      %4556 = vmatpush1.msra.mxu0 0.0
      %4557 = vmatprep.subr.mxu0 0.0
      %4558 = vmatpush1.msra.mxu0 0.0
      %4559 = vmatprep.subr.mxu0 0.0
      %4560 = vmatpush1.msra.mxu0 0.0
      %4561 = vmatprep.subr.mxu0 0.0
      %4562 = vmatpush1.msra.mxu0 0.0
      %4563 = vmatprep.subr.mxu0 0.0
      %4564 = vmatpush1.msra.mxu0 0.0
      %4565 = vmatprep.subr.mxu0 0.0
      %4566 = vmatpush1.msra.mxu0 0.0
      %4567 = vmatprep.subr.mxu0 0.0
      %4568 = vmatpush1.msra.mxu0 0.0
      %4569 = vmatprep.subr.mxu0 0.0
      %4570 = vmatpush1.msra.mxu0 0.0
      %4571 = vmatprep.subr.mxu0 0.0
      %4572 = vmatpush1.msra.mxu0 %v4539
      %4573 = vmatprep.subr.mxu0 0.0
      %4574 = vmatpush2.msra.mxu0 0.0
      %4575 = vmatprep.subr.mxu0 0.0
      %4576 = vmatpush2.msra.mxu0 0.0
      %4577 = vmatprep.subr.mxu0 0.0
      %4578 = vmatpush2.msra.mxu0 0.0
      %4579 = vmatprep.subr.mxu0 0.0
      %4580 = vmatpush2.msra.mxu0 0.0
      %4581 = vmatprep.subr.mxu0 0.0
      %4582 = vmatpush2.msra.mxu0 0.0
      %4583 = vmatprep.subr.mxu0 0.0
      %4584 = vmatpush2.msra.mxu0 0.0
      %4585 = vmatprep.subr.mxu0 0.0
      %4586 = vmatpush2.msra.mxu0 0.0
      %4587 = vmatprep.subr.mxu0 0.0
      %4588 = vmatpush2.msra.mxu0 0.0
      %4589 = vmatprep.subr.mxu0 0.0
      %4590 = vmatpush2.msra.mxu0 0.0
      %4591 = vmatprep.subr.mxu0 0.0
      %4592 = vmatpush2.msra.mxu0 0.0
      %4593 = vmatprep.subr.mxu0 0.0
      %4594 = vmatpush2.msra.mxu0 0.0
      %4595 = vmatprep.subr.mxu0 0.0
      %4596 = vmatpush2.msra.mxu0 0.0
      %4597 = vmatprep.subr.mxu0 0.0
      %4598 = vmatpush2.msra.mxu0 0.0
      %4599 = vmatprep.subr.mxu0 0.0
      %4600 = vmatpush2.msra.mxu0 0.0
      %4601 = vmatprep.subr.mxu0 0.0
      %4602 = vmatpush2.msra.mxu0 0.0
      %4603 = vmatprep.subr.mxu0 0.0
      %4604 = vmatpush2.msra.mxu0 0.0
      %4605 = vmatprep.mubr.f32.mxu0 0.0
      %4606 = vmatmul.mubr.f32.gmra.mxu0 %v582
      %v4607 = vpop.f32.mrf.mxu0
      %v4608 = vadd.f32 0.0, %v4607
      %v4609 = vpop.f32.mrf.mxu0
      %4610 = vmatprep.mubr.f32.mxu0 0.0
      %4611 = vmatmul.mubr.f32.gmra.mxu0 %v584
      %v4612 = vpop.f32.mrf.mxu0
      %v4613 = vadd.f32 0.0, %v4612
      %v4614 = vpop.f32.mrf.mxu0
      %4615 = vmatprep.mubr.f32.mxu0 0.0
      %4616 = vmatmul.mubr.f32.gmra.mxu0 %v586
      %v4617 = vpop.f32.mrf.mxu0
      %v4618 = vadd.f32 0.0, %v4617
      %v4619 = vpop.f32.mrf.mxu0
      %4620 = vmatprep.mubr.f32.mxu0 0.0
      %4621 = vmatmul.mubr.f32.gmra.mxu0 %v588
      %v4622 = vpop.f32.mrf.mxu0
      %v4623 = vadd.f32 0.0, %v4622
      %v4624 = vpop.f32.mrf.mxu0
      %4625 = vmatprep.mubr.f32.mxu0 0.0
      %4626 = vmatmul.mubr.f32.gmra.mxu0 %v590
      %v4627 = vpop.f32.mrf.mxu0
      %v4628 = vadd.f32 0.0, %v4627
      %v4629 = vpop.f32.mrf.mxu0
      %4630 = vmatprep.mubr.f32.mxu0 0.0
      %4631 = vmatmul.mubr.f32.gmra.mxu0 %v592
      %v4632 = vpop.f32.mrf.mxu0
      %v4633 = vadd.f32 0.0, %v4632
      %v4634 = vpop.f32.mrf.mxu0
      %4635 = vmatprep.mubr.f32.mxu0 0.0
      %4636 = vmatmul.mubr.f32.gmra.mxu0 %v594
      %v4637 = vpop.f32.mrf.mxu0
      %v4638 = vadd.f32 0.0, %v4637
      %v4639 = vpop.f32.mrf.mxu0
      %4640 = vmatprep.mubr.f32.mxu0 0.0
      %4641 = vmatmul.mubr.f32.gmra.mxu0 %v596
      %v4642 = vpop.f32.mrf.mxu0
      %v4643 = vadd.f32 0.0, %v4642
      %v4644 = vpop.f32.mrf.mxu0
      %4645 = vmatprep.mubr.f32.mxu0 0.0
      %4646 = vmatmul.mubr.f32.gmra.mxu0 %v598
      %v4647 = vpop.f32.mrf.mxu0
      %v4648 = vadd.f32 0.0, %v4647
      %v4649 = vpop.f32.mrf.mxu0
      %4650 = vmatprep.mubr.f32.mxu0 0.0
      %4651 = vmatmul.mubr.f32.gmra.mxu0 %v600
      %v4652 = vpop.f32.mrf.mxu0
      %v4653 = vadd.f32 0.0, %v4652
      %v4654 = vpop.f32.mrf.mxu0
      %4655 = vmatprep.mubr.f32.mxu0 0.0
      %4656 = vmatmul.mubr.f32.gmra.mxu0 %v602
      %v4657 = vpop.f32.mrf.mxu0
      %v4658 = vadd.f32 0.0, %v4657
      %v4659 = vpop.f32.mrf.mxu0
      %4660 = vmatprep.mubr.f32.mxu0 0.0
      %4661 = vmatmul.mubr.f32.gmra.mxu0 %v604
      %v4662 = vpop.f32.mrf.mxu0
      %v4663 = vadd.f32 0.0, %v4662
      %v4664 = vpop.f32.mrf.mxu0
      %4665 = vmatprep.mubr.f32.mxu0 0.0
      %4666 = vmatmul.mubr.f32.gmra.mxu0 %v606
      %v4667 = vpop.f32.mrf.mxu0
      %v4668 = vadd.f32 0.0, %v4667
      %v4669 = vpop.f32.mrf.mxu0
      %4670 = vmatprep.mubr.f32.mxu0 0.0
      %4671 = vmatmul.mubr.f32.gmra.mxu0 %v608
      %v4672 = vpop.f32.mrf.mxu0
      %v4673 = vadd.f32 0.0, %v4672
      %v4674 = vpop.f32.mrf.mxu0
      %4675 = vmatprep.mubr.f32.mxu0 0.0
      %4676 = vmatmul.mubr.f32.gmra.mxu0 %v1118
      %v4677 = vpop.f32.mrf.mxu0
      %v4678 = vadd.f32 0.0, %v4677
      %v4679 = vpop.f32.mrf.mxu0
      %4680 = vmatprep.mubr.f32.mxu0 0.0
      %4681 = vmatmul.mubr.f32.gmra.mxu0 %v1120
      %v4682 = vpop.f32.mrf.mxu0
      %v4683 = vadd.f32 0.0, %v4682
      %v4684 = vpop.f32.mrf.mxu0
      %4685 = vdwg.mxu0
      %v4687 = vsel %vm610, %v4535, 0
      %4689 = vmatprep.subr.mxu0 0.0
      %4690 = vmatpush1.msra.mxu0 0.0
      %4691 = vmatprep.subr.mxu0 0.0
      %4692 = vmatpush1.msra.mxu0 0.0
      %4693 = vmatprep.subr.mxu0 0.0
      %4694 = vmatpush1.msra.mxu0 0.0
      %4695 = vmatprep.subr.mxu0 0.0
      %4696 = vmatpush1.msra.mxu0 0.0
      %4697 = vmatprep.subr.mxu0 0.0
      %4698 = vmatpush1.msra.mxu0 0.0
      %4699 = vmatprep.subr.mxu0 0.0
      %4700 = vmatpush1.msra.mxu0 0.0
      %4701 = vmatprep.subr.mxu0 0.0
      %4702 = vmatpush1.msra.mxu0 0.0
      %4703 = vmatprep.subr.mxu0 0.0
      %4704 = vmatpush1.msra.mxu0 0.0
      %4705 = vmatprep.subr.mxu0 0.0
      %4706 = vmatpush1.msra.mxu0 0.0
      %4707 = vmatprep.subr.mxu0 0.0
      %4708 = vmatpush1.msra.mxu0 0.0
      %4709 = vmatprep.subr.mxu0 0.0
      %4710 = vmatpush1.msra.mxu0 0.0
      %4711 = vmatprep.subr.mxu0 0.0
      %4712 = vmatpush1.msra.mxu0 0.0
      %4713 = vmatprep.subr.mxu0 0.0
      %4714 = vmatpush1.msra.mxu0 0.0
      %4715 = vmatprep.subr.mxu0 0.0
      %4716 = vmatpush1.msra.mxu0 0.0
      %4717 = vmatprep.subr.mxu0 0.0
      %4718 = vmatpush1.msra.mxu0 0.0
      %4719 = vmatprep.subr.mxu0 0.0
      %4720 = vmatpush1.msra.mxu0 %v4687
      %4721 = vmatprep.subr.mxu0 0.0
      %4722 = vmatpush2.msra.mxu0 0.0
      %4723 = vmatprep.subr.mxu0 0.0
      %4724 = vmatpush2.msra.mxu0 0.0
      %4725 = vmatprep.subr.mxu0 0.0
      %4726 = vmatpush2.msra.mxu0 0.0
      %4727 = vmatprep.subr.mxu0 0.0
      %4728 = vmatpush2.msra.mxu0 0.0
      %4729 = vmatprep.subr.mxu0 0.0
      %4730 = vmatpush2.msra.mxu0 0.0
      %4731 = vmatprep.subr.mxu0 0.0
      %4732 = vmatpush2.msra.mxu0 0.0
      %4733 = vmatprep.subr.mxu0 0.0
      %4734 = vmatpush2.msra.mxu0 0.0
      %4735 = vmatprep.subr.mxu0 0.0
      %4736 = vmatpush2.msra.mxu0 0.0
      %4737 = vmatprep.subr.mxu0 0.0
      %4738 = vmatpush2.msra.mxu0 0.0
      %4739 = vmatprep.subr.mxu0 0.0
      %4740 = vmatpush2.msra.mxu0 0.0
      %4741 = vmatprep.subr.mxu0 0.0
      %4742 = vmatpush2.msra.mxu0 0.0
      %4743 = vmatprep.subr.mxu0 0.0
      %4744 = vmatpush2.msra.mxu0 0.0
      %4745 = vmatprep.subr.mxu0 0.0
      %4746 = vmatpush2.msra.mxu0 0.0
      %4747 = vmatprep.subr.mxu0 0.0
      %4748 = vmatpush2.msra.mxu0 0.0
      %4749 = vmatprep.subr.mxu0 0.0
      %4750 = vmatpush2.msra.mxu0 0.0
      %4751 = vmatprep.subr.mxu0 0.0
      %4752 = vmatpush2.msra.mxu0 0.0
      %4753 = vmatprep.mubr.f32.mxu0 0.0
      %4754 = vmatmul.mubr.f32.gmra.mxu0 %v763
      %v4755 = vpop.f32.mrf.mxu0
      %v4756 = vadd.f32 %v4608, %v4755
      %v4757 = vpop.f32.mrf.mxu0
      %4758 = vmatprep.mubr.f32.mxu0 0.0
      %4759 = vmatmul.mubr.f32.gmra.mxu0 %v765
      %v4760 = vpop.f32.mrf.mxu0
      %v4761 = vadd.f32 %v4613, %v4760
      %v4762 = vpop.f32.mrf.mxu0
      %4763 = vmatprep.mubr.f32.mxu0 0.0
      %4764 = vmatmul.mubr.f32.gmra.mxu0 %v767
      %v4765 = vpop.f32.mrf.mxu0
      %v4766 = vadd.f32 %v4618, %v4765
      %v4767 = vpop.f32.mrf.mxu0
      %4768 = vmatprep.mubr.f32.mxu0 0.0
      %4769 = vmatmul.mubr.f32.gmra.mxu0 %v769
      %v4770 = vpop.f32.mrf.mxu0
      %v4771 = vadd.f32 %v4623, %v4770
      %v4772 = vpop.f32.mrf.mxu0
      %4773 = vmatprep.mubr.f32.mxu0 0.0
      %4774 = vmatmul.mubr.f32.gmra.mxu0 %v771
      %v4775 = vpop.f32.mrf.mxu0
      %v4776 = vadd.f32 %v4628, %v4775
      %v4777 = vpop.f32.mrf.mxu0
      %4778 = vmatprep.mubr.f32.mxu0 0.0
      %4779 = vmatmul.mubr.f32.gmra.mxu0 %v773
      %v4780 = vpop.f32.mrf.mxu0
      %v4781 = vadd.f32 %v4633, %v4780
      %v4782 = vpop.f32.mrf.mxu0
      %4783 = vmatprep.mubr.f32.mxu0 0.0
      %4784 = vmatmul.mubr.f32.gmra.mxu0 %v775
      %v4785 = vpop.f32.mrf.mxu0
      %v4786 = vadd.f32 %v4638, %v4785
      %v4787 = vpop.f32.mrf.mxu0
      %4788 = vmatprep.mubr.f32.mxu0 0.0
      %4789 = vmatmul.mubr.f32.gmra.mxu0 %v777
      %v4790 = vpop.f32.mrf.mxu0
      %v4791 = vadd.f32 %v4643, %v4790
      %v4792 = vpop.f32.mrf.mxu0
      %4793 = vmatprep.mubr.f32.mxu0 0.0
      %4794 = vmatmul.mubr.f32.gmra.mxu0 %v779
      %v4795 = vpop.f32.mrf.mxu0
      %v4796 = vadd.f32 %v4648, %v4795
      %v4797 = vpop.f32.mrf.mxu0
      %4798 = vmatprep.mubr.f32.mxu0 0.0
      %4799 = vmatmul.mubr.f32.gmra.mxu0 %v781
      %v4800 = vpop.f32.mrf.mxu0
      %v4801 = vadd.f32 %v4653, %v4800
      %v4802 = vpop.f32.mrf.mxu0
      %4803 = vmatprep.mubr.f32.mxu0 0.0
      %4804 = vmatmul.mubr.f32.gmra.mxu0 %v783
      %v4805 = vpop.f32.mrf.mxu0
      %v4806 = vadd.f32 %v4658, %v4805
      %v4807 = vpop.f32.mrf.mxu0
      %4808 = vmatprep.mubr.f32.mxu0 0.0
      %4809 = vmatmul.mubr.f32.gmra.mxu0 %v785
      %v4810 = vpop.f32.mrf.mxu0
      %v4811 = vadd.f32 %v4663, %v4810
      %v4812 = vpop.f32.mrf.mxu0
      %4813 = vmatprep.mubr.f32.mxu0 0.0
      %4814 = vmatmul.mubr.f32.gmra.mxu0 %v787
      %v4815 = vpop.f32.mrf.mxu0
      %v4816 = vadd.f32 %v4668, %v4815
      %v4817 = vpop.f32.mrf.mxu0
      %4818 = vmatprep.mubr.f32.mxu0 0.0
      %4819 = vmatmul.mubr.f32.gmra.mxu0 %v789
      %v4820 = vpop.f32.mrf.mxu0
      %v4821 = vadd.f32 %v4673, %v4820
      %v4822 = vpop.f32.mrf.mxu0
      %4823 = vmatprep.mubr.f32.mxu0 0.0
      %4824 = vmatmul.mubr.f32.gmra.mxu0 %v942
      %v4825 = vpop.f32.mrf.mxu0
      %v4826 = vadd.f32 %v4678, %v4825
      %v4827 = vpop.f32.mrf.mxu0
      %4828 = vmatprep.mubr.f32.mxu0 0.0
      %4829 = vmatmul.mubr.f32.gmra.mxu0 %v944
      %v4830 = vpop.f32.mrf.mxu0
      %v4831 = vadd.f32 %v4683, %v4830
      %v4832 = vpop.f32.mrf.mxu0
      %4833 = vdwg.mxu0
      %s4834 = scalar_lea.vmem %s3, 40
      %v4835 = vld [vmem:[%s4834] sm:$0xf]
      %v4837 = vsel %vm577, %v505, 0
      %v4839 = vsel %vm577, %v475, 0
      %v4842 = vsel %vm610, %v4835, 0
      %4844 = vmatprep.subr.mxu0 0.0
      %4845 = vmatpush1.msra.mxu0 0.0
      %4846 = vmatprep.subr.mxu0 0.0
      %4847 = vmatpush1.msra.mxu0 0.0
      %4848 = vmatprep.subr.mxu0 0.0
      %4849 = vmatpush1.msra.mxu0 0.0
      %4850 = vmatprep.subr.mxu0 0.0
      %4851 = vmatpush1.msra.mxu0 0.0
      %4852 = vmatprep.subr.mxu0 0.0
      %4853 = vmatpush1.msra.mxu0 0.0
      %4854 = vmatprep.subr.mxu0 0.0
      %4855 = vmatpush1.msra.mxu0 0.0
      %4856 = vmatprep.subr.mxu0 0.0
      %4857 = vmatpush1.msra.mxu0 0.0
      %4858 = vmatprep.subr.mxu0 0.0
      %4859 = vmatpush1.msra.mxu0 0.0
      %4860 = vmatprep.subr.mxu0 0.0
      %4861 = vmatpush1.msra.mxu0 0.0
      %4862 = vmatprep.subr.mxu0 0.0
      %4863 = vmatpush1.msra.mxu0 0.0
      %4864 = vmatprep.subr.mxu0 0.0
      %4865 = vmatpush1.msra.mxu0 0.0
      %4866 = vmatprep.subr.mxu0 0.0
      %4867 = vmatpush1.msra.mxu0 0.0
      %4868 = vmatprep.subr.mxu0 0.0
      %4869 = vmatpush1.msra.mxu0 0.0
      %4870 = vmatprep.subr.mxu0 0.0
      %4871 = vmatpush1.msra.mxu0 0.0
      %4872 = vmatprep.subr.mxu0 0.0
      %4873 = vmatpush1.msra.mxu0 0.0
      %4874 = vmatprep.subr.mxu0 0.0
      %4875 = vmatpush1.msra.mxu0 %v4842
      %4876 = vmatprep.subr.mxu0 0.0
      %4877 = vmatpush2.msra.mxu0 0.0
      %4878 = vmatprep.subr.mxu0 0.0
      %4879 = vmatpush2.msra.mxu0 0.0
      %4880 = vmatprep.subr.mxu0 0.0
      %4881 = vmatpush2.msra.mxu0 0.0
      %4882 = vmatprep.subr.mxu0 0.0
      %4883 = vmatpush2.msra.mxu0 0.0
      %4884 = vmatprep.subr.mxu0 0.0
      %4885 = vmatpush2.msra.mxu0 0.0
      %4886 = vmatprep.subr.mxu0 0.0
      %4887 = vmatpush2.msra.mxu0 0.0
      %4888 = vmatprep.subr.mxu0 0.0
      %4889 = vmatpush2.msra.mxu0 0.0
      %4890 = vmatprep.subr.mxu0 0.0
      %4891 = vmatpush2.msra.mxu0 0.0
      %4892 = vmatprep.subr.mxu0 0.0
      %4893 = vmatpush2.msra.mxu0 0.0
      %4894 = vmatprep.subr.mxu0 0.0
      %4895 = vmatpush2.msra.mxu0 0.0
      %4896 = vmatprep.subr.mxu0 0.0
      %4897 = vmatpush2.msra.mxu0 0.0
      %4898 = vmatprep.subr.mxu0 0.0
      %4899 = vmatpush2.msra.mxu0 0.0
      %4900 = vmatprep.subr.mxu0 0.0
      %4901 = vmatpush2.msra.mxu0 0.0
      %4902 = vmatprep.subr.mxu0 0.0
      %4903 = vmatpush2.msra.mxu0 0.0
      %4904 = vmatprep.subr.mxu0 0.0
      %4905 = vmatpush2.msra.mxu0 0.0
      %4906 = vmatprep.subr.mxu0 0.0
      %4907 = vmatpush2.msra.mxu0 0.0
      %4908 = vmatprep.mubr.f32.mxu0 0.0
      %4909 = vmatmul.mubr.f32.gmra.mxu0 %v767
      %v4910 = vpop.f32.mrf.mxu0
      %v4911 = vadd.f32 0.0, %v4910
      %v4912 = vpop.f32.mrf.mxu0
      %4913 = vmatprep.mubr.f32.mxu0 0.0
      %4914 = vmatmul.mubr.f32.gmra.mxu0 %v769
      %v4915 = vpop.f32.mrf.mxu0
      %v4916 = vadd.f32 0.0, %v4915
      %v4917 = vpop.f32.mrf.mxu0
      %4918 = vmatprep.mubr.f32.mxu0 0.0
      %4919 = vmatmul.mubr.f32.gmra.mxu0 %v771
      %v4920 = vpop.f32.mrf.mxu0
      %v4921 = vadd.f32 0.0, %v4920
      %v4922 = vpop.f32.mrf.mxu0
      %4923 = vmatprep.mubr.f32.mxu0 0.0
      %4924 = vmatmul.mubr.f32.gmra.mxu0 %v773
      %v4925 = vpop.f32.mrf.mxu0
      %v4926 = vadd.f32 0.0, %v4925
      %v4927 = vpop.f32.mrf.mxu0
      %4928 = vmatprep.mubr.f32.mxu0 0.0
      %4929 = vmatmul.mubr.f32.gmra.mxu0 %v775
      %v4930 = vpop.f32.mrf.mxu0
      %v4931 = vadd.f32 0.0, %v4930
      %v4932 = vpop.f32.mrf.mxu0
      %4933 = vmatprep.mubr.f32.mxu0 0.0
      %4934 = vmatmul.mubr.f32.gmra.mxu0 %v777
      %v4935 = vpop.f32.mrf.mxu0
      %v4936 = vadd.f32 0.0, %v4935
      %v4937 = vpop.f32.mrf.mxu0
      %4938 = vmatprep.mubr.f32.mxu0 0.0
      %4939 = vmatmul.mubr.f32.gmra.mxu0 %v779
      %v4940 = vpop.f32.mrf.mxu0
      %v4941 = vadd.f32 0.0, %v4940
      %v4942 = vpop.f32.mrf.mxu0
      %4943 = vmatprep.mubr.f32.mxu0 0.0
      %4944 = vmatmul.mubr.f32.gmra.mxu0 %v781
      %v4945 = vpop.f32.mrf.mxu0
      %v4946 = vadd.f32 0.0, %v4945
      %v4947 = vpop.f32.mrf.mxu0
      %4948 = vmatprep.mubr.f32.mxu0 0.0
      %4949 = vmatmul.mubr.f32.gmra.mxu0 %v783
      %v4950 = vpop.f32.mrf.mxu0
      %v4951 = vadd.f32 0.0, %v4950
      %v4952 = vpop.f32.mrf.mxu0
      %4953 = vmatprep.mubr.f32.mxu0 0.0
      %4954 = vmatmul.mubr.f32.gmra.mxu0 %v785
      %v4955 = vpop.f32.mrf.mxu0
      %v4956 = vadd.f32 0.0, %v4955
      %v4957 = vpop.f32.mrf.mxu0
      %4958 = vmatprep.mubr.f32.mxu0 0.0
      %4959 = vmatmul.mubr.f32.gmra.mxu0 %v787
      %v4960 = vpop.f32.mrf.mxu0
      %v4961 = vadd.f32 0.0, %v4960
      %v4962 = vpop.f32.mrf.mxu0
      %4963 = vmatprep.mubr.f32.mxu0 0.0
      %4964 = vmatmul.mubr.f32.gmra.mxu0 %v789
      %v4965 = vpop.f32.mrf.mxu0
      %v4966 = vadd.f32 0.0, %v4965
      %v4967 = vpop.f32.mrf.mxu0
      %4968 = vmatprep.mubr.f32.mxu0 0.0
      %4969 = vmatmul.mubr.f32.gmra.mxu0 %v942
      %v4970 = vpop.f32.mrf.mxu0
      %v4971 = vadd.f32 0.0, %v4970
      %v4972 = vpop.f32.mrf.mxu0
      %4973 = vmatprep.mubr.f32.mxu0 0.0
      %4974 = vmatmul.mubr.f32.gmra.mxu0 %v944
      %v4975 = vpop.f32.mrf.mxu0
      %v4976 = vadd.f32 0.0, %v4975
      %v4977 = vpop.f32.mrf.mxu0
      %4978 = vmatprep.mubr.f32.mxu0 0.0
      %4979 = vmatmul.mubr.f32.gmra.mxu0 %v4837
      %v4980 = vpop.f32.mrf.mxu0
      %v4981 = vadd.f32 0.0, %v4980
      %v4982 = vpop.f32.mrf.mxu0
      %4983 = vmatprep.mubr.f32.mxu0 0.0
      %4984 = vmatmul.mubr.f32.gmra.mxu0 %v4839
      %v4985 = vpop.f32.mrf.mxu0
      %v4986 = vadd.f32 0.0, %v4985
      %v4987 = vpop.f32.mrf.mxu0
      %4988 = vdwg.mxu0
      %v4989 = vadd.f32 %v4756, %v4911
      %v4990 = vadd.f32 %v4761, %v4916
      %v4991 = vadd.f32 %v4766, %v4921
      %v4992 = vadd.f32 %v4771, %v4926
      %v4993 = vadd.f32 %v4776, %v4931
      %v4994 = vadd.f32 %v4781, %v4936
      %v4995 = vadd.f32 %v4786, %v4941
      %v4996 = vadd.f32 %v4791, %v4946
      %v4997 = vadd.f32 %v4796, %v4951
      %v4998 = vadd.f32 %v4801, %v4956
      %v4999 = vadd.f32 %v4806, %v4961
      %v5000 = vadd.f32 %v4811, %v4966
      %v5001 = vadd.f32 %v4816, %v4971
      %v5002 = vadd.f32 %v4821, %v4976
      %v5003 = vadd.f32 %v4826, %v4981
      %v5004 = vadd.f32 %v4831, %v4986
      %v5006 = vrot.slane %v505, 1
      %v5007 = vrot.slane %v475, 1
      %v5008 = vsel %vm534, %v5006, %v5007
      %v5009 = vrot.slane %v515, 1
      %v5010 = vsel %vm534, %v5007, %v5009
      %s5011 = scalar_lea.vmem %s3, 44
      %v5012 = vld [vmem:[%s5011] sm:$0xf]
      %v5013 = vsel %vm577, %v5008, 0
      %v5015 = vsel %vm577, %v5010, 0
      %v5018 = vsel %vm610, %v5012, 0
      %5020 = vmatprep.subr.mxu0 0.0
      %5021 = vmatpush1.msra.mxu0 0.0
      %5022 = vmatprep.subr.mxu0 0.0
      %5023 = vmatpush1.msra.mxu0 0.0
      %5024 = vmatprep.subr.mxu0 0.0
      %5025 = vmatpush1.msra.mxu0 0.0
      %5026 = vmatprep.subr.mxu0 0.0
      %5027 = vmatpush1.msra.mxu0 0.0
      %5028 = vmatprep.subr.mxu0 0.0
      %5029 = vmatpush1.msra.mxu0 0.0
      %5030 = vmatprep.subr.mxu0 0.0
      %5031 = vmatpush1.msra.mxu0 0.0
      %5032 = vmatprep.subr.mxu0 0.0
      %5033 = vmatpush1.msra.mxu0 0.0
      %5034 = vmatprep.subr.mxu0 0.0
      %5035 = vmatpush1.msra.mxu0 0.0
      %5036 = vmatprep.subr.mxu0 0.0
      %5037 = vmatpush1.msra.mxu0 0.0
      %5038 = vmatprep.subr.mxu0 0.0
      %5039 = vmatpush1.msra.mxu0 0.0
      %5040 = vmatprep.subr.mxu0 0.0
      %5041 = vmatpush1.msra.mxu0 0.0
      %5042 = vmatprep.subr.mxu0 0.0
      %5043 = vmatpush1.msra.mxu0 0.0
      %5044 = vmatprep.subr.mxu0 0.0
      %5045 = vmatpush1.msra.mxu0 0.0
      %5046 = vmatprep.subr.mxu0 0.0
      %5047 = vmatpush1.msra.mxu0 0.0
      %5048 = vmatprep.subr.mxu0 0.0
      %5049 = vmatpush1.msra.mxu0 0.0
      %5050 = vmatprep.subr.mxu0 0.0
      %5051 = vmatpush1.msra.mxu0 %v5018
      %5052 = vmatprep.subr.mxu0 0.0
      %5053 = vmatpush2.msra.mxu0 0.0
      %5054 = vmatprep.subr.mxu0 0.0
      %5055 = vmatpush2.msra.mxu0 0.0
      %5056 = vmatprep.subr.mxu0 0.0
      %5057 = vmatpush2.msra.mxu0 0.0
      %5058 = vmatprep.subr.mxu0 0.0
      %5059 = vmatpush2.msra.mxu0 0.0
      %5060 = vmatprep.subr.mxu0 0.0
      %5061 = vmatpush2.msra.mxu0 0.0
      %5062 = vmatprep.subr.mxu0 0.0
      %5063 = vmatpush2.msra.mxu0 0.0
      %5064 = vmatprep.subr.mxu0 0.0
      %5065 = vmatpush2.msra.mxu0 0.0
      %5066 = vmatprep.subr.mxu0 0.0
      %5067 = vmatpush2.msra.mxu0 0.0
      %5068 = vmatprep.subr.mxu0 0.0
      %5069 = vmatpush2.msra.mxu0 0.0
      %5070 = vmatprep.subr.mxu0 0.0
      %5071 = vmatpush2.msra.mxu0 0.0
      %5072 = vmatprep.subr.mxu0 0.0
      %5073 = vmatpush2.msra.mxu0 0.0
      %5074 = vmatprep.subr.mxu0 0.0
      %5075 = vmatpush2.msra.mxu0 0.0
      %5076 = vmatprep.subr.mxu0 0.0
      %5077 = vmatpush2.msra.mxu0 0.0
      %5078 = vmatprep.subr.mxu0 0.0
      %5079 = vmatpush2.msra.mxu0 0.0
      %5080 = vmatprep.subr.mxu0 0.0
      %5081 = vmatpush2.msra.mxu0 0.0
      %5082 = vmatprep.subr.mxu0 0.0
      %5083 = vmatpush2.msra.mxu0 0.0
      %5084 = vmatprep.mubr.f32.mxu0 0.0
      %5085 = vmatmul.mubr.f32.gmra.mxu0 %v586
      %v5086 = vpop.f32.mrf.mxu0
      %v5087 = vadd.f32 0.0, %v5086
      %v5088 = vpop.f32.mrf.mxu0
      %5089 = vmatprep.mubr.f32.mxu0 0.0
      %5090 = vmatmul.mubr.f32.gmra.mxu0 %v588
      %v5091 = vpop.f32.mrf.mxu0
      %v5092 = vadd.f32 0.0, %v5091
      %v5093 = vpop.f32.mrf.mxu0
      %5094 = vmatprep.mubr.f32.mxu0 0.0
      %5095 = vmatmul.mubr.f32.gmra.mxu0 %v590
      %v5096 = vpop.f32.mrf.mxu0
      %v5097 = vadd.f32 0.0, %v5096
      %v5098 = vpop.f32.mrf.mxu0
      %5099 = vmatprep.mubr.f32.mxu0 0.0
      %5100 = vmatmul.mubr.f32.gmra.mxu0 %v592
      %v5101 = vpop.f32.mrf.mxu0
      %v5102 = vadd.f32 0.0, %v5101
      %v5103 = vpop.f32.mrf.mxu0
      %5104 = vmatprep.mubr.f32.mxu0 0.0
      %5105 = vmatmul.mubr.f32.gmra.mxu0 %v594
      %v5106 = vpop.f32.mrf.mxu0
      %v5107 = vadd.f32 0.0, %v5106
      %v5108 = vpop.f32.mrf.mxu0
      %5109 = vmatprep.mubr.f32.mxu0 0.0
      %5110 = vmatmul.mubr.f32.gmra.mxu0 %v596
      %v5111 = vpop.f32.mrf.mxu0
      %v5112 = vadd.f32 0.0, %v5111
      %v5113 = vpop.f32.mrf.mxu0
      %5114 = vmatprep.mubr.f32.mxu0 0.0
      %5115 = vmatmul.mubr.f32.gmra.mxu0 %v598
      %v5116 = vpop.f32.mrf.mxu0
      %v5117 = vadd.f32 0.0, %v5116
      %v5118 = vpop.f32.mrf.mxu0
      %5119 = vmatprep.mubr.f32.mxu0 0.0
      %5120 = vmatmul.mubr.f32.gmra.mxu0 %v600
      %v5121 = vpop.f32.mrf.mxu0
      %v5122 = vadd.f32 0.0, %v5121
      %v5123 = vpop.f32.mrf.mxu0
      %5124 = vmatprep.mubr.f32.mxu0 0.0
      %5125 = vmatmul.mubr.f32.gmra.mxu0 %v602
      %v5126 = vpop.f32.mrf.mxu0
      %v5127 = vadd.f32 0.0, %v5126
      %v5128 = vpop.f32.mrf.mxu0
      %5129 = vmatprep.mubr.f32.mxu0 0.0
      %5130 = vmatmul.mubr.f32.gmra.mxu0 %v604
      %v5131 = vpop.f32.mrf.mxu0
      %v5132 = vadd.f32 0.0, %v5131
      %v5133 = vpop.f32.mrf.mxu0
      %5134 = vmatprep.mubr.f32.mxu0 0.0
      %5135 = vmatmul.mubr.f32.gmra.mxu0 %v606
      %v5136 = vpop.f32.mrf.mxu0
      %v5137 = vadd.f32 0.0, %v5136
      %v5138 = vpop.f32.mrf.mxu0
      %5139 = vmatprep.mubr.f32.mxu0 0.0
      %5140 = vmatmul.mubr.f32.gmra.mxu0 %v608
      %v5141 = vpop.f32.mrf.mxu0
      %v5142 = vadd.f32 0.0, %v5141
      %v5143 = vpop.f32.mrf.mxu0
      %5144 = vmatprep.mubr.f32.mxu0 0.0
      %5145 = vmatmul.mubr.f32.gmra.mxu0 %v1118
      %v5146 = vpop.f32.mrf.mxu0
      %v5147 = vadd.f32 0.0, %v5146
      %v5148 = vpop.f32.mrf.mxu0
      %5149 = vmatprep.mubr.f32.mxu0 0.0
      %5150 = vmatmul.mubr.f32.gmra.mxu0 %v1120
      %v5151 = vpop.f32.mrf.mxu0
      %v5152 = vadd.f32 0.0, %v5151
      %v5153 = vpop.f32.mrf.mxu0
      %5154 = vmatprep.mubr.f32.mxu0 0.0
      %5155 = vmatmul.mubr.f32.gmra.mxu0 %v5013
      %v5156 = vpop.f32.mrf.mxu0
      %v5157 = vadd.f32 0.0, %v5156
      %v5158 = vpop.f32.mrf.mxu0
      %5159 = vmatprep.mubr.f32.mxu0 0.0
      %5160 = vmatmul.mubr.f32.gmra.mxu0 %v5015
      %v5161 = vpop.f32.mrf.mxu0
      %v5162 = vadd.f32 0.0, %v5161
      %v5163 = vpop.f32.mrf.mxu0
      %5164 = vdwg.mxu0
      %v5165 = vadd.f32 %v4989, %v5087
      %v5166 = vadd.f32 %v4990, %v5092
      %v5167 = vadd.f32 %v4991, %v5097
      %v5168 = vadd.f32 %v4992, %v5102
      %v5169 = vadd.f32 %v4993, %v5107
      %v5170 = vadd.f32 %v4994, %v5112
      %v5171 = vadd.f32 %v4995, %v5117
      %v5172 = vadd.f32 %v4996, %v5122
      %v5173 = vadd.f32 %v4997, %v5127
      %v5174 = vadd.f32 %v4998, %v5132
      %v5175 = vadd.f32 %v4999, %v5137
      %v5176 = vadd.f32 %v5000, %v5142
      %v5177 = vadd.f32 %v5001, %v5147
      %v5178 = vadd.f32 %v5002, %v5152
      %v5179 = vadd.f32 %v5003, %v5157
      %v5180 = vadd.f32 %v5004, %v5162
      %v5181 = vadd.f32 %v5165, %v1290
      %v5182 = vadd.f32 %v5166, %v1290
      %v5183 = vadd.f32 %v5167, %v1290
      %v5184 = vadd.f32 %v5168, %v1290
      %v5185 = vadd.f32 %v5169, %v1290
      %v5186 = vadd.f32 %v5170, %v1290
      %v5187 = vadd.f32 %v5171, %v1290
      %v5188 = vadd.f32 %v5172, %v1290
      %v5189 = vadd.f32 %v5173, %v1290
      %v5190 = vadd.f32 %v5174, %v1290
      %v5191 = vadd.f32 %v5175, %v1290
      %v5192 = vadd.f32 %v5176, %v1290
      %v5193 = vadd.f32 %v5177, %v1290
      %v5194 = vadd.f32 %v5178, %v1290
      %v5195 = vadd.f32 %v5179, %v1290
      %v5196 = vadd.f32 %v5180, %v1290
      %s5197 = scalar_lea.vmem %s3, 48
      %v5198 = vld [vmem:[%s5197] sm:$0xf]
      %s5199 = scalar_lea.vmem %s3, 52
      %v5200 = vld [vmem:[%s5199] sm:$0xf]
      %v5202 = vsel %vm610, %v5200, 0
      %5204 = vmatprep.subr.mxu0 0.0
      %5205 = vmatpush1.msra.mxu0 0.0
      %5206 = vmatprep.subr.mxu0 0.0
      %5207 = vmatpush1.msra.mxu0 0.0
      %5208 = vmatprep.subr.mxu0 0.0
      %5209 = vmatpush1.msra.mxu0 0.0
      %5210 = vmatprep.subr.mxu0 0.0
      %5211 = vmatpush1.msra.mxu0 0.0
      %5212 = vmatprep.subr.mxu0 0.0
      %5213 = vmatpush1.msra.mxu0 0.0
      %5214 = vmatprep.subr.mxu0 0.0
      %5215 = vmatpush1.msra.mxu0 0.0
      %5216 = vmatprep.subr.mxu0 0.0
      %5217 = vmatpush1.msra.mxu0 0.0
      %5218 = vmatprep.subr.mxu0 0.0
      %5219 = vmatpush1.msra.mxu0 0.0
      %5220 = vmatprep.subr.mxu0 0.0
      %5221 = vmatpush1.msra.mxu0 0.0
      %5222 = vmatprep.subr.mxu0 0.0
      %5223 = vmatpush1.msra.mxu0 0.0
      %5224 = vmatprep.subr.mxu0 0.0
      %5225 = vmatpush1.msra.mxu0 0.0
      %5226 = vmatprep.subr.mxu0 0.0
      %5227 = vmatpush1.msra.mxu0 0.0
      %5228 = vmatprep.subr.mxu0 0.0
      %5229 = vmatpush1.msra.mxu0 0.0
      %5230 = vmatprep.subr.mxu0 0.0
      %5231 = vmatpush1.msra.mxu0 0.0
      %5232 = vmatprep.subr.mxu0 0.0
      %5233 = vmatpush1.msra.mxu0 0.0
      %5234 = vmatprep.subr.mxu0 0.0
      %5235 = vmatpush1.msra.mxu0 %v5202
      %5236 = vmatprep.subr.mxu0 0.0
      %5237 = vmatpush2.msra.mxu0 0.0
      %5238 = vmatprep.subr.mxu0 0.0
      %5239 = vmatpush2.msra.mxu0 0.0
      %5240 = vmatprep.subr.mxu0 0.0
      %5241 = vmatpush2.msra.mxu0 0.0
      %5242 = vmatprep.subr.mxu0 0.0
      %5243 = vmatpush2.msra.mxu0 0.0
      %5244 = vmatprep.subr.mxu0 0.0
      %5245 = vmatpush2.msra.mxu0 0.0
      %5246 = vmatprep.subr.mxu0 0.0
      %5247 = vmatpush2.msra.mxu0 0.0
      %5248 = vmatprep.subr.mxu0 0.0
      %5249 = vmatpush2.msra.mxu0 0.0
      %5250 = vmatprep.subr.mxu0 0.0
      %5251 = vmatpush2.msra.mxu0 0.0
      %5252 = vmatprep.subr.mxu0 0.0
      %5253 = vmatpush2.msra.mxu0 0.0
      %5254 = vmatprep.subr.mxu0 0.0
      %5255 = vmatpush2.msra.mxu0 0.0
      %5256 = vmatprep.subr.mxu0 0.0
      %5257 = vmatpush2.msra.mxu0 0.0
      %5258 = vmatprep.subr.mxu0 0.0
      %5259 = vmatpush2.msra.mxu0 0.0
      %5260 = vmatprep.subr.mxu0 0.0
      %5261 = vmatpush2.msra.mxu0 0.0
      %5262 = vmatprep.subr.mxu0 0.0
      %5263 = vmatpush2.msra.mxu0 0.0
      %5264 = vmatprep.subr.mxu0 0.0
      %5265 = vmatpush2.msra.mxu0 0.0
      %5266 = vmatprep.subr.mxu0 0.0
      %5267 = vmatpush2.msra.mxu0 0.0
      %5268 = vmatprep.mubr.f32.mxu0 0.0
      %5269 = vmatmul.mubr.f32.gmra.mxu0 %v1357
      %v5270 = vpop.f32.mrf.mxu0
      %v5271 = vadd.f32 0.0, %v5270
      %v5272 = vpop.f32.mrf.mxu0
      %5273 = vmatprep.mubr.f32.mxu0 0.0
      %5274 = vmatmul.mubr.f32.gmra.mxu0 %v1359
      %v5275 = vpop.f32.mrf.mxu0
      %v5276 = vadd.f32 0.0, %v5275
      %v5277 = vpop.f32.mrf.mxu0
      %5278 = vmatprep.mubr.f32.mxu0 0.0
      %5279 = vmatmul.mubr.f32.gmra.mxu0 %v1361
      %v5280 = vpop.f32.mrf.mxu0
      %v5281 = vadd.f32 0.0, %v5280
      %v5282 = vpop.f32.mrf.mxu0
      %5283 = vmatprep.mubr.f32.mxu0 0.0
      %5284 = vmatmul.mubr.f32.gmra.mxu0 %v1363
      %v5285 = vpop.f32.mrf.mxu0
      %v5286 = vadd.f32 0.0, %v5285
      %v5287 = vpop.f32.mrf.mxu0
      %5288 = vmatprep.mubr.f32.mxu0 0.0
      %5289 = vmatmul.mubr.f32.gmra.mxu0 %v1365
      %v5290 = vpop.f32.mrf.mxu0
      %v5291 = vadd.f32 0.0, %v5290
      %v5292 = vpop.f32.mrf.mxu0
      %5293 = vmatprep.mubr.f32.mxu0 0.0
      %5294 = vmatmul.mubr.f32.gmra.mxu0 %v1367
      %v5295 = vpop.f32.mrf.mxu0
      %v5296 = vadd.f32 0.0, %v5295
      %v5297 = vpop.f32.mrf.mxu0
      %5298 = vmatprep.mubr.f32.mxu0 0.0
      %5299 = vmatmul.mubr.f32.gmra.mxu0 %v1369
      %v5300 = vpop.f32.mrf.mxu0
      %v5301 = vadd.f32 0.0, %v5300
      %v5302 = vpop.f32.mrf.mxu0
      %5303 = vmatprep.mubr.f32.mxu0 0.0
      %5304 = vmatmul.mubr.f32.gmra.mxu0 %v1371
      %v5305 = vpop.f32.mrf.mxu0
      %v5306 = vadd.f32 0.0, %v5305
      %v5307 = vpop.f32.mrf.mxu0
      %5308 = vmatprep.mubr.f32.mxu0 0.0
      %5309 = vmatmul.mubr.f32.gmra.mxu0 %v1373
      %v5310 = vpop.f32.mrf.mxu0
      %v5311 = vadd.f32 0.0, %v5310
      %v5312 = vpop.f32.mrf.mxu0
      %5313 = vmatprep.mubr.f32.mxu0 0.0
      %5314 = vmatmul.mubr.f32.gmra.mxu0 %v1375
      %v5315 = vpop.f32.mrf.mxu0
      %v5316 = vadd.f32 0.0, %v5315
      %v5317 = vpop.f32.mrf.mxu0
      %5318 = vmatprep.mubr.f32.mxu0 0.0
      %5319 = vmatmul.mubr.f32.gmra.mxu0 %v1377
      %v5320 = vpop.f32.mrf.mxu0
      %v5321 = vadd.f32 0.0, %v5320
      %v5322 = vpop.f32.mrf.mxu0
      %5323 = vmatprep.mubr.f32.mxu0 0.0
      %5324 = vmatmul.mubr.f32.gmra.mxu0 %v1379
      %v5325 = vpop.f32.mrf.mxu0
      %v5326 = vadd.f32 0.0, %v5325
      %v5327 = vpop.f32.mrf.mxu0
      %5328 = vmatprep.mubr.f32.mxu0 0.0
      %5329 = vmatmul.mubr.f32.gmra.mxu0 %v1381
      %v5330 = vpop.f32.mrf.mxu0
      %v5331 = vadd.f32 0.0, %v5330
      %v5332 = vpop.f32.mrf.mxu0
      %5333 = vmatprep.mubr.f32.mxu0 0.0
      %5334 = vmatmul.mubr.f32.gmra.mxu0 %v1383
      %v5335 = vpop.f32.mrf.mxu0
      %v5336 = vadd.f32 0.0, %v5335
      %v5337 = vpop.f32.mrf.mxu0
      %5338 = vmatprep.mubr.f32.mxu0 0.0
      %5339 = vmatmul.mubr.f32.gmra.mxu0 %v1854
      %v5340 = vpop.f32.mrf.mxu0
      %v5341 = vadd.f32 0.0, %v5340
      %v5342 = vpop.f32.mrf.mxu0
      %5343 = vmatprep.mubr.f32.mxu0 0.0
      %5344 = vmatmul.mubr.f32.gmra.mxu0 %v1856
      %v5345 = vpop.f32.mrf.mxu0
      %v5346 = vadd.f32 0.0, %v5345
      %v5347 = vpop.f32.mrf.mxu0
      %5348 = vdwg.mxu0
      %v5350 = vsel %vm610, %v5198, 0
      %5352 = vmatprep.subr.mxu0 0.0
      %5353 = vmatpush1.msra.mxu0 0.0
      %5354 = vmatprep.subr.mxu0 0.0
      %5355 = vmatpush1.msra.mxu0 0.0
      %5356 = vmatprep.subr.mxu0 0.0
      %5357 = vmatpush1.msra.mxu0 0.0
      %5358 = vmatprep.subr.mxu0 0.0
      %5359 = vmatpush1.msra.mxu0 0.0
      %5360 = vmatprep.subr.mxu0 0.0
      %5361 = vmatpush1.msra.mxu0 0.0
      %5362 = vmatprep.subr.mxu0 0.0
      %5363 = vmatpush1.msra.mxu0 0.0
      %5364 = vmatprep.subr.mxu0 0.0
      %5365 = vmatpush1.msra.mxu0 0.0
      %5366 = vmatprep.subr.mxu0 0.0
      %5367 = vmatpush1.msra.mxu0 0.0
      %5368 = vmatprep.subr.mxu0 0.0
      %5369 = vmatpush1.msra.mxu0 0.0
      %5370 = vmatprep.subr.mxu0 0.0
      %5371 = vmatpush1.msra.mxu0 0.0
      %5372 = vmatprep.subr.mxu0 0.0
      %5373 = vmatpush1.msra.mxu0 0.0
      %5374 = vmatprep.subr.mxu0 0.0
      %5375 = vmatpush1.msra.mxu0 0.0
      %5376 = vmatprep.subr.mxu0 0.0
      %5377 = vmatpush1.msra.mxu0 0.0
      %5378 = vmatprep.subr.mxu0 0.0
      %5379 = vmatpush1.msra.mxu0 0.0
      %5380 = vmatprep.subr.mxu0 0.0
      %5381 = vmatpush1.msra.mxu0 0.0
      %5382 = vmatprep.subr.mxu0 0.0
      %5383 = vmatpush1.msra.mxu0 %v5350
      %5384 = vmatprep.subr.mxu0 0.0
      %5385 = vmatpush2.msra.mxu0 0.0
      %5386 = vmatprep.subr.mxu0 0.0
      %5387 = vmatpush2.msra.mxu0 0.0
      %5388 = vmatprep.subr.mxu0 0.0
      %5389 = vmatpush2.msra.mxu0 0.0
      %5390 = vmatprep.subr.mxu0 0.0
      %5391 = vmatpush2.msra.mxu0 0.0
      %5392 = vmatprep.subr.mxu0 0.0
      %5393 = vmatpush2.msra.mxu0 0.0
      %5394 = vmatprep.subr.mxu0 0.0
      %5395 = vmatpush2.msra.mxu0 0.0
      %5396 = vmatprep.subr.mxu0 0.0
      %5397 = vmatpush2.msra.mxu0 0.0
      %5398 = vmatprep.subr.mxu0 0.0
      %5399 = vmatpush2.msra.mxu0 0.0
      %5400 = vmatprep.subr.mxu0 0.0
      %5401 = vmatpush2.msra.mxu0 0.0
      %5402 = vmatprep.subr.mxu0 0.0
      %5403 = vmatpush2.msra.mxu0 0.0
      %5404 = vmatprep.subr.mxu0 0.0
      %5405 = vmatpush2.msra.mxu0 0.0
      %5406 = vmatprep.subr.mxu0 0.0
      %5407 = vmatpush2.msra.mxu0 0.0
      %5408 = vmatprep.subr.mxu0 0.0
      %5409 = vmatpush2.msra.mxu0 0.0
      %5410 = vmatprep.subr.mxu0 0.0
      %5411 = vmatpush2.msra.mxu0 0.0
      %5412 = vmatprep.subr.mxu0 0.0
      %5413 = vmatpush2.msra.mxu0 0.0
      %5414 = vmatprep.subr.mxu0 0.0
      %5415 = vmatpush2.msra.mxu0 0.0
      %5416 = vmatprep.mubr.f32.mxu0 0.0
      %5417 = vmatmul.mubr.f32.gmra.mxu0 %v582
      %v5418 = vpop.f32.mrf.mxu0
      %v5419 = vadd.f32 %v5271, %v5418
      %v5420 = vpop.f32.mrf.mxu0
      %5421 = vmatprep.mubr.f32.mxu0 0.0
      %5422 = vmatmul.mubr.f32.gmra.mxu0 %v584
      %v5423 = vpop.f32.mrf.mxu0
      %v5424 = vadd.f32 %v5276, %v5423
      %v5425 = vpop.f32.mrf.mxu0
      %5426 = vmatprep.mubr.f32.mxu0 0.0
      %5427 = vmatmul.mubr.f32.gmra.mxu0 %v586
      %v5428 = vpop.f32.mrf.mxu0
      %v5429 = vadd.f32 %v5281, %v5428
      %v5430 = vpop.f32.mrf.mxu0
      %5431 = vmatprep.mubr.f32.mxu0 0.0
      %5432 = vmatmul.mubr.f32.gmra.mxu0 %v588
      %v5433 = vpop.f32.mrf.mxu0
      %v5434 = vadd.f32 %v5286, %v5433
      %v5435 = vpop.f32.mrf.mxu0
      %5436 = vmatprep.mubr.f32.mxu0 0.0
      %5437 = vmatmul.mubr.f32.gmra.mxu0 %v590
      %v5438 = vpop.f32.mrf.mxu0
      %v5439 = vadd.f32 %v5291, %v5438
      %v5440 = vpop.f32.mrf.mxu0
      %5441 = vmatprep.mubr.f32.mxu0 0.0
      %5442 = vmatmul.mubr.f32.gmra.mxu0 %v592
      %v5443 = vpop.f32.mrf.mxu0
      %v5444 = vadd.f32 %v5296, %v5443
      %v5445 = vpop.f32.mrf.mxu0
      %5446 = vmatprep.mubr.f32.mxu0 0.0
      %5447 = vmatmul.mubr.f32.gmra.mxu0 %v594
      %v5448 = vpop.f32.mrf.mxu0
      %v5449 = vadd.f32 %v5301, %v5448
      %v5450 = vpop.f32.mrf.mxu0
      %5451 = vmatprep.mubr.f32.mxu0 0.0
      %5452 = vmatmul.mubr.f32.gmra.mxu0 %v596
      %v5453 = vpop.f32.mrf.mxu0
      %v5454 = vadd.f32 %v5306, %v5453
      %v5455 = vpop.f32.mrf.mxu0
      %5456 = vmatprep.mubr.f32.mxu0 0.0
      %5457 = vmatmul.mubr.f32.gmra.mxu0 %v598
      %v5458 = vpop.f32.mrf.mxu0
      %v5459 = vadd.f32 %v5311, %v5458
      %v5460 = vpop.f32.mrf.mxu0
      %5461 = vmatprep.mubr.f32.mxu0 0.0
      %5462 = vmatmul.mubr.f32.gmra.mxu0 %v600
      %v5463 = vpop.f32.mrf.mxu0
      %v5464 = vadd.f32 %v5316, %v5463
      %v5465 = vpop.f32.mrf.mxu0
      %5466 = vmatprep.mubr.f32.mxu0 0.0
      %5467 = vmatmul.mubr.f32.gmra.mxu0 %v602
      %v5468 = vpop.f32.mrf.mxu0
      %v5469 = vadd.f32 %v5321, %v5468
      %v5470 = vpop.f32.mrf.mxu0
      %5471 = vmatprep.mubr.f32.mxu0 0.0
      %5472 = vmatmul.mubr.f32.gmra.mxu0 %v604
      %v5473 = vpop.f32.mrf.mxu0
      %v5474 = vadd.f32 %v5326, %v5473
      %v5475 = vpop.f32.mrf.mxu0
      %5476 = vmatprep.mubr.f32.mxu0 0.0
      %5477 = vmatmul.mubr.f32.gmra.mxu0 %v606
      %v5478 = vpop.f32.mrf.mxu0
      %v5479 = vadd.f32 %v5331, %v5478
      %v5480 = vpop.f32.mrf.mxu0
      %5481 = vmatprep.mubr.f32.mxu0 0.0
      %5482 = vmatmul.mubr.f32.gmra.mxu0 %v608
      %v5483 = vpop.f32.mrf.mxu0
      %v5484 = vadd.f32 %v5336, %v5483
      %v5485 = vpop.f32.mrf.mxu0
      %5486 = vmatprep.mubr.f32.mxu0 0.0
      %5487 = vmatmul.mubr.f32.gmra.mxu0 %v1118
      %v5488 = vpop.f32.mrf.mxu0
      %v5489 = vadd.f32 %v5341, %v5488
      %v5490 = vpop.f32.mrf.mxu0
      %5491 = vmatprep.mubr.f32.mxu0 0.0
      %5492 = vmatmul.mubr.f32.gmra.mxu0 %v1120
      %v5493 = vpop.f32.mrf.mxu0
      %v5494 = vadd.f32 %v5346, %v5493
      %v5495 = vpop.f32.mrf.mxu0
      %5496 = vdwg.mxu0
      %s5497 = scalar_lea.vmem %s3, 56
      %v5498 = vld [vmem:[%s5497] sm:$0xf]
      %v5500 = vsel %vm610, %v5498, 0
      %5502 = vmatprep.subr.mxu0 0.0
      %5503 = vmatpush1.msra.mxu0 0.0
      %5504 = vmatprep.subr.mxu0 0.0
      %5505 = vmatpush1.msra.mxu0 0.0
      %5506 = vmatprep.subr.mxu0 0.0
      %5507 = vmatpush1.msra.mxu0 0.0
      %5508 = vmatprep.subr.mxu0 0.0
      %5509 = vmatpush1.msra.mxu0 0.0
      %5510 = vmatprep.subr.mxu0 0.0
      %5511 = vmatpush1.msra.mxu0 0.0
      %5512 = vmatprep.subr.mxu0 0.0
      %5513 = vmatpush1.msra.mxu0 0.0
      %5514 = vmatprep.subr.mxu0 0.0
      %5515 = vmatpush1.msra.mxu0 0.0
      %5516 = vmatprep.subr.mxu0 0.0
      %5517 = vmatpush1.msra.mxu0 0.0
      %5518 = vmatprep.subr.mxu0 0.0
      %5519 = vmatpush1.msra.mxu0 0.0
      %5520 = vmatprep.subr.mxu0 0.0
      %5521 = vmatpush1.msra.mxu0 0.0
      %5522 = vmatprep.subr.mxu0 0.0
      %5523 = vmatpush1.msra.mxu0 0.0
      %5524 = vmatprep.subr.mxu0 0.0
      %5525 = vmatpush1.msra.mxu0 0.0
      %5526 = vmatprep.subr.mxu0 0.0
      %5527 = vmatpush1.msra.mxu0 0.0
      %5528 = vmatprep.subr.mxu0 0.0
      %5529 = vmatpush1.msra.mxu0 0.0
      %5530 = vmatprep.subr.mxu0 0.0
      %5531 = vmatpush1.msra.mxu0 0.0
      %5532 = vmatprep.subr.mxu0 0.0
      %5533 = vmatpush1.msra.mxu0 %v5500
      %5534 = vmatprep.subr.mxu0 0.0
      %5535 = vmatpush2.msra.mxu0 0.0
      %5536 = vmatprep.subr.mxu0 0.0
      %5537 = vmatpush2.msra.mxu0 0.0
      %5538 = vmatprep.subr.mxu0 0.0
      %5539 = vmatpush2.msra.mxu0 0.0
      %5540 = vmatprep.subr.mxu0 0.0
      %5541 = vmatpush2.msra.mxu0 0.0
      %5542 = vmatprep.subr.mxu0 0.0
      %5543 = vmatpush2.msra.mxu0 0.0
      %5544 = vmatprep.subr.mxu0 0.0
      %5545 = vmatpush2.msra.mxu0 0.0
      %5546 = vmatprep.subr.mxu0 0.0
      %5547 = vmatpush2.msra.mxu0 0.0
      %5548 = vmatprep.subr.mxu0 0.0
      %5549 = vmatpush2.msra.mxu0 0.0
      %5550 = vmatprep.subr.mxu0 0.0
      %5551 = vmatpush2.msra.mxu0 0.0
      %5552 = vmatprep.subr.mxu0 0.0
      %5553 = vmatpush2.msra.mxu0 0.0
      %5554 = vmatprep.subr.mxu0 0.0
      %5555 = vmatpush2.msra.mxu0 0.0
      %5556 = vmatprep.subr.mxu0 0.0
      %5557 = vmatpush2.msra.mxu0 0.0
      %5558 = vmatprep.subr.mxu0 0.0
      %5559 = vmatpush2.msra.mxu0 0.0
      %5560 = vmatprep.subr.mxu0 0.0
      %5561 = vmatpush2.msra.mxu0 0.0
      %5562 = vmatprep.subr.mxu0 0.0
      %5563 = vmatpush2.msra.mxu0 0.0
      %5564 = vmatprep.subr.mxu0 0.0
      %5565 = vmatpush2.msra.mxu0 0.0
      %5566 = vmatprep.mubr.f32.mxu0 0.0
      %5567 = vmatmul.mubr.f32.gmra.mxu0 %v586
      %v5568 = vpop.f32.mrf.mxu0
      %v5569 = vadd.f32 0.0, %v5568
      %v5570 = vpop.f32.mrf.mxu0
      %5571 = vmatprep.mubr.f32.mxu0 0.0
      %5572 = vmatmul.mubr.f32.gmra.mxu0 %v588
      %v5573 = vpop.f32.mrf.mxu0
      %v5574 = vadd.f32 0.0, %v5573
      %v5575 = vpop.f32.mrf.mxu0
      %5576 = vmatprep.mubr.f32.mxu0 0.0
      %5577 = vmatmul.mubr.f32.gmra.mxu0 %v590
      %v5578 = vpop.f32.mrf.mxu0
      %v5579 = vadd.f32 0.0, %v5578
      %v5580 = vpop.f32.mrf.mxu0
      %5581 = vmatprep.mubr.f32.mxu0 0.0
      %5582 = vmatmul.mubr.f32.gmra.mxu0 %v592
      %v5583 = vpop.f32.mrf.mxu0
      %v5584 = vadd.f32 0.0, %v5583
      %v5585 = vpop.f32.mrf.mxu0
      %5586 = vmatprep.mubr.f32.mxu0 0.0
      %5587 = vmatmul.mubr.f32.gmra.mxu0 %v594
      %v5588 = vpop.f32.mrf.mxu0
      %v5589 = vadd.f32 0.0, %v5588
      %v5590 = vpop.f32.mrf.mxu0
      %5591 = vmatprep.mubr.f32.mxu0 0.0
      %5592 = vmatmul.mubr.f32.gmra.mxu0 %v596
      %v5593 = vpop.f32.mrf.mxu0
      %v5594 = vadd.f32 0.0, %v5593
      %v5595 = vpop.f32.mrf.mxu0
      %5596 = vmatprep.mubr.f32.mxu0 0.0
      %5597 = vmatmul.mubr.f32.gmra.mxu0 %v598
      %v5598 = vpop.f32.mrf.mxu0
      %v5599 = vadd.f32 0.0, %v5598
      %v5600 = vpop.f32.mrf.mxu0
      %5601 = vmatprep.mubr.f32.mxu0 0.0
      %5602 = vmatmul.mubr.f32.gmra.mxu0 %v600
      %v5603 = vpop.f32.mrf.mxu0
      %v5604 = vadd.f32 0.0, %v5603
      %v5605 = vpop.f32.mrf.mxu0
      %5606 = vmatprep.mubr.f32.mxu0 0.0
      %5607 = vmatmul.mubr.f32.gmra.mxu0 %v602
      %v5608 = vpop.f32.mrf.mxu0
      %v5609 = vadd.f32 0.0, %v5608
      %v5610 = vpop.f32.mrf.mxu0
      %5611 = vmatprep.mubr.f32.mxu0 0.0
      %5612 = vmatmul.mubr.f32.gmra.mxu0 %v604
      %v5613 = vpop.f32.mrf.mxu0
      %v5614 = vadd.f32 0.0, %v5613
      %v5615 = vpop.f32.mrf.mxu0
      %5616 = vmatprep.mubr.f32.mxu0 0.0
      %5617 = vmatmul.mubr.f32.gmra.mxu0 %v606
      %v5618 = vpop.f32.mrf.mxu0
      %v5619 = vadd.f32 0.0, %v5618
      %v5620 = vpop.f32.mrf.mxu0
      %5621 = vmatprep.mubr.f32.mxu0 0.0
      %5622 = vmatmul.mubr.f32.gmra.mxu0 %v608
      %v5623 = vpop.f32.mrf.mxu0
      %v5624 = vadd.f32 0.0, %v5623
      %v5625 = vpop.f32.mrf.mxu0
      %5626 = vmatprep.mubr.f32.mxu0 0.0
      %5627 = vmatmul.mubr.f32.gmra.mxu0 %v1118
      %v5628 = vpop.f32.mrf.mxu0
      %v5629 = vadd.f32 0.0, %v5628
      %v5630 = vpop.f32.mrf.mxu0
      %5631 = vmatprep.mubr.f32.mxu0 0.0
      %5632 = vmatmul.mubr.f32.gmra.mxu0 %v1120
      %v5633 = vpop.f32.mrf.mxu0
      %v5634 = vadd.f32 0.0, %v5633
      %v5635 = vpop.f32.mrf.mxu0
      %5636 = vmatprep.mubr.f32.mxu0 0.0
      %5637 = vmatmul.mubr.f32.gmra.mxu0 %v5013
      %v5638 = vpop.f32.mrf.mxu0
      %v5639 = vadd.f32 0.0, %v5638
      %v5640 = vpop.f32.mrf.mxu0
      %5641 = vmatprep.mubr.f32.mxu0 0.0
      %5642 = vmatmul.mubr.f32.gmra.mxu0 %v5015
      %v5643 = vpop.f32.mrf.mxu0
      %v5644 = vadd.f32 0.0, %v5643
      %v5645 = vpop.f32.mrf.mxu0
      %5646 = vdwg.mxu0
      %v5647 = vadd.f32 %v5419, %v5569
      %v5648 = vadd.f32 %v5424, %v5574
      %v5649 = vadd.f32 %v5429, %v5579
      %v5650 = vadd.f32 %v5434, %v5584
      %v5651 = vadd.f32 %v5439, %v5589
      %v5652 = vadd.f32 %v5444, %v5594
      %v5653 = vadd.f32 %v5449, %v5599
      %v5654 = vadd.f32 %v5454, %v5604
      %v5655 = vadd.f32 %v5459, %v5609
      %v5656 = vadd.f32 %v5464, %v5614
      %v5657 = vadd.f32 %v5469, %v5619
      %v5658 = vadd.f32 %v5474, %v5624
      %v5659 = vadd.f32 %v5479, %v5629
      %v5660 = vadd.f32 %v5484, %v5634
      %v5661 = vadd.f32 %v5489, %v5639
      %v5662 = vadd.f32 %v5494, %v5644
      %v5663 = vrot.slane %v505, 2
      %v5664 = vrot.slane %v475, 2
      %v5665 = vsel %vm1310, %v5663, %v5664
      %v5666 = vrot.slane %v515, 2
      %v5667 = vsel %vm1310, %v5664, %v5666
      %s5668 = scalar_lea.vmem %s3, 60
      %v5669 = vld [vmem:[%s5668] sm:$0xf]
      %v5670 = vsel %vm577, %v5665, 0
      %v5672 = vsel %vm577, %v5667, 0
      %v5675 = vsel %vm610, %v5669, 0
      %5677 = vmatprep.subr.mxu0 0.0
      %5678 = vmatpush1.msra.mxu0 0.0
      %5679 = vmatprep.subr.mxu0 0.0
      %5680 = vmatpush1.msra.mxu0 0.0
      %5681 = vmatprep.subr.mxu0 0.0
      %5682 = vmatpush1.msra.mxu0 0.0
      %5683 = vmatprep.subr.mxu0 0.0
      %5684 = vmatpush1.msra.mxu0 0.0
      %5685 = vmatprep.subr.mxu0 0.0
      %5686 = vmatpush1.msra.mxu0 0.0
      %5687 = vmatprep.subr.mxu0 0.0
      %5688 = vmatpush1.msra.mxu0 0.0
      %5689 = vmatprep.subr.mxu0 0.0
      %5690 = vmatpush1.msra.mxu0 0.0
      %5691 = vmatprep.subr.mxu0 0.0
      %5692 = vmatpush1.msra.mxu0 0.0
      %5693 = vmatprep.subr.mxu0 0.0
      %5694 = vmatpush1.msra.mxu0 0.0
      %5695 = vmatprep.subr.mxu0 0.0
      %5696 = vmatpush1.msra.mxu0 0.0
      %5697 = vmatprep.subr.mxu0 0.0
      %5698 = vmatpush1.msra.mxu0 0.0
      %5699 = vmatprep.subr.mxu0 0.0
      %5700 = vmatpush1.msra.mxu0 0.0
      %5701 = vmatprep.subr.mxu0 0.0
      %5702 = vmatpush1.msra.mxu0 0.0
      %5703 = vmatprep.subr.mxu0 0.0
      %5704 = vmatpush1.msra.mxu0 0.0
      %5705 = vmatprep.subr.mxu0 0.0
      %5706 = vmatpush1.msra.mxu0 0.0
      %5707 = vmatprep.subr.mxu0 0.0
      %5708 = vmatpush1.msra.mxu0 %v5675
      %5709 = vmatprep.subr.mxu0 0.0
      %5710 = vmatpush2.msra.mxu0 0.0
      %5711 = vmatprep.subr.mxu0 0.0
      %5712 = vmatpush2.msra.mxu0 0.0
      %5713 = vmatprep.subr.mxu0 0.0
      %5714 = vmatpush2.msra.mxu0 0.0
      %5715 = vmatprep.subr.mxu0 0.0
      %5716 = vmatpush2.msra.mxu0 0.0
      %5717 = vmatprep.subr.mxu0 0.0
      %5718 = vmatpush2.msra.mxu0 0.0
      %5719 = vmatprep.subr.mxu0 0.0
      %5720 = vmatpush2.msra.mxu0 0.0
      %5721 = vmatprep.subr.mxu0 0.0
      %5722 = vmatpush2.msra.mxu0 0.0
      %5723 = vmatprep.subr.mxu0 0.0
      %5724 = vmatpush2.msra.mxu0 0.0
      %5725 = vmatprep.subr.mxu0 0.0
      %5726 = vmatpush2.msra.mxu0 0.0
      %5727 = vmatprep.subr.mxu0 0.0
      %5728 = vmatpush2.msra.mxu0 0.0
      %5729 = vmatprep.subr.mxu0 0.0
      %5730 = vmatpush2.msra.mxu0 0.0
      %5731 = vmatprep.subr.mxu0 0.0
      %5732 = vmatpush2.msra.mxu0 0.0
      %5733 = vmatprep.subr.mxu0 0.0
      %5734 = vmatpush2.msra.mxu0 0.0
      %5735 = vmatprep.subr.mxu0 0.0
      %5736 = vmatpush2.msra.mxu0 0.0
      %5737 = vmatprep.subr.mxu0 0.0
      %5738 = vmatpush2.msra.mxu0 0.0
      %5739 = vmatprep.subr.mxu0 0.0
      %5740 = vmatpush2.msra.mxu0 0.0
      %5741 = vmatprep.mubr.f32.mxu0 0.0
      %5742 = vmatmul.mubr.f32.gmra.mxu0 %v1361
      %v5743 = vpop.f32.mrf.mxu0
      %v5744 = vadd.f32 0.0, %v5743
      %v5745 = vpop.f32.mrf.mxu0
      %5746 = vmatprep.mubr.f32.mxu0 0.0
      %5747 = vmatmul.mubr.f32.gmra.mxu0 %v1363
      %v5748 = vpop.f32.mrf.mxu0
      %v5749 = vadd.f32 0.0, %v5748
      %v5750 = vpop.f32.mrf.mxu0
      %5751 = vmatprep.mubr.f32.mxu0 0.0
      %5752 = vmatmul.mubr.f32.gmra.mxu0 %v1365
      %v5753 = vpop.f32.mrf.mxu0
      %v5754 = vadd.f32 0.0, %v5753
      %v5755 = vpop.f32.mrf.mxu0
      %5756 = vmatprep.mubr.f32.mxu0 0.0
      %5757 = vmatmul.mubr.f32.gmra.mxu0 %v1367
      %v5758 = vpop.f32.mrf.mxu0
      %v5759 = vadd.f32 0.0, %v5758
      %v5760 = vpop.f32.mrf.mxu0
      %5761 = vmatprep.mubr.f32.mxu0 0.0
      %5762 = vmatmul.mubr.f32.gmra.mxu0 %v1369
      %v5763 = vpop.f32.mrf.mxu0
      %v5764 = vadd.f32 0.0, %v5763
      %v5765 = vpop.f32.mrf.mxu0
      %5766 = vmatprep.mubr.f32.mxu0 0.0
      %5767 = vmatmul.mubr.f32.gmra.mxu0 %v1371
      %v5768 = vpop.f32.mrf.mxu0
      %v5769 = vadd.f32 0.0, %v5768
      %v5770 = vpop.f32.mrf.mxu0
      %5771 = vmatprep.mubr.f32.mxu0 0.0
      %5772 = vmatmul.mubr.f32.gmra.mxu0 %v1373
      %v5773 = vpop.f32.mrf.mxu0
      %v5774 = vadd.f32 0.0, %v5773
      %v5775 = vpop.f32.mrf.mxu0
      %5776 = vmatprep.mubr.f32.mxu0 0.0
      %5777 = vmatmul.mubr.f32.gmra.mxu0 %v1375
      %v5778 = vpop.f32.mrf.mxu0
      %v5779 = vadd.f32 0.0, %v5778
      %v5780 = vpop.f32.mrf.mxu0
      %5781 = vmatprep.mubr.f32.mxu0 0.0
      %5782 = vmatmul.mubr.f32.gmra.mxu0 %v1377
      %v5783 = vpop.f32.mrf.mxu0
      %v5784 = vadd.f32 0.0, %v5783
      %v5785 = vpop.f32.mrf.mxu0
      %5786 = vmatprep.mubr.f32.mxu0 0.0
      %5787 = vmatmul.mubr.f32.gmra.mxu0 %v1379
      %v5788 = vpop.f32.mrf.mxu0
      %v5789 = vadd.f32 0.0, %v5788
      %v5790 = vpop.f32.mrf.mxu0
      %5791 = vmatprep.mubr.f32.mxu0 0.0
      %5792 = vmatmul.mubr.f32.gmra.mxu0 %v1381
      %v5793 = vpop.f32.mrf.mxu0
      %v5794 = vadd.f32 0.0, %v5793
      %v5795 = vpop.f32.mrf.mxu0
      %5796 = vmatprep.mubr.f32.mxu0 0.0
      %5797 = vmatmul.mubr.f32.gmra.mxu0 %v1383
      %v5798 = vpop.f32.mrf.mxu0
      %v5799 = vadd.f32 0.0, %v5798
      %v5800 = vpop.f32.mrf.mxu0
      %5801 = vmatprep.mubr.f32.mxu0 0.0
      %5802 = vmatmul.mubr.f32.gmra.mxu0 %v1854
      %v5803 = vpop.f32.mrf.mxu0
      %v5804 = vadd.f32 0.0, %v5803
      %v5805 = vpop.f32.mrf.mxu0
      %5806 = vmatprep.mubr.f32.mxu0 0.0
      %5807 = vmatmul.mubr.f32.gmra.mxu0 %v1856
      %v5808 = vpop.f32.mrf.mxu0
      %v5809 = vadd.f32 0.0, %v5808
      %v5810 = vpop.f32.mrf.mxu0
      %5811 = vmatprep.mubr.f32.mxu0 0.0
      %5812 = vmatmul.mubr.f32.gmra.mxu0 %v5670
      %v5813 = vpop.f32.mrf.mxu0
      %v5814 = vadd.f32 0.0, %v5813
      %v5815 = vpop.f32.mrf.mxu0
      %5816 = vmatprep.mubr.f32.mxu0 0.0
      %5817 = vmatmul.mubr.f32.gmra.mxu0 %v5672
      %v5818 = vpop.f32.mrf.mxu0
      %v5819 = vadd.f32 0.0, %v5818
      %v5820 = vpop.f32.mrf.mxu0
      %5821 = vdwg.mxu0
      %v5822 = vadd.f32 %v5647, %v5744
      %v5823 = vadd.f32 %v5648, %v5749
      %v5824 = vadd.f32 %v5649, %v5754
      %v5825 = vadd.f32 %v5650, %v5759
      %v5826 = vadd.f32 %v5651, %v5764
      %v5827 = vadd.f32 %v5652, %v5769
      %v5828 = vadd.f32 %v5653, %v5774
      %v5829 = vadd.f32 %v5654, %v5779
      %v5830 = vadd.f32 %v5655, %v5784
      %v5831 = vadd.f32 %v5656, %v5789
      %v5832 = vadd.f32 %v5657, %v5794
      %v5833 = vadd.f32 %v5658, %v5799
      %v5834 = vadd.f32 %v5659, %v5804
      %v5835 = vadd.f32 %v5660, %v5809
      %v5836 = vadd.f32 %v5661, %v5814
      %v5837 = vadd.f32 %v5662, %v5819
      %v5838 = vadd.f32 %v5822, %v1290
      %v5839 = vadd.f32 %v5823, %v1290
      %v5840 = vadd.f32 %v5824, %v1290
      %v5841 = vadd.f32 %v5825, %v1290
      %v5842 = vadd.f32 %v5826, %v1290
      %v5843 = vadd.f32 %v5827, %v1290
      %v5844 = vadd.f32 %v5828, %v1290
      %v5845 = vadd.f32 %v5829, %v1290
      %v5846 = vadd.f32 %v5830, %v1290
      %v5847 = vadd.f32 %v5831, %v1290
      %v5848 = vadd.f32 %v5832, %v1290
      %v5849 = vadd.f32 %v5833, %v1290
      %v5850 = vadd.f32 %v5834, %v1290
      %v5851 = vadd.f32 %v5835, %v1290
      %v5852 = vadd.f32 %v5836, %v1290
      %v5853 = vadd.f32 %v5837, %v1290
      %v5870 = vcombine.high %v5181, %v5181
      %v5872 = vunpack.c.l.s4 1966171168
      %v5873 = vunpack.c.0.s8 %v5872
      %v5874 = vlaneseq
      %v5875 = vshrl.u32 %v5874, 7
      %v5876 = vsub.s32 %v5873, %v5875
      %v5877 = vrot.slane %v5181, %v5876
      %v5879 = vunpack.c.l.s4 1966171168
      %v5880 = vunpack.c.0.s8 %v5879
      %v5881 = vlaneseq
      %v5882 = vshrl.u32 %v5881, 7
      %v5883 = vsub.s32 %v5880, %v5882
      %v5884 = vrot.slane %v5870, %v5883
      %v5885 = vcombine.high %v5877, %v5877
      %v5886 = vcombine.high %v5884, %v5884
      %v5888 = vunpack.c.l.s4 1966171168
      %v5889 = vunpack.c.0.s8 %v5888
      %v5890 = vlaneseq
      %v5891 = vshrl.u32 %v5890, 7
      %v5892 = vsub.s32 %v5889, %v5891
      %v5893 = vrot.slane %v5877, %v5892
      %v5895 = vunpack.c.l.s4 1966171168
      %v5896 = vunpack.c.0.s8 %v5895
      %v5897 = vlaneseq
      %v5898 = vshrl.u32 %v5897, 7
      %v5899 = vsub.s32 %v5896, %v5898
      %v5900 = vrot.slane %v5884, %v5899
      %v5902 = vunpack.c.l.s4 1966171168
      %v5903 = vunpack.c.0.s8 %v5902
      %v5904 = vlaneseq
      %v5905 = vshrl.u32 %v5904, 7
      %v5906 = vsub.s32 %v5903, %v5905
      %v5907 = vrot.slane %v5885, %v5906
      %v5909 = vunpack.c.l.s4 1966171168
      %v5910 = vunpack.c.0.s8 %v5909
      %v5911 = vlaneseq
      %v5912 = vshrl.u32 %v5911, 7
      %v5913 = vsub.s32 %v5910, %v5912
      %v5914 = vrot.slane %v5886, %v5913
      %v5915 = vcombine.high %v5893, %v5893
      %v5916 = vcombine.high %v5900, %v5900
      %v5917 = vcombine.high %v5907, %v5907
      %v5918 = vcombine.high %v5914, %v5914
      %v5919 = vcombine.high %v5182, %v5182
      %v5921 = vunpack.c.l.s4 1966171168
      %v5922 = vunpack.c.0.s8 %v5921
      %v5923 = vlaneseq
      %v5924 = vshrl.u32 %v5923, 7
      %v5925 = vsub.s32 %v5922, %v5924
      %v5926 = vrot.slane %v5182, %v5925
      %v5928 = vunpack.c.l.s4 1966171168
      %v5929 = vunpack.c.0.s8 %v5928
      %v5930 = vlaneseq
      %v5931 = vshrl.u32 %v5930, 7
      %v5932 = vsub.s32 %v5929, %v5931
      %v5933 = vrot.slane %v5919, %v5932
      %v5934 = vcombine.high %v5926, %v5926
      %v5935 = vcombine.high %v5933, %v5933
      %v5937 = vunpack.c.l.s4 1966171168
      %v5938 = vunpack.c.0.s8 %v5937
      %v5939 = vlaneseq
      %v5940 = vshrl.u32 %v5939, 7
      %v5941 = vsub.s32 %v5938, %v5940
      %v5942 = vrot.slane %v5926, %v5941
      %v5944 = vunpack.c.l.s4 1966171168
      %v5945 = vunpack.c.0.s8 %v5944
      %v5946 = vlaneseq
      %v5947 = vshrl.u32 %v5946, 7
      %v5948 = vsub.s32 %v5945, %v5947
      %v5949 = vrot.slane %v5933, %v5948
      %v5951 = vunpack.c.l.s4 1966171168
      %v5952 = vunpack.c.0.s8 %v5951
      %v5953 = vlaneseq
      %v5954 = vshrl.u32 %v5953, 7
      %v5955 = vsub.s32 %v5952, %v5954
      %v5956 = vrot.slane %v5934, %v5955
      %v5958 = vunpack.c.l.s4 1966171168
      %v5959 = vunpack.c.0.s8 %v5958
      %v5960 = vlaneseq
      %v5961 = vshrl.u32 %v5960, 7
      %v5962 = vsub.s32 %v5959, %v5961
      %v5963 = vrot.slane %v5935, %v5962
      %v5964 = vcombine.high %v5942, %v5942
      %v5965 = vcombine.high %v5949, %v5949
      %v5966 = vcombine.high %v5956, %v5956
      %v5967 = vcombine.high %v5963, %v5963
      %v5968 = vcombine.high %v5183, %v5183
      %v5970 = vunpack.c.l.s4 1966171168
      %v5971 = vunpack.c.0.s8 %v5970
      %v5972 = vlaneseq
      %v5973 = vshrl.u32 %v5972, 7
      %v5974 = vsub.s32 %v5971, %v5973
      %v5975 = vrot.slane %v5183, %v5974
      %v5977 = vunpack.c.l.s4 1966171168
      %v5978 = vunpack.c.0.s8 %v5977
      %v5979 = vlaneseq
      %v5980 = vshrl.u32 %v5979, 7
      %v5981 = vsub.s32 %v5978, %v5980
      %v5982 = vrot.slane %v5968, %v5981
      %v5983 = vcombine.high %v5975, %v5975
      %v5984 = vcombine.high %v5982, %v5982
      %v5986 = vunpack.c.l.s4 1966171168
      %v5987 = vunpack.c.0.s8 %v5986
      %v5988 = vlaneseq
      %v5989 = vshrl.u32 %v5988, 7
      %v5990 = vsub.s32 %v5987, %v5989
      %v5991 = vrot.slane %v5975, %v5990
      %v5993 = vunpack.c.l.s4 1966171168
      %v5994 = vunpack.c.0.s8 %v5993
      %v5995 = vlaneseq
      %v5996 = vshrl.u32 %v5995, 7
      %v5997 = vsub.s32 %v5994, %v5996
      %v5998 = vrot.slane %v5982, %v5997
      %v6000 = vunpack.c.l.s4 1966171168
      %v6001 = vunpack.c.0.s8 %v6000
      %v6002 = vlaneseq
      %v6003 = vshrl.u32 %v6002, 7
      %v6004 = vsub.s32 %v6001, %v6003
      %v6005 = vrot.slane %v5983, %v6004
      %v6007 = vunpack.c.l.s4 1966171168
      %v6008 = vunpack.c.0.s8 %v6007
      %v6009 = vlaneseq
      %v6010 = vshrl.u32 %v6009, 7
      %v6011 = vsub.s32 %v6008, %v6010
      %v6012 = vrot.slane %v5984, %v6011
      %v6013 = vcombine.high %v5991, %v5991
      %v6014 = vcombine.high %v5998, %v5998
      %v6015 = vcombine.high %v6005, %v6005
      %v6016 = vcombine.high %v6012, %v6012
      %v6017 = vcombine.high %v5184, %v5184
      %v6019 = vunpack.c.l.s4 1966171168
      %v6020 = vunpack.c.0.s8 %v6019
      %v6021 = vlaneseq
      %v6022 = vshrl.u32 %v6021, 7
      %v6023 = vsub.s32 %v6020, %v6022
      %v6024 = vrot.slane %v5184, %v6023
      %v6026 = vunpack.c.l.s4 1966171168
      %v6027 = vunpack.c.0.s8 %v6026
      %v6028 = vlaneseq
      %v6029 = vshrl.u32 %v6028, 7
      %v6030 = vsub.s32 %v6027, %v6029
      %v6031 = vrot.slane %v6017, %v6030
      %v6032 = vcombine.high %v6024, %v6024
      %v6033 = vcombine.high %v6031, %v6031
      %v6035 = vunpack.c.l.s4 1966171168
      %v6036 = vunpack.c.0.s8 %v6035
      %v6037 = vlaneseq
      %v6038 = vshrl.u32 %v6037, 7
      %v6039 = vsub.s32 %v6036, %v6038
      %v6040 = vrot.slane %v6024, %v6039
      %v6042 = vunpack.c.l.s4 1966171168
      %v6043 = vunpack.c.0.s8 %v6042
      %v6044 = vlaneseq
      %v6045 = vshrl.u32 %v6044, 7
      %v6046 = vsub.s32 %v6043, %v6045
      %v6047 = vrot.slane %v6031, %v6046
      %v6049 = vunpack.c.l.s4 1966171168
      %v6050 = vunpack.c.0.s8 %v6049
      %v6051 = vlaneseq
      %v6052 = vshrl.u32 %v6051, 7
      %v6053 = vsub.s32 %v6050, %v6052
      %v6054 = vrot.slane %v6032, %v6053
      %v6056 = vunpack.c.l.s4 1966171168
      %v6057 = vunpack.c.0.s8 %v6056
      %v6058 = vlaneseq
      %v6059 = vshrl.u32 %v6058, 7
      %v6060 = vsub.s32 %v6057, %v6059
      %v6061 = vrot.slane %v6033, %v6060
      %v6062 = vcombine.high %v6040, %v6040
      %v6063 = vcombine.high %v6047, %v6047
      %v6064 = vcombine.high %v6054, %v6054
      %v6065 = vcombine.high %v6061, %v6061
      %v6066 = vcombine.high %v5185, %v5185
      %v6068 = vunpack.c.l.s4 1966171168
      %v6069 = vunpack.c.0.s8 %v6068
      %v6070 = vlaneseq
      %v6071 = vshrl.u32 %v6070, 7
      %v6072 = vsub.s32 %v6069, %v6071
      %v6073 = vrot.slane %v5185, %v6072
      %v6075 = vunpack.c.l.s4 1966171168
      %v6076 = vunpack.c.0.s8 %v6075
      %v6077 = vlaneseq
      %v6078 = vshrl.u32 %v6077, 7
      %v6079 = vsub.s32 %v6076, %v6078
      %v6080 = vrot.slane %v6066, %v6079
      %v6081 = vcombine.high %v6073, %v6073
      %v6082 = vcombine.high %v6080, %v6080
      %v6084 = vunpack.c.l.s4 1966171168
      %v6085 = vunpack.c.0.s8 %v6084
      %v6086 = vlaneseq
      %v6087 = vshrl.u32 %v6086, 7
      %v6088 = vsub.s32 %v6085, %v6087
      %v6089 = vrot.slane %v6073, %v6088
      %v6091 = vunpack.c.l.s4 1966171168
      %v6092 = vunpack.c.0.s8 %v6091
      %v6093 = vlaneseq
      %v6094 = vshrl.u32 %v6093, 7
      %v6095 = vsub.s32 %v6092, %v6094
      %v6096 = vrot.slane %v6080, %v6095
      %v6098 = vunpack.c.l.s4 1966171168
      %v6099 = vunpack.c.0.s8 %v6098
      %v6100 = vlaneseq
      %v6101 = vshrl.u32 %v6100, 7
      %v6102 = vsub.s32 %v6099, %v6101
      %v6103 = vrot.slane %v6081, %v6102
      %v6105 = vunpack.c.l.s4 1966171168
      %v6106 = vunpack.c.0.s8 %v6105
      %v6107 = vlaneseq
      %v6108 = vshrl.u32 %v6107, 7
      %v6109 = vsub.s32 %v6106, %v6108
      %v6110 = vrot.slane %v6082, %v6109
      %v6111 = vcombine.high %v6089, %v6089
      %v6112 = vcombine.high %v6096, %v6096
      %v6113 = vcombine.high %v6103, %v6103
      %v6114 = vcombine.high %v6110, %v6110
      %v6115 = vcombine.high %v5186, %v5186
      %v6117 = vunpack.c.l.s4 1966171168
      %v6118 = vunpack.c.0.s8 %v6117
      %v6119 = vlaneseq
      %v6120 = vshrl.u32 %v6119, 7
      %v6121 = vsub.s32 %v6118, %v6120
      %v6122 = vrot.slane %v5186, %v6121
      %v6124 = vunpack.c.l.s4 1966171168
      %v6125 = vunpack.c.0.s8 %v6124
      %v6126 = vlaneseq
      %v6127 = vshrl.u32 %v6126, 7
      %v6128 = vsub.s32 %v6125, %v6127
      %v6129 = vrot.slane %v6115, %v6128
      %v6130 = vcombine.high %v6122, %v6122
      %v6131 = vcombine.high %v6129, %v6129
      %v6133 = vunpack.c.l.s4 1966171168
      %v6134 = vunpack.c.0.s8 %v6133
      %v6135 = vlaneseq
      %v6136 = vshrl.u32 %v6135, 7
      %v6137 = vsub.s32 %v6134, %v6136
      %v6138 = vrot.slane %v6122, %v6137
      %v6140 = vunpack.c.l.s4 1966171168
      %v6141 = vunpack.c.0.s8 %v6140
      %v6142 = vlaneseq
      %v6143 = vshrl.u32 %v6142, 7
      %v6144 = vsub.s32 %v6141, %v6143
      %v6145 = vrot.slane %v6129, %v6144
      %v6147 = vunpack.c.l.s4 1966171168
      %v6148 = vunpack.c.0.s8 %v6147
      %v6149 = vlaneseq
      %v6150 = vshrl.u32 %v6149, 7
      %v6151 = vsub.s32 %v6148, %v6150
      %v6152 = vrot.slane %v6130, %v6151
      %v6154 = vunpack.c.l.s4 1966171168
      %v6155 = vunpack.c.0.s8 %v6154
      %v6156 = vlaneseq
      %v6157 = vshrl.u32 %v6156, 7
      %v6158 = vsub.s32 %v6155, %v6157
      %v6159 = vrot.slane %v6131, %v6158
      %v6160 = vcombine.high %v6138, %v6138
      %v6161 = vcombine.high %v6145, %v6145
      %v6162 = vcombine.high %v6152, %v6152
      %v6163 = vcombine.high %v6159, %v6159
      %v6164 = vcombine.high %v5187, %v5187
      %v6166 = vunpack.c.l.s4 1966171168
      %v6167 = vunpack.c.0.s8 %v6166
      %v6168 = vlaneseq
      %v6169 = vshrl.u32 %v6168, 7
      %v6170 = vsub.s32 %v6167, %v6169
      %v6171 = vrot.slane %v5187, %v6170
      %v6173 = vunpack.c.l.s4 1966171168
      %v6174 = vunpack.c.0.s8 %v6173
      %v6175 = vlaneseq
      %v6176 = vshrl.u32 %v6175, 7
      %v6177 = vsub.s32 %v6174, %v6176
      %v6178 = vrot.slane %v6164, %v6177
      %v6179 = vcombine.high %v6171, %v6171
      %v6180 = vcombine.high %v6178, %v6178
      %v6182 = vunpack.c.l.s4 1966171168
      %v6183 = vunpack.c.0.s8 %v6182
      %v6184 = vlaneseq
      %v6185 = vshrl.u32 %v6184, 7
      %v6186 = vsub.s32 %v6183, %v6185
      %v6187 = vrot.slane %v6171, %v6186
      %v6189 = vunpack.c.l.s4 1966171168
      %v6190 = vunpack.c.0.s8 %v6189
      %v6191 = vlaneseq
      %v6192 = vshrl.u32 %v6191, 7
      %v6193 = vsub.s32 %v6190, %v6192
      %v6194 = vrot.slane %v6178, %v6193
      %v6196 = vunpack.c.l.s4 1966171168
      %v6197 = vunpack.c.0.s8 %v6196
      %v6198 = vlaneseq
      %v6199 = vshrl.u32 %v6198, 7
      %v6200 = vsub.s32 %v6197, %v6199
      %v6201 = vrot.slane %v6179, %v6200
      %v6203 = vunpack.c.l.s4 1966171168
      %v6204 = vunpack.c.0.s8 %v6203
      %v6205 = vlaneseq
      %v6206 = vshrl.u32 %v6205, 7
      %v6207 = vsub.s32 %v6204, %v6206
      %v6208 = vrot.slane %v6180, %v6207
      %v6209 = vcombine.high %v6187, %v6187
      %v6210 = vcombine.high %v6194, %v6194
      %v6211 = vcombine.high %v6201, %v6201
      %v6212 = vcombine.high %v6208, %v6208
      %v6213 = vcombine.high %v5188, %v5188
      %v6215 = vunpack.c.l.s4 1966171168
      %v6216 = vunpack.c.0.s8 %v6215
      %v6217 = vlaneseq
      %v6218 = vshrl.u32 %v6217, 7
      %v6219 = vsub.s32 %v6216, %v6218
      %v6220 = vrot.slane %v5188, %v6219
      %v6222 = vunpack.c.l.s4 1966171168
      %v6223 = vunpack.c.0.s8 %v6222
      %v6224 = vlaneseq
      %v6225 = vshrl.u32 %v6224, 7
      %v6226 = vsub.s32 %v6223, %v6225
      %v6227 = vrot.slane %v6213, %v6226
      %v6228 = vcombine.high %v6220, %v6220
      %v6229 = vcombine.high %v6227, %v6227
      %v6231 = vunpack.c.l.s4 1966171168
      %v6232 = vunpack.c.0.s8 %v6231
      %v6233 = vlaneseq
      %v6234 = vshrl.u32 %v6233, 7
      %v6235 = vsub.s32 %v6232, %v6234
      %v6236 = vrot.slane %v6220, %v6235
      %v6238 = vunpack.c.l.s4 1966171168
      %v6239 = vunpack.c.0.s8 %v6238
      %v6240 = vlaneseq
      %v6241 = vshrl.u32 %v6240, 7
      %v6242 = vsub.s32 %v6239, %v6241
      %v6243 = vrot.slane %v6227, %v6242
      %v6245 = vunpack.c.l.s4 1966171168
      %v6246 = vunpack.c.0.s8 %v6245
      %v6247 = vlaneseq
      %v6248 = vshrl.u32 %v6247, 7
      %v6249 = vsub.s32 %v6246, %v6248
      %v6250 = vrot.slane %v6228, %v6249
      %v6252 = vunpack.c.l.s4 1966171168
      %v6253 = vunpack.c.0.s8 %v6252
      %v6254 = vlaneseq
      %v6255 = vshrl.u32 %v6254, 7
      %v6256 = vsub.s32 %v6253, %v6255
      %v6257 = vrot.slane %v6229, %v6256
      %v6258 = vcombine.high %v6236, %v6236
      %v6259 = vcombine.high %v6243, %v6243
      %v6260 = vcombine.high %v6250, %v6250
      %v6261 = vcombine.high %v6257, %v6257
      %v6262 = vcombine.high %v5189, %v5189
      %v6264 = vunpack.c.l.s4 1966171168
      %v6265 = vunpack.c.0.s8 %v6264
      %v6266 = vlaneseq
      %v6267 = vshrl.u32 %v6266, 7
      %v6268 = vsub.s32 %v6265, %v6267
      %v6269 = vrot.slane %v5189, %v6268
      %v6271 = vunpack.c.l.s4 1966171168
      %v6272 = vunpack.c.0.s8 %v6271
      %v6273 = vlaneseq
      %v6274 = vshrl.u32 %v6273, 7
      %v6275 = vsub.s32 %v6272, %v6274
      %v6276 = vrot.slane %v6262, %v6275
      %v6277 = vcombine.high %v6269, %v6269
      %v6278 = vcombine.high %v6276, %v6276
      %v6280 = vunpack.c.l.s4 1966171168
      %v6281 = vunpack.c.0.s8 %v6280
      %v6282 = vlaneseq
      %v6283 = vshrl.u32 %v6282, 7
      %v6284 = vsub.s32 %v6281, %v6283
      %v6285 = vrot.slane %v6269, %v6284
      %v6287 = vunpack.c.l.s4 1966171168
      %v6288 = vunpack.c.0.s8 %v6287
      %v6289 = vlaneseq
      %v6290 = vshrl.u32 %v6289, 7
      %v6291 = vsub.s32 %v6288, %v6290
      %v6292 = vrot.slane %v6276, %v6291
      %v6294 = vunpack.c.l.s4 1966171168
      %v6295 = vunpack.c.0.s8 %v6294
      %v6296 = vlaneseq
      %v6297 = vshrl.u32 %v6296, 7
      %v6298 = vsub.s32 %v6295, %v6297
      %v6299 = vrot.slane %v6277, %v6298
      %v6301 = vunpack.c.l.s4 1966171168
      %v6302 = vunpack.c.0.s8 %v6301
      %v6303 = vlaneseq
      %v6304 = vshrl.u32 %v6303, 7
      %v6305 = vsub.s32 %v6302, %v6304
      %v6306 = vrot.slane %v6278, %v6305
      %v6307 = vcombine.high %v6285, %v6285
      %v6308 = vcombine.high %v6292, %v6292
      %v6309 = vcombine.high %v6299, %v6299
      %v6310 = vcombine.high %v6306, %v6306
      %v6311 = vcombine.high %v5190, %v5190
      %v6313 = vunpack.c.l.s4 1966171168
      %v6314 = vunpack.c.0.s8 %v6313
      %v6315 = vlaneseq
      %v6316 = vshrl.u32 %v6315, 7
      %v6317 = vsub.s32 %v6314, %v6316
      %v6318 = vrot.slane %v5190, %v6317
      %v6320 = vunpack.c.l.s4 1966171168
      %v6321 = vunpack.c.0.s8 %v6320
      %v6322 = vlaneseq
      %v6323 = vshrl.u32 %v6322, 7
      %v6324 = vsub.s32 %v6321, %v6323
      %v6325 = vrot.slane %v6311, %v6324
      %v6326 = vcombine.high %v6318, %v6318
      %v6327 = vcombine.high %v6325, %v6325
      %v6329 = vunpack.c.l.s4 1966171168
      %v6330 = vunpack.c.0.s8 %v6329
      %v6331 = vlaneseq
      %v6332 = vshrl.u32 %v6331, 7
      %v6333 = vsub.s32 %v6330, %v6332
      %v6334 = vrot.slane %v6318, %v6333
      %v6336 = vunpack.c.l.s4 1966171168
      %v6337 = vunpack.c.0.s8 %v6336
      %v6338 = vlaneseq
      %v6339 = vshrl.u32 %v6338, 7
      %v6340 = vsub.s32 %v6337, %v6339
      %v6341 = vrot.slane %v6325, %v6340
      %v6343 = vunpack.c.l.s4 1966171168
      %v6344 = vunpack.c.0.s8 %v6343
      %v6345 = vlaneseq
      %v6346 = vshrl.u32 %v6345, 7
      %v6347 = vsub.s32 %v6344, %v6346
      %v6348 = vrot.slane %v6326, %v6347
      %v6350 = vunpack.c.l.s4 1966171168
      %v6351 = vunpack.c.0.s8 %v6350
      %v6352 = vlaneseq
      %v6353 = vshrl.u32 %v6352, 7
      %v6354 = vsub.s32 %v6351, %v6353
      %v6355 = vrot.slane %v6327, %v6354
      %v6356 = vcombine.high %v6334, %v6334
      %v6357 = vcombine.high %v6341, %v6341
      %v6358 = vcombine.high %v6348, %v6348
      %v6359 = vcombine.high %v6355, %v6355
      %v6360 = vcombine.high %v5191, %v5191
      %v6362 = vunpack.c.l.s4 1966171168
      %v6363 = vunpack.c.0.s8 %v6362
      %v6364 = vlaneseq
      %v6365 = vshrl.u32 %v6364, 7
      %v6366 = vsub.s32 %v6363, %v6365
      %v6367 = vrot.slane %v5191, %v6366
      %v6369 = vunpack.c.l.s4 1966171168
      %v6370 = vunpack.c.0.s8 %v6369
      %v6371 = vlaneseq
      %v6372 = vshrl.u32 %v6371, 7
      %v6373 = vsub.s32 %v6370, %v6372
      %v6374 = vrot.slane %v6360, %v6373
      %v6375 = vcombine.high %v6367, %v6367
      %v6376 = vcombine.high %v6374, %v6374
      %v6378 = vunpack.c.l.s4 1966171168
      %v6379 = vunpack.c.0.s8 %v6378
      %v6380 = vlaneseq
      %v6381 = vshrl.u32 %v6380, 7
      %v6382 = vsub.s32 %v6379, %v6381
      %v6383 = vrot.slane %v6367, %v6382
      %v6385 = vunpack.c.l.s4 1966171168
      %v6386 = vunpack.c.0.s8 %v6385
      %v6387 = vlaneseq
      %v6388 = vshrl.u32 %v6387, 7
      %v6389 = vsub.s32 %v6386, %v6388
      %v6390 = vrot.slane %v6374, %v6389
      %v6392 = vunpack.c.l.s4 1966171168
      %v6393 = vunpack.c.0.s8 %v6392
      %v6394 = vlaneseq
      %v6395 = vshrl.u32 %v6394, 7
      %v6396 = vsub.s32 %v6393, %v6395
      %v6397 = vrot.slane %v6375, %v6396
      %v6399 = vunpack.c.l.s4 1966171168
      %v6400 = vunpack.c.0.s8 %v6399
      %v6401 = vlaneseq
      %v6402 = vshrl.u32 %v6401, 7
      %v6403 = vsub.s32 %v6400, %v6402
      %v6404 = vrot.slane %v6376, %v6403
      %v6405 = vcombine.high %v6383, %v6383
      %v6406 = vcombine.high %v6390, %v6390
      %v6407 = vcombine.high %v6397, %v6397
      %v6408 = vcombine.high %v6404, %v6404
      %v6409 = vcombine.high %v5192, %v5192
      %v6411 = vunpack.c.l.s4 1966171168
      %v6412 = vunpack.c.0.s8 %v6411
      %v6413 = vlaneseq
      %v6414 = vshrl.u32 %v6413, 7
      %v6415 = vsub.s32 %v6412, %v6414
      %v6416 = vrot.slane %v5192, %v6415
      %v6418 = vunpack.c.l.s4 1966171168
      %v6419 = vunpack.c.0.s8 %v6418
      %v6420 = vlaneseq
      %v6421 = vshrl.u32 %v6420, 7
      %v6422 = vsub.s32 %v6419, %v6421
      %v6423 = vrot.slane %v6409, %v6422
      %v6424 = vcombine.high %v6416, %v6416
      %v6425 = vcombine.high %v6423, %v6423
      %v6427 = vunpack.c.l.s4 1966171168
      %v6428 = vunpack.c.0.s8 %v6427
      %v6429 = vlaneseq
      %v6430 = vshrl.u32 %v6429, 7
      %v6431 = vsub.s32 %v6428, %v6430
      %v6432 = vrot.slane %v6416, %v6431
      %v6434 = vunpack.c.l.s4 1966171168
      %v6435 = vunpack.c.0.s8 %v6434
      %v6436 = vlaneseq
      %v6437 = vshrl.u32 %v6436, 7
      %v6438 = vsub.s32 %v6435, %v6437
      %v6439 = vrot.slane %v6423, %v6438
      %v6441 = vunpack.c.l.s4 1966171168
      %v6442 = vunpack.c.0.s8 %v6441
      %v6443 = vlaneseq
      %v6444 = vshrl.u32 %v6443, 7
      %v6445 = vsub.s32 %v6442, %v6444
      %v6446 = vrot.slane %v6424, %v6445
      %v6448 = vunpack.c.l.s4 1966171168
      %v6449 = vunpack.c.0.s8 %v6448
      %v6450 = vlaneseq
      %v6451 = vshrl.u32 %v6450, 7
      %v6452 = vsub.s32 %v6449, %v6451
      %v6453 = vrot.slane %v6425, %v6452
      %v6454 = vcombine.high %v6432, %v6432
      %v6455 = vcombine.high %v6439, %v6439
      %v6456 = vcombine.high %v6446, %v6446
      %v6457 = vcombine.high %v6453, %v6453
      %v6458 = vcombine.high %v5193, %v5193
      %v6460 = vunpack.c.l.s4 1966171168
      %v6461 = vunpack.c.0.s8 %v6460
      %v6462 = vlaneseq
      %v6463 = vshrl.u32 %v6462, 7
      %v6464 = vsub.s32 %v6461, %v6463
      %v6465 = vrot.slane %v5193, %v6464
      %v6467 = vunpack.c.l.s4 1966171168
      %v6468 = vunpack.c.0.s8 %v6467
      %v6469 = vlaneseq
      %v6470 = vshrl.u32 %v6469, 7
      %v6471 = vsub.s32 %v6468, %v6470
      %v6472 = vrot.slane %v6458, %v6471
      %v6473 = vcombine.high %v6465, %v6465
      %v6474 = vcombine.high %v6472, %v6472
      %v6476 = vunpack.c.l.s4 1966171168
      %v6477 = vunpack.c.0.s8 %v6476
      %v6478 = vlaneseq
      %v6479 = vshrl.u32 %v6478, 7
      %v6480 = vsub.s32 %v6477, %v6479
      %v6481 = vrot.slane %v6465, %v6480
      %v6483 = vunpack.c.l.s4 1966171168
      %v6484 = vunpack.c.0.s8 %v6483
      %v6485 = vlaneseq
      %v6486 = vshrl.u32 %v6485, 7
      %v6487 = vsub.s32 %v6484, %v6486
      %v6488 = vrot.slane %v6472, %v6487
      %v6490 = vunpack.c.l.s4 1966171168
      %v6491 = vunpack.c.0.s8 %v6490
      %v6492 = vlaneseq
      %v6493 = vshrl.u32 %v6492, 7
      %v6494 = vsub.s32 %v6491, %v6493
      %v6495 = vrot.slane %v6473, %v6494
      %v6497 = vunpack.c.l.s4 1966171168
      %v6498 = vunpack.c.0.s8 %v6497
      %v6499 = vlaneseq
      %v6500 = vshrl.u32 %v6499, 7
      %v6501 = vsub.s32 %v6498, %v6500
      %v6502 = vrot.slane %v6474, %v6501
      %v6503 = vcombine.high %v6481, %v6481
      %v6504 = vcombine.high %v6488, %v6488
      %v6505 = vcombine.high %v6495, %v6495
      %v6506 = vcombine.high %v6502, %v6502
      %v6507 = vcombine.high %v5194, %v5194
      %v6509 = vunpack.c.l.s4 1966171168
      %v6510 = vunpack.c.0.s8 %v6509
      %v6511 = vlaneseq
      %v6512 = vshrl.u32 %v6511, 7
      %v6513 = vsub.s32 %v6510, %v6512
      %v6514 = vrot.slane %v5194, %v6513
      %v6516 = vunpack.c.l.s4 1966171168
      %v6517 = vunpack.c.0.s8 %v6516
      %v6518 = vlaneseq
      %v6519 = vshrl.u32 %v6518, 7
      %v6520 = vsub.s32 %v6517, %v6519
      %v6521 = vrot.slane %v6507, %v6520
      %v6522 = vcombine.high %v6514, %v6514
      %v6523 = vcombine.high %v6521, %v6521
      %v6525 = vunpack.c.l.s4 1966171168
      %v6526 = vunpack.c.0.s8 %v6525
      %v6527 = vlaneseq
      %v6528 = vshrl.u32 %v6527, 7
      %v6529 = vsub.s32 %v6526, %v6528
      %v6530 = vrot.slane %v6514, %v6529
      %v6532 = vunpack.c.l.s4 1966171168
      %v6533 = vunpack.c.0.s8 %v6532
      %v6534 = vlaneseq
      %v6535 = vshrl.u32 %v6534, 7
      %v6536 = vsub.s32 %v6533, %v6535
      %v6537 = vrot.slane %v6521, %v6536
      %v6539 = vunpack.c.l.s4 1966171168
      %v6540 = vunpack.c.0.s8 %v6539
      %v6541 = vlaneseq
      %v6542 = vshrl.u32 %v6541, 7
      %v6543 = vsub.s32 %v6540, %v6542
      %v6544 = vrot.slane %v6522, %v6543
      %v6546 = vunpack.c.l.s4 1966171168
      %v6547 = vunpack.c.0.s8 %v6546
      %v6548 = vlaneseq
      %v6549 = vshrl.u32 %v6548, 7
      %v6550 = vsub.s32 %v6547, %v6549
      %v6551 = vrot.slane %v6523, %v6550
      %v6552 = vcombine.high %v6530, %v6530
      %v6553 = vcombine.high %v6537, %v6537
      %v6554 = vcombine.high %v6544, %v6544
      %v6555 = vcombine.high %v6551, %v6551
      %v6556 = vcombine.high %v5195, %v5195
      %v6558 = vunpack.c.l.s4 1966171168
      %v6559 = vunpack.c.0.s8 %v6558
      %v6560 = vlaneseq
      %v6561 = vshrl.u32 %v6560, 7
      %v6562 = vsub.s32 %v6559, %v6561
      %v6563 = vrot.slane %v5195, %v6562
      %v6565 = vunpack.c.l.s4 1966171168
      %v6566 = vunpack.c.0.s8 %v6565
      %v6567 = vlaneseq
      %v6568 = vshrl.u32 %v6567, 7
      %v6569 = vsub.s32 %v6566, %v6568
      %v6570 = vrot.slane %v6556, %v6569
      %v6571 = vcombine.high %v6563, %v6563
      %v6572 = vcombine.high %v6570, %v6570
      %v6574 = vunpack.c.l.s4 1966171168
      %v6575 = vunpack.c.0.s8 %v6574
      %v6576 = vlaneseq
      %v6577 = vshrl.u32 %v6576, 7
      %v6578 = vsub.s32 %v6575, %v6577
      %v6579 = vrot.slane %v6563, %v6578
      %v6581 = vunpack.c.l.s4 1966171168
      %v6582 = vunpack.c.0.s8 %v6581
      %v6583 = vlaneseq
      %v6584 = vshrl.u32 %v6583, 7
      %v6585 = vsub.s32 %v6582, %v6584
      %v6586 = vrot.slane %v6570, %v6585
      %v6588 = vunpack.c.l.s4 1966171168
      %v6589 = vunpack.c.0.s8 %v6588
      %v6590 = vlaneseq
      %v6591 = vshrl.u32 %v6590, 7
      %v6592 = vsub.s32 %v6589, %v6591
      %v6593 = vrot.slane %v6571, %v6592
      %v6595 = vunpack.c.l.s4 1966171168
      %v6596 = vunpack.c.0.s8 %v6595
      %v6597 = vlaneseq
      %v6598 = vshrl.u32 %v6597, 7
      %v6599 = vsub.s32 %v6596, %v6598
      %v6600 = vrot.slane %v6572, %v6599
      %v6601 = vcombine.high %v6579, %v6579
      %v6602 = vcombine.high %v6586, %v6586
      %v6603 = vcombine.high %v6593, %v6593
      %v6604 = vcombine.high %v6600, %v6600
      %v6605 = vcombine.high %v5196, %v5196
      %v6607 = vunpack.c.l.s4 1966171168
      %v6608 = vunpack.c.0.s8 %v6607
      %v6609 = vlaneseq
      %v6610 = vshrl.u32 %v6609, 7
      %v6611 = vsub.s32 %v6608, %v6610
      %v6612 = vrot.slane %v5196, %v6611
      %v6614 = vunpack.c.l.s4 1966171168
      %v6615 = vunpack.c.0.s8 %v6614
      %v6616 = vlaneseq
      %v6617 = vshrl.u32 %v6616, 7
      %v6618 = vsub.s32 %v6615, %v6617
      %v6619 = vrot.slane %v6605, %v6618
      %v6620 = vcombine.high %v6612, %v6612
      %v6621 = vcombine.high %v6619, %v6619
      %v6623 = vunpack.c.l.s4 1966171168
      %v6624 = vunpack.c.0.s8 %v6623
      %v6625 = vlaneseq
      %v6626 = vshrl.u32 %v6625, 7
      %v6627 = vsub.s32 %v6624, %v6626
      %v6628 = vrot.slane %v6612, %v6627
      %v6630 = vunpack.c.l.s4 1966171168
      %v6631 = vunpack.c.0.s8 %v6630
      %v6632 = vlaneseq
      %v6633 = vshrl.u32 %v6632, 7
      %v6634 = vsub.s32 %v6631, %v6633
      %v6635 = vrot.slane %v6619, %v6634
      %v6637 = vunpack.c.l.s4 1966171168
      %v6638 = vunpack.c.0.s8 %v6637
      %v6639 = vlaneseq
      %v6640 = vshrl.u32 %v6639, 7
      %v6641 = vsub.s32 %v6638, %v6640
      %v6642 = vrot.slane %v6620, %v6641
      %v6644 = vunpack.c.l.s4 1966171168
      %v6645 = vunpack.c.0.s8 %v6644
      %v6646 = vlaneseq
      %v6647 = vshrl.u32 %v6646, 7
      %v6648 = vsub.s32 %v6645, %v6647
      %v6649 = vrot.slane %v6621, %v6648
      %v6650 = vcombine.high %v6628, %v6628
      %v6651 = vcombine.high %v6635, %v6635
      %v6652 = vcombine.high %v6642, %v6642
      %v6653 = vcombine.high %v6649, %v6649
      %v6798 = vcombine.high %v5838, %v5838
      %v6800 = vunpack.c.l.s4 1966171168
      %v6801 = vunpack.c.0.s8 %v6800
      %v6802 = vlaneseq
      %v6803 = vshrl.u32 %v6802, 7
      %v6804 = vsub.s32 %v6801, %v6803
      %v6805 = vrot.slane %v5838, %v6804
      %v6807 = vunpack.c.l.s4 1966171168
      %v6808 = vunpack.c.0.s8 %v6807
      %v6809 = vlaneseq
      %v6810 = vshrl.u32 %v6809, 7
      %v6811 = vsub.s32 %v6808, %v6810
      %v6812 = vrot.slane %v6798, %v6811
      %v6813 = vcombine.high %v6805, %v6805
      %v6814 = vcombine.high %v6812, %v6812
      %v6816 = vunpack.c.l.s4 1966171168
      %v6817 = vunpack.c.0.s8 %v6816
      %v6818 = vlaneseq
      %v6819 = vshrl.u32 %v6818, 7
      %v6820 = vsub.s32 %v6817, %v6819
      %v6821 = vrot.slane %v6805, %v6820
      %v6823 = vunpack.c.l.s4 1966171168
      %v6824 = vunpack.c.0.s8 %v6823
      %v6825 = vlaneseq
      %v6826 = vshrl.u32 %v6825, 7
      %v6827 = vsub.s32 %v6824, %v6826
      %v6828 = vrot.slane %v6812, %v6827
      %v6830 = vunpack.c.l.s4 1966171168
      %v6831 = vunpack.c.0.s8 %v6830
      %v6832 = vlaneseq
      %v6833 = vshrl.u32 %v6832, 7
      %v6834 = vsub.s32 %v6831, %v6833
      %v6835 = vrot.slane %v6813, %v6834
      %v6837 = vunpack.c.l.s4 1966171168
      %v6838 = vunpack.c.0.s8 %v6837
      %v6839 = vlaneseq
      %v6840 = vshrl.u32 %v6839, 7
      %v6841 = vsub.s32 %v6838, %v6840
      %v6842 = vrot.slane %v6814, %v6841
      %v6843 = vcombine.high %v6821, %v6821
      %v6844 = vcombine.high %v6828, %v6828
      %v6845 = vcombine.high %v6835, %v6835
      %v6846 = vcombine.high %v6842, %v6842
      %v6847 = vcombine.high %v5839, %v5839
      %v6849 = vunpack.c.l.s4 1966171168
      %v6850 = vunpack.c.0.s8 %v6849
      %v6851 = vlaneseq
      %v6852 = vshrl.u32 %v6851, 7
      %v6853 = vsub.s32 %v6850, %v6852
      %v6854 = vrot.slane %v5839, %v6853
      %v6856 = vunpack.c.l.s4 1966171168
      %v6857 = vunpack.c.0.s8 %v6856
      %v6858 = vlaneseq
      %v6859 = vshrl.u32 %v6858, 7
      %v6860 = vsub.s32 %v6857, %v6859
      %v6861 = vrot.slane %v6847, %v6860
      %v6862 = vcombine.high %v6854, %v6854
      %v6863 = vcombine.high %v6861, %v6861
      %v6865 = vunpack.c.l.s4 1966171168
      %v6866 = vunpack.c.0.s8 %v6865
      %v6867 = vlaneseq
      %v6868 = vshrl.u32 %v6867, 7
      %v6869 = vsub.s32 %v6866, %v6868
      %v6870 = vrot.slane %v6854, %v6869
      %v6872 = vunpack.c.l.s4 1966171168
      %v6873 = vunpack.c.0.s8 %v6872
      %v6874 = vlaneseq
      %v6875 = vshrl.u32 %v6874, 7
      %v6876 = vsub.s32 %v6873, %v6875
      %v6877 = vrot.slane %v6861, %v6876
      %v6879 = vunpack.c.l.s4 1966171168
      %v6880 = vunpack.c.0.s8 %v6879
      %v6881 = vlaneseq
      %v6882 = vshrl.u32 %v6881, 7
      %v6883 = vsub.s32 %v6880, %v6882
      %v6884 = vrot.slane %v6862, %v6883
      %v6886 = vunpack.c.l.s4 1966171168
      %v6887 = vunpack.c.0.s8 %v6886
      %v6888 = vlaneseq
      %v6889 = vshrl.u32 %v6888, 7
      %v6890 = vsub.s32 %v6887, %v6889
      %v6891 = vrot.slane %v6863, %v6890
      %v6892 = vcombine.high %v6870, %v6870
      %v6893 = vcombine.high %v6877, %v6877
      %v6894 = vcombine.high %v6884, %v6884
      %v6895 = vcombine.high %v6891, %v6891
      %v6896 = vcombine.high %v5840, %v5840
      %v6898 = vunpack.c.l.s4 1966171168
      %v6899 = vunpack.c.0.s8 %v6898
      %v6900 = vlaneseq
      %v6901 = vshrl.u32 %v6900, 7
      %v6902 = vsub.s32 %v6899, %v6901
      %v6903 = vrot.slane %v5840, %v6902
      %v6905 = vunpack.c.l.s4 1966171168
      %v6906 = vunpack.c.0.s8 %v6905
      %v6907 = vlaneseq
      %v6908 = vshrl.u32 %v6907, 7
      %v6909 = vsub.s32 %v6906, %v6908
      %v6910 = vrot.slane %v6896, %v6909
      %v6911 = vcombine.high %v6903, %v6903
      %v6912 = vcombine.high %v6910, %v6910
      %v6914 = vunpack.c.l.s4 1966171168
      %v6915 = vunpack.c.0.s8 %v6914
      %v6916 = vlaneseq
      %v6917 = vshrl.u32 %v6916, 7
      %v6918 = vsub.s32 %v6915, %v6917
      %v6919 = vrot.slane %v6903, %v6918
      %v6921 = vunpack.c.l.s4 1966171168
      %v6922 = vunpack.c.0.s8 %v6921
      %v6923 = vlaneseq
      %v6924 = vshrl.u32 %v6923, 7
      %v6925 = vsub.s32 %v6922, %v6924
      %v6926 = vrot.slane %v6910, %v6925
      %v6928 = vunpack.c.l.s4 1966171168
      %v6929 = vunpack.c.0.s8 %v6928
      %v6930 = vlaneseq
      %v6931 = vshrl.u32 %v6930, 7
      %v6932 = vsub.s32 %v6929, %v6931
      %v6933 = vrot.slane %v6911, %v6932
      %v6935 = vunpack.c.l.s4 1966171168
      %v6936 = vunpack.c.0.s8 %v6935
      %v6937 = vlaneseq
      %v6938 = vshrl.u32 %v6937, 7
      %v6939 = vsub.s32 %v6936, %v6938
      %v6940 = vrot.slane %v6912, %v6939
      %v6941 = vcombine.high %v6919, %v6919
      %v6942 = vcombine.high %v6926, %v6926
      %v6943 = vcombine.high %v6933, %v6933
      %v6944 = vcombine.high %v6940, %v6940
      %v6945 = vcombine.high %v5841, %v5841
      %v6947 = vunpack.c.l.s4 1966171168
      %v6948 = vunpack.c.0.s8 %v6947
      %v6949 = vlaneseq
      %v6950 = vshrl.u32 %v6949, 7
      %v6951 = vsub.s32 %v6948, %v6950
      %v6952 = vrot.slane %v5841, %v6951
      %v6954 = vunpack.c.l.s4 1966171168
      %v6955 = vunpack.c.0.s8 %v6954
      %v6956 = vlaneseq
      %v6957 = vshrl.u32 %v6956, 7
      %v6958 = vsub.s32 %v6955, %v6957
      %v6959 = vrot.slane %v6945, %v6958
      %v6960 = vcombine.high %v6952, %v6952
      %v6961 = vcombine.high %v6959, %v6959
      %v6963 = vunpack.c.l.s4 1966171168
      %v6964 = vunpack.c.0.s8 %v6963
      %v6965 = vlaneseq
      %v6966 = vshrl.u32 %v6965, 7
      %v6967 = vsub.s32 %v6964, %v6966
      %v6968 = vrot.slane %v6952, %v6967
      %v6970 = vunpack.c.l.s4 1966171168
      %v6971 = vunpack.c.0.s8 %v6970
      %v6972 = vlaneseq
      %v6973 = vshrl.u32 %v6972, 7
      %v6974 = vsub.s32 %v6971, %v6973
      %v6975 = vrot.slane %v6959, %v6974
      %v6977 = vunpack.c.l.s4 1966171168
      %v6978 = vunpack.c.0.s8 %v6977
      %v6979 = vlaneseq
      %v6980 = vshrl.u32 %v6979, 7
      %v6981 = vsub.s32 %v6978, %v6980
      %v6982 = vrot.slane %v6960, %v6981
      %v6984 = vunpack.c.l.s4 1966171168
      %v6985 = vunpack.c.0.s8 %v6984
      %v6986 = vlaneseq
      %v6987 = vshrl.u32 %v6986, 7
      %v6988 = vsub.s32 %v6985, %v6987
      %v6989 = vrot.slane %v6961, %v6988
      %v6990 = vcombine.high %v6968, %v6968
      %v6991 = vcombine.high %v6975, %v6975
      %v6992 = vcombine.high %v6982, %v6982
      %v6993 = vcombine.high %v6989, %v6989
      %v6994 = vcombine.high %v5842, %v5842
      %v6996 = vunpack.c.l.s4 1966171168
      %v6997 = vunpack.c.0.s8 %v6996
      %v6998 = vlaneseq
      %v6999 = vshrl.u32 %v6998, 7
      %v7000 = vsub.s32 %v6997, %v6999
      %v7001 = vrot.slane %v5842, %v7000
      %v7003 = vunpack.c.l.s4 1966171168
      %v7004 = vunpack.c.0.s8 %v7003
      %v7005 = vlaneseq
      %v7006 = vshrl.u32 %v7005, 7
      %v7007 = vsub.s32 %v7004, %v7006
      %v7008 = vrot.slane %v6994, %v7007
      %v7009 = vcombine.high %v7001, %v7001
      %v7010 = vcombine.high %v7008, %v7008
      %v7012 = vunpack.c.l.s4 1966171168
      %v7013 = vunpack.c.0.s8 %v7012
      %v7014 = vlaneseq
      %v7015 = vshrl.u32 %v7014, 7
      %v7016 = vsub.s32 %v7013, %v7015
      %v7017 = vrot.slane %v7001, %v7016
      %v7019 = vunpack.c.l.s4 1966171168
      %v7020 = vunpack.c.0.s8 %v7019
      %v7021 = vlaneseq
      %v7022 = vshrl.u32 %v7021, 7
      %v7023 = vsub.s32 %v7020, %v7022
      %v7024 = vrot.slane %v7008, %v7023
      %v7026 = vunpack.c.l.s4 1966171168
      %v7027 = vunpack.c.0.s8 %v7026
      %v7028 = vlaneseq
      %v7029 = vshrl.u32 %v7028, 7
      %v7030 = vsub.s32 %v7027, %v7029
      %v7031 = vrot.slane %v7009, %v7030
      %v7033 = vunpack.c.l.s4 1966171168
      %v7034 = vunpack.c.0.s8 %v7033
      %v7035 = vlaneseq
      %v7036 = vshrl.u32 %v7035, 7
      %v7037 = vsub.s32 %v7034, %v7036
      %v7038 = vrot.slane %v7010, %v7037
      %v7039 = vcombine.high %v7017, %v7017
      %v7040 = vcombine.high %v7024, %v7024
      %v7041 = vcombine.high %v7031, %v7031
      %v7042 = vcombine.high %v7038, %v7038
      %v7043 = vcombine.high %v5843, %v5843
      %v7045 = vunpack.c.l.s4 1966171168
      %v7046 = vunpack.c.0.s8 %v7045
      %v7047 = vlaneseq
      %v7048 = vshrl.u32 %v7047, 7
      %v7049 = vsub.s32 %v7046, %v7048
      %v7050 = vrot.slane %v5843, %v7049
      %v7052 = vunpack.c.l.s4 1966171168
      %v7053 = vunpack.c.0.s8 %v7052
      %v7054 = vlaneseq
      %v7055 = vshrl.u32 %v7054, 7
      %v7056 = vsub.s32 %v7053, %v7055
      %v7057 = vrot.slane %v7043, %v7056
      %v7058 = vcombine.high %v7050, %v7050
      %v7059 = vcombine.high %v7057, %v7057
      %v7061 = vunpack.c.l.s4 1966171168
      %v7062 = vunpack.c.0.s8 %v7061
      %v7063 = vlaneseq
      %v7064 = vshrl.u32 %v7063, 7
      %v7065 = vsub.s32 %v7062, %v7064
      %v7066 = vrot.slane %v7050, %v7065
      %v7068 = vunpack.c.l.s4 1966171168
      %v7069 = vunpack.c.0.s8 %v7068
      %v7070 = vlaneseq
      %v7071 = vshrl.u32 %v7070, 7
      %v7072 = vsub.s32 %v7069, %v7071
      %v7073 = vrot.slane %v7057, %v7072
      %v7075 = vunpack.c.l.s4 1966171168
      %v7076 = vunpack.c.0.s8 %v7075
      %v7077 = vlaneseq
      %v7078 = vshrl.u32 %v7077, 7
      %v7079 = vsub.s32 %v7076, %v7078
      %v7080 = vrot.slane %v7058, %v7079
      %v7082 = vunpack.c.l.s4 1966171168
      %v7083 = vunpack.c.0.s8 %v7082
      %v7084 = vlaneseq
      %v7085 = vshrl.u32 %v7084, 7
      %v7086 = vsub.s32 %v7083, %v7085
      %v7087 = vrot.slane %v7059, %v7086
      %v7088 = vcombine.high %v7066, %v7066
      %v7089 = vcombine.high %v7073, %v7073
      %v7090 = vcombine.high %v7080, %v7080
      %v7091 = vcombine.high %v7087, %v7087
      %v7092 = vcombine.high %v5844, %v5844
      %v7094 = vunpack.c.l.s4 1966171168
      %v7095 = vunpack.c.0.s8 %v7094
      %v7096 = vlaneseq
      %v7097 = vshrl.u32 %v7096, 7
      %v7098 = vsub.s32 %v7095, %v7097
      %v7099 = vrot.slane %v5844, %v7098
      %v7101 = vunpack.c.l.s4 1966171168
      %v7102 = vunpack.c.0.s8 %v7101
      %v7103 = vlaneseq
      %v7104 = vshrl.u32 %v7103, 7
      %v7105 = vsub.s32 %v7102, %v7104
      %v7106 = vrot.slane %v7092, %v7105
      %v7107 = vcombine.high %v7099, %v7099
      %v7108 = vcombine.high %v7106, %v7106
      %v7110 = vunpack.c.l.s4 1966171168
      %v7111 = vunpack.c.0.s8 %v7110
      %v7112 = vlaneseq
      %v7113 = vshrl.u32 %v7112, 7
      %v7114 = vsub.s32 %v7111, %v7113
      %v7115 = vrot.slane %v7099, %v7114
      %v7117 = vunpack.c.l.s4 1966171168
      %v7118 = vunpack.c.0.s8 %v7117
      %v7119 = vlaneseq
      %v7120 = vshrl.u32 %v7119, 7
      %v7121 = vsub.s32 %v7118, %v7120
      %v7122 = vrot.slane %v7106, %v7121
      %v7124 = vunpack.c.l.s4 1966171168
      %v7125 = vunpack.c.0.s8 %v7124
      %v7126 = vlaneseq
      %v7127 = vshrl.u32 %v7126, 7
      %v7128 = vsub.s32 %v7125, %v7127
      %v7129 = vrot.slane %v7107, %v7128
      %v7131 = vunpack.c.l.s4 1966171168
      %v7132 = vunpack.c.0.s8 %v7131
      %v7133 = vlaneseq
      %v7134 = vshrl.u32 %v7133, 7
      %v7135 = vsub.s32 %v7132, %v7134
      %v7136 = vrot.slane %v7108, %v7135
      %v7137 = vcombine.high %v7115, %v7115
      %v7138 = vcombine.high %v7122, %v7122
      %v7139 = vcombine.high %v7129, %v7129
      %v7140 = vcombine.high %v7136, %v7136
      %v7141 = vcombine.high %v5845, %v5845
      %v7143 = vunpack.c.l.s4 1966171168
      %v7144 = vunpack.c.0.s8 %v7143
      %v7145 = vlaneseq
      %v7146 = vshrl.u32 %v7145, 7
      %v7147 = vsub.s32 %v7144, %v7146
      %v7148 = vrot.slane %v5845, %v7147
      %v7150 = vunpack.c.l.s4 1966171168
      %v7151 = vunpack.c.0.s8 %v7150
      %v7152 = vlaneseq
      %v7153 = vshrl.u32 %v7152, 7
      %v7154 = vsub.s32 %v7151, %v7153
      %v7155 = vrot.slane %v7141, %v7154
      %v7156 = vcombine.high %v7148, %v7148
      %v7157 = vcombine.high %v7155, %v7155
      %v7159 = vunpack.c.l.s4 1966171168
      %v7160 = vunpack.c.0.s8 %v7159
      %v7161 = vlaneseq
      %v7162 = vshrl.u32 %v7161, 7
      %v7163 = vsub.s32 %v7160, %v7162
      %v7164 = vrot.slane %v7148, %v7163
      %v7166 = vunpack.c.l.s4 1966171168
      %v7167 = vunpack.c.0.s8 %v7166
      %v7168 = vlaneseq
      %v7169 = vshrl.u32 %v7168, 7
      %v7170 = vsub.s32 %v7167, %v7169
      %v7171 = vrot.slane %v7155, %v7170
      %v7173 = vunpack.c.l.s4 1966171168
      %v7174 = vunpack.c.0.s8 %v7173
      %v7175 = vlaneseq
      %v7176 = vshrl.u32 %v7175, 7
      %v7177 = vsub.s32 %v7174, %v7176
      %v7178 = vrot.slane %v7156, %v7177
      %v7180 = vunpack.c.l.s4 1966171168
      %v7181 = vunpack.c.0.s8 %v7180
      %v7182 = vlaneseq
      %v7183 = vshrl.u32 %v7182, 7
      %v7184 = vsub.s32 %v7181, %v7183
      %v7185 = vrot.slane %v7157, %v7184
      %v7186 = vcombine.high %v7164, %v7164
      %v7187 = vcombine.high %v7171, %v7171
      %v7188 = vcombine.high %v7178, %v7178
      %v7189 = vcombine.high %v7185, %v7185
      %v7190 = vcombine.high %v5846, %v5846
      %v7192 = vunpack.c.l.s4 1966171168
      %v7193 = vunpack.c.0.s8 %v7192
      %v7194 = vlaneseq
      %v7195 = vshrl.u32 %v7194, 7
      %v7196 = vsub.s32 %v7193, %v7195
      %v7197 = vrot.slane %v5846, %v7196
      %v7199 = vunpack.c.l.s4 1966171168
      %v7200 = vunpack.c.0.s8 %v7199
      %v7201 = vlaneseq
      %v7202 = vshrl.u32 %v7201, 7
      %v7203 = vsub.s32 %v7200, %v7202
      %v7204 = vrot.slane %v7190, %v7203
      %v7205 = vcombine.high %v7197, %v7197
      %v7206 = vcombine.high %v7204, %v7204
      %v7208 = vunpack.c.l.s4 1966171168
      %v7209 = vunpack.c.0.s8 %v7208
      %v7210 = vlaneseq
      %v7211 = vshrl.u32 %v7210, 7
      %v7212 = vsub.s32 %v7209, %v7211
      %v7213 = vrot.slane %v7197, %v7212
      %v7215 = vunpack.c.l.s4 1966171168
      %v7216 = vunpack.c.0.s8 %v7215
      %v7217 = vlaneseq
      %v7218 = vshrl.u32 %v7217, 7
      %v7219 = vsub.s32 %v7216, %v7218
      %v7220 = vrot.slane %v7204, %v7219
      %v7222 = vunpack.c.l.s4 1966171168
      %v7223 = vunpack.c.0.s8 %v7222
      %v7224 = vlaneseq
      %v7225 = vshrl.u32 %v7224, 7
      %v7226 = vsub.s32 %v7223, %v7225
      %v7227 = vrot.slane %v7205, %v7226
      %v7229 = vunpack.c.l.s4 1966171168
      %v7230 = vunpack.c.0.s8 %v7229
      %v7231 = vlaneseq
      %v7232 = vshrl.u32 %v7231, 7
      %v7233 = vsub.s32 %v7230, %v7232
      %v7234 = vrot.slane %v7206, %v7233
      %v7235 = vcombine.high %v7213, %v7213
      %v7236 = vcombine.high %v7220, %v7220
      %v7237 = vcombine.high %v7227, %v7227
      %v7238 = vcombine.high %v7234, %v7234
      %v7239 = vcombine.high %v5847, %v5847
      %v7241 = vunpack.c.l.s4 1966171168
      %v7242 = vunpack.c.0.s8 %v7241
      %v7243 = vlaneseq
      %v7244 = vshrl.u32 %v7243, 7
      %v7245 = vsub.s32 %v7242, %v7244
      %v7246 = vrot.slane %v5847, %v7245
      %v7248 = vunpack.c.l.s4 1966171168
      %v7249 = vunpack.c.0.s8 %v7248
      %v7250 = vlaneseq
      %v7251 = vshrl.u32 %v7250, 7
      %v7252 = vsub.s32 %v7249, %v7251
      %v7253 = vrot.slane %v7239, %v7252
      %v7254 = vcombine.high %v7246, %v7246
      %v7255 = vcombine.high %v7253, %v7253
      %v7257 = vunpack.c.l.s4 1966171168
      %v7258 = vunpack.c.0.s8 %v7257
      %v7259 = vlaneseq
      %v7260 = vshrl.u32 %v7259, 7
      %v7261 = vsub.s32 %v7258, %v7260
      %v7262 = vrot.slane %v7246, %v7261
      %v7264 = vunpack.c.l.s4 1966171168
      %v7265 = vunpack.c.0.s8 %v7264
      %v7266 = vlaneseq
      %v7267 = vshrl.u32 %v7266, 7
      %v7268 = vsub.s32 %v7265, %v7267
      %v7269 = vrot.slane %v7253, %v7268
      %v7271 = vunpack.c.l.s4 1966171168
      %v7272 = vunpack.c.0.s8 %v7271
      %v7273 = vlaneseq
      %v7274 = vshrl.u32 %v7273, 7
      %v7275 = vsub.s32 %v7272, %v7274
      %v7276 = vrot.slane %v7254, %v7275
      %v7278 = vunpack.c.l.s4 1966171168
      %v7279 = vunpack.c.0.s8 %v7278
      %v7280 = vlaneseq
      %v7281 = vshrl.u32 %v7280, 7
      %v7282 = vsub.s32 %v7279, %v7281
      %v7283 = vrot.slane %v7255, %v7282
      %v7284 = vcombine.high %v7262, %v7262
      %v7285 = vcombine.high %v7269, %v7269
      %v7286 = vcombine.high %v7276, %v7276
      %v7287 = vcombine.high %v7283, %v7283
      %v7288 = vcombine.high %v5848, %v5848
      %v7290 = vunpack.c.l.s4 1966171168
      %v7291 = vunpack.c.0.s8 %v7290
      %v7292 = vlaneseq
      %v7293 = vshrl.u32 %v7292, 7
      %v7294 = vsub.s32 %v7291, %v7293
      %v7295 = vrot.slane %v5848, %v7294
      %v7297 = vunpack.c.l.s4 1966171168
      %v7298 = vunpack.c.0.s8 %v7297
      %v7299 = vlaneseq
      %v7300 = vshrl.u32 %v7299, 7
      %v7301 = vsub.s32 %v7298, %v7300
      %v7302 = vrot.slane %v7288, %v7301
      %v7303 = vcombine.high %v7295, %v7295
      %v7304 = vcombine.high %v7302, %v7302
      %v7306 = vunpack.c.l.s4 1966171168
      %v7307 = vunpack.c.0.s8 %v7306
      %v7308 = vlaneseq
      %v7309 = vshrl.u32 %v7308, 7
      %v7310 = vsub.s32 %v7307, %v7309
      %v7311 = vrot.slane %v7295, %v7310
      %v7313 = vunpack.c.l.s4 1966171168
      %v7314 = vunpack.c.0.s8 %v7313
      %v7315 = vlaneseq
      %v7316 = vshrl.u32 %v7315, 7
      %v7317 = vsub.s32 %v7314, %v7316
      %v7318 = vrot.slane %v7302, %v7317
      %v7320 = vunpack.c.l.s4 1966171168
      %v7321 = vunpack.c.0.s8 %v7320
      %v7322 = vlaneseq
      %v7323 = vshrl.u32 %v7322, 7
      %v7324 = vsub.s32 %v7321, %v7323
      %v7325 = vrot.slane %v7303, %v7324
      %v7327 = vunpack.c.l.s4 1966171168
      %v7328 = vunpack.c.0.s8 %v7327
      %v7329 = vlaneseq
      %v7330 = vshrl.u32 %v7329, 7
      %v7331 = vsub.s32 %v7328, %v7330
      %v7332 = vrot.slane %v7304, %v7331
      %v7333 = vcombine.high %v7311, %v7311
      %v7334 = vcombine.high %v7318, %v7318
      %v7335 = vcombine.high %v7325, %v7325
      %v7336 = vcombine.high %v7332, %v7332
      %v7337 = vcombine.high %v5849, %v5849
      %v7339 = vunpack.c.l.s4 1966171168
      %v7340 = vunpack.c.0.s8 %v7339
      %v7341 = vlaneseq
      %v7342 = vshrl.u32 %v7341, 7
      %v7343 = vsub.s32 %v7340, %v7342
      %v7344 = vrot.slane %v5849, %v7343
      %v7346 = vunpack.c.l.s4 1966171168
      %v7347 = vunpack.c.0.s8 %v7346
      %v7348 = vlaneseq
      %v7349 = vshrl.u32 %v7348, 7
      %v7350 = vsub.s32 %v7347, %v7349
      %v7351 = vrot.slane %v7337, %v7350
      %v7352 = vcombine.high %v7344, %v7344
      %v7353 = vcombine.high %v7351, %v7351
      %v7355 = vunpack.c.l.s4 1966171168
      %v7356 = vunpack.c.0.s8 %v7355
      %v7357 = vlaneseq
      %v7358 = vshrl.u32 %v7357, 7
      %v7359 = vsub.s32 %v7356, %v7358
      %v7360 = vrot.slane %v7344, %v7359
      %v7362 = vunpack.c.l.s4 1966171168
      %v7363 = vunpack.c.0.s8 %v7362
      %v7364 = vlaneseq
      %v7365 = vshrl.u32 %v7364, 7
      %v7366 = vsub.s32 %v7363, %v7365
      %v7367 = vrot.slane %v7351, %v7366
      %v7369 = vunpack.c.l.s4 1966171168
      %v7370 = vunpack.c.0.s8 %v7369
      %v7371 = vlaneseq
      %v7372 = vshrl.u32 %v7371, 7
      %v7373 = vsub.s32 %v7370, %v7372
      %v7374 = vrot.slane %v7352, %v7373
      %v7376 = vunpack.c.l.s4 1966171168
      %v7377 = vunpack.c.0.s8 %v7376
      %v7378 = vlaneseq
      %v7379 = vshrl.u32 %v7378, 7
      %v7380 = vsub.s32 %v7377, %v7379
      %v7381 = vrot.slane %v7353, %v7380
      %v7382 = vcombine.high %v7360, %v7360
      %v7383 = vcombine.high %v7367, %v7367
      %v7384 = vcombine.high %v7374, %v7374
      %v7385 = vcombine.high %v7381, %v7381
      %v7386 = vcombine.high %v5850, %v5850
      %v7388 = vunpack.c.l.s4 1966171168
      %v7389 = vunpack.c.0.s8 %v7388
      %v7390 = vlaneseq
      %v7391 = vshrl.u32 %v7390, 7
      %v7392 = vsub.s32 %v7389, %v7391
      %v7393 = vrot.slane %v5850, %v7392
      %v7395 = vunpack.c.l.s4 1966171168
      %v7396 = vunpack.c.0.s8 %v7395
      %v7397 = vlaneseq
      %v7398 = vshrl.u32 %v7397, 7
      %v7399 = vsub.s32 %v7396, %v7398
      %v7400 = vrot.slane %v7386, %v7399
      %v7401 = vcombine.high %v7393, %v7393
      %v7402 = vcombine.high %v7400, %v7400
      %v7404 = vunpack.c.l.s4 1966171168
      %v7405 = vunpack.c.0.s8 %v7404
      %v7406 = vlaneseq
      %v7407 = vshrl.u32 %v7406, 7
      %v7408 = vsub.s32 %v7405, %v7407
      %v7409 = vrot.slane %v7393, %v7408
      %v7411 = vunpack.c.l.s4 1966171168
      %v7412 = vunpack.c.0.s8 %v7411
      %v7413 = vlaneseq
      %v7414 = vshrl.u32 %v7413, 7
      %v7415 = vsub.s32 %v7412, %v7414
      %v7416 = vrot.slane %v7400, %v7415
      %v7418 = vunpack.c.l.s4 1966171168
      %v7419 = vunpack.c.0.s8 %v7418
      %v7420 = vlaneseq
      %v7421 = vshrl.u32 %v7420, 7
      %v7422 = vsub.s32 %v7419, %v7421
      %v7423 = vrot.slane %v7401, %v7422
      %v7425 = vunpack.c.l.s4 1966171168
      %v7426 = vunpack.c.0.s8 %v7425
      %v7427 = vlaneseq
      %v7428 = vshrl.u32 %v7427, 7
      %v7429 = vsub.s32 %v7426, %v7428
      %v7430 = vrot.slane %v7402, %v7429
      %v7431 = vcombine.high %v7409, %v7409
      %v7432 = vcombine.high %v7416, %v7416
      %v7433 = vcombine.high %v7423, %v7423
      %v7434 = vcombine.high %v7430, %v7430
      %v7435 = vcombine.high %v5851, %v5851
      %v7437 = vunpack.c.l.s4 1966171168
      %v7438 = vunpack.c.0.s8 %v7437
      %v7439 = vlaneseq
      %v7440 = vshrl.u32 %v7439, 7
      %v7441 = vsub.s32 %v7438, %v7440
      %v7442 = vrot.slane %v5851, %v7441
      %v7444 = vunpack.c.l.s4 1966171168
      %v7445 = vunpack.c.0.s8 %v7444
      %v7446 = vlaneseq
      %v7447 = vshrl.u32 %v7446, 7
      %v7448 = vsub.s32 %v7445, %v7447
      %v7449 = vrot.slane %v7435, %v7448
      %v7450 = vcombine.high %v7442, %v7442
      %v7451 = vcombine.high %v7449, %v7449
      %v7453 = vunpack.c.l.s4 1966171168
      %v7454 = vunpack.c.0.s8 %v7453
      %v7455 = vlaneseq
      %v7456 = vshrl.u32 %v7455, 7
      %v7457 = vsub.s32 %v7454, %v7456
      %v7458 = vrot.slane %v7442, %v7457
      %v7460 = vunpack.c.l.s4 1966171168
      %v7461 = vunpack.c.0.s8 %v7460
      %v7462 = vlaneseq
      %v7463 = vshrl.u32 %v7462, 7
      %v7464 = vsub.s32 %v7461, %v7463
      %v7465 = vrot.slane %v7449, %v7464
      %v7467 = vunpack.c.l.s4 1966171168
      %v7468 = vunpack.c.0.s8 %v7467
      %v7469 = vlaneseq
      %v7470 = vshrl.u32 %v7469, 7
      %v7471 = vsub.s32 %v7468, %v7470
      %v7472 = vrot.slane %v7450, %v7471
      %v7474 = vunpack.c.l.s4 1966171168
      %v7475 = vunpack.c.0.s8 %v7474
      %v7476 = vlaneseq
      %v7477 = vshrl.u32 %v7476, 7
      %v7478 = vsub.s32 %v7475, %v7477
      %v7479 = vrot.slane %v7451, %v7478
      %v7480 = vcombine.high %v7458, %v7458
      %v7481 = vcombine.high %v7465, %v7465
      %v7482 = vcombine.high %v7472, %v7472
      %v7483 = vcombine.high %v7479, %v7479
      %v7484 = vcombine.high %v5852, %v5852
      %v7486 = vunpack.c.l.s4 1966171168
      %v7487 = vunpack.c.0.s8 %v7486
      %v7488 = vlaneseq
      %v7489 = vshrl.u32 %v7488, 7
      %v7490 = vsub.s32 %v7487, %v7489
      %v7491 = vrot.slane %v5852, %v7490
      %v7493 = vunpack.c.l.s4 1966171168
      %v7494 = vunpack.c.0.s8 %v7493
      %v7495 = vlaneseq
      %v7496 = vshrl.u32 %v7495, 7
      %v7497 = vsub.s32 %v7494, %v7496
      %v7498 = vrot.slane %v7484, %v7497
      %v7499 = vcombine.high %v7491, %v7491
      %v7500 = vcombine.high %v7498, %v7498
      %v7502 = vunpack.c.l.s4 1966171168
      %v7503 = vunpack.c.0.s8 %v7502
      %v7504 = vlaneseq
      %v7505 = vshrl.u32 %v7504, 7
      %v7506 = vsub.s32 %v7503, %v7505
      %v7507 = vrot.slane %v7491, %v7506
      %v7509 = vunpack.c.l.s4 1966171168
      %v7510 = vunpack.c.0.s8 %v7509
      %v7511 = vlaneseq
      %v7512 = vshrl.u32 %v7511, 7
      %v7513 = vsub.s32 %v7510, %v7512
      %v7514 = vrot.slane %v7498, %v7513
      %v7516 = vunpack.c.l.s4 1966171168
      %v7517 = vunpack.c.0.s8 %v7516
      %v7518 = vlaneseq
      %v7519 = vshrl.u32 %v7518, 7
      %v7520 = vsub.s32 %v7517, %v7519
      %v7521 = vrot.slane %v7499, %v7520
      %v7523 = vunpack.c.l.s4 1966171168
      %v7524 = vunpack.c.0.s8 %v7523
      %v7525 = vlaneseq
      %v7526 = vshrl.u32 %v7525, 7
      %v7527 = vsub.s32 %v7524, %v7526
      %v7528 = vrot.slane %v7500, %v7527
      %v7529 = vcombine.high %v7507, %v7507
      %v7530 = vcombine.high %v7514, %v7514
      %v7531 = vcombine.high %v7521, %v7521
      %v7532 = vcombine.high %v7528, %v7528
      %v7533 = vcombine.high %v5853, %v5853
      %v7535 = vunpack.c.l.s4 1966171168
      %v7536 = vunpack.c.0.s8 %v7535
      %v7537 = vlaneseq
      %v7538 = vshrl.u32 %v7537, 7
      %v7539 = vsub.s32 %v7536, %v7538
      %v7540 = vrot.slane %v5853, %v7539
      %v7542 = vunpack.c.l.s4 1966171168
      %v7543 = vunpack.c.0.s8 %v7542
      %v7544 = vlaneseq
      %v7545 = vshrl.u32 %v7544, 7
      %v7546 = vsub.s32 %v7543, %v7545
      %v7547 = vrot.slane %v7533, %v7546
      %v7548 = vcombine.high %v7540, %v7540
      %v7549 = vcombine.high %v7547, %v7547
      %v7551 = vunpack.c.l.s4 1966171168
      %v7552 = vunpack.c.0.s8 %v7551
      %v7553 = vlaneseq
      %v7554 = vshrl.u32 %v7553, 7
      %v7555 = vsub.s32 %v7552, %v7554
      %v7556 = vrot.slane %v7540, %v7555
      %v7558 = vunpack.c.l.s4 1966171168
      %v7559 = vunpack.c.0.s8 %v7558
      %v7560 = vlaneseq
      %v7561 = vshrl.u32 %v7560, 7
      %v7562 = vsub.s32 %v7559, %v7561
      %v7563 = vrot.slane %v7547, %v7562
      %v7565 = vunpack.c.l.s4 1966171168
      %v7566 = vunpack.c.0.s8 %v7565
      %v7567 = vlaneseq
      %v7568 = vshrl.u32 %v7567, 7
      %v7569 = vsub.s32 %v7566, %v7568
      %v7570 = vrot.slane %v7548, %v7569
      %v7572 = vunpack.c.l.s4 1966171168
      %v7573 = vunpack.c.0.s8 %v7572
      %v7574 = vlaneseq
      %v7575 = vshrl.u32 %v7574, 7
      %v7576 = vsub.s32 %v7573, %v7575
      %v7577 = vrot.slane %v7549, %v7576
      %v7578 = vcombine.high %v7556, %v7556
      %v7579 = vcombine.high %v7563, %v7563
      %v7580 = vcombine.high %v7570, %v7570
      %v7581 = vcombine.high %v7577, %v7577
      %v7582 = vlaneseq
      %v7583 = vshrl.u32 %v7582, 7
      %v7584 = vsub.s32 0, %v7583
      %v7585 = vrot.slane %v6821, %v7584
      %v7586 = vlaneseq
      %v7587 = vshrl.u32 %v7586, 7
      %v7588 = vsub.s32 0, %v7587
      %v7589 = vrot.slane %v6835, %v7588
      %v7590 = vlaneseq
      %v7591 = vshrl.u32 %v7590, 7
      %v7592 = vsub.s32 0, %v7591
      %v7593 = vrot.slane %v6843, %v7592
      %v7594 = vlaneseq
      %v7595 = vshrl.u32 %v7594, 7
      %v7596 = vsub.s32 0, %v7595
      %v7597 = vrot.slane %v6845, %v7596
      %v7598 = vlaneseq
      %v7599 = vshrl.u32 %v7598, 7
      %v7600 = vsub.s32 0, %v7599
      %v7601 = vrot.slane %v6828, %v7600
      %v7602 = vlaneseq
      %v7603 = vshrl.u32 %v7602, 7
      %v7604 = vsub.s32 0, %v7603
      %v7605 = vrot.slane %v6842, %v7604
      %v7606 = vlaneseq
      %v7607 = vshrl.u32 %v7606, 7
      %v7608 = vsub.s32 0, %v7607
      %v7609 = vrot.slane %v6844, %v7608
      %v7610 = vlaneseq
      %v7611 = vshrl.u32 %v7610, 7
      %v7612 = vsub.s32 0, %v7611
      %v7613 = vrot.slane %v6846, %v7612
      %v7614 = vlaneseq
      %v7615 = vshrl.u32 %v7614, 7
      %v7616 = vsub.s32 0, %v7615
      %v7617 = vrot.slane %v6870, %v7616
      %v7618 = vlaneseq
      %v7619 = vshrl.u32 %v7618, 7
      %v7620 = vsub.s32 0, %v7619
      %v7621 = vrot.slane %v6884, %v7620
      %v7622 = vlaneseq
      %v7623 = vshrl.u32 %v7622, 7
      %v7624 = vsub.s32 0, %v7623
      %v7625 = vrot.slane %v6892, %v7624
      %v7626 = vlaneseq
      %v7627 = vshrl.u32 %v7626, 7
      %v7628 = vsub.s32 0, %v7627
      %v7629 = vrot.slane %v6894, %v7628
      %v7630 = vlaneseq
      %v7631 = vshrl.u32 %v7630, 7
      %v7632 = vsub.s32 0, %v7631
      %v7633 = vrot.slane %v6877, %v7632
      %v7634 = vlaneseq
      %v7635 = vshrl.u32 %v7634, 7
      %v7636 = vsub.s32 0, %v7635
      %v7637 = vrot.slane %v6891, %v7636
      %v7638 = vlaneseq
      %v7639 = vshrl.u32 %v7638, 7
      %v7640 = vsub.s32 0, %v7639
      %v7641 = vrot.slane %v6893, %v7640
      %v7642 = vlaneseq
      %v7643 = vshrl.u32 %v7642, 7
      %v7644 = vsub.s32 0, %v7643
      %v7645 = vrot.slane %v6895, %v7644
      %v7646 = vlaneseq
      %v7647 = vshrl.u32 %v7646, 7
      %v7648 = vsub.s32 0, %v7647
      %v7649 = vrot.slane %v6919, %v7648
      %v7650 = vlaneseq
      %v7651 = vshrl.u32 %v7650, 7
      %v7652 = vsub.s32 0, %v7651
      %v7653 = vrot.slane %v6933, %v7652
      %v7654 = vlaneseq
      %v7655 = vshrl.u32 %v7654, 7
      %v7656 = vsub.s32 0, %v7655
      %v7657 = vrot.slane %v6941, %v7656
      %v7658 = vlaneseq
      %v7659 = vshrl.u32 %v7658, 7
      %v7660 = vsub.s32 0, %v7659
      %v7661 = vrot.slane %v6943, %v7660
      %v7662 = vlaneseq
      %v7663 = vshrl.u32 %v7662, 7
      %v7664 = vsub.s32 0, %v7663
      %v7665 = vrot.slane %v6926, %v7664
      %v7666 = vlaneseq
      %v7667 = vshrl.u32 %v7666, 7
      %v7668 = vsub.s32 0, %v7667
      %v7669 = vrot.slane %v6940, %v7668
      %v7670 = vlaneseq
      %v7671 = vshrl.u32 %v7670, 7
      %v7672 = vsub.s32 0, %v7671
      %v7673 = vrot.slane %v6942, %v7672
      %v7674 = vlaneseq
      %v7675 = vshrl.u32 %v7674, 7
      %v7676 = vsub.s32 0, %v7675
      %v7677 = vrot.slane %v6944, %v7676
      %v7678 = vlaneseq
      %v7679 = vshrl.u32 %v7678, 7
      %v7680 = vsub.s32 0, %v7679
      %v7681 = vrot.slane %v6968, %v7680
      %v7682 = vlaneseq
      %v7683 = vshrl.u32 %v7682, 7
      %v7684 = vsub.s32 0, %v7683
      %v7685 = vrot.slane %v6982, %v7684
      %v7686 = vlaneseq
      %v7687 = vshrl.u32 %v7686, 7
      %v7688 = vsub.s32 0, %v7687
      %v7689 = vrot.slane %v6990, %v7688
      %v7690 = vlaneseq
      %v7691 = vshrl.u32 %v7690, 7
      %v7692 = vsub.s32 0, %v7691
      %v7693 = vrot.slane %v6992, %v7692
      %v7694 = vlaneseq
      %v7695 = vshrl.u32 %v7694, 7
      %v7696 = vsub.s32 0, %v7695
      %v7697 = vrot.slane %v6975, %v7696
      %v7698 = vlaneseq
      %v7699 = vshrl.u32 %v7698, 7
      %v7700 = vsub.s32 0, %v7699
      %v7701 = vrot.slane %v6989, %v7700
      %v7702 = vlaneseq
      %v7703 = vshrl.u32 %v7702, 7
      %v7704 = vsub.s32 0, %v7703
      %v7705 = vrot.slane %v6991, %v7704
      %v7706 = vlaneseq
      %v7707 = vshrl.u32 %v7706, 7
      %v7708 = vsub.s32 0, %v7707
      %v7709 = vrot.slane %v6993, %v7708
      %v7710 = vlaneseq
      %v7711 = vshrl.u32 %v7710, 7
      %v7712 = vsub.s32 0, %v7711
      %v7713 = vrot.slane %v7017, %v7712
      %v7714 = vlaneseq
      %v7715 = vshrl.u32 %v7714, 7
      %v7716 = vsub.s32 0, %v7715
      %v7717 = vrot.slane %v7031, %v7716
      %v7718 = vlaneseq
      %v7719 = vshrl.u32 %v7718, 7
      %v7720 = vsub.s32 0, %v7719
      %v7721 = vrot.slane %v7039, %v7720
      %v7722 = vlaneseq
      %v7723 = vshrl.u32 %v7722, 7
      %v7724 = vsub.s32 0, %v7723
      %v7725 = vrot.slane %v7041, %v7724
      %v7726 = vlaneseq
      %v7727 = vshrl.u32 %v7726, 7
      %v7728 = vsub.s32 0, %v7727
      %v7729 = vrot.slane %v7024, %v7728
      %v7730 = vlaneseq
      %v7731 = vshrl.u32 %v7730, 7
      %v7732 = vsub.s32 0, %v7731
      %v7733 = vrot.slane %v7038, %v7732
      %v7734 = vlaneseq
      %v7735 = vshrl.u32 %v7734, 7
      %v7736 = vsub.s32 0, %v7735
      %v7737 = vrot.slane %v7040, %v7736
      %v7738 = vlaneseq
      %v7739 = vshrl.u32 %v7738, 7
      %v7740 = vsub.s32 0, %v7739
      %v7741 = vrot.slane %v7042, %v7740
      %v7742 = vlaneseq
      %v7743 = vshrl.u32 %v7742, 7
      %v7744 = vsub.s32 0, %v7743
      %v7745 = vrot.slane %v7066, %v7744
      %v7746 = vlaneseq
      %v7747 = vshrl.u32 %v7746, 7
      %v7748 = vsub.s32 0, %v7747
      %v7749 = vrot.slane %v7080, %v7748
      %v7750 = vlaneseq
      %v7751 = vshrl.u32 %v7750, 7
      %v7752 = vsub.s32 0, %v7751
      %v7753 = vrot.slane %v7088, %v7752
      %v7754 = vlaneseq
      %v7755 = vshrl.u32 %v7754, 7
      %v7756 = vsub.s32 0, %v7755
      %v7757 = vrot.slane %v7090, %v7756
      %v7758 = vlaneseq
      %v7759 = vshrl.u32 %v7758, 7
      %v7760 = vsub.s32 0, %v7759
      %v7761 = vrot.slane %v7073, %v7760
      %v7762 = vlaneseq
      %v7763 = vshrl.u32 %v7762, 7
      %v7764 = vsub.s32 0, %v7763
      %v7765 = vrot.slane %v7087, %v7764
      %v7766 = vlaneseq
      %v7767 = vshrl.u32 %v7766, 7
      %v7768 = vsub.s32 0, %v7767
      %v7769 = vrot.slane %v7089, %v7768
      %v7770 = vlaneseq
      %v7771 = vshrl.u32 %v7770, 7
      %v7772 = vsub.s32 0, %v7771
      %v7773 = vrot.slane %v7091, %v7772
      %v7774 = vlaneseq
      %v7775 = vshrl.u32 %v7774, 7
      %v7776 = vsub.s32 0, %v7775
      %v7777 = vrot.slane %v7115, %v7776
      %v7778 = vlaneseq
      %v7779 = vshrl.u32 %v7778, 7
      %v7780 = vsub.s32 0, %v7779
      %v7781 = vrot.slane %v7129, %v7780
      %v7782 = vlaneseq
      %v7783 = vshrl.u32 %v7782, 7
      %v7784 = vsub.s32 0, %v7783
      %v7785 = vrot.slane %v7137, %v7784
      %v7786 = vlaneseq
      %v7787 = vshrl.u32 %v7786, 7
      %v7788 = vsub.s32 0, %v7787
      %v7789 = vrot.slane %v7139, %v7788
      %v7790 = vlaneseq
      %v7791 = vshrl.u32 %v7790, 7
      %v7792 = vsub.s32 0, %v7791
      %v7793 = vrot.slane %v7122, %v7792
      %v7794 = vlaneseq
      %v7795 = vshrl.u32 %v7794, 7
      %v7796 = vsub.s32 0, %v7795
      %v7797 = vrot.slane %v7136, %v7796
      %v7798 = vlaneseq
      %v7799 = vshrl.u32 %v7798, 7
      %v7800 = vsub.s32 0, %v7799
      %v7801 = vrot.slane %v7138, %v7800
      %v7802 = vlaneseq
      %v7803 = vshrl.u32 %v7802, 7
      %v7804 = vsub.s32 0, %v7803
      %v7805 = vrot.slane %v7140, %v7804
      %v7806 = vlaneseq
      %v7807 = vshrl.u32 %v7806, 7
      %v7808 = vsub.s32 0, %v7807
      %v7809 = vrot.slane %v7164, %v7808
      %v7810 = vlaneseq
      %v7811 = vshrl.u32 %v7810, 7
      %v7812 = vsub.s32 0, %v7811
      %v7813 = vrot.slane %v7178, %v7812
      %v7814 = vlaneseq
      %v7815 = vshrl.u32 %v7814, 7
      %v7816 = vsub.s32 0, %v7815
      %v7817 = vrot.slane %v7186, %v7816
      %v7818 = vlaneseq
      %v7819 = vshrl.u32 %v7818, 7
      %v7820 = vsub.s32 0, %v7819
      %v7821 = vrot.slane %v7188, %v7820
      %v7822 = vlaneseq
      %v7823 = vshrl.u32 %v7822, 7
      %v7824 = vsub.s32 0, %v7823
      %v7825 = vrot.slane %v7171, %v7824
      %v7826 = vlaneseq
      %v7827 = vshrl.u32 %v7826, 7
      %v7828 = vsub.s32 0, %v7827
      %v7829 = vrot.slane %v7185, %v7828
      %v7830 = vlaneseq
      %v7831 = vshrl.u32 %v7830, 7
      %v7832 = vsub.s32 0, %v7831
      %v7833 = vrot.slane %v7187, %v7832
      %v7834 = vlaneseq
      %v7835 = vshrl.u32 %v7834, 7
      %v7836 = vsub.s32 0, %v7835
      %v7837 = vrot.slane %v7189, %v7836
      %v7838 = vlaneseq
      %v7839 = vshrl.u32 %v7838, 7
      %v7840 = vsub.s32 0, %v7839
      %v7841 = vrot.slane %v7213, %v7840
      %v7842 = vlaneseq
      %v7843 = vshrl.u32 %v7842, 7
      %v7844 = vsub.s32 0, %v7843
      %v7845 = vrot.slane %v7227, %v7844
      %v7846 = vlaneseq
      %v7847 = vshrl.u32 %v7846, 7
      %v7848 = vsub.s32 0, %v7847
      %v7849 = vrot.slane %v7235, %v7848
      %v7850 = vlaneseq
      %v7851 = vshrl.u32 %v7850, 7
      %v7852 = vsub.s32 0, %v7851
      %v7853 = vrot.slane %v7237, %v7852
      %v7854 = vlaneseq
      %v7855 = vshrl.u32 %v7854, 7
      %v7856 = vsub.s32 0, %v7855
      %v7857 = vrot.slane %v7220, %v7856
      %v7858 = vlaneseq
      %v7859 = vshrl.u32 %v7858, 7
      %v7860 = vsub.s32 0, %v7859
      %v7861 = vrot.slane %v7234, %v7860
      %v7862 = vlaneseq
      %v7863 = vshrl.u32 %v7862, 7
      %v7864 = vsub.s32 0, %v7863
      %v7865 = vrot.slane %v7236, %v7864
      %v7866 = vlaneseq
      %v7867 = vshrl.u32 %v7866, 7
      %v7868 = vsub.s32 0, %v7867
      %v7869 = vrot.slane %v7238, %v7868
      %v7870 = vlaneseq
      %v7871 = vshrl.u32 %v7870, 7
      %v7872 = vsub.s32 0, %v7871
      %v7873 = vrot.slane %v7262, %v7872
      %v7874 = vlaneseq
      %v7875 = vshrl.u32 %v7874, 7
      %v7876 = vsub.s32 0, %v7875
      %v7877 = vrot.slane %v7276, %v7876
      %v7878 = vlaneseq
      %v7879 = vshrl.u32 %v7878, 7
      %v7880 = vsub.s32 0, %v7879
      %v7881 = vrot.slane %v7284, %v7880
      %v7882 = vlaneseq
      %v7883 = vshrl.u32 %v7882, 7
      %v7884 = vsub.s32 0, %v7883
      %v7885 = vrot.slane %v7286, %v7884
      %v7886 = vlaneseq
      %v7887 = vshrl.u32 %v7886, 7
      %v7888 = vsub.s32 0, %v7887
      %v7889 = vrot.slane %v7269, %v7888
      %v7890 = vlaneseq
      %v7891 = vshrl.u32 %v7890, 7
      %v7892 = vsub.s32 0, %v7891
      %v7893 = vrot.slane %v7283, %v7892
      %v7894 = vlaneseq
      %v7895 = vshrl.u32 %v7894, 7
      %v7896 = vsub.s32 0, %v7895
      %v7897 = vrot.slane %v7285, %v7896
      %v7898 = vlaneseq
      %v7899 = vshrl.u32 %v7898, 7
      %v7900 = vsub.s32 0, %v7899
      %v7901 = vrot.slane %v7287, %v7900
      %v7902 = vlaneseq
      %v7903 = vshrl.u32 %v7902, 7
      %v7904 = vsub.s32 0, %v7903
      %v7905 = vrot.slane %v7311, %v7904
      %v7906 = vlaneseq
      %v7907 = vshrl.u32 %v7906, 7
      %v7908 = vsub.s32 0, %v7907
      %v7909 = vrot.slane %v7325, %v7908
      %v7910 = vlaneseq
      %v7911 = vshrl.u32 %v7910, 7
      %v7912 = vsub.s32 0, %v7911
      %v7913 = vrot.slane %v7333, %v7912
      %v7914 = vlaneseq
      %v7915 = vshrl.u32 %v7914, 7
      %v7916 = vsub.s32 0, %v7915
      %v7917 = vrot.slane %v7335, %v7916
      %v7918 = vlaneseq
      %v7919 = vshrl.u32 %v7918, 7
      %v7920 = vsub.s32 0, %v7919
      %v7921 = vrot.slane %v7318, %v7920
      %v7922 = vlaneseq
      %v7923 = vshrl.u32 %v7922, 7
      %v7924 = vsub.s32 0, %v7923
      %v7925 = vrot.slane %v7332, %v7924
      %v7926 = vlaneseq
      %v7927 = vshrl.u32 %v7926, 7
      %v7928 = vsub.s32 0, %v7927
      %v7929 = vrot.slane %v7334, %v7928
      %v7930 = vlaneseq
      %v7931 = vshrl.u32 %v7930, 7
      %v7932 = vsub.s32 0, %v7931
      %v7933 = vrot.slane %v7336, %v7932
      %v7934 = vlaneseq
      %v7935 = vshrl.u32 %v7934, 7
      %v7936 = vsub.s32 0, %v7935
      %v7937 = vrot.slane %v7360, %v7936
      %v7938 = vlaneseq
      %v7939 = vshrl.u32 %v7938, 7
      %v7940 = vsub.s32 0, %v7939
      %v7941 = vrot.slane %v7374, %v7940
      %v7942 = vlaneseq
      %v7943 = vshrl.u32 %v7942, 7
      %v7944 = vsub.s32 0, %v7943
      %v7945 = vrot.slane %v7382, %v7944
      %v7946 = vlaneseq
      %v7947 = vshrl.u32 %v7946, 7
      %v7948 = vsub.s32 0, %v7947
      %v7949 = vrot.slane %v7384, %v7948
      %v7950 = vlaneseq
      %v7951 = vshrl.u32 %v7950, 7
      %v7952 = vsub.s32 0, %v7951
      %v7953 = vrot.slane %v7367, %v7952
      %v7954 = vlaneseq
      %v7955 = vshrl.u32 %v7954, 7
      %v7956 = vsub.s32 0, %v7955
      %v7957 = vrot.slane %v7381, %v7956
      %v7958 = vlaneseq
      %v7959 = vshrl.u32 %v7958, 7
      %v7960 = vsub.s32 0, %v7959
      %v7961 = vrot.slane %v7383, %v7960
      %v7962 = vlaneseq
      %v7963 = vshrl.u32 %v7962, 7
      %v7964 = vsub.s32 0, %v7963
      %v7965 = vrot.slane %v7385, %v7964
      %v7966 = vlaneseq
      %v7967 = vshrl.u32 %v7966, 7
      %v7968 = vsub.s32 0, %v7967
      %v7969 = vrot.slane %v7409, %v7968
      %v7970 = vlaneseq
      %v7971 = vshrl.u32 %v7970, 7
      %v7972 = vsub.s32 0, %v7971
      %v7973 = vrot.slane %v7423, %v7972
      %v7974 = vlaneseq
      %v7975 = vshrl.u32 %v7974, 7
      %v7976 = vsub.s32 0, %v7975
      %v7977 = vrot.slane %v7431, %v7976
      %v7978 = vlaneseq
      %v7979 = vshrl.u32 %v7978, 7
      %v7980 = vsub.s32 0, %v7979
      %v7981 = vrot.slane %v7433, %v7980
      %v7982 = vlaneseq
      %v7983 = vshrl.u32 %v7982, 7
      %v7984 = vsub.s32 0, %v7983
      %v7985 = vrot.slane %v7416, %v7984
      %v7986 = vlaneseq
      %v7987 = vshrl.u32 %v7986, 7
      %v7988 = vsub.s32 0, %v7987
      %v7989 = vrot.slane %v7430, %v7988
      %v7990 = vlaneseq
      %v7991 = vshrl.u32 %v7990, 7
      %v7992 = vsub.s32 0, %v7991
      %v7993 = vrot.slane %v7432, %v7992
      %v7994 = vlaneseq
      %v7995 = vshrl.u32 %v7994, 7
      %v7996 = vsub.s32 0, %v7995
      %v7997 = vrot.slane %v7434, %v7996
      %v7998 = vlaneseq
      %v7999 = vshrl.u32 %v7998, 7
      %v8000 = vsub.s32 0, %v7999
      %v8001 = vrot.slane %v7458, %v8000
      %v8002 = vlaneseq
      %v8003 = vshrl.u32 %v8002, 7
      %v8004 = vsub.s32 0, %v8003
      %v8005 = vrot.slane %v7472, %v8004
      %v8006 = vlaneseq
      %v8007 = vshrl.u32 %v8006, 7
      %v8008 = vsub.s32 0, %v8007
      %v8009 = vrot.slane %v7480, %v8008
      %v8010 = vlaneseq
      %v8011 = vshrl.u32 %v8010, 7
      %v8012 = vsub.s32 0, %v8011
      %v8013 = vrot.slane %v7482, %v8012
      %v8014 = vlaneseq
      %v8015 = vshrl.u32 %v8014, 7
      %v8016 = vsub.s32 0, %v8015
      %v8017 = vrot.slane %v7465, %v8016
      %v8018 = vlaneseq
      %v8019 = vshrl.u32 %v8018, 7
      %v8020 = vsub.s32 0, %v8019
      %v8021 = vrot.slane %v7479, %v8020
      %v8022 = vlaneseq
      %v8023 = vshrl.u32 %v8022, 7
      %v8024 = vsub.s32 0, %v8023
      %v8025 = vrot.slane %v7481, %v8024
      %v8026 = vlaneseq
      %v8027 = vshrl.u32 %v8026, 7
      %v8028 = vsub.s32 0, %v8027
      %v8029 = vrot.slane %v7483, %v8028
      %v8030 = vlaneseq
      %v8031 = vshrl.u32 %v8030, 7
      %v8032 = vsub.s32 0, %v8031
      %v8033 = vrot.slane %v7507, %v8032
      %v8034 = vlaneseq
      %v8035 = vshrl.u32 %v8034, 7
      %v8036 = vsub.s32 0, %v8035
      %v8037 = vrot.slane %v7521, %v8036
      %v8038 = vlaneseq
      %v8039 = vshrl.u32 %v8038, 7
      %v8040 = vsub.s32 0, %v8039
      %v8041 = vrot.slane %v7529, %v8040
      %v8042 = vlaneseq
      %v8043 = vshrl.u32 %v8042, 7
      %v8044 = vsub.s32 0, %v8043
      %v8045 = vrot.slane %v7531, %v8044
      %v8046 = vlaneseq
      %v8047 = vshrl.u32 %v8046, 7
      %v8048 = vsub.s32 0, %v8047
      %v8049 = vrot.slane %v7514, %v8048
      %v8050 = vlaneseq
      %v8051 = vshrl.u32 %v8050, 7
      %v8052 = vsub.s32 0, %v8051
      %v8053 = vrot.slane %v7528, %v8052
      %v8054 = vlaneseq
      %v8055 = vshrl.u32 %v8054, 7
      %v8056 = vsub.s32 0, %v8055
      %v8057 = vrot.slane %v7530, %v8056
      %v8058 = vlaneseq
      %v8059 = vshrl.u32 %v8058, 7
      %v8060 = vsub.s32 0, %v8059
      %v8061 = vrot.slane %v7532, %v8060
      %v8062 = vlaneseq
      %v8063 = vshrl.u32 %v8062, 7
      %v8064 = vsub.s32 0, %v8063
      %v8065 = vrot.slane %v7556, %v8064
      %v8066 = vlaneseq
      %v8067 = vshrl.u32 %v8066, 7
      %v8068 = vsub.s32 0, %v8067
      %v8069 = vrot.slane %v7570, %v8068
      %v8070 = vlaneseq
      %v8071 = vshrl.u32 %v8070, 7
      %v8072 = vsub.s32 0, %v8071
      %v8073 = vrot.slane %v7578, %v8072
      %v8074 = vlaneseq
      %v8075 = vshrl.u32 %v8074, 7
      %v8076 = vsub.s32 0, %v8075
      %v8077 = vrot.slane %v7580, %v8076
      %v8078 = vlaneseq
      %v8079 = vshrl.u32 %v8078, 7
      %v8080 = vsub.s32 0, %v8079
      %v8081 = vrot.slane %v7563, %v8080
      %v8082 = vlaneseq
      %v8083 = vshrl.u32 %v8082, 7
      %v8084 = vsub.s32 0, %v8083
      %v8085 = vrot.slane %v7577, %v8084
      %v8086 = vlaneseq
      %v8087 = vshrl.u32 %v8086, 7
      %v8088 = vsub.s32 0, %v8087
      %v8089 = vrot.slane %v7579, %v8088
      %v8090 = vlaneseq
      %v8091 = vshrl.u32 %v8090, 7
      %v8092 = vsub.s32 0, %v8091
      %v8093 = vrot.slane %v7581, %v8092
      %v8222 = vsel %vm445, %v5893, %v7585
      %v8223 = vsel %vm445, %v5907, %v7589
      %v8224 = vsel %vm445, %v5915, %v7593
      %v8225 = vsel %vm445, %v5917, %v7597
      %v8226 = vsel %vm445, %v5900, %v7601
      %v8227 = vsel %vm445, %v5914, %v7605
      %v8228 = vsel %vm445, %v5916, %v7609
      %v8229 = vsel %vm445, %v5918, %v7613
      %v8230 = vsel %vm445, %v5942, %v7617
      %v8231 = vsel %vm445, %v5956, %v7621
      %v8232 = vsel %vm445, %v5964, %v7625
      %v8233 = vsel %vm445, %v5966, %v7629
      %v8234 = vsel %vm445, %v5949, %v7633
      %v8235 = vsel %vm445, %v5963, %v7637
      %v8236 = vsel %vm445, %v5965, %v7641
      %v8237 = vsel %vm445, %v5967, %v7645
      %v8238 = vsel %vm445, %v5991, %v7649
      %v8239 = vsel %vm445, %v6005, %v7653
      %v8240 = vsel %vm445, %v6013, %v7657
      %v8241 = vsel %vm445, %v6015, %v7661
      %v8242 = vsel %vm445, %v5998, %v7665
      %v8243 = vsel %vm445, %v6012, %v7669
      %v8244 = vsel %vm445, %v6014, %v7673
      %v8245 = vsel %vm445, %v6016, %v7677
      %v8246 = vsel %vm445, %v6040, %v7681
      %v8247 = vsel %vm445, %v6054, %v7685
      %v8248 = vsel %vm445, %v6062, %v7689
      %v8249 = vsel %vm445, %v6064, %v7693
      %v8250 = vsel %vm445, %v6047, %v7697
      %v8251 = vsel %vm445, %v6061, %v7701
      %v8252 = vsel %vm445, %v6063, %v7705
      %v8253 = vsel %vm445, %v6065, %v7709
      %v8254 = vsel %vm445, %v6089, %v7713
      %v8255 = vsel %vm445, %v6103, %v7717
      %v8256 = vsel %vm445, %v6111, %v7721
      %v8257 = vsel %vm445, %v6113, %v7725
      %v8258 = vsel %vm445, %v6096, %v7729
      %v8259 = vsel %vm445, %v6110, %v7733
      %v8260 = vsel %vm445, %v6112, %v7737
      %v8261 = vsel %vm445, %v6114, %v7741
      %v8262 = vsel %vm445, %v6138, %v7745
      %v8263 = vsel %vm445, %v6152, %v7749
      %v8264 = vsel %vm445, %v6160, %v7753
      %v8265 = vsel %vm445, %v6162, %v7757
      %v8266 = vsel %vm445, %v6145, %v7761
      %v8267 = vsel %vm445, %v6159, %v7765
      %v8268 = vsel %vm445, %v6161, %v7769
      %v8269 = vsel %vm445, %v6163, %v7773
      %v8270 = vsel %vm445, %v6187, %v7777
      %v8271 = vsel %vm445, %v6201, %v7781
      %v8272 = vsel %vm445, %v6209, %v7785
      %v8273 = vsel %vm445, %v6211, %v7789
      %v8274 = vsel %vm445, %v6194, %v7793
      %v8275 = vsel %vm445, %v6208, %v7797
      %v8276 = vsel %vm445, %v6210, %v7801
      %v8277 = vsel %vm445, %v6212, %v7805
      %v8278 = vsel %vm445, %v6236, %v7809
      %v8279 = vsel %vm445, %v6250, %v7813
      %v8280 = vsel %vm445, %v6258, %v7817
      %v8281 = vsel %vm445, %v6260, %v7821
      %v8282 = vsel %vm445, %v6243, %v7825
      %v8283 = vsel %vm445, %v6257, %v7829
      %v8284 = vsel %vm445, %v6259, %v7833
      %v8285 = vsel %vm445, %v6261, %v7837
      %v8286 = vsel %vm445, %v6285, %v7841
      %v8287 = vsel %vm445, %v6299, %v7845
      %v8288 = vsel %vm445, %v6307, %v7849
      %v8289 = vsel %vm445, %v6309, %v7853
      %v8290 = vsel %vm445, %v6292, %v7857
      %v8291 = vsel %vm445, %v6306, %v7861
      %v8292 = vsel %vm445, %v6308, %v7865
      %v8293 = vsel %vm445, %v6310, %v7869
      %v8294 = vsel %vm445, %v6334, %v7873
      %v8295 = vsel %vm445, %v6348, %v7877
      %v8296 = vsel %vm445, %v6356, %v7881
      %v8297 = vsel %vm445, %v6358, %v7885
      %v8298 = vsel %vm445, %v6341, %v7889
      %v8299 = vsel %vm445, %v6355, %v7893
      %v8300 = vsel %vm445, %v6357, %v7897
      %v8301 = vsel %vm445, %v6359, %v7901
      %v8302 = vsel %vm445, %v6383, %v7905
      %v8303 = vsel %vm445, %v6397, %v7909
      %v8304 = vsel %vm445, %v6405, %v7913
      %v8305 = vsel %vm445, %v6407, %v7917
      %v8306 = vsel %vm445, %v6390, %v7921
      %v8307 = vsel %vm445, %v6404, %v7925
      %v8308 = vsel %vm445, %v6406, %v7929
      %v8309 = vsel %vm445, %v6408, %v7933
      %v8310 = vsel %vm445, %v6432, %v7937
      %v8311 = vsel %vm445, %v6446, %v7941
      %v8312 = vsel %vm445, %v6454, %v7945
      %v8313 = vsel %vm445, %v6456, %v7949
      %v8314 = vsel %vm445, %v6439, %v7953
      %v8315 = vsel %vm445, %v6453, %v7957
      %v8316 = vsel %vm445, %v6455, %v7961
      %v8317 = vsel %vm445, %v6457, %v7965
      %v8318 = vsel %vm445, %v6481, %v7969
      %v8319 = vsel %vm445, %v6495, %v7973
      %v8320 = vsel %vm445, %v6503, %v7977
      %v8321 = vsel %vm445, %v6505, %v7981
      %v8322 = vsel %vm445, %v6488, %v7985
      %v8323 = vsel %vm445, %v6502, %v7989
      %v8324 = vsel %vm445, %v6504, %v7993
      %v8325 = vsel %vm445, %v6506, %v7997
      %v8326 = vsel %vm445, %v6530, %v8001
      %v8327 = vsel %vm445, %v6544, %v8005
      %v8328 = vsel %vm445, %v6552, %v8009
      %v8329 = vsel %vm445, %v6554, %v8013
      %v8330 = vsel %vm445, %v6537, %v8017
      %v8331 = vsel %vm445, %v6551, %v8021
      %v8332 = vsel %vm445, %v6553, %v8025
      %v8333 = vsel %vm445, %v6555, %v8029
      %v8334 = vsel %vm445, %v6579, %v8033
      %v8335 = vsel %vm445, %v6593, %v8037
      %v8336 = vsel %vm445, %v6601, %v8041
      %v8337 = vsel %vm445, %v6603, %v8045
      %v8338 = vsel %vm445, %v6586, %v8049
      %v8339 = vsel %vm445, %v6600, %v8053
      %v8340 = vsel %vm445, %v6602, %v8057
      %v8341 = vsel %vm445, %v6604, %v8061
      %v8342 = vsel %vm445, %v6628, %v8065
      %v8343 = vsel %vm445, %v6642, %v8069
      %v8344 = vsel %vm445, %v6650, %v8073
      %v8345 = vsel %vm445, %v6652, %v8077
      %v8346 = vsel %vm445, %v6635, %v8081
      %v8347 = vsel %vm445, %v6649, %v8085
      %v8348 = vsel %vm445, %v6651, %v8089
      %v8349 = vsel %vm445, %v6653, %v8093
      %v8606 = vcombine.low %v4406, %v4407
      %v8607 = vcombine.low %v4408, %v4409
      %v8609 = vunpack.c.l.s4 1983009808
      %v8610 = vunpack.c.0.s8 %v8609
      %v8611 = vlaneseq
      %v8612 = vshrl.u32 %v8611, 7
      %v8613 = vsub.s32 %v8610, %v8612
      %v8614 = vrot.slane %v8606, %v8613
      %v8616 = vunpack.c.l.s4 1983009808
      %v8617 = vunpack.c.0.s8 %v8616
      %v8618 = vlaneseq
      %v8619 = vshrl.u32 %v8618, 7
      %v8620 = vsub.s32 %v8617, %v8619
      %v8621 = vrot.slane %v8607, %v8620
      %v8622 = vcombine.low %v8614, %v8621
      %v8623 = vcombine.low %v4410, %v4411
      %v8624 = vcombine.low %v4412, %v4413
      %v8626 = vunpack.c.l.s4 1983009808
      %v8627 = vunpack.c.0.s8 %v8626
      %v8628 = vlaneseq
      %v8629 = vshrl.u32 %v8628, 7
      %v8630 = vsub.s32 %v8627, %v8629
      %v8631 = vrot.slane %v8623, %v8630
      %v8633 = vunpack.c.l.s4 1983009808
      %v8634 = vunpack.c.0.s8 %v8633
      %v8635 = vlaneseq
      %v8636 = vshrl.u32 %v8635, 7
      %v8637 = vsub.s32 %v8634, %v8636
      %v8638 = vrot.slane %v8624, %v8637
      %v8639 = vcombine.low %v8631, %v8638
      %v8640 = vcombine.low %v4414, %v4415
      %v8641 = vcombine.low %v4416, %v4417
      %v8643 = vunpack.c.l.s4 1983009808
      %v8644 = vunpack.c.0.s8 %v8643
      %v8645 = vlaneseq
      %v8646 = vshrl.u32 %v8645, 7
      %v8647 = vsub.s32 %v8644, %v8646
      %v8648 = vrot.slane %v8640, %v8647
      %v8650 = vunpack.c.l.s4 1983009808
      %v8651 = vunpack.c.0.s8 %v8650
      %v8652 = vlaneseq
      %v8653 = vshrl.u32 %v8652, 7
      %v8654 = vsub.s32 %v8651, %v8653
      %v8655 = vrot.slane %v8641, %v8654
      %v8656 = vcombine.low %v8648, %v8655
      %v8657 = vcombine.low %v4418, %v4419
      %v8658 = vcombine.low %v4420, %v4421
      %v8660 = vunpack.c.l.s4 1983009808
      %v8661 = vunpack.c.0.s8 %v8660
      %v8662 = vlaneseq
      %v8663 = vshrl.u32 %v8662, 7
      %v8664 = vsub.s32 %v8661, %v8663
      %v8665 = vrot.slane %v8657, %v8664
      %v8667 = vunpack.c.l.s4 1983009808
      %v8668 = vunpack.c.0.s8 %v8667
      %v8669 = vlaneseq
      %v8670 = vshrl.u32 %v8669, 7
      %v8671 = vsub.s32 %v8668, %v8670
      %v8672 = vrot.slane %v8658, %v8671
      %v8673 = vcombine.low %v8665, %v8672
      %v8674 = vcombine.low %v8222, %v8223
      %v8675 = vcombine.low %v8224, %v8225
      %v8677 = vunpack.c.l.s4 1983009808
      %v8678 = vunpack.c.0.s8 %v8677
      %v8679 = vlaneseq
      %v8680 = vshrl.u32 %v8679, 7
      %v8681 = vsub.s32 %v8678, %v8680
      %v8682 = vrot.slane %v8674, %v8681
      %v8684 = vunpack.c.l.s4 1983009808
      %v8685 = vunpack.c.0.s8 %v8684
      %v8686 = vlaneseq
      %v8687 = vshrl.u32 %v8686, 7
      %v8688 = vsub.s32 %v8685, %v8687
      %v8689 = vrot.slane %v8675, %v8688
      %v8690 = vcombine.low %v8682, %v8689
      %v8691 = vcombine.low %v8226, %v8227
      %v8692 = vcombine.low %v8228, %v8229
      %v8694 = vunpack.c.l.s4 1983009808
      %v8695 = vunpack.c.0.s8 %v8694
      %v8696 = vlaneseq
      %v8697 = vshrl.u32 %v8696, 7
      %v8698 = vsub.s32 %v8695, %v8697
      %v8699 = vrot.slane %v8691, %v8698
      %v8701 = vunpack.c.l.s4 1983009808
      %v8702 = vunpack.c.0.s8 %v8701
      %v8703 = vlaneseq
      %v8704 = vshrl.u32 %v8703, 7
      %v8705 = vsub.s32 %v8702, %v8704
      %v8706 = vrot.slane %v8692, %v8705
      %v8707 = vcombine.low %v8699, %v8706
      %v8708 = vcombine.low %v8230, %v8231
      %v8709 = vcombine.low %v8232, %v8233
      %v8711 = vunpack.c.l.s4 1983009808
      %v8712 = vunpack.c.0.s8 %v8711
      %v8713 = vlaneseq
      %v8714 = vshrl.u32 %v8713, 7
      %v8715 = vsub.s32 %v8712, %v8714
      %v8716 = vrot.slane %v8708, %v8715
      %v8718 = vunpack.c.l.s4 1983009808
      %v8719 = vunpack.c.0.s8 %v8718
      %v8720 = vlaneseq
      %v8721 = vshrl.u32 %v8720, 7
      %v8722 = vsub.s32 %v8719, %v8721
      %v8723 = vrot.slane %v8709, %v8722
      %v8724 = vcombine.low %v8716, %v8723
      %v8725 = vcombine.low %v8234, %v8235
      %v8726 = vcombine.low %v8236, %v8237
      %v8728 = vunpack.c.l.s4 1983009808
      %v8729 = vunpack.c.0.s8 %v8728
      %v8730 = vlaneseq
      %v8731 = vshrl.u32 %v8730, 7
      %v8732 = vsub.s32 %v8729, %v8731
      %v8733 = vrot.slane %v8725, %v8732
      %v8735 = vunpack.c.l.s4 1983009808
      %v8736 = vunpack.c.0.s8 %v8735
      %v8737 = vlaneseq
      %v8738 = vshrl.u32 %v8737, 7
      %v8739 = vsub.s32 %v8736, %v8738
      %v8740 = vrot.slane %v8726, %v8739
      %v8741 = vcombine.low %v8733, %v8740
      %v8742 = vcombine.low %v4422, %v4423
      %v8743 = vcombine.low %v4424, %v4425
      %v8745 = vunpack.c.l.s4 1983009808
      %v8746 = vunpack.c.0.s8 %v8745
      %v8747 = vlaneseq
      %v8748 = vshrl.u32 %v8747, 7
      %v8749 = vsub.s32 %v8746, %v8748
      %v8750 = vrot.slane %v8742, %v8749
      %v8752 = vunpack.c.l.s4 1983009808
      %v8753 = vunpack.c.0.s8 %v8752
      %v8754 = vlaneseq
      %v8755 = vshrl.u32 %v8754, 7
      %v8756 = vsub.s32 %v8753, %v8755
      %v8757 = vrot.slane %v8743, %v8756
      %v8758 = vcombine.low %v8750, %v8757
      %v8759 = vcombine.low %v4426, %v4427
      %v8760 = vcombine.low %v4428, %v4429
      %v8762 = vunpack.c.l.s4 1983009808
      %v8763 = vunpack.c.0.s8 %v8762
      %v8764 = vlaneseq
      %v8765 = vshrl.u32 %v8764, 7
      %v8766 = vsub.s32 %v8763, %v8765
      %v8767 = vrot.slane %v8759, %v8766
      %v8769 = vunpack.c.l.s4 1983009808
      %v8770 = vunpack.c.0.s8 %v8769
      %v8771 = vlaneseq
      %v8772 = vshrl.u32 %v8771, 7
      %v8773 = vsub.s32 %v8770, %v8772
      %v8774 = vrot.slane %v8760, %v8773
      %v8775 = vcombine.low %v8767, %v8774
      %v8776 = vcombine.low %v4430, %v4431
      %v8777 = vcombine.low %v4432, %v4433
      %v8779 = vunpack.c.l.s4 1983009808
      %v8780 = vunpack.c.0.s8 %v8779
      %v8781 = vlaneseq
      %v8782 = vshrl.u32 %v8781, 7
      %v8783 = vsub.s32 %v8780, %v8782
      %v8784 = vrot.slane %v8776, %v8783
      %v8786 = vunpack.c.l.s4 1983009808
      %v8787 = vunpack.c.0.s8 %v8786
      %v8788 = vlaneseq
      %v8789 = vshrl.u32 %v8788, 7
      %v8790 = vsub.s32 %v8787, %v8789
      %v8791 = vrot.slane %v8777, %v8790
      %v8792 = vcombine.low %v8784, %v8791
      %v8793 = vcombine.low %v4434, %v4435
      %v8794 = vcombine.low %v4436, %v4437
      %v8796 = vunpack.c.l.s4 1983009808
      %v8797 = vunpack.c.0.s8 %v8796
      %v8798 = vlaneseq
      %v8799 = vshrl.u32 %v8798, 7
      %v8800 = vsub.s32 %v8797, %v8799
      %v8801 = vrot.slane %v8793, %v8800
      %v8803 = vunpack.c.l.s4 1983009808
      %v8804 = vunpack.c.0.s8 %v8803
      %v8805 = vlaneseq
      %v8806 = vshrl.u32 %v8805, 7
      %v8807 = vsub.s32 %v8804, %v8806
      %v8808 = vrot.slane %v8794, %v8807
      %v8809 = vcombine.low %v8801, %v8808
      %v8810 = vcombine.low %v8238, %v8239
      %v8811 = vcombine.low %v8240, %v8241
      %v8813 = vunpack.c.l.s4 1983009808
      %v8814 = vunpack.c.0.s8 %v8813
      %v8815 = vlaneseq
      %v8816 = vshrl.u32 %v8815, 7
      %v8817 = vsub.s32 %v8814, %v8816
      %v8818 = vrot.slane %v8810, %v8817
      %v8820 = vunpack.c.l.s4 1983009808
      %v8821 = vunpack.c.0.s8 %v8820
      %v8822 = vlaneseq
      %v8823 = vshrl.u32 %v8822, 7
      %v8824 = vsub.s32 %v8821, %v8823
      %v8825 = vrot.slane %v8811, %v8824
      %v8826 = vcombine.low %v8818, %v8825
      %v8827 = vcombine.low %v8242, %v8243
      %v8828 = vcombine.low %v8244, %v8245
      %v8830 = vunpack.c.l.s4 1983009808
      %v8831 = vunpack.c.0.s8 %v8830
      %v8832 = vlaneseq
      %v8833 = vshrl.u32 %v8832, 7
      %v8834 = vsub.s32 %v8831, %v8833
      %v8835 = vrot.slane %v8827, %v8834
      %v8837 = vunpack.c.l.s4 1983009808
      %v8838 = vunpack.c.0.s8 %v8837
      %v8839 = vlaneseq
      %v8840 = vshrl.u32 %v8839, 7
      %v8841 = vsub.s32 %v8838, %v8840
      %v8842 = vrot.slane %v8828, %v8841
      %v8843 = vcombine.low %v8835, %v8842
      %v8844 = vcombine.low %v8246, %v8247
      %v8845 = vcombine.low %v8248, %v8249
      %v8847 = vunpack.c.l.s4 1983009808
      %v8848 = vunpack.c.0.s8 %v8847
      %v8849 = vlaneseq
      %v8850 = vshrl.u32 %v8849, 7
      %v8851 = vsub.s32 %v8848, %v8850
      %v8852 = vrot.slane %v8844, %v8851
      %v8854 = vunpack.c.l.s4 1983009808
      %v8855 = vunpack.c.0.s8 %v8854
      %v8856 = vlaneseq
      %v8857 = vshrl.u32 %v8856, 7
      %v8858 = vsub.s32 %v8855, %v8857
      %v8859 = vrot.slane %v8845, %v8858
      %v8860 = vcombine.low %v8852, %v8859
      %v8861 = vcombine.low %v8250, %v8251
      %v8862 = vcombine.low %v8252, %v8253
      %v8864 = vunpack.c.l.s4 1983009808
      %v8865 = vunpack.c.0.s8 %v8864
      %v8866 = vlaneseq
      %v8867 = vshrl.u32 %v8866, 7
      %v8868 = vsub.s32 %v8865, %v8867
      %v8869 = vrot.slane %v8861, %v8868
      %v8871 = vunpack.c.l.s4 1983009808
      %v8872 = vunpack.c.0.s8 %v8871
      %v8873 = vlaneseq
      %v8874 = vshrl.u32 %v8873, 7
      %v8875 = vsub.s32 %v8872, %v8874
      %v8876 = vrot.slane %v8862, %v8875
      %v8877 = vcombine.low %v8869, %v8876
      %v8878 = vcombine.low %v4438, %v4439
      %v8879 = vcombine.low %v4440, %v4441
      %v8881 = vunpack.c.l.s4 1983009808
      %v8882 = vunpack.c.0.s8 %v8881
      %v8883 = vlaneseq
      %v8884 = vshrl.u32 %v8883, 7
      %v8885 = vsub.s32 %v8882, %v8884
      %v8886 = vrot.slane %v8878, %v8885
      %v8888 = vunpack.c.l.s4 1983009808
      %v8889 = vunpack.c.0.s8 %v8888
      %v8890 = vlaneseq
      %v8891 = vshrl.u32 %v8890, 7
      %v8892 = vsub.s32 %v8889, %v8891
      %v8893 = vrot.slane %v8879, %v8892
      %v8894 = vcombine.low %v8886, %v8893
      %v8895 = vcombine.low %v4442, %v4443
      %v8896 = vcombine.low %v4444, %v4445
      %v8898 = vunpack.c.l.s4 1983009808
      %v8899 = vunpack.c.0.s8 %v8898
      %v8900 = vlaneseq
      %v8901 = vshrl.u32 %v8900, 7
      %v8902 = vsub.s32 %v8899, %v8901
      %v8903 = vrot.slane %v8895, %v8902
      %v8905 = vunpack.c.l.s4 1983009808
      %v8906 = vunpack.c.0.s8 %v8905
      %v8907 = vlaneseq
      %v8908 = vshrl.u32 %v8907, 7
      %v8909 = vsub.s32 %v8906, %v8908
      %v8910 = vrot.slane %v8896, %v8909
      %v8911 = vcombine.low %v8903, %v8910
      %v8912 = vcombine.low %v4446, %v4447
      %v8913 = vcombine.low %v4448, %v4449
      %v8915 = vunpack.c.l.s4 1983009808
      %v8916 = vunpack.c.0.s8 %v8915
      %v8917 = vlaneseq
      %v8918 = vshrl.u32 %v8917, 7
      %v8919 = vsub.s32 %v8916, %v8918
      %v8920 = vrot.slane %v8912, %v8919
      %v8922 = vunpack.c.l.s4 1983009808
      %v8923 = vunpack.c.0.s8 %v8922
      %v8924 = vlaneseq
      %v8925 = vshrl.u32 %v8924, 7
      %v8926 = vsub.s32 %v8923, %v8925
      %v8927 = vrot.slane %v8913, %v8926
      %v8928 = vcombine.low %v8920, %v8927
      %v8929 = vcombine.low %v4450, %v4451
      %v8930 = vcombine.low %v4452, %v4453
      %v8932 = vunpack.c.l.s4 1983009808
      %v8933 = vunpack.c.0.s8 %v8932
      %v8934 = vlaneseq
      %v8935 = vshrl.u32 %v8934, 7
      %v8936 = vsub.s32 %v8933, %v8935
      %v8937 = vrot.slane %v8929, %v8936
      %v8939 = vunpack.c.l.s4 1983009808
      %v8940 = vunpack.c.0.s8 %v8939
      %v8941 = vlaneseq
      %v8942 = vshrl.u32 %v8941, 7
      %v8943 = vsub.s32 %v8940, %v8942
      %v8944 = vrot.slane %v8930, %v8943
      %v8945 = vcombine.low %v8937, %v8944
      %v8946 = vcombine.low %v8254, %v8255
      %v8947 = vcombine.low %v8256, %v8257
      %v8949 = vunpack.c.l.s4 1983009808
      %v8950 = vunpack.c.0.s8 %v8949
      %v8951 = vlaneseq
      %v8952 = vshrl.u32 %v8951, 7
      %v8953 = vsub.s32 %v8950, %v8952
      %v8954 = vrot.slane %v8946, %v8953
      %v8956 = vunpack.c.l.s4 1983009808
      %v8957 = vunpack.c.0.s8 %v8956
      %v8958 = vlaneseq
      %v8959 = vshrl.u32 %v8958, 7
      %v8960 = vsub.s32 %v8957, %v8959
      %v8961 = vrot.slane %v8947, %v8960
      %v8962 = vcombine.low %v8954, %v8961
      %v8963 = vcombine.low %v8258, %v8259
      %v8964 = vcombine.low %v8260, %v8261
      %v8966 = vunpack.c.l.s4 1983009808
      %v8967 = vunpack.c.0.s8 %v8966
      %v8968 = vlaneseq
      %v8969 = vshrl.u32 %v8968, 7
      %v8970 = vsub.s32 %v8967, %v8969
      %v8971 = vrot.slane %v8963, %v8970
      %v8973 = vunpack.c.l.s4 1983009808
      %v8974 = vunpack.c.0.s8 %v8973
      %v8975 = vlaneseq
      %v8976 = vshrl.u32 %v8975, 7
      %v8977 = vsub.s32 %v8974, %v8976
      %v8978 = vrot.slane %v8964, %v8977
      %v8979 = vcombine.low %v8971, %v8978
      %v8980 = vcombine.low %v8262, %v8263
      %v8981 = vcombine.low %v8264, %v8265
      %v8983 = vunpack.c.l.s4 1983009808
      %v8984 = vunpack.c.0.s8 %v8983
      %v8985 = vlaneseq
      %v8986 = vshrl.u32 %v8985, 7
      %v8987 = vsub.s32 %v8984, %v8986
      %v8988 = vrot.slane %v8980, %v8987
      %v8990 = vunpack.c.l.s4 1983009808
      %v8991 = vunpack.c.0.s8 %v8990
      %v8992 = vlaneseq
      %v8993 = vshrl.u32 %v8992, 7
      %v8994 = vsub.s32 %v8991, %v8993
      %v8995 = vrot.slane %v8981, %v8994
      %v8996 = vcombine.low %v8988, %v8995
      %v8997 = vcombine.low %v8266, %v8267
      %v8998 = vcombine.low %v8268, %v8269
      %v9000 = vunpack.c.l.s4 1983009808
      %v9001 = vunpack.c.0.s8 %v9000
      %v9002 = vlaneseq
      %v9003 = vshrl.u32 %v9002, 7
      %v9004 = vsub.s32 %v9001, %v9003
      %v9005 = vrot.slane %v8997, %v9004
      %v9007 = vunpack.c.l.s4 1983009808
      %v9008 = vunpack.c.0.s8 %v9007
      %v9009 = vlaneseq
      %v9010 = vshrl.u32 %v9009, 7
      %v9011 = vsub.s32 %v9008, %v9010
      %v9012 = vrot.slane %v8998, %v9011
      %v9013 = vcombine.low %v9005, %v9012
      %v9014 = vcombine.low %v4454, %v4455
      %v9015 = vcombine.low %v4456, %v4457
      %v9017 = vunpack.c.l.s4 1983009808
      %v9018 = vunpack.c.0.s8 %v9017
      %v9019 = vlaneseq
      %v9020 = vshrl.u32 %v9019, 7
      %v9021 = vsub.s32 %v9018, %v9020
      %v9022 = vrot.slane %v9014, %v9021
      %v9024 = vunpack.c.l.s4 1983009808
      %v9025 = vunpack.c.0.s8 %v9024
      %v9026 = vlaneseq
      %v9027 = vshrl.u32 %v9026, 7
      %v9028 = vsub.s32 %v9025, %v9027
      %v9029 = vrot.slane %v9015, %v9028
      %v9030 = vcombine.low %v9022, %v9029
      %v9031 = vcombine.low %v4458, %v4459
      %v9032 = vcombine.low %v4460, %v4461
      %v9034 = vunpack.c.l.s4 1983009808
      %v9035 = vunpack.c.0.s8 %v9034
      %v9036 = vlaneseq
      %v9037 = vshrl.u32 %v9036, 7
      %v9038 = vsub.s32 %v9035, %v9037
      %v9039 = vrot.slane %v9031, %v9038
      %v9041 = vunpack.c.l.s4 1983009808
      %v9042 = vunpack.c.0.s8 %v9041
      %v9043 = vlaneseq
      %v9044 = vshrl.u32 %v9043, 7
      %v9045 = vsub.s32 %v9042, %v9044
      %v9046 = vrot.slane %v9032, %v9045
      %v9047 = vcombine.low %v9039, %v9046
      %v9048 = vcombine.low %v4462, %v4463
      %v9049 = vcombine.low %v4464, %v4465
      %v9051 = vunpack.c.l.s4 1983009808
      %v9052 = vunpack.c.0.s8 %v9051
      %v9053 = vlaneseq
      %v9054 = vshrl.u32 %v9053, 7
      %v9055 = vsub.s32 %v9052, %v9054
      %v9056 = vrot.slane %v9048, %v9055
      %v9058 = vunpack.c.l.s4 1983009808
      %v9059 = vunpack.c.0.s8 %v9058
      %v9060 = vlaneseq
      %v9061 = vshrl.u32 %v9060, 7
      %v9062 = vsub.s32 %v9059, %v9061
      %v9063 = vrot.slane %v9049, %v9062
      %v9064 = vcombine.low %v9056, %v9063
      %v9065 = vcombine.low %v4466, %v4467
      %v9066 = vcombine.low %v4468, %v4469
      %v9068 = vunpack.c.l.s4 1983009808
      %v9069 = vunpack.c.0.s8 %v9068
      %v9070 = vlaneseq
      %v9071 = vshrl.u32 %v9070, 7
      %v9072 = vsub.s32 %v9069, %v9071
      %v9073 = vrot.slane %v9065, %v9072
      %v9075 = vunpack.c.l.s4 1983009808
      %v9076 = vunpack.c.0.s8 %v9075
      %v9077 = vlaneseq
      %v9078 = vshrl.u32 %v9077, 7
      %v9079 = vsub.s32 %v9076, %v9078
      %v9080 = vrot.slane %v9066, %v9079
      %v9081 = vcombine.low %v9073, %v9080
      %v9082 = vcombine.low %v8270, %v8271
      %v9083 = vcombine.low %v8272, %v8273
      %v9085 = vunpack.c.l.s4 1983009808
      %v9086 = vunpack.c.0.s8 %v9085
      %v9087 = vlaneseq
      %v9088 = vshrl.u32 %v9087, 7
      %v9089 = vsub.s32 %v9086, %v9088
      %v9090 = vrot.slane %v9082, %v9089
      %v9092 = vunpack.c.l.s4 1983009808
      %v9093 = vunpack.c.0.s8 %v9092
      %v9094 = vlaneseq
      %v9095 = vshrl.u32 %v9094, 7
      %v9096 = vsub.s32 %v9093, %v9095
      %v9097 = vrot.slane %v9083, %v9096
      %v9098 = vcombine.low %v9090, %v9097
      %v9099 = vcombine.low %v8274, %v8275
      %v9100 = vcombine.low %v8276, %v8277
      %v9102 = vunpack.c.l.s4 1983009808
      %v9103 = vunpack.c.0.s8 %v9102
      %v9104 = vlaneseq
      %v9105 = vshrl.u32 %v9104, 7
      %v9106 = vsub.s32 %v9103, %v9105
      %v9107 = vrot.slane %v9099, %v9106
      %v9109 = vunpack.c.l.s4 1983009808
      %v9110 = vunpack.c.0.s8 %v9109
      %v9111 = vlaneseq
      %v9112 = vshrl.u32 %v9111, 7
      %v9113 = vsub.s32 %v9110, %v9112
      %v9114 = vrot.slane %v9100, %v9113
      %v9115 = vcombine.low %v9107, %v9114
      %v9116 = vcombine.low %v8278, %v8279
      %v9117 = vcombine.low %v8280, %v8281
      %v9119 = vunpack.c.l.s4 1983009808
      %v9120 = vunpack.c.0.s8 %v9119
      %v9121 = vlaneseq
      %v9122 = vshrl.u32 %v9121, 7
      %v9123 = vsub.s32 %v9120, %v9122
      %v9124 = vrot.slane %v9116, %v9123
      %v9126 = vunpack.c.l.s4 1983009808
      %v9127 = vunpack.c.0.s8 %v9126
      %v9128 = vlaneseq
      %v9129 = vshrl.u32 %v9128, 7
      %v9130 = vsub.s32 %v9127, %v9129
      %v9131 = vrot.slane %v9117, %v9130
      %v9132 = vcombine.low %v9124, %v9131
      %v9133 = vcombine.low %v8282, %v8283
      %v9134 = vcombine.low %v8284, %v8285
      %v9136 = vunpack.c.l.s4 1983009808
      %v9137 = vunpack.c.0.s8 %v9136
      %v9138 = vlaneseq
      %v9139 = vshrl.u32 %v9138, 7
      %v9140 = vsub.s32 %v9137, %v9139
      %v9141 = vrot.slane %v9133, %v9140
      %v9143 = vunpack.c.l.s4 1983009808
      %v9144 = vunpack.c.0.s8 %v9143
      %v9145 = vlaneseq
      %v9146 = vshrl.u32 %v9145, 7
      %v9147 = vsub.s32 %v9144, %v9146
      %v9148 = vrot.slane %v9134, %v9147
      %v9149 = vcombine.low %v9141, %v9148
      %v9150 = vcombine.low %v4470, %v4471
      %v9151 = vcombine.low %v4472, %v4473
      %v9153 = vunpack.c.l.s4 1983009808
      %v9154 = vunpack.c.0.s8 %v9153
      %v9155 = vlaneseq
      %v9156 = vshrl.u32 %v9155, 7
      %v9157 = vsub.s32 %v9154, %v9156
      %v9158 = vrot.slane %v9150, %v9157
      %v9160 = vunpack.c.l.s4 1983009808
      %v9161 = vunpack.c.0.s8 %v9160
      %v9162 = vlaneseq
      %v9163 = vshrl.u32 %v9162, 7
      %v9164 = vsub.s32 %v9161, %v9163
      %v9165 = vrot.slane %v9151, %v9164
      %v9166 = vcombine.low %v9158, %v9165
      %v9167 = vcombine.low %v4474, %v4475
      %v9168 = vcombine.low %v4476, %v4477
      %v9170 = vunpack.c.l.s4 1983009808
      %v9171 = vunpack.c.0.s8 %v9170
      %v9172 = vlaneseq
      %v9173 = vshrl.u32 %v9172, 7
      %v9174 = vsub.s32 %v9171, %v9173
      %v9175 = vrot.slane %v9167, %v9174
      %v9177 = vunpack.c.l.s4 1983009808
      %v9178 = vunpack.c.0.s8 %v9177
      %v9179 = vlaneseq
      %v9180 = vshrl.u32 %v9179, 7
      %v9181 = vsub.s32 %v9178, %v9180
      %v9182 = vrot.slane %v9168, %v9181
      %v9183 = vcombine.low %v9175, %v9182
      %v9184 = vcombine.low %v4478, %v4479
      %v9185 = vcombine.low %v4480, %v4481
      %v9187 = vunpack.c.l.s4 1983009808
      %v9188 = vunpack.c.0.s8 %v9187
      %v9189 = vlaneseq
      %v9190 = vshrl.u32 %v9189, 7
      %v9191 = vsub.s32 %v9188, %v9190
      %v9192 = vrot.slane %v9184, %v9191
      %v9194 = vunpack.c.l.s4 1983009808
      %v9195 = vunpack.c.0.s8 %v9194
      %v9196 = vlaneseq
      %v9197 = vshrl.u32 %v9196, 7
      %v9198 = vsub.s32 %v9195, %v9197
      %v9199 = vrot.slane %v9185, %v9198
      %v9200 = vcombine.low %v9192, %v9199
      %v9201 = vcombine.low %v4482, %v4483
      %v9202 = vcombine.low %v4484, %v4485
      %v9204 = vunpack.c.l.s4 1983009808
      %v9205 = vunpack.c.0.s8 %v9204
      %v9206 = vlaneseq
      %v9207 = vshrl.u32 %v9206, 7
      %v9208 = vsub.s32 %v9205, %v9207
      %v9209 = vrot.slane %v9201, %v9208
      %v9211 = vunpack.c.l.s4 1983009808
      %v9212 = vunpack.c.0.s8 %v9211
      %v9213 = vlaneseq
      %v9214 = vshrl.u32 %v9213, 7
      %v9215 = vsub.s32 %v9212, %v9214
      %v9216 = vrot.slane %v9202, %v9215
      %v9217 = vcombine.low %v9209, %v9216
      %v9218 = vcombine.low %v8286, %v8287
      %v9219 = vcombine.low %v8288, %v8289
      %v9221 = vunpack.c.l.s4 1983009808
      %v9222 = vunpack.c.0.s8 %v9221
      %v9223 = vlaneseq
      %v9224 = vshrl.u32 %v9223, 7
      %v9225 = vsub.s32 %v9222, %v9224
      %v9226 = vrot.slane %v9218, %v9225
      %v9228 = vunpack.c.l.s4 1983009808
      %v9229 = vunpack.c.0.s8 %v9228
      %v9230 = vlaneseq
      %v9231 = vshrl.u32 %v9230, 7
      %v9232 = vsub.s32 %v9229, %v9231
      %v9233 = vrot.slane %v9219, %v9232
      %v9234 = vcombine.low %v9226, %v9233
      %v9235 = vcombine.low %v8290, %v8291
      %v9236 = vcombine.low %v8292, %v8293
      %v9238 = vunpack.c.l.s4 1983009808
      %v9239 = vunpack.c.0.s8 %v9238
      %v9240 = vlaneseq
      %v9241 = vshrl.u32 %v9240, 7
      %v9242 = vsub.s32 %v9239, %v9241
      %v9243 = vrot.slane %v9235, %v9242
      %v9245 = vunpack.c.l.s4 1983009808
      %v9246 = vunpack.c.0.s8 %v9245
      %v9247 = vlaneseq
      %v9248 = vshrl.u32 %v9247, 7
      %v9249 = vsub.s32 %v9246, %v9248
      %v9250 = vrot.slane %v9236, %v9249
      %v9251 = vcombine.low %v9243, %v9250
      %v9252 = vcombine.low %v8294, %v8295
      %v9253 = vcombine.low %v8296, %v8297
      %v9255 = vunpack.c.l.s4 1983009808
      %v9256 = vunpack.c.0.s8 %v9255
      %v9257 = vlaneseq
      %v9258 = vshrl.u32 %v9257, 7
      %v9259 = vsub.s32 %v9256, %v9258
      %v9260 = vrot.slane %v9252, %v9259
      %v9262 = vunpack.c.l.s4 1983009808
      %v9263 = vunpack.c.0.s8 %v9262
      %v9264 = vlaneseq
      %v9265 = vshrl.u32 %v9264, 7
      %v9266 = vsub.s32 %v9263, %v9265
      %v9267 = vrot.slane %v9253, %v9266
      %v9268 = vcombine.low %v9260, %v9267
      %v9269 = vcombine.low %v8298, %v8299
      %v9270 = vcombine.low %v8300, %v8301
      %v9272 = vunpack.c.l.s4 1983009808
      %v9273 = vunpack.c.0.s8 %v9272
      %v9274 = vlaneseq
      %v9275 = vshrl.u32 %v9274, 7
      %v9276 = vsub.s32 %v9273, %v9275
      %v9277 = vrot.slane %v9269, %v9276
      %v9279 = vunpack.c.l.s4 1983009808
      %v9280 = vunpack.c.0.s8 %v9279
      %v9281 = vlaneseq
      %v9282 = vshrl.u32 %v9281, 7
      %v9283 = vsub.s32 %v9280, %v9282
      %v9284 = vrot.slane %v9270, %v9283
      %v9285 = vcombine.low %v9277, %v9284
      %v9286 = vcombine.low %v4486, %v4487
      %v9287 = vcombine.low %v4488, %v4489
      %v9289 = vunpack.c.l.s4 1983009808
      %v9290 = vunpack.c.0.s8 %v9289
      %v9291 = vlaneseq
      %v9292 = vshrl.u32 %v9291, 7
      %v9293 = vsub.s32 %v9290, %v9292
      %v9294 = vrot.slane %v9286, %v9293
      %v9296 = vunpack.c.l.s4 1983009808
      %v9297 = vunpack.c.0.s8 %v9296
      %v9298 = vlaneseq
      %v9299 = vshrl.u32 %v9298, 7
      %v9300 = vsub.s32 %v9297, %v9299
      %v9301 = vrot.slane %v9287, %v9300
      %v9302 = vcombine.low %v9294, %v9301
      %v9303 = vcombine.low %v4490, %v4491
      %v9304 = vcombine.low %v4492, %v4493
      %v9306 = vunpack.c.l.s4 1983009808
      %v9307 = vunpack.c.0.s8 %v9306
      %v9308 = vlaneseq
      %v9309 = vshrl.u32 %v9308, 7
      %v9310 = vsub.s32 %v9307, %v9309
      %v9311 = vrot.slane %v9303, %v9310
      %v9313 = vunpack.c.l.s4 1983009808
      %v9314 = vunpack.c.0.s8 %v9313
      %v9315 = vlaneseq
      %v9316 = vshrl.u32 %v9315, 7
      %v9317 = vsub.s32 %v9314, %v9316
      %v9318 = vrot.slane %v9304, %v9317
      %v9319 = vcombine.low %v9311, %v9318
      %v9320 = vcombine.low %v4494, %v4495
      %v9321 = vcombine.low %v4496, %v4497
      %v9323 = vunpack.c.l.s4 1983009808
      %v9324 = vunpack.c.0.s8 %v9323
      %v9325 = vlaneseq
      %v9326 = vshrl.u32 %v9325, 7
      %v9327 = vsub.s32 %v9324, %v9326
      %v9328 = vrot.slane %v9320, %v9327
      %v9330 = vunpack.c.l.s4 1983009808
      %v9331 = vunpack.c.0.s8 %v9330
      %v9332 = vlaneseq
      %v9333 = vshrl.u32 %v9332, 7
      %v9334 = vsub.s32 %v9331, %v9333
      %v9335 = vrot.slane %v9321, %v9334
      %v9336 = vcombine.low %v9328, %v9335
      %v9337 = vcombine.low %v4498, %v4499
      %v9338 = vcombine.low %v4500, %v4501
      %v9340 = vunpack.c.l.s4 1983009808
      %v9341 = vunpack.c.0.s8 %v9340
      %v9342 = vlaneseq
      %v9343 = vshrl.u32 %v9342, 7
      %v9344 = vsub.s32 %v9341, %v9343
      %v9345 = vrot.slane %v9337, %v9344
      %v9347 = vunpack.c.l.s4 1983009808
      %v9348 = vunpack.c.0.s8 %v9347
      %v9349 = vlaneseq
      %v9350 = vshrl.u32 %v9349, 7
      %v9351 = vsub.s32 %v9348, %v9350
      %v9352 = vrot.slane %v9338, %v9351
      %v9353 = vcombine.low %v9345, %v9352
      %v9354 = vcombine.low %v8302, %v8303
      %v9355 = vcombine.low %v8304, %v8305
      %v9357 = vunpack.c.l.s4 1983009808
      %v9358 = vunpack.c.0.s8 %v9357
      %v9359 = vlaneseq
      %v9360 = vshrl.u32 %v9359, 7
      %v9361 = vsub.s32 %v9358, %v9360
      %v9362 = vrot.slane %v9354, %v9361
      %v9364 = vunpack.c.l.s4 1983009808
      %v9365 = vunpack.c.0.s8 %v9364
      %v9366 = vlaneseq
      %v9367 = vshrl.u32 %v9366, 7
      %v9368 = vsub.s32 %v9365, %v9367
      %v9369 = vrot.slane %v9355, %v9368
      %v9370 = vcombine.low %v9362, %v9369
      %v9371 = vcombine.low %v8306, %v8307
      %v9372 = vcombine.low %v8308, %v8309
      %v9374 = vunpack.c.l.s4 1983009808
      %v9375 = vunpack.c.0.s8 %v9374
      %v9376 = vlaneseq
      %v9377 = vshrl.u32 %v9376, 7
      %v9378 = vsub.s32 %v9375, %v9377
      %v9379 = vrot.slane %v9371, %v9378
      %v9381 = vunpack.c.l.s4 1983009808
      %v9382 = vunpack.c.0.s8 %v9381
      %v9383 = vlaneseq
      %v9384 = vshrl.u32 %v9383, 7
      %v9385 = vsub.s32 %v9382, %v9384
      %v9386 = vrot.slane %v9372, %v9385
      %v9387 = vcombine.low %v9379, %v9386
      %v9388 = vcombine.low %v8310, %v8311
      %v9389 = vcombine.low %v8312, %v8313
      %v9391 = vunpack.c.l.s4 1983009808
      %v9392 = vunpack.c.0.s8 %v9391
      %v9393 = vlaneseq
      %v9394 = vshrl.u32 %v9393, 7
      %v9395 = vsub.s32 %v9392, %v9394
      %v9396 = vrot.slane %v9388, %v9395
      %v9398 = vunpack.c.l.s4 1983009808
      %v9399 = vunpack.c.0.s8 %v9398
      %v9400 = vlaneseq
      %v9401 = vshrl.u32 %v9400, 7
      %v9402 = vsub.s32 %v9399, %v9401
      %v9403 = vrot.slane %v9389, %v9402
      %v9404 = vcombine.low %v9396, %v9403
      %v9405 = vcombine.low %v8314, %v8315
      %v9406 = vcombine.low %v8316, %v8317
      %v9408 = vunpack.c.l.s4 1983009808
      %v9409 = vunpack.c.0.s8 %v9408
      %v9410 = vlaneseq
      %v9411 = vshrl.u32 %v9410, 7
      %v9412 = vsub.s32 %v9409, %v9411
      %v9413 = vrot.slane %v9405, %v9412
      %v9415 = vunpack.c.l.s4 1983009808
      %v9416 = vunpack.c.0.s8 %v9415
      %v9417 = vlaneseq
      %v9418 = vshrl.u32 %v9417, 7
      %v9419 = vsub.s32 %v9416, %v9418
      %v9420 = vrot.slane %v9406, %v9419
      %v9421 = vcombine.low %v9413, %v9420
      %v9422 = vcombine.low %v4502, %v4503
      %v9423 = vcombine.low %v4504, %v4505
      %v9425 = vunpack.c.l.s4 1983009808
      %v9426 = vunpack.c.0.s8 %v9425
      %v9427 = vlaneseq
      %v9428 = vshrl.u32 %v9427, 7
      %v9429 = vsub.s32 %v9426, %v9428
      %v9430 = vrot.slane %v9422, %v9429
      %v9432 = vunpack.c.l.s4 1983009808
      %v9433 = vunpack.c.0.s8 %v9432
      %v9434 = vlaneseq
      %v9435 = vshrl.u32 %v9434, 7
      %v9436 = vsub.s32 %v9433, %v9435
      %v9437 = vrot.slane %v9423, %v9436
      %v9438 = vcombine.low %v9430, %v9437
      %v9439 = vcombine.low %v4506, %v4507
      %v9440 = vcombine.low %v4508, %v4509
      %v9442 = vunpack.c.l.s4 1983009808
      %v9443 = vunpack.c.0.s8 %v9442
      %v9444 = vlaneseq
      %v9445 = vshrl.u32 %v9444, 7
      %v9446 = vsub.s32 %v9443, %v9445
      %v9447 = vrot.slane %v9439, %v9446
      %v9449 = vunpack.c.l.s4 1983009808
      %v9450 = vunpack.c.0.s8 %v9449
      %v9451 = vlaneseq
      %v9452 = vshrl.u32 %v9451, 7
      %v9453 = vsub.s32 %v9450, %v9452
      %v9454 = vrot.slane %v9440, %v9453
      %v9455 = vcombine.low %v9447, %v9454
      %v9456 = vcombine.low %v4510, %v4511
      %v9457 = vcombine.low %v4512, %v4513
      %v9459 = vunpack.c.l.s4 1983009808
      %v9460 = vunpack.c.0.s8 %v9459
      %v9461 = vlaneseq
      %v9462 = vshrl.u32 %v9461, 7
      %v9463 = vsub.s32 %v9460, %v9462
      %v9464 = vrot.slane %v9456, %v9463
      %v9466 = vunpack.c.l.s4 1983009808
      %v9467 = vunpack.c.0.s8 %v9466
      %v9468 = vlaneseq
      %v9469 = vshrl.u32 %v9468, 7
      %v9470 = vsub.s32 %v9467, %v9469
      %v9471 = vrot.slane %v9457, %v9470
      %v9472 = vcombine.low %v9464, %v9471
      %v9473 = vcombine.low %v4514, %v4515
      %v9474 = vcombine.low %v4516, %v4517
      %v9476 = vunpack.c.l.s4 1983009808
      %v9477 = vunpack.c.0.s8 %v9476
      %v9478 = vlaneseq
      %v9479 = vshrl.u32 %v9478, 7
      %v9480 = vsub.s32 %v9477, %v9479
      %v9481 = vrot.slane %v9473, %v9480
      %v9483 = vunpack.c.l.s4 1983009808
      %v9484 = vunpack.c.0.s8 %v9483
      %v9485 = vlaneseq
      %v9486 = vshrl.u32 %v9485, 7
      %v9487 = vsub.s32 %v9484, %v9486
      %v9488 = vrot.slane %v9474, %v9487
      %v9489 = vcombine.low %v9481, %v9488
      %v9490 = vcombine.low %v8318, %v8319
      %v9491 = vcombine.low %v8320, %v8321
      %v9493 = vunpack.c.l.s4 1983009808
      %v9494 = vunpack.c.0.s8 %v9493
      %v9495 = vlaneseq
      %v9496 = vshrl.u32 %v9495, 7
      %v9497 = vsub.s32 %v9494, %v9496
      %v9498 = vrot.slane %v9490, %v9497
      %v9500 = vunpack.c.l.s4 1983009808
      %v9501 = vunpack.c.0.s8 %v9500
      %v9502 = vlaneseq
      %v9503 = vshrl.u32 %v9502, 7
      %v9504 = vsub.s32 %v9501, %v9503
      %v9505 = vrot.slane %v9491, %v9504
      %v9506 = vcombine.low %v9498, %v9505
      %v9507 = vcombine.low %v8322, %v8323
      %v9508 = vcombine.low %v8324, %v8325
      %v9510 = vunpack.c.l.s4 1983009808
      %v9511 = vunpack.c.0.s8 %v9510
      %v9512 = vlaneseq
      %v9513 = vshrl.u32 %v9512, 7
      %v9514 = vsub.s32 %v9511, %v9513
      %v9515 = vrot.slane %v9507, %v9514
      %v9517 = vunpack.c.l.s4 1983009808
      %v9518 = vunpack.c.0.s8 %v9517
      %v9519 = vlaneseq
      %v9520 = vshrl.u32 %v9519, 7
      %v9521 = vsub.s32 %v9518, %v9520
      %v9522 = vrot.slane %v9508, %v9521
      %v9523 = vcombine.low %v9515, %v9522
      %v9524 = vcombine.low %v8326, %v8327
      %v9525 = vcombine.low %v8328, %v8329
      %v9527 = vunpack.c.l.s4 1983009808
      %v9528 = vunpack.c.0.s8 %v9527
      %v9529 = vlaneseq
      %v9530 = vshrl.u32 %v9529, 7
      %v9531 = vsub.s32 %v9528, %v9530
      %v9532 = vrot.slane %v9524, %v9531
      %v9534 = vunpack.c.l.s4 1983009808
      %v9535 = vunpack.c.0.s8 %v9534
      %v9536 = vlaneseq
      %v9537 = vshrl.u32 %v9536, 7
      %v9538 = vsub.s32 %v9535, %v9537
      %v9539 = vrot.slane %v9525, %v9538
      %v9540 = vcombine.low %v9532, %v9539
      %v9541 = vcombine.low %v8330, %v8331
      %v9542 = vcombine.low %v8332, %v8333
      %v9544 = vunpack.c.l.s4 1983009808
      %v9545 = vunpack.c.0.s8 %v9544
      %v9546 = vlaneseq
      %v9547 = vshrl.u32 %v9546, 7
      %v9548 = vsub.s32 %v9545, %v9547
      %v9549 = vrot.slane %v9541, %v9548
      %v9551 = vunpack.c.l.s4 1983009808
      %v9552 = vunpack.c.0.s8 %v9551
      %v9553 = vlaneseq
      %v9554 = vshrl.u32 %v9553, 7
      %v9555 = vsub.s32 %v9552, %v9554
      %v9556 = vrot.slane %v9542, %v9555
      %v9557 = vcombine.low %v9549, %v9556
      %v9558 = vcombine.low %v4518, %v4519
      %v9559 = vcombine.low %v4520, %v4521
      %v9561 = vunpack.c.l.s4 1983009808
      %v9562 = vunpack.c.0.s8 %v9561
      %v9563 = vlaneseq
      %v9564 = vshrl.u32 %v9563, 7
      %v9565 = vsub.s32 %v9562, %v9564
      %v9566 = vrot.slane %v9558, %v9565
      %v9568 = vunpack.c.l.s4 1983009808
      %v9569 = vunpack.c.0.s8 %v9568
      %v9570 = vlaneseq
      %v9571 = vshrl.u32 %v9570, 7
      %v9572 = vsub.s32 %v9569, %v9571
      %v9573 = vrot.slane %v9559, %v9572
      %v9574 = vcombine.low %v9566, %v9573
      %v9575 = vcombine.low %v4522, %v4523
      %v9576 = vcombine.low %v4524, %v4525
      %v9578 = vunpack.c.l.s4 1983009808
      %v9579 = vunpack.c.0.s8 %v9578
      %v9580 = vlaneseq
      %v9581 = vshrl.u32 %v9580, 7
      %v9582 = vsub.s32 %v9579, %v9581
      %v9583 = vrot.slane %v9575, %v9582
      %v9585 = vunpack.c.l.s4 1983009808
      %v9586 = vunpack.c.0.s8 %v9585
      %v9587 = vlaneseq
      %v9588 = vshrl.u32 %v9587, 7
      %v9589 = vsub.s32 %v9586, %v9588
      %v9590 = vrot.slane %v9576, %v9589
      %v9591 = vcombine.low %v9583, %v9590
      %v9592 = vcombine.low %v4526, %v4527
      %v9593 = vcombine.low %v4528, %v4529
      %v9595 = vunpack.c.l.s4 1983009808
      %v9596 = vunpack.c.0.s8 %v9595
      %v9597 = vlaneseq
      %v9598 = vshrl.u32 %v9597, 7
      %v9599 = vsub.s32 %v9596, %v9598
      %v9600 = vrot.slane %v9592, %v9599
      %v9602 = vunpack.c.l.s4 1983009808
      %v9603 = vunpack.c.0.s8 %v9602
      %v9604 = vlaneseq
      %v9605 = vshrl.u32 %v9604, 7
      %v9606 = vsub.s32 %v9603, %v9605
      %v9607 = vrot.slane %v9593, %v9606
      %v9608 = vcombine.low %v9600, %v9607
      %v9609 = vcombine.low %v4530, %v4531
      %v9610 = vcombine.low %v4532, %v4533
      %v9612 = vunpack.c.l.s4 1983009808
      %v9613 = vunpack.c.0.s8 %v9612
      %v9614 = vlaneseq
      %v9615 = vshrl.u32 %v9614, 7
      %v9616 = vsub.s32 %v9613, %v9615
      %v9617 = vrot.slane %v9609, %v9616
      %v9619 = vunpack.c.l.s4 1983009808
      %v9620 = vunpack.c.0.s8 %v9619
      %v9621 = vlaneseq
      %v9622 = vshrl.u32 %v9621, 7
      %v9623 = vsub.s32 %v9620, %v9622
      %v9624 = vrot.slane %v9610, %v9623
      %v9625 = vcombine.low %v9617, %v9624
      %v9626 = vcombine.low %v8334, %v8335
      %v9627 = vcombine.low %v8336, %v8337
      %v9629 = vunpack.c.l.s4 1983009808
      %v9630 = vunpack.c.0.s8 %v9629
      %v9631 = vlaneseq
      %v9632 = vshrl.u32 %v9631, 7
      %v9633 = vsub.s32 %v9630, %v9632
      %v9634 = vrot.slane %v9626, %v9633
      %v9636 = vunpack.c.l.s4 1983009808
      %v9637 = vunpack.c.0.s8 %v9636
      %v9638 = vlaneseq
      %v9639 = vshrl.u32 %v9638, 7
      %v9640 = vsub.s32 %v9637, %v9639
      %v9641 = vrot.slane %v9627, %v9640
      %v9642 = vcombine.low %v9634, %v9641
      %v9643 = vcombine.low %v8338, %v8339
      %v9644 = vcombine.low %v8340, %v8341
      %v9646 = vunpack.c.l.s4 1983009808
      %v9647 = vunpack.c.0.s8 %v9646
      %v9648 = vlaneseq
      %v9649 = vshrl.u32 %v9648, 7
      %v9650 = vsub.s32 %v9647, %v9649
      %v9651 = vrot.slane %v9643, %v9650
      %v9653 = vunpack.c.l.s4 1983009808
      %v9654 = vunpack.c.0.s8 %v9653
      %v9655 = vlaneseq
      %v9656 = vshrl.u32 %v9655, 7
      %v9657 = vsub.s32 %v9654, %v9656
      %v9658 = vrot.slane %v9644, %v9657
      %v9659 = vcombine.low %v9651, %v9658
      %v9660 = vcombine.low %v8342, %v8343
      %v9661 = vcombine.low %v8344, %v8345
      %v9663 = vunpack.c.l.s4 1983009808
      %v9664 = vunpack.c.0.s8 %v9663
      %v9665 = vlaneseq
      %v9666 = vshrl.u32 %v9665, 7
      %v9667 = vsub.s32 %v9664, %v9666
      %v9668 = vrot.slane %v9660, %v9667
      %v9670 = vunpack.c.l.s4 1983009808
      %v9671 = vunpack.c.0.s8 %v9670
      %v9672 = vlaneseq
      %v9673 = vshrl.u32 %v9672, 7
      %v9674 = vsub.s32 %v9671, %v9673
      %v9675 = vrot.slane %v9661, %v9674
      %v9676 = vcombine.low %v9668, %v9675
      %v9677 = vcombine.low %v8346, %v8347
      %v9678 = vcombine.low %v8348, %v8349
      %v9680 = vunpack.c.l.s4 1983009808
      %v9681 = vunpack.c.0.s8 %v9680
      %v9682 = vlaneseq
      %v9683 = vshrl.u32 %v9682, 7
      %v9684 = vsub.s32 %v9681, %v9683
      %v9685 = vrot.slane %v9677, %v9684
      %v9687 = vunpack.c.l.s4 1983009808
      %v9688 = vunpack.c.0.s8 %v9687
      %v9689 = vlaneseq
      %v9690 = vshrl.u32 %v9689, 7
      %v9691 = vsub.s32 %v9688, %v9690
      %v9692 = vrot.slane %v9678, %v9691
      %v9693 = vcombine.low %v9685, %v9692
      %9758 = vst.msk [vmem:[%s391] sm:$0xff] %vm577, %v8622
      %9759 = vst.msk [vmem:[%s391 + $0x8] sm:$0xff] %vm577, %v8639
      %9760 = vst.msk [vmem:[%s391 + $0x10] sm:$0xff] %vm577, %v8656
      %9761 = vst.msk [vmem:[%s391 + $0x18] sm:$0xff] %vm577, %v8673
      %9762 = vst.msk [vmem:[%s391 + $0x20] sm:$0xff] %vm577, %v8690
      %9763 = vst.msk [vmem:[%s391 + $0x28] sm:$0xff] %vm577, %v8707
      %9764 = vst.msk [vmem:[%s391 + $0x30] sm:$0xff] %vm577, %v8724
      %9765 = vst.msk [vmem:[%s391 + $0x38] sm:$0xff] %vm577, %v8741
      %9766 = vst.msk [vmem:[%s391 + $0x40] sm:$0xff] %vm577, %v8758
      %9767 = vst.msk [vmem:[%s391 + $0x48] sm:$0xff] %vm577, %v8775
      %9768 = vst.msk [vmem:[%s391 + $0x50] sm:$0xff] %vm577, %v8792
      %9769 = vst.msk [vmem:[%s391 + $0x58] sm:$0xff] %vm577, %v8809
      %9770 = vst.msk [vmem:[%s391 + $0x60] sm:$0xff] %vm577, %v8826
      %9771 = vst.msk [vmem:[%s391 + $0x68] sm:$0xff] %vm577, %v8843
      %9772 = vst.msk [vmem:[%s391 + $0x70] sm:$0xff] %vm577, %v8860
      %9773 = vst.msk [vmem:[%s391 + $0x78] sm:$0xff] %vm577, %v8877
      %9774 = vst.msk [vmem:[%s391 + $0x80] sm:$0xff] %vm577, %v8894
      %9775 = vst.msk [vmem:[%s391 + $0x88] sm:$0xff] %vm577, %v8911
      %9776 = vst.msk [vmem:[%s391 + $0x90] sm:$0xff] %vm577, %v8928
      %9777 = vst.msk [vmem:[%s391 + $0x98] sm:$0xff] %vm577, %v8945
      %9778 = vst.msk [vmem:[%s391 + $0xa0] sm:$0xff] %vm577, %v8962
      %9779 = vst.msk [vmem:[%s391 + $0xa8] sm:$0xff] %vm577, %v8979
      %9780 = vst.msk [vmem:[%s391 + $0xb0] sm:$0xff] %vm577, %v8996
      %9781 = vst.msk [vmem:[%s391 + $0xb8] sm:$0xff] %vm577, %v9013
      %9782 = vst.msk [vmem:[%s391 + $0xc0] sm:$0xff] %vm577, %v9030
      %9783 = vst.msk [vmem:[%s391 + $0xc8] sm:$0xff] %vm577, %v9047
      %9784 = vst.msk [vmem:[%s391 + $0xd0] sm:$0xff] %vm577, %v9064
      %9785 = vst.msk [vmem:[%s391 + $0xd8] sm:$0xff] %vm577, %v9081
      %9786 = vst.msk [vmem:[%s391 + $0xe0] sm:$0xff] %vm577, %v9098
      %9787 = vst.msk [vmem:[%s391 + $0xe8] sm:$0xff] %vm577, %v9115
      %9788 = vst.msk [vmem:[%s391 + $0xf0] sm:$0xff] %vm577, %v9132
      %9789 = vst.msk [vmem:[%s391 + $0xf8] sm:$0xff] %vm577, %v9149
      %9790 = vst.msk [vmem:[%s391 + $0x100] sm:$0xff] %vm577, %v9166
      %9791 = vst.msk [vmem:[%s391 + $0x108] sm:$0xff] %vm577, %v9183
      %9792 = vst.msk [vmem:[%s391 + $0x110] sm:$0xff] %vm577, %v9200
      %9793 = vst.msk [vmem:[%s391 + $0x118] sm:$0xff] %vm577, %v9217
      %9794 = vst.msk [vmem:[%s391 + $0x120] sm:$0xff] %vm577, %v9234
      %9795 = vst.msk [vmem:[%s391 + $0x128] sm:$0xff] %vm577, %v9251
      %9796 = vst.msk [vmem:[%s391 + $0x130] sm:$0xff] %vm577, %v9268
      %9797 = vst.msk [vmem:[%s391 + $0x138] sm:$0xff] %vm577, %v9285
      %9798 = vst.msk [vmem:[%s391 + $0x140] sm:$0xff] %vm577, %v9302
      %9799 = vst.msk [vmem:[%s391 + $0x148] sm:$0xff] %vm577, %v9319
      %9800 = vst.msk [vmem:[%s391 + $0x150] sm:$0xff] %vm577, %v9336
      %9801 = vst.msk [vmem:[%s391 + $0x158] sm:$0xff] %vm577, %v9353
      %9802 = vst.msk [vmem:[%s391 + $0x160] sm:$0xff] %vm577, %v9370
      %9803 = vst.msk [vmem:[%s391 + $0x168] sm:$0xff] %vm577, %v9387
      %9804 = vst.msk [vmem:[%s391 + $0x170] sm:$0xff] %vm577, %v9404
      %9805 = vst.msk [vmem:[%s391 + $0x178] sm:$0xff] %vm577, %v9421
      %9806 = vst.msk [vmem:[%s391 + $0x180] sm:$0xff] %vm577, %v9438
      %9807 = vst.msk [vmem:[%s391 + $0x188] sm:$0xff] %vm577, %v9455
      %9808 = vst.msk [vmem:[%s391 + $0x190] sm:$0xff] %vm577, %v9472
      %9809 = vst.msk [vmem:[%s391 + $0x198] sm:$0xff] %vm577, %v9489
      %9810 = vst.msk [vmem:[%s391 + $0x1a0] sm:$0xff] %vm577, %v9506
      %9811 = vst.msk [vmem:[%s391 + $0x1a8] sm:$0xff] %vm577, %v9523
      %9812 = vst.msk [vmem:[%s391 + $0x1b0] sm:$0xff] %vm577, %v9540
      %9813 = vst.msk [vmem:[%s391 + $0x1b8] sm:$0xff] %vm577, %v9557
      %9814 = vst.msk [vmem:[%s391 + $0x1c0] sm:$0xff] %vm577, %v9574
      %9815 = vst.msk [vmem:[%s391 + $0x1c8] sm:$0xff] %vm577, %v9591
      %9816 = vst.msk [vmem:[%s391 + $0x1d0] sm:$0xff] %vm577, %v9608
      %9817 = vst.msk [vmem:[%s391 + $0x1d8] sm:$0xff] %vm577, %v9625
      %9818 = vst.msk [vmem:[%s391 + $0x1e0] sm:$0xff] %vm577, %v9642
      %9819 = vst.msk [vmem:[%s391 + $0x1e8] sm:$0xff] %vm577, %v9659
      %9820 = vst.msk [vmem:[%s391 + $0x1f0] sm:$0xff] %vm577, %v9676
      %9821 = vst.msk [vmem:[%s391 + $0x1f8] sm:$0xff] %vm577, %v9693
      %s9822 = smul.u32 16, %s21
      %p9823 = scmp.lt.s32.totalorder %s20, 1
      %s9824 = scalar_select %p9823, %s20, 1
      %p9825 = scmp.lt.s32.totalorder %s9822, 31
      %s9826 = scalar_select %p9825, %s9822, 31
      %s9827 = smul.addr %s9826, 4
      %s9828 = smul.addr %s9824, 128
      %s9829 = sadd.s32 %s9827, %s9828
      %s9830 = smul.addr %s9829, 8
      %s9831 = scalar_lea.vmem %s5, %s9830
      // Predicated region
      $region41: #{_upsample_forward.1} parent=39 // pred_check
        %p9832 = pneg %p190
      $region42: #{_upsample_forward.1} parent=39 // pred_check_branch
        %9834 = sbr.rel (%p9832) target = $region44
      $region43: #{_upsample_forward.1} parent=39 // pred_region
        %s9835 = smul.u32 16, %s21
      $region44: #{_upsample_forward.1} parent=39 // pred_fallthru
        _
    $region40: #{_upsample_forward.1} parent=5 // pred_fallthru
      _
    %p9836 = scmp.le.s32.totalorder 2, %s11
    // Predicated region
    $region45: #{_upsample_forward.1} parent=5 // pred_check
      %p9837 = pneg %p9836
    $region46: #{_upsample_forward.1} parent=5 // pred_check_branch
      %9839 = sbr.rel (%p9837) target = $region48
    $region47: #{_upsample_forward.1} parent=5 // pred_region
      %s9840 = ssub.s32 %s11, 2
      // Predicated region
      $region49: #{_upsample_forward.1} parent=47 // pred_check
        %p9841 = pneg %p196
      $region50: #{_upsample_forward.1} parent=47 // pred_check_branch
        %9843 = sbr.rel (%p9841) target = $region52
      $region51: #{_upsample_forward.1} parent=47 // pred_region
        %s9844 = smul.u32 16, %s23
        %p9845 = scmp.lt.s32.totalorder %s22, 1
        %s9846 = scalar_select %p9845, %s22, 1
        %p9847 = scmp.lt.s32.totalorder %s9844, 31
        %s9848 = scalar_select %p9847, %s9844, 31
        %s9849 = smul.addr %s9848, 4
        %s9850 = smul.addr %s9846, 128
        %s9851 = sadd.s32 %s9849, %s9850
        %s9852 = smul.addr %s9851, 8
        %s9853 = scalar_lea.vmem %s5, %s9852
      $region52: #{_upsample_forward.1} parent=47 // pred_fallthru
        _
    $region48: #{_upsample_forward.1} parent=5 // pred_fallthru
      _
  $region6: #{_upsample_forward.1} parent=0 // loop_footer
    %s15 = sadd.s32 1, %s11
  $region7: #{_upsample_forward.1} parent=0 // loop_footer_branch
    %10 = sbr.rel target = $region3
  $region8: #{_upsample_forward.1} parent=0 // loop_exit
    _

</llo_original>
